<compile_context>
chip_gen: v5e
topology: v5e:2x2
jax: 0.10.0
libtpu: 0.0.40
codegen_flags: <defaults>
</compile_context>

<pallas_src>
import functools

import numpy as np

import jax
import jax.numpy as jnp
from jax.experimental import pallas as pl
from jax.experimental.pallas import tpu as pltpu


# ----------------------------------------------------------------------------
# Fused kernel: 3 x base_model = Conv3d -> ReLU -> n_blocks*[ResBlock] -> Conv3d
# ----------------------------------------------------------------------------

def _make_fused_kernel(T, H, W, in_chans, n_hidden, out_chans, n_blocks,
                       lanes_out):
    T_pad, H_pad, W_pad = T + 2, H + 2, W + 2
    RP = T_pad * H_pad                 # activation rows (sublanes): (t_pad, h_pad)
    Q = (T - 1) * H_pad + H            # contiguous "output row" window
    # (kd, kh) tap-pair row shifts, in the same order the slabs are K-stacked.
    shifts = tuple(kd * H_pad + kh for kd in range(3) for kh in range(3))

    def conv_layer(read_win, w_slab, b_row, cout, row_ok, act_ref, *,
                   relu, residual):
        """One 3x3x3 'same' conv as a single K-stacked MXU matmul.

        read_win(shift) -> (Q, W_pad*cin) shifted row window (zero halos).
        w_slab : (9*W_pad*cin, W_pad*cout) banded slab (kw, ci, w-halo baked in).
        b_row  : (1, W_pad*cout) bias row (zero at w-halo columns).
        Writes the (zero-haloed) result into the persistent activation scratch
        and returns the (Q, W_pad*cout) value.
        """
        stacked = jnp.concatenate([read_win(s) for s in shifts], axis=1)
        acc = jnp.dot(stacked, w_slab, preferred_element_type=jnp.float32)
        acc = acc + b_row                                 # zero at w-halo columns
        if relu:
            acc = jnp.maximum(acc, 0.0)
        acc = acc * row_ok                                # zero h-halo garbage rows
        if residual:                                      # ResBlock: relu(bn(conv)) + x
            acc = acc + act_ref[pl.ds(H_pad + 1, Q), pl.ds(0, W_pad * cout)]
        act_ref[pl.ds(H_pad + 1, Q), pl.ds(0, W_pad * cout)] = acc
        return acc

    def kernel(x_ref, win_ref, bin_ref, wblk_ref, bblk_ref, wout_ref, bout_ref,
               o_ref, act_ref):
        # Valid-output-row mask (the h-halo rows of the shifted window are junk).
        q_idx = jax.lax.broadcasted_iota(jnp.int32, (Q, 1), 0)
        row_ok = ((q_idx % H_pad) < H).astype(jnp.float32)

        # Zero the persistent activation scratch once per grid step: the rows
        # outside the write window and the t/h halos must stay zero.
        act_ref[...] = jnp.zeros_like(act_ref)

        def from_x(shift):
            return x_ref[0, pl.ds(shift, Q), :]

        def from_act(cin):
            def rd(shift):
                return act_ref[pl.ds(shift, Q), pl.ds(0, W_pad * cin)]
            return rd

        outs = []
        read_in = from_x                                  # model1 reads the input
        for m in range(3):                                # model1 / model2 / model3
            conv_layer(read_in, win_ref[m], bin_ref[m], n_hidden, row_ok,
                       act_ref, relu=True, residual=False)
            for blk in range(n_blocks):
                # ResBlock: out = relu(batch_norm(conv(h))) + h
                # (eval-mode BatchNorm3d folded into the packed weights).
                conv_layer(from_act(n_hidden), wblk_ref[m, blk],
                           bblk_ref[m, blk], n_hidden, row_ok, act_ref,
                           relu=True, residual=True)
                # TODO(synk): nn.Dropout(p=0.5) train-mode randomness is not
                # reproducible; implemented as eval-mode identity.
            out_m = conv_layer(from_act(n_hidden), wout_ref[m], bout_ref[m],
                               out_chans, row_ok, act_ref, relu=False,
                               residual=False)
            outs.append(out_m)                            # (Q, W_pad*out_chans)
            read_in = from_act(out_chans)                 # next model reads it back

        # Lane-dense output: one unmasked full-width store of (Q, lanes_out).
        pad = lanes_out - 3 * W_pad * out_chans
        if pad:
            outs.append(jnp.zeros((Q, pad), jnp.float32))
        o_ref[0] = jnp.concatenate(outs, axis=1)

    return kernel


def conv3d_model_forward(packed, x_ncthw, *, n_hidden, n_blocks,
                         future_steps=30, pred_chan=1):
    """x_ncthw: (B, C, T, H, W) PyTorch layout. Returns (B, future_steps, H, W)."""
    B, C, T, H, W = x_ncthw.shape
    T_pad, H_pad, W_pad = T + 2, H + 2, W + 2
    RP = T_pad * H_pad
    Q = (T - 1) * H_pad + H
    out_chans = packed["wout"].shape[-1] // W_pad
    assert out_chans == C, "Conv3dModel chains base_models with out_chans == in_chans"
    lanes_out = -(-(3 * W_pad * out_chans) // 128) * 128   # round up to 128 lanes

    x = jnp.transpose(x_ncthw, (0, 2, 3, 4, 1)).astype(jnp.float32)  # (B,T,H,W,C)

    # Baseline persistence prediction: stack(future_steps * [x[:, 1, -1]], dim=1).
    x_id_future = jnp.broadcast_to(x[:, -1, :, :, 1][:, None],
                                   (B, future_steps, H, W))

    # One-time halo pad + row layout: rows = (t_pad, h_pad), lanes = (w_pad, c).
    xp = jnp.pad(x, ((0, 0), (1, 1), (1, 1), (1, 1), (0, 0)))
    xp = xp.reshape(B, RP, W_pad * C)

    kernel = _make_fused_kernel(T, H, W, C, n_hidden, out_chans, n_blocks,
                                lanes_out)

    def _full(arr):                                       # whole-array, grid-invariant
        nd = arr.ndim
        return pl.BlockSpec(arr.shape, lambda i, _nd=nd: (0,) * _nd)

    out_rows = pl.pallas_call(
        kernel,
        out_shape=jax.ShapeDtypeStruct((B, Q, lanes_out), jnp.float32),
        grid=(B,),
        in_specs=[pl.BlockSpec((1, RP, W_pad * C), lambda i: (i, 0, 0)),
                  _full(packed["win"]), _full(packed["bin"]),
                  _full(packed["wblk"]), _full(packed["bblk"]),
                  _full(packed["wout"]), _full(packed["bout"])],
        out_specs=pl.BlockSpec((1, Q, lanes_out), lambda i: (i, 0, 0)),
        scratch_shapes=[pltpu.VMEM((RP, W_pad * max(C, n_hidden, out_chans)),
                                   jnp.float32)],
        compiler_params=pltpu.CompilerParams(
            dimension_semantics=("parallel",),
            vmem_limit_bytes=32 * 1024 * 1024),
    )(xp, packed["win"], packed["bin"], packed["wblk"], packed["bblk"],
      packed["wout"], packed["bout"])

    # Tiny XLA epilogue: un-layout the three model outputs (y, z, w).
    WC = W_pad * out_chans
    model_outs = []
    for m in range(3):
        slab = out_rows[:, :, m * WC:(m + 1) * WC]            # (B, Q, W_pad*C)
        slab = jnp.pad(slab, ((0, 0), (0, T * H_pad - Q), (0, 0)))
        slab = slab.reshape(B, T, H_pad, W_pad, out_chans)
        model_outs.append(slab[:, :, :H, 1:W + 1, :])          # (B, T, H, W, C)

    # torch.cat([y, z, w], dim=2)[:, pred_chan, :future_steps] + x_id_future
    cat = jnp.concatenate(model_outs, axis=1)
    return cat[:, :future_steps, :, :, pred_chan] + x_id_future


# ----------------------- parameter construction (glue) -----------------------

def _init_conv(key, cin, cout, gain=1.0):
    kw, kb = jax.random.split(key)
    fan_in = cin * 27
    w = gain * jax.random.normal(kw, (cout, cin, 3, 3, 3), jnp.float32) / jnp.sqrt(
        float(fan_in))
    b = 0.01 * jax.random.normal(kb, (cout,), jnp.float32)
    return w, b


def init_base_model(key, in_chans, out_chans, n_hidden, n_blocks):
    keys = jax.random.split(key, n_blocks + 2)
    params = {"conv_in": _init_conv(keys[0], in_chans, n_hidden)}
    blocks = []
    for i in range(n_blocks):
        # ResBlock conv: kaiming_normal_(nonlinearity='relu') -> std sqrt(2/fan_in)
        w, b = _init_conv(keys[1 + i], n_hidden, n_hidden, gain=float(np.sqrt(2.0)))
        blocks.append(dict(
            w=w, b=b,
            gamma=jnp.full((n_hidden,), 0.5, jnp.float32),   # BN weight init 0.5
            beta=jnp.zeros((n_hidden,), jnp.float32),        # BN bias init 0
            mean=jnp.zeros((n_hidden,), jnp.float32),        # running_mean
            var=jnp.ones((n_hidden,), jnp.float32),          # running_var
        ))
    params["blocks"] = blocks
    params["conv_out"] = _init_conv(keys[-1], n_hidden, out_chans)
    return params


# ------------------ one-time weight packing (numpy, offline) ------------------

def _toeplitz_slab(w_torch_layout, W):
    """(Cout, Cin, 3, 3, 3) torch weight -> K-stacked banded slab.

    Output shape (9*(W+2)*Cin, (W+2)*Cout): the 9 (kd, kh) tap-pair blocks are
    stacked along the contraction dim (matching the in-kernel window concat);
    the kw / ci structure is baked into each (W_pad*Cin, W_pad*Cout) band and
    the output columns for the w-halo positions are identically zero.
    """
    w = np.asarray(w_torch_layout, np.float32)
    wt = np.transpose(w, (2, 3, 4, 1, 0))                # (kd, kh, kw, Cin, Cout)
    Cin, Cout = wt.shape[3], wt.shape[4]
    W_pad = W + 2
    M = np.zeros((9, W_pad * Cin, W_pad * Cout), np.float32)
    for kd in range(3):
        for kh in range(3):
            for kw in range(3):
                blk = wt[kd, kh, kw]                     # (Cin, Cout)
                for w_o in range(W):
                    wi = w_o + kw                        # input padded-w coord
                    wo = w_o + 1                         # output padded-w coord
                    M[kd * 3 + kh,
                      wi * Cin:(wi + 1) * Cin,
                      wo * Cout:(wo + 1) * Cout] = blk
    return M.reshape(9 * W_pad * Cin, W_pad * Cout)


def _bias_row(b, W):
    b = np.asarray(b, np.float32)
    Cout = b.shape[0]
    W_pad = W + 2
    row = np.zeros((1, W_pad * Cout), np.float32)        # zeros at w-halo columns
    row[0, Cout:(W + 1) * Cout] = np.tile(b, W)
    return row


def _pack_base_model(raw, W):
    w_in, b_in = raw["conv_in"]
    wblk, bblk = [], []
    for blk in raw["blocks"]:
        g, be = np.asarray(blk["gamma"]), np.asarray(blk["beta"])
        mu, var = np.asarray(blk["mean"]), np.asarray(blk["var"])
        s = g / np.sqrt(var + 1e-5)                       # fold eval-mode BatchNorm3d
        w_f = np.asarray(blk["w"]) * s[:, None, None, None, None]
        b_f = (np.asarray(blk["b"]) - mu) * s + be
        wblk.append(_toeplitz_slab(w_f, W))
        bblk.append(_bias_row(b_f, W))
    w_out, b_out = raw["conv_out"]
    return dict(win=_toeplitz_slab(w_in, W), bin=_bias_row(b_in, W),
                wblk=np.stack(wblk), bblk=np.stack(bblk),
                wout=_toeplitz_slab(w_out, W), bout=_bias_row(b_out, W))


def pack_params(params, W):
    per = [_pack_base_model(params[k], W) for k in ("model1", "model2", "model3")]
    return {k: jnp.asarray(np.stack([p[k] for p in per]))
            for k in ("win", "bin", "wblk", "bblk", "wout", "bout")}


# ------------------------ pure-JAX reference (checking) -----------------------

def _conv3d_ref(x, w, b):
    rhs = jnp.transpose(w, (2, 3, 4, 1, 0))
    y = jax.lax.conv_general_dilated(
        x, rhs, window_strides=(1, 1, 1), padding="SAME",
        dimension_numbers=("NDHWC", "DHWIO", "NDHWC"),
        precision=jax.lax.Precision.HIGHEST)
    return y + b


def _base_model_ref(raw, x):
    w, b = raw["conv_in"]
    h = jnp.maximum(_conv3d_ref(x, w, b), 0.0)
    for blk in raw["blocks"]:
        c = _conv3d_ref(h, blk["w"], blk["b"])
        c = (c - blk["mean"]) / jnp.sqrt(blk["var"] + 1e-5) * blk["gamma"] + blk["beta"]
        h = jnp.maximum(c, 0.0) + h
    w, b = raw["conv_out"]
    return _conv3d_ref(h, w, b)


def _forward_ref(params, x_ncthw, future_steps, pred_chan):
    x = jnp.transpose(x_ncthw, (0, 2, 3, 4, 1))
    B, T, H, W, C = x.shape
    x_id = jnp.broadcast_to(x[:, -1, :, :, 1][:, None], (B, future_steps, H, W))
    y = _base_model_ref(params["model1"], x)
    z = _base_model_ref(params["model2"], y)
    w_ = _base_model_ref(params["model3"], z)
    cat = jnp.concatenate([y, z, w_], axis=1)
    return cat[:, :future_steps, :, :, pred_chan] + x_id


# ----------------------------------- main ------------------------------------

if __name__ == "__main__":
    # Small shapes consistent with the module (need 3*T >= future_steps).
    B, in_chans, T, H, W = 2, 4, 4, 8, 8
    n_hidden, n_blocks, pred_chan = 8, 2, 1
    future_steps = 6

    key = jax.random.PRNGKey(0)
    k_x, k1, k2, k3 = jax.random.split(key, 4)
    x = jax.random.normal(k_x, (B, in_chans, T, H, W), jnp.float32)

    params = {
        "model1": init_base_model(k1, in_chans, in_chans, n_hidden, n_blocks),
        "model2": init_base_model(k2, in_chans, in_chans, n_hidden, n_blocks),
        "model3": init_base_model(k3, in_chans, in_chans, n_hidden, n_blocks),
    }
    packed = pack_params(params, W)

    fwd = jax.jit(functools.partial(conv3d_model_forward, packed,
                                    n_hidden=n_hidden, n_blocks=n_blocks,
                                    future_steps=future_steps,
                                    pred_chan=pred_chan))
    out = jax.block_until_ready(fwd(x))

    assert out.shape == (B, future_steps, H, W), out.shape
    assert bool(jnp.all(jnp.isfinite(out)))

    ref = jax.block_until_ready(_forward_ref(params, x, future_steps, pred_chan))
    err = float(jnp.max(jnp.abs(out - ref)))
    assert err < 1e-3, f"max |kernel - reference| = {err}"

    print("KERNEL_OK")
</pallas_src>

<mosaic_0001>
module attributes {stable_mosaic.version = 11 : i64} {
  func.func @kernel(%arg0: i32, %arg1: memref<1x60x40xf32, #tpu.memory_space<vmem>>, %arg2: memref<3x360x80xf32, #tpu.memory_space<vmem>>, %arg3: memref<3x1x80xf32, #tpu.memory_space<vmem>>, %arg4: memref<3x2x720x80xf32, #tpu.memory_space<vmem>>, %arg5: memref<3x2x1x80xf32, #tpu.memory_space<vmem>>, %arg6: memref<3x720x40xf32, #tpu.memory_space<vmem>>, %arg7: memref<3x1x40xf32, #tpu.memory_space<vmem>>, %arg8: memref<1x38x128xf32, #tpu.memory_space<vmem>>, %arg9: memref<60x80xf32, #tpu.memory_space<vmem>>) attributes {dimension_semantics = [#tpu.dimension_semantics<parallel>], iteration_bounds = array<i64: 2>, scalar_prefetch = 0 : i64, scratch_operands = 1 : i64, tpu.core_type = #tpu.core_type<tc>, window_params = [{transform_indices = @transform_0, window_bounds = array<i64: 1, 60, 40>}, {pipeline_mode = #tpu.pipeline_mode<synchronous>, transform_indices = @transform_1, window_bounds = array<i64: 3, 360, 80>}, {pipeline_mode = #tpu.pipeline_mode<synchronous>, transform_indices = @transform_2, window_bounds = array<i64: 3, 1, 80>}, {pipeline_mode = #tpu.pipeline_mode<synchronous>, transform_indices = @transform_3, window_bounds = array<i64: 3, 2, 720, 80>}, {pipeline_mode = #tpu.pipeline_mode<synchronous>, transform_indices = @transform_4, window_bounds = array<i64: 3, 2, 1, 80>}, {pipeline_mode = #tpu.pipeline_mode<synchronous>, transform_indices = @transform_5, window_bounds = array<i64: 3, 720, 40>}, {pipeline_mode = #tpu.pipeline_mode<synchronous>, transform_indices = @transform_6, window_bounds = array<i64: 3, 1, 40>}, {transform_indices = @transform_7, window_bounds = array<i64: 1, 38, 128>}]} {
    %0 = tpu.iota {dimensions = array<i32: 0>} : vector<38x1xi32>
    %c10_i32 = arith.constant 10 : i32
    %c0_i32 = arith.constant 0 : i32
    %1 = arith.cmpi eq, %c10_i32, %c0_i32 : i32
    %c1_i32 = arith.constant 1 : i32
    %2 = arith.select %1, %c1_i32, %c10_i32 : i32
    %3 = vector.broadcast %2 : i32 to vector<38x1xi32>
    %4 = arith.remsi %0, %3 : vector<38x1xi32>
    %c0_i32_0 = arith.constant 0 : i32
    %5 = vector.broadcast %c0_i32_0 : i32 to vector<38x1xi32>
    %6 = arith.cmpi ne, %4, %5 : vector<38x1xi32>
    %c0_i32_1 = arith.constant 0 : i32
    %7 = vector.broadcast %c0_i32_1 : i32 to vector<38x1xi32>
    %8 = arith.cmpi slt, %4, %7 : vector<38x1xi32>
    %c0_i32_2 = arith.constant 0 : i32
    %9 = arith.cmpi slt, %2, %c0_i32_2 : i32
    %10 = vector.broadcast %9 : i1 to vector<38x1xi1>
    %11 = vector.broadcast %10 : vector<38x1xi1> to vector<38x1xi1>
    %12 = arith.xori %8, %11 : vector<38x1xi1>
    %13 = arith.andi %12, %6 : vector<38x1xi1>
    %14 = vector.broadcast %2 : i32 to vector<38x1xi32>
    %15 = arith.addi %4, %14 : vector<38x1xi32>
    %16 = arith.select %13, %15, %4 : vector<38x1xi1>, vector<38x1xi32>
    %c8_i32 = arith.constant 8 : i32
    %17 = vector.broadcast %c8_i32 : i32 to vector<38x1xi32>
    %18 = arith.cmpi slt, %16, %17 : vector<38x1xi32>
    %19 = arith.extui %18 : vector<38x1xi1> to vector<38x1xi32>
    %20 = arith.sitofp %19 : vector<38x1xi32> to vector<38x1xf32>
    %cst = arith.constant 0.000000e+00 : f32
    %21 = vector.broadcast %cst : f32 to vector<60x80xf32>
    %c0 = arith.constant 0 : index
    %c0_3 = arith.constant 0 : index
    %22 = vector.load %arg9[%c0, %c0_3] : memref<60x80xf32, #tpu.memory_space<vmem>>, vector<60x80xf32>
    tpu.vector_store %arg9[%c0, %c0_3], %21 {strides = array<i32>} : memref<60x80xf32, #tpu.memory_space<vmem>>, vector<60x80xf32>,
    %c0_4 = arith.constant 0 : index
    %c0_5 = arith.constant 0 : index
    %c0_6 = arith.constant 0 : index
    %23 = vector.load %arg2[%c0_4, %c0_5, %c0_6] : memref<3x360x80xf32, #tpu.memory_space<vmem>>, vector<1x360x80xf32>
    %24 = vector.shape_cast %23 : vector<1x360x80xf32> to vector<360x80xf32>
    %c0_7 = arith.constant 0 : index
    %c0_8 = arith.constant 0 : index
    %c0_9 = arith.constant 0 : index
    %25 = vector.load %arg3[%c0_7, %c0_8, %c0_9] : memref<3x1x80xf32, #tpu.memory_space<vmem>>, vector<1x1x80xf32>
    %26 = vector.shape_cast %25 : vector<1x1x80xf32> to vector<1x80xf32>
    %c0_10 = arith.constant 0 : index
    %c0_11 = arith.constant 0 : index
    %c0_12 = arith.constant 0 : index
    %27 = vector.load %arg1[%c0_10, %c0_11, %c0_12] : memref<1x60x40xf32, #tpu.memory_space<vmem>>, vector<1x38x40xf32>
    %28 = vector.shape_cast %27 : vector<1x38x40xf32> to vector<38x40xf32>
    %c0_13 = arith.constant 0 : index
    %c1 = arith.constant 1 : index
    %c0_14 = arith.constant 0 : index
    %29 = vector.load %arg1[%c0_13, %c1, %c0_14] : memref<1x60x40xf32, #tpu.memory_space<vmem>>, vector<1x38x40xf32>
    %30 = vector.shape_cast %29 : vector<1x38x40xf32> to vector<38x40xf32>
    %c0_15 = arith.constant 0 : index
    %c2 = arith.constant 2 : index
    %c0_16 = arith.constant 0 : index
    %31 = vector.load %arg1[%c0_15, %c2, %c0_16] : memref<1x60x40xf32, #tpu.memory_space<vmem>>, vector<1x38x40xf32>
    %32 = vector.shape_cast %31 : vector<1x38x40xf32> to vector<38x40xf32>
    %c0_17 = arith.constant 0 : index
    %c10 = arith.constant 10 : index
    %c0_18 = arith.constant 0 : index
    %33 = vector.load %arg1[%c0_17, %c10, %c0_18] : memref<1x60x40xf32, #tpu.memory_space<vmem>>, vector<1x38x40xf32>
    %34 = vector.shape_cast %33 : vector<1x38x40xf32> to vector<38x40xf32>
    %c0_19 = arith.constant 0 : index
    %c11 = arith.constant 11 : index
    %c0_20 = arith.constant 0 : index
    %35 = vector.load %arg1[%c0_19, %c11, %c0_20] : memref<1x60x40xf32, #tpu.memory_space<vmem>>, vector<1x38x40xf32>
    %36 = vector.shape_cast %35 : vector<1x38x40xf32> to vector<38x40xf32>
    %c0_21 = arith.constant 0 : index
    %c12 = arith.constant 12 : index
    %c0_22 = arith.constant 0 : index
    %37 = vector.load %arg1[%c0_21, %c12, %c0_22] : memref<1x60x40xf32, #tpu.memory_space<vmem>>, vector<1x38x40xf32>
    %38 = vector.shape_cast %37 : vector<1x38x40xf32> to vector<38x40xf32>
    %c0_23 = arith.constant 0 : index
    %c20 = arith.constant 20 : index
    %c0_24 = arith.constant 0 : index
    %39 = vector.load %arg1[%c0_23, %c20, %c0_24] : memref<1x60x40xf32, #tpu.memory_space<vmem>>, vector<1x38x40xf32>
    %40 = vector.shape_cast %39 : vector<1x38x40xf32> to vector<38x40xf32>
    %c0_25 = arith.constant 0 : index
    %c21 = arith.constant 21 : index
    %c0_26 = arith.constant 0 : index
    %41 = vector.load %arg1[%c0_25, %c21, %c0_26] : memref<1x60x40xf32, #tpu.memory_space<vmem>>, vector<1x38x40xf32>
    %42 = vector.shape_cast %41 : vector<1x38x40xf32> to vector<38x40xf32>
    %c0_27 = arith.constant 0 : index
    %c22 = arith.constant 22 : index
    %c0_28 = arith.constant 0 : index
    %43 = vector.load %arg1[%c0_27, %c22, %c0_28] : memref<1x60x40xf32, #tpu.memory_space<vmem>>, vector<1x38x40xf32>
    %44 = vector.shape_cast %43 : vector<1x38x40xf32> to vector<38x40xf32>
    %45 = tpu.concatenate %28, %30, %32, %34, %36, %38, %40, %42, %44 in 1 : vector<38x40xf32>, vector<38x40xf32>, vector<38x40xf32>, vector<38x40xf32>, vector<38x40xf32>, vector<38x40xf32>, vector<38x40xf32>, vector<38x40xf32>, vector<38x40xf32> -> vector<38x360xf32>
    %cst_29 = arith.constant dense<0.000000e+00> : vector<38x80xf32>
    %46 = tpu.matmul %45, %24, %cst_29 {dimension_numbers = #tpu.dot_dimension_numbers<[1], [0], [0], [1], [0, 0, 1, 1], [], []>} : vector<38x360xf32>, vector<360x80xf32>, vector<38x80xf32> -> vector<38x80xf32>
    %47 = vector.broadcast %26 : vector<1x80xf32> to vector<38x80xf32>
    %48 = arith.addf %46, %47 : vector<38x80xf32>
    %cst_30 = arith.constant 0.000000e+00 : f32
    %49 = vector.broadcast %cst_30 : f32 to vector<38x80xf32>
    %50 = arith.maximumf %48, %49 : vector<38x80xf32>
    %51 = vector.broadcast %20 : vector<38x1xf32> to vector<38x80xf32>
    %52 = arith.mulf %50, %51 : vector<38x80xf32>
    %c11_31 = arith.constant 11 : index
    %c0_32 = arith.constant 0 : index
    %53 = vector.load %arg9[%c11_31, %c0_32] : memref<60x80xf32, #tpu.memory_space<vmem>>, vector<38x80xf32>
    tpu.vector_store %arg9[%c11_31, %c0_32], %52 {strides = array<i32>} : memref<60x80xf32, #tpu.memory_space<vmem>>, vector<38x80xf32>,
    %c0_33 = arith.constant 0 : index
    %c0_34 = arith.constant 0 : index
    %c0_35 = arith.constant 0 : index
    %c0_36 = arith.constant 0 : index
    %54 = vector.load %arg4[%c0_33, %c0_34, %c0_35, %c0_36] : memref<3x2x720x80xf32, #tpu.memory_space<vmem>>, vector<1x1x720x80xf32>
    %55 = vector.shape_cast %54 : vector<1x1x720x80xf32> to vector<720x80xf32>
    %c0_37 = arith.constant 0 : index
    %c0_38 = arith.constant 0 : index
    %c0_39 = arith.constant 0 : index
    %c0_40 = arith.constant 0 : index
    %56 = vector.load %arg5[%c0_37, %c0_38, %c0_39, %c0_40] : memref<3x2x1x80xf32, #tpu.memory_space<vmem>>, vector<1x1x1x80xf32>
    %57 = vector.shape_cast %56 : vector<1x1x1x80xf32> to vector<1x80xf32>
    %c0_41 = arith.constant 0 : index
    %c0_42 = arith.constant 0 : index
    %58 = vector.load %arg9[%c0_41, %c0_42] : memref<60x80xf32, #tpu.memory_space<vmem>>, vector<38x80xf32>
    %c1_43 = arith.constant 1 : index
    %c0_44 = arith.constant 0 : index
    %59 = vector.load %arg9[%c1_43, %c0_44] : memref<60x80xf32, #tpu.memory_space<vmem>>, vector<38x80xf32>
    %c2_45 = arith.constant 2 : index
    %c0_46 = arith.constant 0 : index
    %60 = vector.load %arg9[%c2_45, %c0_46] : memref<60x80xf32, #tpu.memory_space<vmem>>, vector<38x80xf32>
    %c10_47 = arith.constant 10 : index
    %c0_48 = arith.constant 0 : index
    %61 = vector.load %arg9[%c10_47, %c0_48] : memref<60x80xf32, #tpu.memory_space<vmem>>, vector<38x80xf32>
    %c11_49 = arith.constant 11 : index
    %c0_50 = arith.constant 0 : index
    %62 = vector.load %arg9[%c11_49, %c0_50] : memref<60x80xf32, #tpu.memory_space<vmem>>, vector<38x80xf32>
    %c12_51 = arith.constant 12 : index
    %c0_52 = arith.constant 0 : index
    %63 = vector.load %arg9[%c12_51, %c0_52] : memref<60x80xf32, #tpu.memory_space<vmem>>, vector<38x80xf32>
    %c20_53 = arith.constant 20 : index
    %c0_54 = arith.constant 0 : index
    %64 = vector.load %arg9[%c20_53, %c0_54] : memref<60x80xf32, #tpu.memory_space<vmem>>, vector<38x80xf32>
    %c21_55 = arith.constant 21 : index
    %c0_56 = arith.constant 0 : index
    %65 = vector.load %arg9[%c21_55, %c0_56] : memref<60x80xf32, #tpu.memory_space<vmem>>, vector<38x80xf32>
    %c22_57 = arith.constant 22 : index
    %c0_58 = arith.constant 0 : index
    %66 = vector.load %arg9[%c22_57, %c0_58] : memref<60x80xf32, #tpu.memory_space<vmem>>, vector<38x80xf32>
    %67 = tpu.concatenate %58, %59, %60, %61, %62, %63, %64, %65, %66 in 1 : vector<38x80xf32>, vector<38x80xf32>, vector<38x80xf32>, vector<38x80xf32>, vector<38x80xf32>, vector<38x80xf32>, vector<38x80xf32>, vector<38x80xf32>, vector<38x80xf32> -> vector<38x720xf32>
    %cst_59 = arith.constant dense<0.000000e+00> : vector<38x80xf32>
    %68 = tpu.matmul %67, %55, %cst_59 {dimension_numbers = #tpu.dot_dimension_numbers<[1], [0], [0], [1], [0, 0, 1, 1], [], []>} : vector<38x720xf32>, vector<720x80xf32>, vector<38x80xf32> -> vector<38x80xf32>
    %69 = vector.broadcast %57 : vector<1x80xf32> to vector<38x80xf32>
    %70 = arith.addf %68, %69 : vector<38x80xf32>
    %cst_60 = arith.constant 0.000000e+00 : f32
    %71 = vector.broadcast %cst_60 : f32 to vector<38x80xf32>
    %72 = arith.maximumf %70, %71 : vector<38x80xf32>
    %73 = vector.broadcast %20 : vector<38x1xf32> to vector<38x80xf32>
    %74 = arith.mulf %72, %73 : vector<38x80xf32>
    %c11_61 = arith.constant 11 : index
    %c0_62 = arith.constant 0 : index
    %75 = vector.load %arg9[%c11_61, %c0_62] : memref<60x80xf32, #tpu.memory_space<vmem>>, vector<38x80xf32>
    %76 = arith.addf %74, %75 : vector<38x80xf32>
    %c11_63 = arith.constant 11 : index
    %c0_64 = arith.constant 0 : index
    %77 = vector.load %arg9[%c11_63, %c0_64] : memref<60x80xf32, #tpu.memory_space<vmem>>, vector<38x80xf32>
    tpu.vector_store %arg9[%c11_63, %c0_64], %76 {strides = array<i32>} : memref<60x80xf32, #tpu.memory_space<vmem>>, vector<38x80xf32>,
    %c0_65 = arith.constant 0 : index
    %c1_66 = arith.constant 1 : index
    %c0_67 = arith.constant 0 : index
    %c0_68 = arith.constant 0 : index
    %78 = vector.load %arg4[%c0_65, %c1_66, %c0_67, %c0_68] : memref<3x2x720x80xf32, #tpu.memory_space<vmem>>, vector<1x1x720x80xf32>
    %79 = vector.shape_cast %78 : vector<1x1x720x80xf32> to vector<720x80xf32>
    %c0_69 = arith.constant 0 : index
    %c1_70 = arith.constant 1 : index
    %c0_71 = arith.constant 0 : index
    %c0_72 = arith.constant 0 : index
    %80 = vector.load %arg5[%c0_69, %c1_70, %c0_71, %c0_72] : memref<3x2x1x80xf32, #tpu.memory_space<vmem>>, vector<1x1x1x80xf32>
    %81 = vector.shape_cast %80 : vector<1x1x1x80xf32> to vector<1x80xf32>
    %c0_73 = arith.constant 0 : index
    %c0_74 = arith.constant 0 : index
    %82 = vector.load %arg9[%c0_73, %c0_74] : memref<60x80xf32, #tpu.memory_space<vmem>>, vector<38x80xf32>
    %c1_75 = arith.constant 1 : index
    %c0_76 = arith.constant 0 : index
    %83 = vector.load %arg9[%c1_75, %c0_76] : memref<60x80xf32, #tpu.memory_space<vmem>>, vector<38x80xf32>
    %c2_77 = arith.constant 2 : index
    %c0_78 = arith.constant 0 : index
    %84 = vector.load %arg9[%c2_77, %c0_78] : memref<60x80xf32, #tpu.memory_space<vmem>>, vector<38x80xf32>
    %c10_79 = arith.constant 10 : index
    %c0_80 = arith.constant 0 : index
    %85 = vector.load %arg9[%c10_79, %c0_80] : memref<60x80xf32, #tpu.memory_space<vmem>>, vector<38x80xf32>
    %c11_81 = arith.constant 11 : index
    %c0_82 = arith.constant 0 : index
    %86 = vector.load %arg9[%c11_81, %c0_82] : memref<60x80xf32, #tpu.memory_space<vmem>>, vector<38x80xf32>
    %c12_83 = arith.constant 12 : index
    %c0_84 = arith.constant 0 : index
    %87 = vector.load %arg9[%c12_83, %c0_84] : memref<60x80xf32, #tpu.memory_space<vmem>>, vector<38x80xf32>
    %c20_85 = arith.constant 20 : index
    %c0_86 = arith.constant 0 : index
    %88 = vector.load %arg9[%c20_85, %c0_86] : memref<60x80xf32, #tpu.memory_space<vmem>>, vector<38x80xf32>
    %c21_87 = arith.constant 21 : index
    %c0_88 = arith.constant 0 : index
    %89 = vector.load %arg9[%c21_87, %c0_88] : memref<60x80xf32, #tpu.memory_space<vmem>>, vector<38x80xf32>
    %c22_89 = arith.constant 22 : index
    %c0_90 = arith.constant 0 : index
    %90 = vector.load %arg9[%c22_89, %c0_90] : memref<60x80xf32, #tpu.memory_space<vmem>>, vector<38x80xf32>
    %91 = tpu.concatenate %82, %83, %84, %85, %86, %87, %88, %89, %90 in 1 : vector<38x80xf32>, vector<38x80xf32>, vector<38x80xf32>, vector<38x80xf32>, vector<38x80xf32>, vector<38x80xf32>, vector<38x80xf32>, vector<38x80xf32>, vector<38x80xf32> -> vector<38x720xf32>
    %cst_91 = arith.constant dense<0.000000e+00> : vector<38x80xf32>
    %92 = tpu.matmul %91, %79, %cst_91 {dimension_numbers = #tpu.dot_dimension_numbers<[1], [0], [0], [1], [0, 0, 1, 1], [], []>} : vector<38x720xf32>, vector<720x80xf32>, vector<38x80xf32> -> vector<38x80xf32>
    %93 = vector.broadcast %81 : vector<1x80xf32> to vector<38x80xf32>
    %94 = arith.addf %92, %93 : vector<38x80xf32>
    %cst_92 = arith.constant 0.000000e+00 : f32
    %95 = vector.broadcast %cst_92 : f32 to vector<38x80xf32>
    %96 = arith.maximumf %94, %95 : vector<38x80xf32>
    %97 = vector.broadcast %20 : vector<38x1xf32> to vector<38x80xf32>
    %98 = arith.mulf %96, %97 : vector<38x80xf32>
    %c11_93 = arith.constant 11 : index
    %c0_94 = arith.constant 0 : index
    %99 = vector.load %arg9[%c11_93, %c0_94] : memref<60x80xf32, #tpu.memory_space<vmem>>, vector<38x80xf32>
    %100 = arith.addf %98, %99 : vector<38x80xf32>
    %c11_95 = arith.constant 11 : index
    %c0_96 = arith.constant 0 : index
    %101 = vector.load %arg9[%c11_95, %c0_96] : memref<60x80xf32, #tpu.memory_space<vmem>>, vector<38x80xf32>
    tpu.vector_store %arg9[%c11_95, %c0_96], %100 {strides = array<i32>} : memref<60x80xf32, #tpu.memory_space<vmem>>, vector<38x80xf32>,
    %c0_97 = arith.constant 0 : index
    %c0_98 = arith.constant 0 : index
    %c0_99 = arith.constant 0 : index
    %102 = vector.load %arg6[%c0_97, %c0_98, %c0_99] : memref<3x720x40xf32, #tpu.memory_space<vmem>>, vector<1x720x40xf32>
    %103 = vector.shape_cast %102 : vector<1x720x40xf32> to vector<720x40xf32>
    %c0_100 = arith.constant 0 : index
    %c0_101 = arith.constant 0 : index
    %c0_102 = arith.constant 0 : index
    %104 = vector.load %arg7[%c0_100, %c0_101, %c0_102] : memref<3x1x40xf32, #tpu.memory_space<vmem>>, vector<1x1x40xf32>
    %105 = vector.shape_cast %104 : vector<1x1x40xf32> to vector<1x40xf32>
    %c0_103 = arith.constant 0 : index
    %c0_104 = arith.constant 0 : index
    %106 = vector.load %arg9[%c0_103, %c0_104] : memref<60x80xf32, #tpu.memory_space<vmem>>, vector<38x80xf32>
    %c1_105 = arith.constant 1 : index
    %c0_106 = arith.constant 0 : index
    %107 = vector.load %arg9[%c1_105, %c0_106] : memref<60x80xf32, #tpu.memory_space<vmem>>, vector<38x80xf32>
    %c2_107 = arith.constant 2 : index
    %c0_108 = arith.constant 0 : index
    %108 = vector.load %arg9[%c2_107, %c0_108] : memref<60x80xf32, #tpu.memory_space<vmem>>, vector<38x80xf32>
    %c10_109 = arith.constant 10 : index
    %c0_110 = arith.constant 0 : index
    %109 = vector.load %arg9[%c10_109, %c0_110] : memref<60x80xf32, #tpu.memory_space<vmem>>, vector<38x80xf32>
    %c11_111 = arith.constant 11 : index
    %c0_112 = arith.constant 0 : index
    %110 = vector.load %arg9[%c11_111, %c0_112] : memref<60x80xf32, #tpu.memory_space<vmem>>, vector<38x80xf32>
    %c12_113 = arith.constant 12 : index
    %c0_114 = arith.constant 0 : index
    %111 = vector.load %arg9[%c12_113, %c0_114] : memref<60x80xf32, #tpu.memory_space<vmem>>, vector<38x80xf32>
    %c20_115 = arith.constant 20 : index
    %c0_116 = arith.constant 0 : index
    %112 = vector.load %arg9[%c20_115, %c0_116] : memref<60x80xf32, #tpu.memory_space<vmem>>, vector<38x80xf32>
    %c21_117 = arith.constant 21 : index
    %c0_118 = arith.constant 0 : index
    %113 = vector.load %arg9[%c21_117, %c0_118] : memref<60x80xf32, #tpu.memory_space<vmem>>, vector<38x80xf32>
    %c22_119 = arith.constant 22 : index
    %c0_120 = arith.constant 0 : index
    %114 = vector.load %arg9[%c22_119, %c0_120] : memref<60x80xf32, #tpu.memory_space<vmem>>, vector<38x80xf32>
    %115 = tpu.concatenate %106, %107, %108, %109, %110, %111, %112, %113, %114 in 1 : vector<38x80xf32>, vector<38x80xf32>, vector<38x80xf32>, vector<38x80xf32>, vector<38x80xf32>, vector<38x80xf32>, vector<38x80xf32>, vector<38x80xf32>, vector<38x80xf32> -> vector<38x720xf32>
    %cst_121 = arith.constant dense<0.000000e+00> : vector<38x40xf32>
    %116 = tpu.matmul %115, %103, %cst_121 {dimension_numbers = #tpu.dot_dimension_numbers<[1], [0], [0], [1], [0, 0, 1, 1], [], []>} : vector<38x720xf32>, vector<720x40xf32>, vector<38x40xf32> -> vector<38x40xf32>
    %117 = vector.broadcast %105 : vector<1x40xf32> to vector<38x40xf32>
    %118 = arith.addf %116, %117 : vector<38x40xf32>
    %119 = vector.broadcast %20 : vector<38x1xf32> to vector<38x40xf32>
    %120 = arith.mulf %118, %119 : vector<38x40xf32>
    %c11_122 = arith.constant 11 : index
    %c0_123 = arith.constant 0 : index
    %121 = vector.load %arg9[%c11_122, %c0_123] : memref<60x80xf32, #tpu.memory_space<vmem>>, vector<38x40xf32>
    tpu.vector_store %arg9[%c11_122, %c0_123], %120 {strides = array<i32>} : memref<60x80xf32, #tpu.memory_space<vmem>>, vector<38x40xf32>,
    %c1_124 = arith.constant 1 : index
    %c0_125 = arith.constant 0 : index
    %c0_126 = arith.constant 0 : index
    %122 = vector.load %arg2[%c1_124, %c0_125, %c0_126] : memref<3x360x80xf32, #tpu.memory_space<vmem>>, vector<1x360x80xf32>
    %123 = vector.shape_cast %122 : vector<1x360x80xf32> to vector<360x80xf32>
    %c1_127 = arith.constant 1 : index
    %c0_128 = arith.constant 0 : index
    %c0_129 = arith.constant 0 : index
    %124 = vector.load %arg3[%c1_127, %c0_128, %c0_129] : memref<3x1x80xf32, #tpu.memory_space<vmem>>, vector<1x1x80xf32>
    %125 = vector.shape_cast %124 : vector<1x1x80xf32> to vector<1x80xf32>
    %c0_130 = arith.constant 0 : index
    %c0_131 = arith.constant 0 : index
    %126 = vector.load %arg9[%c0_130, %c0_131] : memref<60x80xf32, #tpu.memory_space<vmem>>, vector<38x40xf32>
    %c1_132 = arith.constant 1 : index
    %c0_133 = arith.constant 0 : index
    %127 = vector.load %arg9[%c1_132, %c0_133] : memref<60x80xf32, #tpu.memory_space<vmem>>, vector<38x40xf32>
    %c2_134 = arith.constant 2 : index
    %c0_135 = arith.constant 0 : index
    %128 = vector.load %arg9[%c2_134, %c0_135] : memref<60x80xf32, #tpu.memory_space<vmem>>, vector<38x40xf32>
    %c10_136 = arith.constant 10 : index
    %c0_137 = arith.constant 0 : index
    %129 = vector.load %arg9[%c10_136, %c0_137] : memref<60x80xf32, #tpu.memory_space<vmem>>, vector<38x40xf32>
    %c11_138 = arith.constant 11 : index
    %c0_139 = arith.constant 0 : index
    %130 = vector.load %arg9[%c11_138, %c0_139] : memref<60x80xf32, #tpu.memory_space<vmem>>, vector<38x40xf32>
    %c12_140 = arith.constant 12 : index
    %c0_141 = arith.constant 0 : index
    %131 = vector.load %arg9[%c12_140, %c0_141] : memref<60x80xf32, #tpu.memory_space<vmem>>, vector<38x40xf32>
    %c20_142 = arith.constant 20 : index
    %c0_143 = arith.constant 0 : index
    %132 = vector.load %arg9[%c20_142, %c0_143] : memref<60x80xf32, #tpu.memory_space<vmem>>, vector<38x40xf32>
    %c21_144 = arith.constant 21 : index
    %c0_145 = arith.constant 0 : index
    %133 = vector.load %arg9[%c21_144, %c0_145] : memref<60x80xf32, #tpu.memory_space<vmem>>, vector<38x40xf32>
    %c22_146 = arith.constant 22 : index
    %c0_147 = arith.constant 0 : index
    %134 = vector.load %arg9[%c22_146, %c0_147] : memref<60x80xf32, #tpu.memory_space<vmem>>, vector<38x40xf32>
    %135 = tpu.concatenate %126, %127, %128, %129, %130, %131, %132, %133, %134 in 1 : vector<38x40xf32>, vector<38x40xf32>, vector<38x40xf32>, vector<38x40xf32>, vector<38x40xf32>, vector<38x40xf32>, vector<38x40xf32>, vector<38x40xf32>, vector<38x40xf32> -> vector<38x360xf32>
    %cst_148 = arith.constant dense<0.000000e+00> : vector<38x80xf32>
    %136 = tpu.matmul %135, %123, %cst_148 {dimension_numbers = #tpu.dot_dimension_numbers<[1], [0], [0], [1], [0, 0, 1, 1], [], []>} : vector<38x360xf32>, vector<360x80xf32>, vector<38x80xf32> -> vector<38x80xf32>
    %137 = vector.broadcast %125 : vector<1x80xf32> to vector<38x80xf32>
    %138 = arith.addf %136, %137 : vector<38x80xf32>
    %cst_149 = arith.constant 0.000000e+00 : f32
    %139 = vector.broadcast %cst_149 : f32 to vector<38x80xf32>
    %140 = arith.maximumf %138, %139 : vector<38x80xf32>
    %141 = vector.broadcast %20 : vector<38x1xf32> to vector<38x80xf32>
    %142 = arith.mulf %140, %141 : vector<38x80xf32>
    %c11_150 = arith.constant 11 : index
    %c0_151 = arith.constant 0 : index
    %143 = vector.load %arg9[%c11_150, %c0_151] : memref<60x80xf32, #tpu.memory_space<vmem>>, vector<38x80xf32>
    tpu.vector_store %arg9[%c11_150, %c0_151], %142 {strides = array<i32>} : memref<60x80xf32, #tpu.memory_space<vmem>>, vector<38x80xf32>,
    %c1_152 = arith.constant 1 : index
    %c0_153 = arith.constant 0 : index
    %c0_154 = arith.constant 0 : index
    %c0_155 = arith.constant 0 : index
    %144 = vector.load %arg4[%c1_152, %c0_153, %c0_154, %c0_155] : memref<3x2x720x80xf32, #tpu.memory_space<vmem>>, vector<1x1x720x80xf32>
    %145 = vector.shape_cast %144 : vector<1x1x720x80xf32> to vector<720x80xf32>
    %c1_156 = arith.constant 1 : index
    %c0_157 = arith.constant 0 : index
    %c0_158 = arith.constant 0 : index
    %c0_159 = arith.constant 0 : index
    %146 = vector.load %arg5[%c1_156, %c0_157, %c0_158, %c0_159] : memref<3x2x1x80xf32, #tpu.memory_space<vmem>>, vector<1x1x1x80xf32>
    %147 = vector.shape_cast %146 : vector<1x1x1x80xf32> to vector<1x80xf32>
    %c0_160 = arith.constant 0 : index
    %c0_161 = arith.constant 0 : index
    %148 = vector.load %arg9[%c0_160, %c0_161] : memref<60x80xf32, #tpu.memory_space<vmem>>, vector<38x80xf32>
    %c1_162 = arith.constant 1 : index
    %c0_163 = arith.constant 0 : index
    %149 = vector.load %arg9[%c1_162, %c0_163] : memref<60x80xf32, #tpu.memory_space<vmem>>, vector<38x80xf32>
    %c2_164 = arith.constant 2 : index
    %c0_165 = arith.constant 0 : index
    %150 = vector.load %arg9[%c2_164, %c0_165] : memref<60x80xf32, #tpu.memory_space<vmem>>, vector<38x80xf32>
    %c10_166 = arith.constant 10 : index
    %c0_167 = arith.constant 0 : index
    %151 = vector.load %arg9[%c10_166, %c0_167] : memref<60x80xf32, #tpu.memory_space<vmem>>, vector<38x80xf32>
    %c11_168 = arith.constant 11 : index
    %c0_169 = arith.constant 0 : index
    %152 = vector.load %arg9[%c11_168, %c0_169] : memref<60x80xf32, #tpu.memory_space<vmem>>, vector<38x80xf32>
    %c12_170 = arith.constant 12 : index
    %c0_171 = arith.constant 0 : index
    %153 = vector.load %arg9[%c12_170, %c0_171] : memref<60x80xf32, #tpu.memory_space<vmem>>, vector<38x80xf32>
    %c20_172 = arith.constant 20 : index
    %c0_173 = arith.constant 0 : index
    %154 = vector.load %arg9[%c20_172, %c0_173] : memref<60x80xf32, #tpu.memory_space<vmem>>, vector<38x80xf32>
    %c21_174 = arith.constant 21 : index
    %c0_175 = arith.constant 0 : index
    %155 = vector.load %arg9[%c21_174, %c0_175] : memref<60x80xf32, #tpu.memory_space<vmem>>, vector<38x80xf32>
    %c22_176 = arith.constant 22 : index
    %c0_177 = arith.constant 0 : index
    %156 = vector.load %arg9[%c22_176, %c0_177] : memref<60x80xf32, #tpu.memory_space<vmem>>, vector<38x80xf32>
    %157 = tpu.concatenate %148, %149, %150, %151, %152, %153, %154, %155, %156 in 1 : vector<38x80xf32>, vector<38x80xf32>, vector<38x80xf32>, vector<38x80xf32>, vector<38x80xf32>, vector<38x80xf32>, vector<38x80xf32>, vector<38x80xf32>, vector<38x80xf32> -> vector<38x720xf32>
    %cst_178 = arith.constant dense<0.000000e+00> : vector<38x80xf32>
    %158 = tpu.matmul %157, %145, %cst_178 {dimension_numbers = #tpu.dot_dimension_numbers<[1], [0], [0], [1], [0, 0, 1, 1], [], []>} : vector<38x720xf32>, vector<720x80xf32>, vector<38x80xf32> -> vector<38x80xf32>
    %159 = vector.broadcast %147 : vector<1x80xf32> to vector<38x80xf32>
    %160 = arith.addf %158, %159 : vector<38x80xf32>
    %cst_179 = arith.constant 0.000000e+00 : f32
    %161 = vector.broadcast %cst_179 : f32 to vector<38x80xf32>
    %162 = arith.maximumf %160, %161 : vector<38x80xf32>
    %163 = vector.broadcast %20 : vector<38x1xf32> to vector<38x80xf32>
    %164 = arith.mulf %162, %163 : vector<38x80xf32>
    %c11_180 = arith.constant 11 : index
    %c0_181 = arith.constant 0 : index
    %165 = vector.load %arg9[%c11_180, %c0_181] : memref<60x80xf32, #tpu.memory_space<vmem>>, vector<38x80xf32>
    %166 = arith.addf %164, %165 : vector<38x80xf32>
    %c11_182 = arith.constant 11 : index
    %c0_183 = arith.constant 0 : index
    %167 = vector.load %arg9[%c11_182, %c0_183] : memref<60x80xf32, #tpu.memory_space<vmem>>, vector<38x80xf32>
    tpu.vector_store %arg9[%c11_182, %c0_183], %166 {strides = array<i32>} : memref<60x80xf32, #tpu.memory_space<vmem>>, vector<38x80xf32>,
    %c1_184 = arith.constant 1 : index
    %c1_185 = arith.constant 1 : index
    %c0_186 = arith.constant 0 : index
    %c0_187 = arith.constant 0 : index
    %168 = vector.load %arg4[%c1_184, %c1_185, %c0_186, %c0_187] : memref<3x2x720x80xf32, #tpu.memory_space<vmem>>, vector<1x1x720x80xf32>
    %169 = vector.shape_cast %168 : vector<1x1x720x80xf32> to vector<720x80xf32>
    %c1_188 = arith.constant 1 : index
    %c1_189 = arith.constant 1 : index
    %c0_190 = arith.constant 0 : index
    %c0_191 = arith.constant 0 : index
    %170 = vector.load %arg5[%c1_188, %c1_189, %c0_190, %c0_191] : memref<3x2x1x80xf32, #tpu.memory_space<vmem>>, vector<1x1x1x80xf32>
    %171 = vector.shape_cast %170 : vector<1x1x1x80xf32> to vector<1x80xf32>
    %c0_192 = arith.constant 0 : index
    %c0_193 = arith.constant 0 : index
    %172 = vector.load %arg9[%c0_192, %c0_193] : memref<60x80xf32, #tpu.memory_space<vmem>>, vector<38x80xf32>
    %c1_194 = arith.constant 1 : index
    %c0_195 = arith.constant 0 : index
    %173 = vector.load %arg9[%c1_194, %c0_195] : memref<60x80xf32, #tpu.memory_space<vmem>>, vector<38x80xf32>
    %c2_196 = arith.constant 2 : index
    %c0_197 = arith.constant 0 : index
    %174 = vector.load %arg9[%c2_196, %c0_197] : memref<60x80xf32, #tpu.memory_space<vmem>>, vector<38x80xf32>
    %c10_198 = arith.constant 10 : index
    %c0_199 = arith.constant 0 : index
    %175 = vector.load %arg9[%c10_198, %c0_199] : memref<60x80xf32, #tpu.memory_space<vmem>>, vector<38x80xf32>
    %c11_200 = arith.constant 11 : index
    %c0_201 = arith.constant 0 : index
    %176 = vector.load %arg9[%c11_200, %c0_201] : memref<60x80xf32, #tpu.memory_space<vmem>>, vector<38x80xf32>
    %c12_202 = arith.constant 12 : index
    %c0_203 = arith.constant 0 : index
    %177 = vector.load %arg9[%c12_202, %c0_203] : memref<60x80xf32, #tpu.memory_space<vmem>>, vector<38x80xf32>
    %c20_204 = arith.constant 20 : index
    %c0_205 = arith.constant 0 : index
    %178 = vector.load %arg9[%c20_204, %c0_205] : memref<60x80xf32, #tpu.memory_space<vmem>>, vector<38x80xf32>
    %c21_206 = arith.constant 21 : index
    %c0_207 = arith.constant 0 : index
    %179 = vector.load %arg9[%c21_206, %c0_207] : memref<60x80xf32, #tpu.memory_space<vmem>>, vector<38x80xf32>
    %c22_208 = arith.constant 22 : index
    %c0_209 = arith.constant 0 : index
    %180 = vector.load %arg9[%c22_208, %c0_209] : memref<60x80xf32, #tpu.memory_space<vmem>>, vector<38x80xf32>
    %181 = tpu.concatenate %172, %173, %174, %175, %176, %177, %178, %179, %180 in 1 : vector<38x80xf32>, vector<38x80xf32>, vector<38x80xf32>, vector<38x80xf32>, vector<38x80xf32>, vector<38x80xf32>, vector<38x80xf32>, vector<38x80xf32>, vector<38x80xf32> -> vector<38x720xf32>
    %cst_210 = arith.constant dense<0.000000e+00> : vector<38x80xf32>
    %182 = tpu.matmul %181, %169, %cst_210 {dimension_numbers = #tpu.dot_dimension_numbers<[1], [0], [0], [1], [0, 0, 1, 1], [], []>} : vector<38x720xf32>, vector<720x80xf32>, vector<38x80xf32> -> vector<38x80xf32>
    %183 = vector.broadcast %171 : vector<1x80xf32> to vector<38x80xf32>
    %184 = arith.addf %182, %183 : vector<38x80xf32>
    %cst_211 = arith.constant 0.000000e+00 : f32
    %185 = vector.broadcast %cst_211 : f32 to vector<38x80xf32>
    %186 = arith.maximumf %184, %185 : vector<38x80xf32>
    %187 = vector.broadcast %20 : vector<38x1xf32> to vector<38x80xf32>
    %188 = arith.mulf %186, %187 : vector<38x80xf32>
    %c11_212 = arith.constant 11 : index
    %c0_213 = arith.constant 0 : index
    %189 = vector.load %arg9[%c11_212, %c0_213] : memref<60x80xf32, #tpu.memory_space<vmem>>, vector<38x80xf32>
    %190 = arith.addf %188, %189 : vector<38x80xf32>
    %c11_214 = arith.constant 11 : index
    %c0_215 = arith.constant 0 : index
    %191 = vector.load %arg9[%c11_214, %c0_215] : memref<60x80xf32, #tpu.memory_space<vmem>>, vector<38x80xf32>
    tpu.vector_store %arg9[%c11_214, %c0_215], %190 {strides = array<i32>} : memref<60x80xf32, #tpu.memory_space<vmem>>, vector<38x80xf32>,
    %c1_216 = arith.constant 1 : index
    %c0_217 = arith.constant 0 : index
    %c0_218 = arith.constant 0 : index
    %192 = vector.load %arg6[%c1_216, %c0_217, %c0_218] : memref<3x720x40xf32, #tpu.memory_space<vmem>>, vector<1x720x40xf32>
    %193 = vector.shape_cast %192 : vector<1x720x40xf32> to vector<720x40xf32>
    %c1_219 = arith.constant 1 : index
    %c0_220 = arith.constant 0 : index
    %c0_221 = arith.constant 0 : index
    %194 = vector.load %arg7[%c1_219, %c0_220, %c0_221] : memref<3x1x40xf32, #tpu.memory_space<vmem>>, vector<1x1x40xf32>
    %195 = vector.shape_cast %194 : vector<1x1x40xf32> to vector<1x40xf32>
    %c0_222 = arith.constant 0 : index
    %c0_223 = arith.constant 0 : index
    %196 = vector.load %arg9[%c0_222, %c0_223] : memref<60x80xf32, #tpu.memory_space<vmem>>, vector<38x80xf32>
    %c1_224 = arith.constant 1 : index
    %c0_225 = arith.constant 0 : index
    %197 = vector.load %arg9[%c1_224, %c0_225] : memref<60x80xf32, #tpu.memory_space<vmem>>, vector<38x80xf32>
    %c2_226 = arith.constant 2 : index
    %c0_227 = arith.constant 0 : index
    %198 = vector.load %arg9[%c2_226, %c0_227] : memref<60x80xf32, #tpu.memory_space<vmem>>, vector<38x80xf32>
    %c10_228 = arith.constant 10 : index
    %c0_229 = arith.constant 0 : index
    %199 = vector.load %arg9[%c10_228, %c0_229] : memref<60x80xf32, #tpu.memory_space<vmem>>, vector<38x80xf32>
    %c11_230 = arith.constant 11 : index
    %c0_231 = arith.constant 0 : index
    %200 = vector.load %arg9[%c11_230, %c0_231] : memref<60x80xf32, #tpu.memory_space<vmem>>, vector<38x80xf32>
    %c12_232 = arith.constant 12 : index
    %c0_233 = arith.constant 0 : index
    %201 = vector.load %arg9[%c12_232, %c0_233] : memref<60x80xf32, #tpu.memory_space<vmem>>, vector<38x80xf32>
    %c20_234 = arith.constant 20 : index
    %c0_235 = arith.constant 0 : index
    %202 = vector.load %arg9[%c20_234, %c0_235] : memref<60x80xf32, #tpu.memory_space<vmem>>, vector<38x80xf32>
    %c21_236 = arith.constant 21 : index
    %c0_237 = arith.constant 0 : index
    %203 = vector.load %arg9[%c21_236, %c0_237] : memref<60x80xf32, #tpu.memory_space<vmem>>, vector<38x80xf32>
    %c22_238 = arith.constant 22 : index
    %c0_239 = arith.constant 0 : index
    %204 = vector.load %arg9[%c22_238, %c0_239] : memref<60x80xf32, #tpu.memory_space<vmem>>, vector<38x80xf32>
    %205 = tpu.concatenate %196, %197, %198, %199, %200, %201, %202, %203, %204 in 1 : vector<38x80xf32>, vector<38x80xf32>, vector<38x80xf32>, vector<38x80xf32>, vector<38x80xf32>, vector<38x80xf32>, vector<38x80xf32>, vector<38x80xf32>, vector<38x80xf32> -> vector<38x720xf32>
    %cst_240 = arith.constant dense<0.000000e+00> : vector<38x40xf32>
    %206 = tpu.matmul %205, %193, %cst_240 {dimension_numbers = #tpu.dot_dimension_numbers<[1], [0], [0], [1], [0, 0, 1, 1], [], []>} : vector<38x720xf32>, vector<720x40xf32>, vector<38x40xf32> -> vector<38x40xf32>
    %207 = vector.broadcast %195 : vector<1x40xf32> to vector<38x40xf32>
    %208 = arith.addf %206, %207 : vector<38x40xf32>
    %209 = vector.broadcast %20 : vector<38x1xf32> to vector<38x40xf32>
    %210 = arith.mulf %208, %209 : vector<38x40xf32>
    %c11_241 = arith.constant 11 : index
    %c0_242 = arith.constant 0 : index
    %211 = vector.load %arg9[%c11_241, %c0_242] : memref<60x80xf32, #tpu.memory_space<vmem>>, vector<38x40xf32>
    tpu.vector_store %arg9[%c11_241, %c0_242], %210 {strides = array<i32>} : memref<60x80xf32, #tpu.memory_space<vmem>>, vector<38x40xf32>,
    %c2_243 = arith.constant 2 : index
    %c0_244 = arith.constant 0 : index
    %c0_245 = arith.constant 0 : index
    %212 = vector.load %arg2[%c2_243, %c0_244, %c0_245] : memref<3x360x80xf32, #tpu.memory_space<vmem>>, vector<1x360x80xf32>
    %213 = vector.shape_cast %212 : vector<1x360x80xf32> to vector<360x80xf32>
    %c2_246 = arith.constant 2 : index
    %c0_247 = arith.constant 0 : index
    %c0_248 = arith.constant 0 : index
    %214 = vector.load %arg3[%c2_246, %c0_247, %c0_248] : memref<3x1x80xf32, #tpu.memory_space<vmem>>, vector<1x1x80xf32>
    %215 = vector.shape_cast %214 : vector<1x1x80xf32> to vector<1x80xf32>
    %c0_249 = arith.constant 0 : index
    %c0_250 = arith.constant 0 : index
    %216 = vector.load %arg9[%c0_249, %c0_250] : memref<60x80xf32, #tpu.memory_space<vmem>>, vector<38x40xf32>
    %c1_251 = arith.constant 1 : index
    %c0_252 = arith.constant 0 : index
    %217 = vector.load %arg9[%c1_251, %c0_252] : memref<60x80xf32, #tpu.memory_space<vmem>>, vector<38x40xf32>
    %c2_253 = arith.constant 2 : index
    %c0_254 = arith.constant 0 : index
    %218 = vector.load %arg9[%c2_253, %c0_254] : memref<60x80xf32, #tpu.memory_space<vmem>>, vector<38x40xf32>
    %c10_255 = arith.constant 10 : index
    %c0_256 = arith.constant 0 : index
    %219 = vector.load %arg9[%c10_255, %c0_256] : memref<60x80xf32, #tpu.memory_space<vmem>>, vector<38x40xf32>
    %c11_257 = arith.constant 11 : index
    %c0_258 = arith.constant 0 : index
    %220 = vector.load %arg9[%c11_257, %c0_258] : memref<60x80xf32, #tpu.memory_space<vmem>>, vector<38x40xf32>
    %c12_259 = arith.constant 12 : index
    %c0_260 = arith.constant 0 : index
    %221 = vector.load %arg9[%c12_259, %c0_260] : memref<60x80xf32, #tpu.memory_space<vmem>>, vector<38x40xf32>
    %c20_261 = arith.constant 20 : index
    %c0_262 = arith.constant 0 : index
    %222 = vector.load %arg9[%c20_261, %c0_262] : memref<60x80xf32, #tpu.memory_space<vmem>>, vector<38x40xf32>
    %c21_263 = arith.constant 21 : index
    %c0_264 = arith.constant 0 : index
    %223 = vector.load %arg9[%c21_263, %c0_264] : memref<60x80xf32, #tpu.memory_space<vmem>>, vector<38x40xf32>
    %c22_265 = arith.constant 22 : index
    %c0_266 = arith.constant 0 : index
    %224 = vector.load %arg9[%c22_265, %c0_266] : memref<60x80xf32, #tpu.memory_space<vmem>>, vector<38x40xf32>
    %225 = tpu.concatenate %216, %217, %218, %219, %220, %221, %222, %223, %224 in 1 : vector<38x40xf32>, vector<38x40xf32>, vector<38x40xf32>, vector<38x40xf32>, vector<38x40xf32>, vector<38x40xf32>, vector<38x40xf32>, vector<38x40xf32>, vector<38x40xf32> -> vector<38x360xf32>
    %cst_267 = arith.constant dense<0.000000e+00> : vector<38x80xf32>
    %226 = tpu.matmul %225, %213, %cst_267 {dimension_numbers = #tpu.dot_dimension_numbers<[1], [0], [0], [1], [0, 0, 1, 1], [], []>} : vector<38x360xf32>, vector<360x80xf32>, vector<38x80xf32> -> vector<38x80xf32>
    %227 = vector.broadcast %215 : vector<1x80xf32> to vector<38x80xf32>
    %228 = arith.addf %226, %227 : vector<38x80xf32>
    %cst_268 = arith.constant 0.000000e+00 : f32
    %229 = vector.broadcast %cst_268 : f32 to vector<38x80xf32>
    %230 = arith.maximumf %228, %229 : vector<38x80xf32>
    %231 = vector.broadcast %20 : vector<38x1xf32> to vector<38x80xf32>
    %232 = arith.mulf %230, %231 : vector<38x80xf32>
    %c11_269 = arith.constant 11 : index
    %c0_270 = arith.constant 0 : index
    %233 = vector.load %arg9[%c11_269, %c0_270] : memref<60x80xf32, #tpu.memory_space<vmem>>, vector<38x80xf32>
    tpu.vector_store %arg9[%c11_269, %c0_270], %232 {strides = array<i32>} : memref<60x80xf32, #tpu.memory_space<vmem>>, vector<38x80xf32>,
    %c2_271 = arith.constant 2 : index
    %c0_272 = arith.constant 0 : index
    %c0_273 = arith.constant 0 : index
    %c0_274 = arith.constant 0 : index
    %234 = vector.load %arg4[%c2_271, %c0_272, %c0_273, %c0_274] : memref<3x2x720x80xf32, #tpu.memory_space<vmem>>, vector<1x1x720x80xf32>
    %235 = vector.shape_cast %234 : vector<1x1x720x80xf32> to vector<720x80xf32>
    %c2_275 = arith.constant 2 : index
    %c0_276 = arith.constant 0 : index
    %c0_277 = arith.constant 0 : index
    %c0_278 = arith.constant 0 : index
    %236 = vector.load %arg5[%c2_275, %c0_276, %c0_277, %c0_278] : memref<3x2x1x80xf32, #tpu.memory_space<vmem>>, vector<1x1x1x80xf32>
    %237 = vector.shape_cast %236 : vector<1x1x1x80xf32> to vector<1x80xf32>
    %c0_279 = arith.constant 0 : index
    %c0_280 = arith.constant 0 : index
    %238 = vector.load %arg9[%c0_279, %c0_280] : memref<60x80xf32, #tpu.memory_space<vmem>>, vector<38x80xf32>
    %c1_281 = arith.constant 1 : index
    %c0_282 = arith.constant 0 : index
    %239 = vector.load %arg9[%c1_281, %c0_282] : memref<60x80xf32, #tpu.memory_space<vmem>>, vector<38x80xf32>
    %c2_283 = arith.constant 2 : index
    %c0_284 = arith.constant 0 : index
    %240 = vector.load %arg9[%c2_283, %c0_284] : memref<60x80xf32, #tpu.memory_space<vmem>>, vector<38x80xf32>
    %c10_285 = arith.constant 10 : index
    %c0_286 = arith.constant 0 : index
    %241 = vector.load %arg9[%c10_285, %c0_286] : memref<60x80xf32, #tpu.memory_space<vmem>>, vector<38x80xf32>
    %c11_287 = arith.constant 11 : index
    %c0_288 = arith.constant 0 : index
    %242 = vector.load %arg9[%c11_287, %c0_288] : memref<60x80xf32, #tpu.memory_space<vmem>>, vector<38x80xf32>
    %c12_289 = arith.constant 12 : index
    %c0_290 = arith.constant 0 : index
    %243 = vector.load %arg9[%c12_289, %c0_290] : memref<60x80xf32, #tpu.memory_space<vmem>>, vector<38x80xf32>
    %c20_291 = arith.constant 20 : index
    %c0_292 = arith.constant 0 : index
    %244 = vector.load %arg9[%c20_291, %c0_292] : memref<60x80xf32, #tpu.memory_space<vmem>>, vector<38x80xf32>
    %c21_293 = arith.constant 21 : index
    %c0_294 = arith.constant 0 : index
    %245 = vector.load %arg9[%c21_293, %c0_294] : memref<60x80xf32, #tpu.memory_space<vmem>>, vector<38x80xf32>
    %c22_295 = arith.constant 22 : index
    %c0_296 = arith.constant 0 : index
    %246 = vector.load %arg9[%c22_295, %c0_296] : memref<60x80xf32, #tpu.memory_space<vmem>>, vector<38x80xf32>
    %247 = tpu.concatenate %238, %239, %240, %241, %242, %243, %244, %245, %246 in 1 : vector<38x80xf32>, vector<38x80xf32>, vector<38x80xf32>, vector<38x80xf32>, vector<38x80xf32>, vector<38x80xf32>, vector<38x80xf32>, vector<38x80xf32>, vector<38x80xf32> -> vector<38x720xf32>
    %cst_297 = arith.constant dense<0.000000e+00> : vector<38x80xf32>
    %248 = tpu.matmul %247, %235, %cst_297 {dimension_numbers = #tpu.dot_dimension_numbers<[1], [0], [0], [1], [0, 0, 1, 1], [], []>} : vector<38x720xf32>, vector<720x80xf32>, vector<38x80xf32> -> vector<38x80xf32>
    %249 = vector.broadcast %237 : vector<1x80xf32> to vector<38x80xf32>
    %250 = arith.addf %248, %249 : vector<38x80xf32>
    %cst_298 = arith.constant 0.000000e+00 : f32
    %251 = vector.broadcast %cst_298 : f32 to vector<38x80xf32>
    %252 = arith.maximumf %250, %251 : vector<38x80xf32>
    %253 = vector.broadcast %20 : vector<38x1xf32> to vector<38x80xf32>
    %254 = arith.mulf %252, %253 : vector<38x80xf32>
    %c11_299 = arith.constant 11 : index
    %c0_300 = arith.constant 0 : index
    %255 = vector.load %arg9[%c11_299, %c0_300] : memref<60x80xf32, #tpu.memory_space<vmem>>, vector<38x80xf32>
    %256 = arith.addf %254, %255 : vector<38x80xf32>
    %c11_301 = arith.constant 11 : index
    %c0_302 = arith.constant 0 : index
    %257 = vector.load %arg9[%c11_301, %c0_302] : memref<60x80xf32, #tpu.memory_space<vmem>>, vector<38x80xf32>
    tpu.vector_store %arg9[%c11_301, %c0_302], %256 {strides = array<i32>} : memref<60x80xf32, #tpu.memory_space<vmem>>, vector<38x80xf32>,
    %c2_303 = arith.constant 2 : index
    %c1_304 = arith.constant 1 : index
    %c0_305 = arith.constant 0 : index
    %c0_306 = arith.constant 0 : index
    %258 = vector.load %arg4[%c2_303, %c1_304, %c0_305, %c0_306] : memref<3x2x720x80xf32, #tpu.memory_space<vmem>>, vector<1x1x720x80xf32>
    %259 = vector.shape_cast %258 : vector<1x1x720x80xf32> to vector<720x80xf32>
    %c2_307 = arith.constant 2 : index
    %c1_308 = arith.constant 1 : index
    %c0_309 = arith.constant 0 : index
    %c0_310 = arith.constant 0 : index
    %260 = vector.load %arg5[%c2_307, %c1_308, %c0_309, %c0_310] : memref<3x2x1x80xf32, #tpu.memory_space<vmem>>, vector<1x1x1x80xf32>
    %261 = vector.shape_cast %260 : vector<1x1x1x80xf32> to vector<1x80xf32>
    %c0_311 = arith.constant 0 : index
    %c0_312 = arith.constant 0 : index
    %262 = vector.load %arg9[%c0_311, %c0_312] : memref<60x80xf32, #tpu.memory_space<vmem>>, vector<38x80xf32>
    %c1_313 = arith.constant 1 : index
    %c0_314 = arith.constant 0 : index
    %263 = vector.load %arg9[%c1_313, %c0_314] : memref<60x80xf32, #tpu.memory_space<vmem>>, vector<38x80xf32>
    %c2_315 = arith.constant 2 : index
    %c0_316 = arith.constant 0 : index
    %264 = vector.load %arg9[%c2_315, %c0_316] : memref<60x80xf32, #tpu.memory_space<vmem>>, vector<38x80xf32>
    %c10_317 = arith.constant 10 : index
    %c0_318 = arith.constant 0 : index
    %265 = vector.load %arg9[%c10_317, %c0_318] : memref<60x80xf32, #tpu.memory_space<vmem>>, vector<38x80xf32>
    %c11_319 = arith.constant 11 : index
    %c0_320 = arith.constant 0 : index
    %266 = vector.load %arg9[%c11_319, %c0_320] : memref<60x80xf32, #tpu.memory_space<vmem>>, vector<38x80xf32>
    %c12_321 = arith.constant 12 : index
    %c0_322 = arith.constant 0 : index
    %267 = vector.load %arg9[%c12_321, %c0_322] : memref<60x80xf32, #tpu.memory_space<vmem>>, vector<38x80xf32>
    %c20_323 = arith.constant 20 : index
    %c0_324 = arith.constant 0 : index
    %268 = vector.load %arg9[%c20_323, %c0_324] : memref<60x80xf32, #tpu.memory_space<vmem>>, vector<38x80xf32>
    %c21_325 = arith.constant 21 : index
    %c0_326 = arith.constant 0 : index
    %269 = vector.load %arg9[%c21_325, %c0_326] : memref<60x80xf32, #tpu.memory_space<vmem>>, vector<38x80xf32>
    %c22_327 = arith.constant 22 : index
    %c0_328 = arith.constant 0 : index
    %270 = vector.load %arg9[%c22_327, %c0_328] : memref<60x80xf32, #tpu.memory_space<vmem>>, vector<38x80xf32>
    %271 = tpu.concatenate %262, %263, %264, %265, %266, %267, %268, %269, %270 in 1 : vector<38x80xf32>, vector<38x80xf32>, vector<38x80xf32>, vector<38x80xf32>, vector<38x80xf32>, vector<38x80xf32>, vector<38x80xf32>, vector<38x80xf32>, vector<38x80xf32> -> vector<38x720xf32>
    %cst_329 = arith.constant dense<0.000000e+00> : vector<38x80xf32>
    %272 = tpu.matmul %271, %259, %cst_329 {dimension_numbers = #tpu.dot_dimension_numbers<[1], [0], [0], [1], [0, 0, 1, 1], [], []>} : vector<38x720xf32>, vector<720x80xf32>, vector<38x80xf32> -> vector<38x80xf32>
    %273 = vector.broadcast %261 : vector<1x80xf32> to vector<38x80xf32>
    %274 = arith.addf %272, %273 : vector<38x80xf32>
    %cst_330 = arith.constant 0.000000e+00 : f32
    %275 = vector.broadcast %cst_330 : f32 to vector<38x80xf32>
    %276 = arith.maximumf %274, %275 : vector<38x80xf32>
    %277 = vector.broadcast %20 : vector<38x1xf32> to vector<38x80xf32>
    %278 = arith.mulf %276, %277 : vector<38x80xf32>
    %c11_331 = arith.constant 11 : index
    %c0_332 = arith.constant 0 : index
    %279 = vector.load %arg9[%c11_331, %c0_332] : memref<60x80xf32, #tpu.memory_space<vmem>>, vector<38x80xf32>
    %280 = arith.addf %278, %279 : vector<38x80xf32>
    %c11_333 = arith.constant 11 : index
    %c0_334 = arith.constant 0 : index
    %281 = vector.load %arg9[%c11_333, %c0_334] : memref<60x80xf32, #tpu.memory_space<vmem>>, vector<38x80xf32>
    tpu.vector_store %arg9[%c11_333, %c0_334], %280 {strides = array<i32>} : memref<60x80xf32, #tpu.memory_space<vmem>>, vector<38x80xf32>,
    %c2_335 = arith.constant 2 : index
    %c0_336 = arith.constant 0 : index
    %c0_337 = arith.constant 0 : index
    %282 = vector.load %arg6[%c2_335, %c0_336, %c0_337] : memref<3x720x40xf32, #tpu.memory_space<vmem>>, vector<1x720x40xf32>
    %283 = vector.shape_cast %282 : vector<1x720x40xf32> to vector<720x40xf32>
    %c2_338 = arith.constant 2 : index
    %c0_339 = arith.constant 0 : index
    %c0_340 = arith.constant 0 : index
    %284 = vector.load %arg7[%c2_338, %c0_339, %c0_340] : memref<3x1x40xf32, #tpu.memory_space<vmem>>, vector<1x1x40xf32>
    %285 = vector.shape_cast %284 : vector<1x1x40xf32> to vector<1x40xf32>
    %c0_341 = arith.constant 0 : index
    %c0_342 = arith.constant 0 : index
    %286 = vector.load %arg9[%c0_341, %c0_342] : memref<60x80xf32, #tpu.memory_space<vmem>>, vector<38x80xf32>
    %c1_343 = arith.constant 1 : index
    %c0_344 = arith.constant 0 : index
    %287 = vector.load %arg9[%c1_343, %c0_344] : memref<60x80xf32, #tpu.memory_space<vmem>>, vector<38x80xf32>
    %c2_345 = arith.constant 2 : index
    %c0_346 = arith.constant 0 : index
    %288 = vector.load %arg9[%c2_345, %c0_346] : memref<60x80xf32, #tpu.memory_space<vmem>>, vector<38x80xf32>
    %c10_347 = arith.constant 10 : index
    %c0_348 = arith.constant 0 : index
    %289 = vector.load %arg9[%c10_347, %c0_348] : memref<60x80xf32, #tpu.memory_space<vmem>>, vector<38x80xf32>
    %c11_349 = arith.constant 11 : index
    %c0_350 = arith.constant 0 : index
    %290 = vector.load %arg9[%c11_349, %c0_350] : memref<60x80xf32, #tpu.memory_space<vmem>>, vector<38x80xf32>
    %c12_351 = arith.constant 12 : index
    %c0_352 = arith.constant 0 : index
    %291 = vector.load %arg9[%c12_351, %c0_352] : memref<60x80xf32, #tpu.memory_space<vmem>>, vector<38x80xf32>
    %c20_353 = arith.constant 20 : index
    %c0_354 = arith.constant 0 : index
    %292 = vector.load %arg9[%c20_353, %c0_354] : memref<60x80xf32, #tpu.memory_space<vmem>>, vector<38x80xf32>
    %c21_355 = arith.constant 21 : index
    %c0_356 = arith.constant 0 : index
    %293 = vector.load %arg9[%c21_355, %c0_356] : memref<60x80xf32, #tpu.memory_space<vmem>>, vector<38x80xf32>
    %c22_357 = arith.constant 22 : index
    %c0_358 = arith.constant 0 : index
    %294 = vector.load %arg9[%c22_357, %c0_358] : memref<60x80xf32, #tpu.memory_space<vmem>>, vector<38x80xf32>
    %295 = tpu.concatenate %286, %287, %288, %289, %290, %291, %292, %293, %294 in 1 : vector<38x80xf32>, vector<38x80xf32>, vector<38x80xf32>, vector<38x80xf32>, vector<38x80xf32>, vector<38x80xf32>, vector<38x80xf32>, vector<38x80xf32>, vector<38x80xf32> -> vector<38x720xf32>
    %cst_359 = arith.constant dense<0.000000e+00> : vector<38x40xf32>
    %296 = tpu.matmul %295, %283, %cst_359 {dimension_numbers = #tpu.dot_dimension_numbers<[1], [0], [0], [1], [0, 0, 1, 1], [], []>} : vector<38x720xf32>, vector<720x40xf32>, vector<38x40xf32> -> vector<38x40xf32>
    %297 = vector.broadcast %285 : vector<1x40xf32> to vector<38x40xf32>
    %298 = arith.addf %296, %297 : vector<38x40xf32>
    %299 = vector.broadcast %20 : vector<38x1xf32> to vector<38x40xf32>
    %300 = arith.mulf %298, %299 : vector<38x40xf32>
    %c11_360 = arith.constant 11 : index
    %c0_361 = arith.constant 0 : index
    %301 = vector.load %arg9[%c11_360, %c0_361] : memref<60x80xf32, #tpu.memory_space<vmem>>, vector<38x40xf32>
    tpu.vector_store %arg9[%c11_360, %c0_361], %300 {strides = array<i32>} : memref<60x80xf32, #tpu.memory_space<vmem>>, vector<38x40xf32>,
    %cst_362 = arith.constant 0.000000e+00 : f32
    %302 = vector.broadcast %cst_362 : f32 to vector<38x8xf32>
    %303 = tpu.concatenate %120, %210, %300, %302 in 1 : vector<38x40xf32>, vector<38x40xf32>, vector<38x40xf32>, vector<38x8xf32> -> vector<38x128xf32>
    %c0_363 = arith.constant 0 : index
    %c0_364 = arith.constant 0 : index
    %c0_365 = arith.constant 0 : index
    %304 = vector.load %arg8[%c0_363, %c0_364, %c0_365] : memref<1x38x128xf32, #tpu.memory_space<vmem>>, vector<1x38x128xf32>
    %305 = vector.shape_cast %304 : vector<1x38x128xf32> to vector<38x128xf32>
    %306 = vector.shape_cast %303 : vector<38x128xf32> to vector<1x38x128xf32>
    tpu.vector_store %arg8[%c0_363, %c0_364, %c0_365], %306 {strides = array<i32>} : memref<1x38x128xf32, #tpu.memory_space<vmem>>, vector<1x38x128xf32>,
    return
  }
  func.func @transform_0(%arg0: i32) -> (i32, i32, i32) {
    %c0_i32 = arith.constant 0 : i32
    %c0_i32_0 = arith.constant 0 : i32
    %c0_i32_1 = arith.constant 0 : i32
    return %arg0, %c0_i32, %c0_i32_0 : i32, i32, i32
  }
  func.func @transform_1(%arg0: i32) -> (i32, i32, i32) {
    %c0_i32 = arith.constant 0 : i32
    %c0_i32_0 = arith.constant 0 : i32
    %c0_i32_1 = arith.constant 0 : i32
    %c0_i32_2 = arith.constant 0 : i32
    return %c0_i32, %c0_i32_0, %c0_i32_1 : i32, i32, i32
  }
  func.func @transform_2(%arg0: i32) -> (i32, i32, i32) {
    %c0_i32 = arith.constant 0 : i32
    %c0_i32_0 = arith.constant 0 : i32
    %c0_i32_1 = arith.constant 0 : i32
    %c0_i32_2 = arith.constant 0 : i32
    return %c0_i32, %c0_i32_0, %c0_i32_1 : i32, i32, i32
  }
  func.func @transform_3(%arg0: i32) -> (i32, i32, i32, i32) {
    %c0_i32 = arith.constant 0 : i32
    %c0_i32_0 = arith.constant 0 : i32
    %c0_i32_1 = arith.constant 0 : i32
    %c0_i32_2 = arith.constant 0 : i32
    %c0_i32_3 = arith.constant 0 : i32
    return %c0_i32, %c0_i32_0, %c0_i32_1, %c0_i32_2 : i32, i32, i32, i32
  }
  func.func @transform_4(%arg0: i32) -> (i32, i32, i32, i32) {
    %c0_i32 = arith.constant 0 : i32
    %c0_i32_0 = arith.constant 0 : i32
    %c0_i32_1 = arith.constant 0 : i32
    %c0_i32_2 = arith.constant 0 : i32
    %c0_i32_3 = arith.constant 0 : i32
    return %c0_i32, %c0_i32_0, %c0_i32_1, %c0_i32_2 : i32, i32, i32, i32
  }
  func.func @transform_5(%arg0: i32) -> (i32, i32, i32) {
    %c0_i32 = arith.constant 0 : i32
    %c0_i32_0 = arith.constant 0 : i32
    %c0_i32_1 = arith.constant 0 : i32
    %c0_i32_2 = arith.constant 0 : i32
    return %c0_i32, %c0_i32_0, %c0_i32_1 : i32, i32, i32
  }
  func.func @transform_6(%arg0: i32) -> (i32, i32, i32) {
    %c0_i32 = arith.constant 0 : i32
    %c0_i32_0 = arith.constant 0 : i32
    %c0_i32_1 = arith.constant 0 : i32
    %c0_i32_2 = arith.constant 0 : i32
    return %c0_i32, %c0_i32_0, %c0_i32_1 : i32, i32, i32
  }
  func.func @transform_7(%arg0: i32) -> (i32, i32, i32) {
    %c0_i32 = arith.constant 0 : i32
    %c0_i32_0 = arith.constant 0 : i32
    %c0_i32_1 = arith.constant 0 : i32
    return %arg0, %c0_i32, %c0_i32_0 : i32, i32, i32
  }
}

</mosaic_0001>

<llo_original>
// kernel: conv3d_model_forward.1
$region0: #{conv3d_model_forward.1}
  #allocation0 [shape = 'u32[]', space=smem, size = 0x4, offset = 0x4, fixed_abs, tag = 'smem constant byte address 0x4 - core index']
  #allocation1 [shape = 'u32[72,128]{1,0:T(1,128)}', space=vmem, size = 0x9000, scoped, tag = 'internal scratch']
  #allocation2 [shape = 'f32[60,80]{1,0:T(8,128)}', space=vmem, size = 0x8000, scoped, tag = 'scratch operand']
  %s0 = inlined_call_operand.vmem [shape: f32[2,60,40], index: 0, kind: input, shape index: {}]
  %s1 = inlined_call_operand.hbm [shape: f32[3,360,80], index: 1, kind: input, shape index: {}]
  %s2 = inlined_call_operand.hbm [shape: f32[3,1,80], index: 2, kind: input, shape index: {}]
  %s3 = inlined_call_operand.hbm [shape: f32[3,2,720,80], index: 3, kind: input, shape index: {}]
  %s4 = inlined_call_operand.hbm [shape: f32[3,2,1,80], index: 4, kind: input, shape index: {}]
  %s5 = inlined_call_operand.hbm [shape: f32[3,720,40], index: 5, kind: input, shape index: {}]
  %s6 = inlined_call_operand.hbm [shape: f32[3,1,40], index: 6, kind: input, shape index: {}]
  %s7 = inlined_call_operand.vmem [shape: f32[2,38,128], index: 7, kind: output, shape index: {}]
  %s8 = sld [smem:[#allocation0]]
  $region85: #{conv3d_model_forward.1} parent=0
    _
  %s10 = ssub.s32 1, %s8
  %s11 = scalar_select 0, %s10, %s8
  $region1: #{conv3d_model_forward.1} parent=0
    #allocation3 [shape = 'u8[552960]{0}', space=vmem, size = 0x87000, scoped, tag = 'input window, operand 1, single buffered']
    #allocation4 [shape = 's32[2]{0}', space=sflag, size = 0x8, scoped, tag = 'scoped memory for conv3d_model_forward.1']
    #allocation5 [shape = 'u8[1536]{0}', space=vmem, size = 0x800, scoped, tag = 'input window, operand 2, single buffered']
    #allocation6 [shape = 's32[1]{0}', space=sflag, size = 0x4, scoped, tag = 'scoped memory for conv3d_model_forward.1']
    #allocation7 [shape = 'u8[2211840]{0}', space=vmem, size = 0x21c000, scoped, tag = 'input window, operand 3, single buffered']
    #allocation8 [shape = 'u8[3072]{0}', space=vmem, size = 0xc00, scoped, tag = 'input window, operand 4, single buffered']
    #allocation9 [shape = 's32[1]{0}', space=sflag, size = 0x4, scoped, tag = 'scoped memory for conv3d_model_forward.1']
    #allocation10 [shape = 'u8[1105920]{0}', space=vmem, size = 0x10e000, scoped, tag = 'input window, operand 5, single buffered']
    #allocation11 [shape = 'u8[1536]{0}', space=vmem, size = 0x800, scoped, tag = 'input window, operand 6, single buffered']
    #allocation12 [shape = 's32[1]{0}', space=sflag, size = 0x4, scoped, tag = 'scoped memory for conv3d_model_forward.1']
    %12 = vsyncpa [#allocation4], 0
    %13 = vsyncpa [#allocation6], 0
    %14 = vsyncpa [#allocation9], 0
    %15 = vsyncpa [#allocation12], 0
    loop: start=0, step=1, limit=4
    $region2: #{conv3d_model_forward.1} parent=1 // loop_pre_header
      _
    $region3: #{conv3d_model_forward.1} parent=1 // loop_header
      %s17 = sphi 0, %s21
      %p18 = scmp.ge.s32.totalorder %s17, 4
      %s27 = sphi 0, %s29
      %s30 = sphi 0, %s27
      %s31 = sphi 0, %s30
      %s47 = sphi 0, %s31
      %s51 = sphi 0, %s51
      %s53 = sphi 0, %s51
      %s54 = sphi 0, %s53
      %s68 = sphi 0, %s54
      %s72 = sphi 0, %s72
      %s74 = sphi 0, %s72
      %s75 = sphi 0, %s74
      %s89 = sphi 0, %s75
      %s93 = sphi 0, %s93
      %s95 = sphi 0, %s93
      %s96 = sphi 0, %s95
      %s110 = sphi 0, %s96
      %s114 = sphi 0, %s114
      %s116 = sphi 0, %s114
      %s117 = sphi 0, %s116
      %s131 = sphi 0, %s117
      %s135 = sphi 0, %s135
      %s137 = sphi 0, %s135
      %s138 = sphi 0, %s137
      %s152 = sphi 0, %s138
      %s156 = sphi 0, %s156
      %s158 = sphi 0, %s156
      %s159 = sphi 0, %s158
      %s173 = sphi 0, %s159
      %s179 = sphi 0, %s181
      %s182 = sphi 0, %s179
      %s183 = sphi 0, %s182
      %s199 = sphi 0, %s183
    $region4: #{conv3d_model_forward.1} parent=1 // loop_header_branch
      %20 = sbr.rel (%p18) target = $region8
    $region5: #{conv3d_model_forward.1} parent=1 // loop_body
      %s22 = ssub.s32 %s17, 1
      %s23 = ssub.s32 %s17, 2
      %s24 = sadd.s32 %s17, 1
      %s25 = ssub.s32 %s17, %s24
      %p26 = scmp.eq.s32.totalorder %s25, 0
      %s28 = sadd.s32 %s27, 1
      %s29 = scalar_select %p26, %s27, %s28
      %p32 = pneg %p26
      %p33 = scmp.eq.s32.totalorder %s17, 1
      %p34 = por %p32, %p33
      %p35 = scmp.ne.s32.totalorder %s27, %s30
      %p36 = scmp.eq.s32.totalorder %s17, 0
      %p37 = por %p35, %p36
      %p38 = scmp.ne.s32.totalorder %s27, %s30
      %p39 = scmp.eq.s32.totalorder %s22, 1
      %p40 = por %p38, %p39
      %p41 = scmp.ne.s32.totalorder %s30, %s31
      %p42 = scmp.eq.s32.totalorder %s22, 0
      %p43 = por %p41, %p42
      %p44 = scmp.ne.s32.totalorder %s30, %s31
      %p45 = scmp.eq.s32.totalorder %s23, 1
      %p46 = por %p44, %p45
      %p48 = scmp.ne.s32.totalorder %s31, %s47
      %p49 = scmp.eq.s32.totalorder %s23, 0
      %p50 = por %p48, %p49
      %s52 = sadd.s32 %s51, 1
      %p55 = scmp.eq.s32.totalorder %s17, 1
      %p56 = scmp.ne.s32.totalorder %s51, %s53
      %p57 = scmp.eq.s32.totalorder %s17, 0
      %p58 = por %p56, %p57
      %p59 = scmp.ne.s32.totalorder %s51, %s53
      %p60 = scmp.eq.s32.totalorder %s22, 1
      %p61 = por %p59, %p60
      %p62 = scmp.ne.s32.totalorder %s53, %s54
      %p63 = scmp.eq.s32.totalorder %s22, 0
      %p64 = por %p62, %p63
      %p65 = scmp.ne.s32.totalorder %s53, %s54
      %p66 = scmp.eq.s32.totalorder %s23, 1
      %p67 = por %p65, %p66
      %p69 = scmp.ne.s32.totalorder %s54, %s68
      %p70 = scmp.eq.s32.totalorder %s23, 0
      %p71 = por %p69, %p70
      %s73 = sadd.s32 %s72, 1
      %p76 = scmp.eq.s32.totalorder %s17, 1
      %p77 = scmp.ne.s32.totalorder %s72, %s74
      %p78 = scmp.eq.s32.totalorder %s17, 0
      %p79 = por %p77, %p78
      %p80 = scmp.ne.s32.totalorder %s72, %s74
      %p81 = scmp.eq.s32.totalorder %s22, 1
      %p82 = por %p80, %p81
      %p83 = scmp.ne.s32.totalorder %s74, %s75
      %p84 = scmp.eq.s32.totalorder %s22, 0
      %p85 = por %p83, %p84
      %p86 = scmp.ne.s32.totalorder %s74, %s75
      %p87 = scmp.eq.s32.totalorder %s23, 1
      %p88 = por %p86, %p87
      %p90 = scmp.ne.s32.totalorder %s75, %s89
      %p91 = scmp.eq.s32.totalorder %s23, 0
      %p92 = por %p90, %p91
      %s94 = sadd.s32 %s93, 1
      %p97 = scmp.eq.s32.totalorder %s17, 1
      %p98 = scmp.ne.s32.totalorder %s93, %s95
      %p99 = scmp.eq.s32.totalorder %s17, 0
      %p100 = por %p98, %p99
      %p101 = scmp.ne.s32.totalorder %s93, %s95
      %p102 = scmp.eq.s32.totalorder %s22, 1
      %p103 = por %p101, %p102
      %p104 = scmp.ne.s32.totalorder %s95, %s96
      %p105 = scmp.eq.s32.totalorder %s22, 0
      %p106 = por %p104, %p105
      %p107 = scmp.ne.s32.totalorder %s95, %s96
      %p108 = scmp.eq.s32.totalorder %s23, 1
      %p109 = por %p107, %p108
      %p111 = scmp.ne.s32.totalorder %s96, %s110
      %p112 = scmp.eq.s32.totalorder %s23, 0
      %p113 = por %p111, %p112
      %s115 = sadd.s32 %s114, 1
      %p118 = scmp.eq.s32.totalorder %s17, 1
      %p119 = scmp.ne.s32.totalorder %s114, %s116
      %p120 = scmp.eq.s32.totalorder %s17, 0
      %p121 = por %p119, %p120
      %p122 = scmp.ne.s32.totalorder %s114, %s116
      %p123 = scmp.eq.s32.totalorder %s22, 1
      %p124 = por %p122, %p123
      %p125 = scmp.ne.s32.totalorder %s116, %s117
      %p126 = scmp.eq.s32.totalorder %s22, 0
      %p127 = por %p125, %p126
      %p128 = scmp.ne.s32.totalorder %s116, %s117
      %p129 = scmp.eq.s32.totalorder %s23, 1
      %p130 = por %p128, %p129
      %p132 = scmp.ne.s32.totalorder %s117, %s131
      %p133 = scmp.eq.s32.totalorder %s23, 0
      %p134 = por %p132, %p133
      %s136 = sadd.s32 %s135, 1
      %p139 = scmp.eq.s32.totalorder %s17, 1
      %p140 = scmp.ne.s32.totalorder %s135, %s137
      %p141 = scmp.eq.s32.totalorder %s17, 0
      %p142 = por %p140, %p141
      %p143 = scmp.ne.s32.totalorder %s135, %s137
      %p144 = scmp.eq.s32.totalorder %s22, 1
      %p145 = por %p143, %p144
      %p146 = scmp.ne.s32.totalorder %s137, %s138
      %p147 = scmp.eq.s32.totalorder %s22, 0
      %p148 = por %p146, %p147
      %p149 = scmp.ne.s32.totalorder %s137, %s138
      %p150 = scmp.eq.s32.totalorder %s23, 1
      %p151 = por %p149, %p150
      %p153 = scmp.ne.s32.totalorder %s138, %s152
      %p154 = scmp.eq.s32.totalorder %s23, 0
      %p155 = por %p153, %p154
      %s157 = sadd.s32 %s156, 1
      %p160 = scmp.eq.s32.totalorder %s17, 1
      %p161 = scmp.ne.s32.totalorder %s156, %s158
      %p162 = scmp.eq.s32.totalorder %s17, 0
      %p163 = por %p161, %p162
      %p164 = scmp.ne.s32.totalorder %s156, %s158
      %p165 = scmp.eq.s32.totalorder %s22, 1
      %p166 = por %p164, %p165
      %p167 = scmp.ne.s32.totalorder %s158, %s159
      %p168 = scmp.eq.s32.totalorder %s22, 0
      %p169 = por %p167, %p168
      %p170 = scmp.ne.s32.totalorder %s158, %s159
      %p171 = scmp.eq.s32.totalorder %s23, 1
      %p172 = por %p170, %p171
      %p174 = scmp.ne.s32.totalorder %s159, %s173
      %p175 = scmp.eq.s32.totalorder %s23, 0
      %p176 = por %p174, %p175
      %s177 = ssub.s32 %s17, %s24
      %p178 = scmp.eq.s32.totalorder %s177, 0
      %s180 = sadd.s32 %s179, 1
      %s181 = scalar_select %p178, %s179, %s180
      %p184 = pneg %p178
      %p185 = scmp.eq.s32.totalorder %s17, 1
      %p186 = por %p184, %p185
      %p187 = scmp.ne.s32.totalorder %s179, %s182
      %p188 = scmp.eq.s32.totalorder %s17, 0
      %p189 = por %p187, %p188
      %p190 = scmp.ne.s32.totalorder %s179, %s182
      %p191 = scmp.eq.s32.totalorder %s22, 1
      %p192 = por %p190, %p191
      %p193 = scmp.ne.s32.totalorder %s182, %s183
      %p194 = scmp.eq.s32.totalorder %s22, 0
      %p195 = por %p193, %p194
      %p196 = scmp.ne.s32.totalorder %s182, %s183
      %p197 = scmp.eq.s32.totalorder %s23, 1
      %p198 = por %p196, %p197
      %p200 = scmp.ne.s32.totalorder %s183, %s199
      %p201 = scmp.eq.s32.totalorder %s23, 0
      %p202 = por %p200, %p201
      %p203 = scmp.le.s32.totalorder 1, %s17
      %p204 = scmp.lt.s32.totalorder %s17, 3
      %p205 = pnand %p203, %p204
      %p206 = pneg %p205
      // Predicated region
      $region9: #{conv3d_model_forward.1} parent=5 // pred_check
        _
      $region10: #{conv3d_model_forward.1} parent=5 // pred_check_branch
        %208 = sbr.rel (%p205) target = $region12
      $region11: #{conv3d_model_forward.1} parent=5 // pred_region
        %s209 = ssub.s32 %s17, 1
        // Predicated region
        $region13: #{conv3d_model_forward.1} parent=11 // pred_check
          %p210 = pneg %p64
        $region14: #{conv3d_model_forward.1} parent=11 // pred_check_branch
          %212 = sbr.rel (%p210) target = $region16
        $region15: #{conv3d_model_forward.1} parent=11 // pred_region
          %214 = vsyncadd [#allocation4], 0
          %s215 = sshll.u32 %s1, 4
          %s216 = int_to_ptr.hbm [resolvable:$true] %s215
          %s217 = sshll.u32 [#allocation3], 4
          %s218 = int_to_ptr.vmem [resolvable:$true] %s217
          %223 = dma.hbm_to_vmem [thread:$0]  %s216, 17280, %s218, [#allocation4], 128, 128, 8
        $region16: #{conv3d_model_forward.1} parent=11 // pred_fallthru
          _
        // Predicated region
        $region17: #{conv3d_model_forward.1} parent=11 // pred_check
          %p224 = pneg %p85
        $region18: #{conv3d_model_forward.1} parent=11 // pred_check_branch
          %226 = sbr.rel (%p224) target = $region20
        $region19: #{conv3d_model_forward.1} parent=11 // pred_region
          %228 = vsyncadd [#allocation6], 0
          %s229 = sshll.u32 %s2, 4
          %s230 = int_to_ptr.hbm [resolvable:$true] %s229
          %s231 = sshll.u32 [#allocation5], 4
          %s232 = int_to_ptr.vmem [resolvable:$true] %s231
          %237 = dma.hbm_to_vmem [thread:$0]  %s230, 48, %s232, [#allocation6], 16, 16, 1
        $region20: #{conv3d_model_forward.1} parent=11 // pred_fallthru
          _
        // Predicated region
        $region21: #{conv3d_model_forward.1} parent=11 // pred_check
          %p238 = pneg %p106
        $region22: #{conv3d_model_forward.1} parent=11 // pred_check_branch
          %240 = sbr.rel (%p238) target = $region24
        $region23: #{conv3d_model_forward.1} parent=11 // pred_region
          %242 = vsyncadd [#allocation6], 0
          %s243 = sshll.u32 %s3, 4
          %s244 = int_to_ptr.hbm [resolvable:$true] %s243
          %s245 = sshll.u32 [#allocation7], 4
          %s246 = int_to_ptr.vmem [resolvable:$true] %s245
          %251 = dma.hbm_to_vmem [thread:$0]  %s244, 69120, %s246, [#allocation6], 128, 128, 8
        $region24: #{conv3d_model_forward.1} parent=11 // pred_fallthru
          _
        // Predicated region
        $region25: #{conv3d_model_forward.1} parent=11 // pred_check
          %p252 = pneg %p127
        $region26: #{conv3d_model_forward.1} parent=11 // pred_check_branch
          %254 = sbr.rel (%p252) target = $region28
        $region27: #{conv3d_model_forward.1} parent=11 // pred_region
          %256 = vsyncadd [#allocation9], 0
          %s257 = sshll.u32 %s4, 4
          %s258 = int_to_ptr.hbm [resolvable:$true] %s257
          %s259 = sshll.u32 [#allocation8], 4
          %s260 = int_to_ptr.vmem [resolvable:$true] %s259
          %265 = dma.hbm_to_vmem [thread:$0]  %s258, 96, %s260, [#allocation9], 16, 16, 1
        $region28: #{conv3d_model_forward.1} parent=11 // pred_fallthru
          _
        // Predicated region
        $region29: #{conv3d_model_forward.1} parent=11 // pred_check
          %p266 = pneg %p148
        $region30: #{conv3d_model_forward.1} parent=11 // pred_check_branch
          %268 = sbr.rel (%p266) target = $region32
        $region31: #{conv3d_model_forward.1} parent=11 // pred_region
          %270 = vsyncadd [#allocation9], 0
          %s271 = sshll.u32 %s5, 4
          %s272 = int_to_ptr.hbm [resolvable:$true] %s271
          %s273 = sshll.u32 [#allocation10], 4
          %s274 = int_to_ptr.vmem [resolvable:$true] %s273
          %279 = dma.hbm_to_vmem [thread:$0]  %s272, 34560, %s274, [#allocation9], 128, 128, 8
        $region32: #{conv3d_model_forward.1} parent=11 // pred_fallthru
          _
        // Predicated region
        $region33: #{conv3d_model_forward.1} parent=11 // pred_check
          %p280 = pneg %p169
        $region34: #{conv3d_model_forward.1} parent=11 // pred_check_branch
          %282 = sbr.rel (%p280) target = $region36
        $region35: #{conv3d_model_forward.1} parent=11 // pred_region
          %284 = vsyncadd [#allocation12], 0
          %s285 = sshll.u32 %s6, 4
          %s286 = int_to_ptr.hbm [resolvable:$true] %s285
          %s287 = sshll.u32 [#allocation11], 4
          %s288 = int_to_ptr.vmem [resolvable:$true] %s287
          %293 = dma.hbm_to_vmem [thread:$0]  %s286, 48, %s288, [#allocation12], 16, 16, 1
        $region36: #{conv3d_model_forward.1} parent=11 // pred_fallthru
          _
      $region12: #{conv3d_model_forward.1} parent=5 // pred_fallthru
        _
      %p294 = scmp.lt.s32.totalorder %s17, 2
      // Predicated region
      $region37: #{conv3d_model_forward.1} parent=5 // pred_check
        %p295 = pneg %p294
      $region38: #{conv3d_model_forward.1} parent=5 // pred_check_branch
        %297 = sbr.rel (%p295) target = $region40
      $region39: #{conv3d_model_forward.1} parent=5 // pred_region
        // Predicated region
        $region41: #{conv3d_model_forward.1} parent=39 // pred_check
          %p298 = pneg %p37
        $region42: #{conv3d_model_forward.1} parent=39 // pred_check_branch
          %300 = sbr.rel (%p298) target = $region44
        $region43: #{conv3d_model_forward.1} parent=39 // pred_region
          %p301 = scmp.lt.s32.totalorder %s17, 1
          %s302 = scalar_select %p301, %s17, 1
          %s303 = smul.addr %s302, 8
          %s304 = smul.addr %s303, 8
          %s305 = scalar_lea.vmem %s0, %s304
        $region44: #{conv3d_model_forward.1} parent=39 // pred_fallthru
          _
      $region40: #{conv3d_model_forward.1} parent=5 // pred_fallthru
        _
      %p306 = scmp.le.s32.totalorder 1, %s17
      %p307 = scmp.lt.s32.totalorder %s17, 3
      %p308 = pnand %p306, %p307
      %p309 = pneg %p308
      // Predicated region
      $region45: #{conv3d_model_forward.1} parent=5 // pred_check
        _
      $region46: #{conv3d_model_forward.1} parent=5 // pred_check_branch
        %311 = sbr.rel (%p308) target = $region48
      $region47: #{conv3d_model_forward.1} parent=5 // pred_region
        %s312 = ssub.s32 %s17, 1
        // Predicated region
        $region49: #{conv3d_model_forward.1} parent=47 // pred_check
          %p313 = pneg %p64
        $region50: #{conv3d_model_forward.1} parent=47 // pred_check_branch
          %315 = sbr.rel (%p313) target = $region52
        $region51: #{conv3d_model_forward.1} parent=47 // pred_region
          %317 = dma.done [#allocation4], 17280
        $region52: #{conv3d_model_forward.1} parent=47 // pred_fallthru
          _
        // Predicated region
        $region53: #{conv3d_model_forward.1} parent=47 // pred_check
          %p318 = pneg %p85
        $region54: #{conv3d_model_forward.1} parent=47 // pred_check_branch
          %320 = sbr.rel (%p318) target = $region56
        $region55: #{conv3d_model_forward.1} parent=47 // pred_region
          %322 = dma.done [#allocation6], 48
        $region56: #{conv3d_model_forward.1} parent=47 // pred_fallthru
          _
        // Predicated region
        $region57: #{conv3d_model_forward.1} parent=47 // pred_check
          %p323 = pneg %p106
        $region58: #{conv3d_model_forward.1} parent=47 // pred_check_branch
          %325 = sbr.rel (%p323) target = $region60
        $region59: #{conv3d_model_forward.1} parent=47 // pred_region
          %327 = dma.done [#allocation6], 69120
        $region60: #{conv3d_model_forward.1} parent=47 // pred_fallthru
          _
        // Predicated region
        $region61: #{conv3d_model_forward.1} parent=47 // pred_check
          %p328 = pneg %p127
        $region62: #{conv3d_model_forward.1} parent=47 // pred_check_branch
          %330 = sbr.rel (%p328) target = $region64
        $region63: #{conv3d_model_forward.1} parent=47 // pred_region
          %332 = dma.done [#allocation9], 96
        $region64: #{conv3d_model_forward.1} parent=47 // pred_fallthru
          _
        // Predicated region
        $region65: #{conv3d_model_forward.1} parent=47 // pred_check
          %p333 = pneg %p148
        $region66: #{conv3d_model_forward.1} parent=47 // pred_check_branch
          %335 = sbr.rel (%p333) target = $region68
        $region67: #{conv3d_model_forward.1} parent=47 // pred_region
          %337 = dma.done [#allocation9], 34560
        $region68: #{conv3d_model_forward.1} parent=47 // pred_fallthru
          _
        // Predicated region
        $region69: #{conv3d_model_forward.1} parent=47 // pred_check
          %p338 = pneg %p169
        $region70: #{conv3d_model_forward.1} parent=47 // pred_check_branch
          %340 = sbr.rel (%p338) target = $region72
        $region71: #{conv3d_model_forward.1} parent=47 // pred_region
          %342 = dma.done [#allocation12], 48
        $region72: #{conv3d_model_forward.1} parent=47 // pred_fallthru
          _
        %p343 = scmp.lt.s32.totalorder %s22, 1
        %s344 = scalar_select %p343, %s22, 1
        %s345 = smul.addr %s344, 8
        %s346 = smul.addr %s345, 8
        %s347 = scalar_lea.vmem %s0, %s346
        %p348 = pneg %p43
        %p349 = pneg %p40
        %p350 = pneg %p64
        %p351 = pneg %p61
        %p352 = pneg %p85
        %p353 = pneg %p82
        %p354 = pneg %p106
        %p355 = pneg %p103
        %p356 = pneg %p127
        %p357 = pneg %p124
        %p358 = pneg %p148
        %p359 = pneg %p145
        %p360 = pneg %p169
        %p361 = pneg %p166
        %p362 = pneg %p195
        %p363 = pneg %p192
        %p364 = scmp.lt.s32.totalorder %s22, 1
        %s365 = scalar_select %p364, %s22, 1
        %s366 = smul.addr %s365, 5
        %s367 = smul.addr %s366, 8
        %s368 = scalar_lea.vmem %s7, %s367
        %p369 = scmp.lt.s32.totalorder %s22, 1
        %s370 = scalar_select %p369, %s22, 1
        %s371 = smul.addr %s370, 8
        %s372 = smul.addr %s371, 8
        %s373 = scalar_lea.vmem %s0, %s372
        %p374 = scmp.lt.s32.totalorder %s22, 1
        %s375 = scalar_select %p374, %s22, 1
        %s376 = smul.addr %s375, 5
        %s377 = smul.addr %s376, 8
        %s378 = scalar_lea.vmem %s7, %s377
        %v379 = vlaneseq
        %v380 = vshrl.u32 %v379, 7
        %v381 = vadd.s32 %v380, 8
        %v382 = vadd.s32 %v380, 16
        %v383 = vadd.s32 %v380, 24
        %v384 = vadd.s32 %v380, 32
        %vm385 = vcmp.lt.s32.totalorder %v380, 0
        %v386 = vsub.s32 0, %v380
        %v387 = vsel %vm385, %v386, %v380
        %v388 = vand.u32 %v387, 65535
        %v389 = vshrl.u32 %v387, 16
        %v391 = vmul.u32 %v388, 52429
        %v392 = vmul.u32 %v388, 52428
        %v393 = vmul.u32 %v389, 52429
        %v394 = vmul.u32 %v389, 52428
        %v395 = vshll.u32 %v392, 16
        %v396 = vshrl.u32 %v392, 16
        %v397 = vshll.u32 %v393, 16
        %v398 = vshrl.u32 %v393, 16
        %vm399 = vc.u32 %v391, %v395
        %v400 = vsel %vm399, 1, 0
        %v401 = vadd.s32 %v391, %v395
        %v402 = vadd.s32 %v394, %v400
        %vm403 = vc.u32 %v401, %v397
        %v404 = vsel %vm403, 1, 0
        %v405 = vadd.s32 %v401, %v397
        %v406 = vadd.s32 %v402, %v404
        %v407 = vadd.s32 %v406, %v396
        %v408 = vadd.s32 %v407, %v398
        %v409 = vshrl.u32 %v408, 3
        %v410 = vmul.u32 %v409, 10
        %v411 = vsub.s32 %v387, %v410
        %v412 = vsub.s32 0, %v411
        %v413 = vsel %vm385, %v412, %v411
        %vm414 = vcmp.lt.s32.totalorder %v381, 0
        %v415 = vsub.s32 0, %v381
        %v416 = vsel %vm414, %v415, %v381
        %v417 = vand.u32 %v416, 65535
        %v418 = vshrl.u32 %v416, 16
        %v420 = vmul.u32 %v417, 52429
        %v421 = vmul.u32 %v417, 52428
        %v422 = vmul.u32 %v418, 52429
        %v423 = vmul.u32 %v418, 52428
        %v424 = vshll.u32 %v421, 16
        %v425 = vshrl.u32 %v421, 16
        %v426 = vshll.u32 %v422, 16
        %v427 = vshrl.u32 %v422, 16
        %vm428 = vc.u32 %v420, %v424
        %v429 = vsel %vm428, 1, 0
        %v430 = vadd.s32 %v420, %v424
        %v431 = vadd.s32 %v423, %v429
        %vm432 = vc.u32 %v430, %v426
        %v433 = vsel %vm432, 1, 0
        %v434 = vadd.s32 %v430, %v426
        %v435 = vadd.s32 %v431, %v433
        %v436 = vadd.s32 %v435, %v425
        %v437 = vadd.s32 %v436, %v427
        %v438 = vshrl.u32 %v437, 3
        %v439 = vmul.u32 %v438, 10
        %v440 = vsub.s32 %v416, %v439
        %v441 = vsub.s32 0, %v440
        %v442 = vsel %vm414, %v441, %v440
        %vm443 = vcmp.lt.s32.totalorder %v382, 0
        %v444 = vsub.s32 0, %v382
        %v445 = vsel %vm443, %v444, %v382
        %v446 = vand.u32 %v445, 65535
        %v447 = vshrl.u32 %v445, 16
        %v449 = vmul.u32 %v446, 52429
        %v450 = vmul.u32 %v446, 52428
        %v451 = vmul.u32 %v447, 52429
        %v452 = vmul.u32 %v447, 52428
        %v453 = vshll.u32 %v450, 16
        %v454 = vshrl.u32 %v450, 16
        %v455 = vshll.u32 %v451, 16
        %v456 = vshrl.u32 %v451, 16
        %vm457 = vc.u32 %v449, %v453
        %v458 = vsel %vm457, 1, 0
        %v459 = vadd.s32 %v449, %v453
        %v460 = vadd.s32 %v452, %v458
        %vm461 = vc.u32 %v459, %v455
        %v462 = vsel %vm461, 1, 0
        %v463 = vadd.s32 %v459, %v455
        %v464 = vadd.s32 %v460, %v462
        %v465 = vadd.s32 %v464, %v454
        %v466 = vadd.s32 %v465, %v456
        %v467 = vshrl.u32 %v466, 3
        %v468 = vmul.u32 %v467, 10
        %v469 = vsub.s32 %v445, %v468
        %v470 = vsub.s32 0, %v469
        %v471 = vsel %vm443, %v470, %v469
        %vm472 = vcmp.lt.s32.totalorder %v383, 0
        %v473 = vsub.s32 0, %v383
        %v474 = vsel %vm472, %v473, %v383
        %v475 = vand.u32 %v474, 65535
        %v476 = vshrl.u32 %v474, 16
        %v478 = vmul.u32 %v475, 52429
        %v479 = vmul.u32 %v475, 52428
        %v480 = vmul.u32 %v476, 52429
        %v481 = vmul.u32 %v476, 52428
        %v482 = vshll.u32 %v479, 16
        %v483 = vshrl.u32 %v479, 16
        %v484 = vshll.u32 %v480, 16
        %v485 = vshrl.u32 %v480, 16
        %vm486 = vc.u32 %v478, %v482
        %v487 = vsel %vm486, 1, 0
        %v488 = vadd.s32 %v478, %v482
        %v489 = vadd.s32 %v481, %v487
        %vm490 = vc.u32 %v488, %v484
        %v491 = vsel %vm490, 1, 0
        %v492 = vadd.s32 %v488, %v484
        %v493 = vadd.s32 %v489, %v491
        %v494 = vadd.s32 %v493, %v483
        %v495 = vadd.s32 %v494, %v485
        %v496 = vshrl.u32 %v495, 3
        %v497 = vmul.u32 %v496, 10
        %v498 = vsub.s32 %v474, %v497
        %v499 = vsub.s32 0, %v498
        %v500 = vsel %vm472, %v499, %v498
        %vm501 = vcmp.lt.s32.totalorder %v384, 0
        %v502 = vsub.s32 0, %v384
        %v503 = vsel %vm501, %v502, %v384
        %v504 = vand.u32 %v503, 65535
        %v505 = vshrl.u32 %v503, 16
        %v507 = vmul.u32 %v504, 52429
        %v508 = vmul.u32 %v504, 52428
        %v509 = vmul.u32 %v505, 52429
        %v510 = vmul.u32 %v505, 52428
        %v511 = vshll.u32 %v508, 16
        %v512 = vshrl.u32 %v508, 16
        %v513 = vshll.u32 %v509, 16
        %v514 = vshrl.u32 %v509, 16
        %vm515 = vc.u32 %v507, %v511
        %v516 = vsel %vm515, 1, 0
        %v517 = vadd.s32 %v507, %v511
        %v518 = vadd.s32 %v510, %v516
        %vm519 = vc.u32 %v517, %v513
        %v520 = vsel %vm519, 1, 0
        %v521 = vadd.s32 %v517, %v513
        %v522 = vadd.s32 %v518, %v520
        %v523 = vadd.s32 %v522, %v512
        %v524 = vadd.s32 %v523, %v514
        %v525 = vshrl.u32 %v524, 3
        %v526 = vmul.u32 %v525, 10
        %v527 = vsub.s32 %v503, %v526
        %v528 = vsub.s32 0, %v527
        %v529 = vsel %vm501, %v528, %v527
        %vm530 = vcmp.ne.s32.totalorder %v413, 0
        %vm531 = vcmp.ne.s32.totalorder %v442, 0
        %vm532 = vcmp.ne.s32.totalorder %v471, 0
        %vm533 = vcmp.ne.s32.totalorder %v500, 0
        %vm534 = vcmp.ne.s32.totalorder %v529, 0
        %vm535 = vcmp.lt.s32.totalorder %v413, 0
        %vm536 = vcmp.lt.s32.totalorder %v442, 0
        %vm537 = vcmp.lt.s32.totalorder %v471, 0
        %vm538 = vcmp.lt.s32.totalorder %v500, 0
        %vm539 = vcmp.lt.s32.totalorder %v529, 0
        %vm540 = vmand %vm535, %vm530
        %vm541 = vmand %vm536, %vm531
        %vm542 = vmand %vm537, %vm532
        %vm543 = vmand %vm538, %vm533
        %vm544 = vmand %vm539, %vm534
        %v545 = vadd.s32 %v413, 10
        %v546 = vadd.s32 %v442, 10
        %v547 = vadd.s32 %v471, 10
        %v548 = vadd.s32 %v500, 10
        %v549 = vadd.s32 %v529, 10
        %v550 = vsel %vm540, %v545, %v413
        %v551 = vsel %vm541, %v546, %v442
        %v552 = vsel %vm542, %v547, %v471
        %v553 = vsel %vm543, %v548, %v500
        %v554 = vsel %vm544, %v549, %v529
        %vm555 = vcmp.lt.s32.totalorder %v550, 8
        %vm556 = vcmp.lt.s32.totalorder %v551, 8
        %vm557 = vcmp.lt.s32.totalorder %v552, 8
        %vm558 = vcmp.lt.s32.totalorder %v553, 8
        %vm559 = vcmp.lt.s32.totalorder %v554, 8
        %v560 = vsel %vm555, 1, 0
        %v561 = vsel %vm556, 1, 0
        %v562 = vsel %vm557, 1, 0
        %v563 = vsel %vm558, 1, 0
        %v564 = vsel %vm559, 1, 0
        %v565 = vcvt.s32.f32 %v560
        %v566 = vcvt.s32.f32 %v561
        %v567 = vcvt.s32.f32 %v562
        %v568 = vcvt.s32.f32 %v563
        %v569 = vcvt.s32.f32 %v564
        %vm570 = vcmask 654336
        %571 = vst.msk [vmem:[#allocation2] sm:$0xff] %vm570, 0.0
        %572 = vst.msk [vmem:[#allocation2 + $0x8] sm:$0xff] %vm570, 0.0
        %573 = vst.msk [vmem:[#allocation2 + $0x10] sm:$0xff] %vm570, 0.0
        %574 = vst.msk [vmem:[#allocation2 + $0x18] sm:$0xff] %vm570, 0.0
        %575 = vst.msk [vmem:[#allocation2 + $0x20] sm:$0xff] %vm570, 0.0
        %576 = vst.msk [vmem:[#allocation2 + $0x28] sm:$0xff] %vm570, 0.0
        %577 = vst.msk [vmem:[#allocation2 + $0x30] sm:$0xff] %vm570, 0.0
        %vm578 = vcmask 650240
        %579 = vst.msk [vmem:[#allocation2 + $0x38] sm:$0xf] %vm578, 0.0
        %v580 = vld [vmem:[#allocation3] sm:$0xff]
        %v581 = vld [vmem:[#allocation3 + $0x8] sm:$0xff]
        %v582 = vld [vmem:[#allocation3 + $0x10] sm:$0xff]
        %v583 = vld [vmem:[#allocation3 + $0x18] sm:$0xff]
        %v584 = vld [vmem:[#allocation3 + $0x20] sm:$0xff]
        %v585 = vld [vmem:[#allocation3 + $0x28] sm:$0xff]
        %v586 = vld [vmem:[#allocation3 + $0x30] sm:$0xff]
        %v587 = vld [vmem:[#allocation3 + $0x38] sm:$0xff]
        %v588 = vld [vmem:[#allocation3 + $0x40] sm:$0xff]
        %v589 = vld [vmem:[#allocation3 + $0x48] sm:$0xff]
        %v590 = vld [vmem:[#allocation3 + $0x50] sm:$0xff]
        %v591 = vld [vmem:[#allocation3 + $0x58] sm:$0xff]
        %v592 = vld [vmem:[#allocation3 + $0x60] sm:$0xff]
        %v593 = vld [vmem:[#allocation3 + $0x68] sm:$0xff]
        %v594 = vld [vmem:[#allocation3 + $0x70] sm:$0xff]
        %v595 = vld [vmem:[#allocation3 + $0x78] sm:$0xff]
        %v596 = vld [vmem:[#allocation3 + $0x80] sm:$0xff]
        %v597 = vld [vmem:[#allocation3 + $0x88] sm:$0xff]
        %v598 = vld [vmem:[#allocation3 + $0x90] sm:$0xff]
        %v599 = vld [vmem:[#allocation3 + $0x98] sm:$0xff]
        %v600 = vld [vmem:[#allocation3 + $0xa0] sm:$0xff]
        %v601 = vld [vmem:[#allocation3 + $0xa8] sm:$0xff]
        %v602 = vld [vmem:[#allocation3 + $0xb0] sm:$0xff]
        %v603 = vld [vmem:[#allocation3 + $0xb8] sm:$0xff]
        %v604 = vld [vmem:[#allocation3 + $0xc0] sm:$0xff]
        %v605 = vld [vmem:[#allocation3 + $0xc8] sm:$0xff]
        %v606 = vld [vmem:[#allocation3 + $0xd0] sm:$0xff]
        %v607 = vld [vmem:[#allocation3 + $0xd8] sm:$0xff]
        %v608 = vld [vmem:[#allocation3 + $0xe0] sm:$0xff]
        %v609 = vld [vmem:[#allocation3 + $0xe8] sm:$0xff]
        %v610 = vld [vmem:[#allocation3 + $0xf0] sm:$0xff]
        %v611 = vld [vmem:[#allocation3 + $0xf8] sm:$0xff]
        %v612 = vld [vmem:[#allocation3 + $0x100] sm:$0xff]
        %v613 = vld [vmem:[#allocation3 + $0x108] sm:$0xff]
        %v614 = vld [vmem:[#allocation3 + $0x110] sm:$0xff]
        %v615 = vld [vmem:[#allocation3 + $0x118] sm:$0xff]
        %v616 = vld [vmem:[#allocation3 + $0x120] sm:$0xff]
        %v617 = vld [vmem:[#allocation3 + $0x128] sm:$0xff]
        %v618 = vld [vmem:[#allocation3 + $0x130] sm:$0xff]
        %v619 = vld [vmem:[#allocation3 + $0x138] sm:$0xff]
        %v620 = vld [vmem:[#allocation3 + $0x140] sm:$0xff]
        %v621 = vld [vmem:[#allocation3 + $0x148] sm:$0xff]
        %v622 = vld [vmem:[#allocation3 + $0x150] sm:$0xff]
        %v623 = vld [vmem:[#allocation3 + $0x158] sm:$0xff]
        %v624 = vld [vmem:[#allocation3 + $0x160] sm:$0xff]
        %v625 = vld [vmem:[#allocation5] sm:$0x1]
        %v626 = vld [vmem:[%s373] sm:$0xff]
        %v627 = vld [vmem:[%s373 + $0x8] sm:$0xff]
        %v628 = vld [vmem:[%s373 + $0x10] sm:$0xff]
        %v629 = vld [vmem:[%s373 + $0x18] sm:$0xff]
        %v630 = vld [vmem:[%s373 + $0x20] sm:$0x3f]
        %v631 = vld [vmem:[%s373 + $0x1] sm:$0xff]
        %v632 = vld [vmem:[%s373 + $0x9] sm:$0xff]
        %v633 = vld [vmem:[%s373 + $0x11] sm:$0xff]
        %v634 = vld [vmem:[%s373 + $0x19] sm:$0xff]
        %v635 = vld [vmem:[%s373 + $0x21] sm:$0x3f]
        %v636 = vld [vmem:[%s373 + $0x2] sm:$0xff]
        %v637 = vld [vmem:[%s373 + $0xa] sm:$0xff]
        %v638 = vld [vmem:[%s373 + $0x12] sm:$0xff]
        %v639 = vld [vmem:[%s373 + $0x1a] sm:$0xff]
        %v640 = vld [vmem:[%s373 + $0x22] sm:$0x3f]
        %v641 = vld [vmem:[%s373 + $0x22] sm:$0xff]
        %v642 = vld [vmem:[%s373 + $0x2a] sm:$0x3f]
        %v643 = vld [vmem:[%s373 + $0xb] sm:$0xff]
        %v644 = vld [vmem:[%s373 + $0x13] sm:$0xff]
        %v645 = vld [vmem:[%s373 + $0x1b] sm:$0xff]
        %v646 = vld [vmem:[%s373 + $0x23] sm:$0xff]
        %v647 = vld [vmem:[%s373 + $0x2b] sm:$0x3f]
        %v648 = vld [vmem:[%s373 + $0xc] sm:$0xff]
        %v649 = vld [vmem:[%s373 + $0x14] sm:$0xff]
        %v650 = vld [vmem:[%s373 + $0x1c] sm:$0xff]
        %v651 = vld [vmem:[%s373 + $0x24] sm:$0xff]
        %v652 = vld [vmem:[%s373 + $0x2c] sm:$0x3f]
        %v653 = vld [vmem:[%s373 + $0x2c] sm:$0xff]
        %v654 = vld [vmem:[%s373 + $0x34] sm:$0x3f]
        %v655 = vld [vmem:[%s373 + $0x15] sm:$0xff]
        %v656 = vld [vmem:[%s373 + $0x1d] sm:$0xff]
        %v657 = vld [vmem:[%s373 + $0x25] sm:$0xff]
        %v658 = vld [vmem:[%s373 + $0x2d] sm:$0xff]
        %v659 = vld [vmem:[%s373 + $0x35] sm:$0x3f]
        %v660 = vld [vmem:[%s373 + $0x16] sm:$0xff]
        %v661 = vld [vmem:[%s373 + $0x1e] sm:$0xff]
        %v662 = vld [vmem:[%s373 + $0x26] sm:$0xff]
        %v663 = vld [vmem:[%s373 + $0x2e] sm:$0xff]
        %v664 = vld [vmem:[%s373 + $0x36] sm:$0x3f]
        %670 = vrot.lane.b32.xlu0 %v631, 40
        %v671 = vpop.permute.xlu0 %670
        %672 = vrot.lane.b32.xlu0 %v632, 40
        %v673 = vpop.permute.xlu0 %672
        %674 = vrot.lane.b32.xlu0 %v633, 40
        %v675 = vpop.permute.xlu0 %674
        %676 = vrot.lane.b32.xlu0 %v634, 40
        %v677 = vpop.permute.xlu0 %676
        %678 = vrot.lane.b32.xlu0 %v635, 40
        %v679 = vpop.permute.xlu0 %678
        %690 = vrot.lane.b32.xlu0 %v636, 80
        %v691 = vpop.permute.xlu0 %690
        %692 = vrot.lane.b32.xlu0 %v637, 80
        %v693 = vpop.permute.xlu0 %692
        %694 = vrot.lane.b32.xlu0 %v638, 80
        %v695 = vpop.permute.xlu0 %694
        %696 = vrot.lane.b32.xlu0 %v639, 80
        %v697 = vpop.permute.xlu0 %696
        %698 = vrot.lane.b32.xlu0 %v640, 80
        %v699 = vpop.permute.xlu0 %698
        %707 = vrot.lane.b32.xlu0 %v637, 120
        %v708 = vpop.permute.xlu0 %707
        %709 = vrot.lane.b32.xlu0 %v638, 120
        %v710 = vpop.permute.xlu0 %709
        %711 = vrot.lane.b32.xlu0 %v639, 120
        %v712 = vpop.permute.xlu0 %711
        %713 = vrot.lane.b32.xlu0 %v641, 120
        %v714 = vpop.permute.xlu0 %713
        %715 = vrot.lane.b32.xlu0 %v642, 120
        %v716 = vpop.permute.xlu0 %715
        %727 = vrot.lane.b32.xlu0 %v643, 32
        %v728 = vpop.permute.xlu0 %727
        %729 = vrot.lane.b32.xlu0 %v644, 32
        %v730 = vpop.permute.xlu0 %729
        %731 = vrot.lane.b32.xlu0 %v645, 32
        %v732 = vpop.permute.xlu0 %731
        %733 = vrot.lane.b32.xlu0 %v646, 32
        %v734 = vpop.permute.xlu0 %733
        %735 = vrot.lane.b32.xlu0 %v647, 32
        %v736 = vpop.permute.xlu0 %735
        %747 = vrot.lane.b32.xlu0 %v648, 72
        %v748 = vpop.permute.xlu0 %747
        %749 = vrot.lane.b32.xlu0 %v649, 72
        %v750 = vpop.permute.xlu0 %749
        %751 = vrot.lane.b32.xlu0 %v650, 72
        %v752 = vpop.permute.xlu0 %751
        %753 = vrot.lane.b32.xlu0 %v651, 72
        %v754 = vpop.permute.xlu0 %753
        %755 = vrot.lane.b32.xlu0 %v652, 72
        %v756 = vpop.permute.xlu0 %755
        %764 = vrot.lane.b32.xlu0 %v649, 112
        %v765 = vpop.permute.xlu0 %764
        %766 = vrot.lane.b32.xlu0 %v650, 112
        %v767 = vpop.permute.xlu0 %766
        %768 = vrot.lane.b32.xlu0 %v651, 112
        %v769 = vpop.permute.xlu0 %768
        %770 = vrot.lane.b32.xlu0 %v653, 112
        %v771 = vpop.permute.xlu0 %770
        %772 = vrot.lane.b32.xlu0 %v654, 112
        %v773 = vpop.permute.xlu0 %772
        %784 = vrot.lane.b32.xlu0 %v655, 24
        %v785 = vpop.permute.xlu0 %784
        %786 = vrot.lane.b32.xlu0 %v656, 24
        %v787 = vpop.permute.xlu0 %786
        %788 = vrot.lane.b32.xlu0 %v657, 24
        %v789 = vpop.permute.xlu0 %788
        %790 = vrot.lane.b32.xlu0 %v658, 24
        %v791 = vpop.permute.xlu0 %790
        %792 = vrot.lane.b32.xlu0 %v659, 24
        %v793 = vpop.permute.xlu0 %792
        %804 = vrot.lane.b32.xlu0 %v660, 64
        %v805 = vpop.permute.xlu0 %804
        %806 = vrot.lane.b32.xlu0 %v661, 64
        %v807 = vpop.permute.xlu0 %806
        %808 = vrot.lane.b32.xlu0 %v662, 64
        %v809 = vpop.permute.xlu0 %808
        %810 = vrot.lane.b32.xlu0 %v663, 64
        %v811 = vpop.permute.xlu0 %810
        %812 = vrot.lane.b32.xlu0 %v664, 64
        %v813 = vpop.permute.xlu0 %812
        %vm819 = vcmask 326656
        %v820 = vsel %vm819, %v626, %v671
        %v821 = vsel %vm819, %v627, %v673
        %v822 = vsel %vm819, %v628, %v675
        %v823 = vsel %vm819, %v629, %v677
        %v824 = vsel %vm819, %v630, %v679
        %v825 = vsel %vm570, %v820, %v691
        %v826 = vsel %vm570, %v821, %v693
        %v827 = vsel %vm570, %v822, %v695
        %v828 = vsel %vm570, %v823, %v697
        %v829 = vsel %vm570, %v824, %v699
        %vm830 = vcmask 982016
        %v831 = vsel %vm830, %v825, %v708
        %v832 = vsel %vm830, %v826, %v710
        %v833 = vsel %vm830, %v827, %v712
        %v834 = vsel %vm830, %v828, %v714
        %v835 = vsel %vm830, %v829, %v716
        %vm836 = vcmask 261120
        %v837 = vsel %vm836, %v708, %v728
        %v838 = vsel %vm836, %v710, %v730
        %v839 = vsel %vm836, %v712, %v732
        %v840 = vsel %vm836, %v714, %v734
        %v841 = vsel %vm836, %v716, %v736
        %vm842 = vcmask 588800
        %v843 = vsel %vm842, %v837, %v748
        %v844 = vsel %vm842, %v838, %v750
        %v845 = vsel %vm842, %v839, %v752
        %v846 = vsel %vm842, %v840, %v754
        %v847 = vsel %vm842, %v841, %v756
        %vm848 = vcmask 916480
        %v849 = vsel %vm848, %v843, %v765
        %v850 = vsel %vm848, %v844, %v767
        %v851 = vsel %vm848, %v845, %v769
        %v852 = vsel %vm848, %v846, %v771
        %v853 = vsel %vm848, %v847, %v773
        %vm854 = vcmask 195584
        %v855 = vsel %vm854, %v765, %v785
        %v856 = vsel %vm854, %v767, %v787
        %v857 = vsel %vm854, %v769, %v789
        %v858 = vsel %vm854, %v771, %v791
        %v859 = vsel %vm854, %v773, %v793
        %vm860 = vcmask 523264
        %v861 = vsel %vm860, %v855, %v805
        %v862 = vsel %vm860, %v856, %v807
        %v863 = vsel %vm860, %v857, %v809
        %v864 = vsel %vm860, %v858, %v811
        %v865 = vsel %vm860, %v859, %v813
        %v867 = vperm.slane %v625, 0
        %vm869 = vcmask 850944
        %v871 = vsel %vm869, %v861, 0
        %v874 = vsel %vm869, %v862, 0
        %v877 = vsel %vm869, %v863, 0
        %v880 = vsel %vm869, %v864, 0
        %v883 = vsel %vm869, %v865, 0
        %885 = vmatpush.msra.mxu0 %v595
        %886 = vmatpush.msra.mxu0 %v594
        %887 = vmatpush.msra.mxu0 %v593
        %888 = vmatpush.msra.mxu0 %v592
        %889 = vmatpush.msra.mxu0 %v591
        %890 = vmatpush.msra.mxu0 %v590
        %891 = vmatpush.msra.mxu0 %v589
        %892 = vmatpush.msra.mxu0 %v588
        %893 = vmatpush.msra.mxu0 %v587
        %894 = vmatpush.msra.mxu0 %v586
        %895 = vmatpush.msra.mxu0 %v585
        %896 = vmatpush.msra.mxu0 %v584
        %897 = vmatpush.msra.mxu0 %v583
        %898 = vmatpush.msra.mxu0 %v582
        %899 = vmatpush.msra.mxu0 %v581
        %900 = vmatpush.msra.mxu0 %v580
        %901 = vmatmul.f32.gmra.mxu0 %v831
        %v902 = vpop.f32.mrf.mxu0
        %v903 = vadd.f32 %v867, %v902
        %904 = vmatmul.f32.gmra.mxu0 %v832
        %v905 = vpop.f32.mrf.mxu0
        %v906 = vadd.f32 %v867, %v905
        %907 = vmatmul.f32.gmra.mxu0 %v833
        %v908 = vpop.f32.mrf.mxu0
        %v909 = vadd.f32 %v867, %v908
        %910 = vmatmul.f32.gmra.mxu0 %v834
        %v911 = vpop.f32.mrf.mxu0
        %v912 = vadd.f32 %v867, %v911
        %913 = vmatmul.f32.gmra.mxu0 %v835
        %v914 = vpop.f32.mrf.mxu0
        %v915 = vadd.f32 %v867, %v914
        %916 = vdwg.mxu0
        %917 = vmatpush.msra.mxu0 %v611
        %918 = vmatpush.msra.mxu0 %v610
        %919 = vmatpush.msra.mxu0 %v609
        %920 = vmatpush.msra.mxu0 %v608
        %921 = vmatpush.msra.mxu0 %v607
        %922 = vmatpush.msra.mxu0 %v606
        %923 = vmatpush.msra.mxu0 %v605
        %924 = vmatpush.msra.mxu0 %v604
        %925 = vmatpush.msra.mxu0 %v603
        %926 = vmatpush.msra.mxu0 %v602
        %927 = vmatpush.msra.mxu0 %v601
        %928 = vmatpush.msra.mxu0 %v600
        %929 = vmatpush.msra.mxu0 %v599
        %930 = vmatpush.msra.mxu0 %v598
        %931 = vmatpush.msra.mxu0 %v597
        %932 = vmatpush.msra.mxu0 %v596
        %933 = vmatmul.f32.gmra.mxu0 %v849
        %v934 = vpop.f32.mrf.mxu0
        %v935 = vadd.f32 %v903, %v934
        %936 = vmatmul.f32.gmra.mxu0 %v850
        %v937 = vpop.f32.mrf.mxu0
        %v938 = vadd.f32 %v906, %v937
        %939 = vmatmul.f32.gmra.mxu0 %v851
        %v940 = vpop.f32.mrf.mxu0
        %v941 = vadd.f32 %v909, %v940
        %942 = vmatmul.f32.gmra.mxu0 %v852
        %v943 = vpop.f32.mrf.mxu0
        %v944 = vadd.f32 %v912, %v943
        %945 = vmatmul.f32.gmra.mxu0 %v853
        %v946 = vpop.f32.mrf.mxu0
        %v947 = vadd.f32 %v915, %v946
        %948 = vdwg.mxu0
        %949 = vmatpush.msra.mxu0 0.0
        %950 = vmatpush.msra.mxu0 0.0
        %951 = vmatpush.msra.mxu0 0.0
        %952 = vmatpush.msra.mxu0 %v624
        %953 = vmatpush.msra.mxu0 %v623
        %954 = vmatpush.msra.mxu0 %v622
        %955 = vmatpush.msra.mxu0 %v621
        %956 = vmatpush.msra.mxu0 %v620
        %957 = vmatpush.msra.mxu0 %v619
        %958 = vmatpush.msra.mxu0 %v618
        %959 = vmatpush.msra.mxu0 %v617
        %960 = vmatpush.msra.mxu0 %v616
        %961 = vmatpush.msra.mxu0 %v615
        %962 = vmatpush.msra.mxu0 %v614
        %963 = vmatpush.msra.mxu0 %v613
        %964 = vmatpush.msra.mxu0 %v612
        %965 = vmatmul.f32.gmra.mxu0 %v871
        %v966 = vpop.f32.mrf.mxu0
        %v967 = vadd.f32 %v935, %v966
        %968 = vmatmul.f32.gmra.mxu0 %v874
        %v969 = vpop.f32.mrf.mxu0
        %v970 = vadd.f32 %v938, %v969
        %971 = vmatmul.f32.gmra.mxu0 %v877
        %v972 = vpop.f32.mrf.mxu0
        %v973 = vadd.f32 %v941, %v972
        %974 = vmatmul.f32.gmra.mxu0 %v880
        %v975 = vpop.f32.mrf.mxu0
        %v976 = vadd.f32 %v944, %v975
        %977 = vmatmul.f32.gmra.mxu0 %v883
        %v978 = vpop.f32.mrf.mxu0
        %v979 = vadd.f32 %v947, %v978
        %980 = vdwg.mxu0
        %v981 = vmax.f32 %v967, 0.0
        %v982 = vmax.f32 %v970, 0.0
        %v983 = vmax.f32 %v973, 0.0
        %v984 = vmax.f32 %v976, 0.0
        %v985 = vmax.f32 %v979, 0.0
        %v986 = vmul.f32 %v981, %v565
        %v987 = vmul.f32 %v982, %v566
        %v988 = vmul.f32 %v983, %v567
        %v989 = vmul.f32 %v984, %v568
        %v990 = vmul.f32 %v985, %v569
        %991 = vst.msk [vmem:[#allocation2 + $0xb] sm:$0xff] %vm570, %v986
        %992 = vst.msk [vmem:[#allocation2 + $0x13] sm:$0xff] %vm570, %v987
        %993 = vst.msk [vmem:[#allocation2 + $0x1b] sm:$0xff] %vm570, %v988
        %994 = vst.msk [vmem:[#allocation2 + $0x23] sm:$0xff] %vm570, %v989
        %vm995 = vcmask 652288
        %996 = vst.msk [vmem:[#allocation2 + $0x2b] sm:$0x3f] %vm995, %v990
        %v997 = vld [vmem:[#allocation7] sm:$0xff]
        %v998 = vld [vmem:[#allocation7 + $0x8] sm:$0xff]
        %v999 = vld [vmem:[#allocation7 + $0x10] sm:$0xff]
        %v1000 = vld [vmem:[#allocation7 + $0x18] sm:$0xff]
        %v1001 = vld [vmem:[#allocation7 + $0x20] sm:$0xff]
        %v1002 = vld [vmem:[#allocation7 + $0x28] sm:$0xff]
        %v1003 = vld [vmem:[#allocation7 + $0x30] sm:$0xff]
        %v1004 = vld [vmem:[#allocation7 + $0x38] sm:$0xff]
        %v1005 = vld [vmem:[#allocation7 + $0x40] sm:$0xff]
        %v1006 = vld [vmem:[#allocation7 + $0x48] sm:$0xff]
        %v1007 = vld [vmem:[#allocation7 + $0x50] sm:$0xff]
        %v1008 = vld [vmem:[#allocation7 + $0x58] sm:$0xff]
        %v1009 = vld [vmem:[#allocation7 + $0x60] sm:$0xff]
        %v1010 = vld [vmem:[#allocation7 + $0x68] sm:$0xff]
        %v1011 = vld [vmem:[#allocation7 + $0x70] sm:$0xff]
        %v1012 = vld [vmem:[#allocation7 + $0x78] sm:$0xff]
        %v1013 = vld [vmem:[#allocation7 + $0x80] sm:$0xff]
        %v1014 = vld [vmem:[#allocation7 + $0x88] sm:$0xff]
        %v1015 = vld [vmem:[#allocation7 + $0x90] sm:$0xff]
        %v1016 = vld [vmem:[#allocation7 + $0x98] sm:$0xff]
        %v1017 = vld [vmem:[#allocation7 + $0xa0] sm:$0xff]
        %v1018 = vld [vmem:[#allocation7 + $0xa8] sm:$0xff]
        %v1019 = vld [vmem:[#allocation7 + $0xb0] sm:$0xff]
        %v1020 = vld [vmem:[#allocation7 + $0xb8] sm:$0xff]
        %v1021 = vld [vmem:[#allocation7 + $0xc0] sm:$0xff]
        %v1022 = vld [vmem:[#allocation7 + $0xc8] sm:$0xff]
        %v1023 = vld [vmem:[#allocation7 + $0xd0] sm:$0xff]
        %v1024 = vld [vmem:[#allocation7 + $0xd8] sm:$0xff]
        %v1025 = vld [vmem:[#allocation7 + $0xe0] sm:$0xff]
        %v1026 = vld [vmem:[#allocation7 + $0xe8] sm:$0xff]
        %v1027 = vld [vmem:[#allocation7 + $0xf0] sm:$0xff]
        %v1028 = vld [vmem:[#allocation7 + $0xf8] sm:$0xff]
        %v1029 = vld [vmem:[#allocation7 + $0x100] sm:$0xff]
        %v1030 = vld [vmem:[#allocation7 + $0x108] sm:$0xff]
        %v1031 = vld [vmem:[#allocation7 + $0x110] sm:$0xff]
        %v1032 = vld [vmem:[#allocation7 + $0x118] sm:$0xff]
        %v1033 = vld [vmem:[#allocation7 + $0x120] sm:$0xff]
        %v1034 = vld [vmem:[#allocation7 + $0x128] sm:$0xff]
        %v1035 = vld [vmem:[#allocation7 + $0x130] sm:$0xff]
        %v1036 = vld [vmem:[#allocation7 + $0x138] sm:$0xff]
        %v1037 = vld [vmem:[#allocation7 + $0x140] sm:$0xff]
        %v1038 = vld [vmem:[#allocation7 + $0x148] sm:$0xff]
        %v1039 = vld [vmem:[#allocation7 + $0x150] sm:$0xff]
        %v1040 = vld [vmem:[#allocation7 + $0x158] sm:$0xff]
        %v1041 = vld [vmem:[#allocation7 + $0x160] sm:$0xff]
        %v1042 = vld [vmem:[#allocation7 + $0x168] sm:$0xff]
        %v1043 = vld [vmem:[#allocation7 + $0x170] sm:$0xff]
        %v1044 = vld [vmem:[#allocation7 + $0x178] sm:$0xff]
        %v1045 = vld [vmem:[#allocation7 + $0x180] sm:$0xff]
        %v1046 = vld [vmem:[#allocation7 + $0x188] sm:$0xff]
        %v1047 = vld [vmem:[#allocation7 + $0x190] sm:$0xff]
        %v1048 = vld [vmem:[#allocation7 + $0x198] sm:$0xff]
        %v1049 = vld [vmem:[#allocation7 + $0x1a0] sm:$0xff]
        %v1050 = vld [vmem:[#allocation7 + $0x1a8] sm:$0xff]
        %v1051 = vld [vmem:[#allocation7 + $0x1b0] sm:$0xff]
        %v1052 = vld [vmem:[#allocation7 + $0x1b8] sm:$0xff]
        %v1053 = vld [vmem:[#allocation7 + $0x1c0] sm:$0xff]
        %v1054 = vld [vmem:[#allocation7 + $0x1c8] sm:$0xff]
        %v1055 = vld [vmem:[#allocation7 + $0x1d0] sm:$0xff]
        %v1056 = vld [vmem:[#allocation7 + $0x1d8] sm:$0xff]
        %v1057 = vld [vmem:[#allocation7 + $0x1e0] sm:$0xff]
        %v1058 = vld [vmem:[#allocation7 + $0x1e8] sm:$0xff]
        %v1059 = vld [vmem:[#allocation7 + $0x1f0] sm:$0xff]
        %v1060 = vld [vmem:[#allocation7 + $0x1f8] sm:$0xff]
        %v1061 = vld [vmem:[#allocation7 + $0x200] sm:$0xff]
        %v1062 = vld [vmem:[#allocation7 + $0x208] sm:$0xff]
        %v1063 = vld [vmem:[#allocation7 + $0x210] sm:$0xff]
        %v1064 = vld [vmem:[#allocation7 + $0x218] sm:$0xff]
        %v1065 = vld [vmem:[#allocation7 + $0x220] sm:$0xff]
        %v1066 = vld [vmem:[#allocation7 + $0x228] sm:$0xff]
        %v1067 = vld [vmem:[#allocation7 + $0x230] sm:$0xff]
        %v1068 = vld [vmem:[#allocation7 + $0x238] sm:$0xff]
        %v1069 = vld [vmem:[#allocation7 + $0x240] sm:$0xff]
        %v1070 = vld [vmem:[#allocation7 + $0x248] sm:$0xff]
        %v1071 = vld [vmem:[#allocation7 + $0x250] sm:$0xff]
        %v1072 = vld [vmem:[#allocation7 + $0x258] sm:$0xff]
        %v1073 = vld [vmem:[#allocation7 + $0x260] sm:$0xff]
        %v1074 = vld [vmem:[#allocation7 + $0x268] sm:$0xff]
        %v1075 = vld [vmem:[#allocation7 + $0x270] sm:$0xff]
        %v1076 = vld [vmem:[#allocation7 + $0x278] sm:$0xff]
        %v1077 = vld [vmem:[#allocation7 + $0x280] sm:$0xff]
        %v1078 = vld [vmem:[#allocation7 + $0x288] sm:$0xff]
        %v1079 = vld [vmem:[#allocation7 + $0x290] sm:$0xff]
        %v1080 = vld [vmem:[#allocation7 + $0x298] sm:$0xff]
        %v1081 = vld [vmem:[#allocation7 + $0x2a0] sm:$0xff]
        %v1082 = vld [vmem:[#allocation7 + $0x2a8] sm:$0xff]
        %v1083 = vld [vmem:[#allocation7 + $0x2b0] sm:$0xff]
        %v1084 = vld [vmem:[#allocation7 + $0x2b8] sm:$0xff]
        %v1085 = vld [vmem:[#allocation7 + $0x2c0] sm:$0xff]
        %v1086 = vld [vmem:[#allocation7 + $0x2c8] sm:$0xff]
        %v1087 = vld [vmem:[#allocation8] sm:$0x1]
        %v1088 = vld [vmem:[#allocation2] sm:$0xff]
        %v1089 = vld [vmem:[#allocation2 + $0x8] sm:$0xff]
        %v1090 = vld [vmem:[#allocation2 + $0x10] sm:$0xff]
        %v1091 = vld [vmem:[#allocation2 + $0x18] sm:$0xff]
        %v1092 = vld [vmem:[#allocation2 + $0x20] sm:$0x3f]
        %v1093 = vld [vmem:[#allocation2 + $0x1] sm:$0xff]
        %v1094 = vld [vmem:[#allocation2 + $0x9] sm:$0xff]
        %v1095 = vld [vmem:[#allocation2 + $0x11] sm:$0xff]
        %v1096 = vld [vmem:[#allocation2 + $0x19] sm:$0xff]
        %v1097 = vld [vmem:[#allocation2 + $0x21] sm:$0x3f]
        %v1098 = vld [vmem:[#allocation2 + $0x2] sm:$0xff]
        %v1099 = vld [vmem:[#allocation2 + $0xa] sm:$0xff]
        %v1100 = vld [vmem:[#allocation2 + $0x12] sm:$0xff]
        %v1101 = vld [vmem:[#allocation2 + $0x1a] sm:$0xff]
        %v1102 = vld [vmem:[#allocation2 + $0x22] sm:$0x3f]
        %v1103 = vld [vmem:[#allocation2 + $0x22] sm:$0xff]
        %v1104 = vld [vmem:[#allocation2 + $0x2a] sm:$0x3f]
        %v1105 = vld [vmem:[#allocation2 + $0xb] sm:$0xff]
        %v1106 = vld [vmem:[#allocation2 + $0x13] sm:$0xff]
        %v1107 = vld [vmem:[#allocation2 + $0x1b] sm:$0xff]
        %v1108 = vld [vmem:[#allocation2 + $0x23] sm:$0xff]
        %v1109 = vld [vmem:[#allocation2 + $0x2b] sm:$0x3f]
        %v1110 = vld [vmem:[#allocation2 + $0xc] sm:$0xff]
        %v1111 = vld [vmem:[#allocation2 + $0x14] sm:$0xff]
        %v1112 = vld [vmem:[#allocation2 + $0x1c] sm:$0xff]
        %v1113 = vld [vmem:[#allocation2 + $0x24] sm:$0xff]
        %v1114 = vld [vmem:[#allocation2 + $0x2c] sm:$0x3f]
        %v1115 = vld [vmem:[#allocation2 + $0x2c] sm:$0xff]
        %v1116 = vld [vmem:[#allocation2 + $0x34] sm:$0x3f]
        %v1117 = vld [vmem:[#allocation2 + $0x15] sm:$0xff]
        %v1118 = vld [vmem:[#allocation2 + $0x1d] sm:$0xff]
        %v1119 = vld [vmem:[#allocation2 + $0x25] sm:$0xff]
        %v1120 = vld [vmem:[#allocation2 + $0x2d] sm:$0xff]
        %v1121 = vld [vmem:[#allocation2 + $0x35] sm:$0x3f]
        %v1122 = vld [vmem:[#allocation2 + $0x16] sm:$0xff]
        %v1123 = vld [vmem:[#allocation2 + $0x1e] sm:$0xff]
        %v1124 = vld [vmem:[#allocation2 + $0x26] sm:$0xff]
        %v1125 = vld [vmem:[#allocation2 + $0x2e] sm:$0xff]
        %v1126 = vld [vmem:[#allocation2 + $0x36] sm:$0x3f]
        %1132 = vrot.lane.b32.xlu0 %v1093, 80
        %v1133 = vpop.permute.xlu0 %1132
        %1134 = vrot.lane.b32.xlu0 %v1094, 80
        %v1135 = vpop.permute.xlu0 %1134
        %1136 = vrot.lane.b32.xlu0 %v1095, 80
        %v1137 = vpop.permute.xlu0 %1136
        %1138 = vrot.lane.b32.xlu0 %v1096, 80
        %v1139 = vpop.permute.xlu0 %1138
        %1140 = vrot.lane.b32.xlu0 %v1097, 80
        %v1141 = vpop.permute.xlu0 %1140
        %1152 = vrot.lane.b32.xlu0 %v1098, 32
        %v1153 = vpop.permute.xlu0 %1152
        %1154 = vrot.lane.b32.xlu0 %v1099, 32
        %v1155 = vpop.permute.xlu0 %1154
        %1156 = vrot.lane.b32.xlu0 %v1100, 32
        %v1157 = vpop.permute.xlu0 %1156
        %1158 = vrot.lane.b32.xlu0 %v1101, 32
        %v1159 = vpop.permute.xlu0 %1158
        %1160 = vrot.lane.b32.xlu0 %v1102, 32
        %v1161 = vpop.permute.xlu0 %1160
        %1169 = vrot.lane.b32.xlu0 %v1099, 112
        %v1170 = vpop.permute.xlu0 %1169
        %1171 = vrot.lane.b32.xlu0 %v1100, 112
        %v1172 = vpop.permute.xlu0 %1171
        %1173 = vrot.lane.b32.xlu0 %v1101, 112
        %v1174 = vpop.permute.xlu0 %1173
        %1175 = vrot.lane.b32.xlu0 %v1103, 112
        %v1176 = vpop.permute.xlu0 %1175
        %1177 = vrot.lane.b32.xlu0 %v1104, 112
        %v1178 = vpop.permute.xlu0 %1177
        %1189 = vrot.lane.b32.xlu0 %v1105, 64
        %v1190 = vpop.permute.xlu0 %1189
        %1191 = vrot.lane.b32.xlu0 %v1106, 64
        %v1192 = vpop.permute.xlu0 %1191
        %1193 = vrot.lane.b32.xlu0 %v1107, 64
        %v1194 = vpop.permute.xlu0 %1193
        %1195 = vrot.lane.b32.xlu0 %v1108, 64
        %v1196 = vpop.permute.xlu0 %1195
        %1197 = vrot.lane.b32.xlu0 %v1109, 64
        %v1198 = vpop.permute.xlu0 %1197
        %1209 = vrot.lane.b32.xlu0 %v1110, 16
        %v1210 = vpop.permute.xlu0 %1209
        %1211 = vrot.lane.b32.xlu0 %v1111, 16
        %v1212 = vpop.permute.xlu0 %1211
        %1213 = vrot.lane.b32.xlu0 %v1112, 16
        %v1214 = vpop.permute.xlu0 %1213
        %1215 = vrot.lane.b32.xlu0 %v1113, 16
        %v1216 = vpop.permute.xlu0 %1215
        %1217 = vrot.lane.b32.xlu0 %v1114, 16
        %v1218 = vpop.permute.xlu0 %1217
        %1226 = vrot.lane.b32.xlu0 %v1111, 96
        %v1227 = vpop.permute.xlu0 %1226
        %1228 = vrot.lane.b32.xlu0 %v1112, 96
        %v1229 = vpop.permute.xlu0 %1228
        %1230 = vrot.lane.b32.xlu0 %v1113, 96
        %v1231 = vpop.permute.xlu0 %1230
        %1232 = vrot.lane.b32.xlu0 %v1115, 96
        %v1233 = vpop.permute.xlu0 %1232
        %1234 = vrot.lane.b32.xlu0 %v1116, 96
        %v1235 = vpop.permute.xlu0 %1234
        %1246 = vrot.lane.b32.xlu0 %v1117, 48
        %v1247 = vpop.permute.xlu0 %1246
        %1248 = vrot.lane.b32.xlu0 %v1118, 48
        %v1249 = vpop.permute.xlu0 %1248
        %1250 = vrot.lane.b32.xlu0 %v1119, 48
        %v1251 = vpop.permute.xlu0 %1250
        %1252 = vrot.lane.b32.xlu0 %v1120, 48
        %v1253 = vpop.permute.xlu0 %1252
        %1254 = vrot.lane.b32.xlu0 %v1121, 48
        %v1255 = vpop.permute.xlu0 %1254
        %v1261 = vsel %vm570, %v1088, %v1133
        %v1262 = vsel %vm570, %v1089, %v1135
        %v1263 = vsel %vm570, %v1090, %v1137
        %v1264 = vsel %vm570, %v1091, %v1139
        %v1265 = vsel %vm570, %v1092, %v1141
        %v1266 = vsel %vm836, %v1133, %v1153
        %v1267 = vsel %vm836, %v1135, %v1155
        %v1268 = vsel %vm836, %v1137, %v1157
        %v1269 = vsel %vm836, %v1139, %v1159
        %v1270 = vsel %vm836, %v1141, %v1161
        %v1271 = vsel %vm848, %v1266, %v1170
        %v1272 = vsel %vm848, %v1267, %v1172
        %v1273 = vsel %vm848, %v1268, %v1174
        %v1274 = vsel %vm848, %v1269, %v1176
        %v1275 = vsel %vm848, %v1270, %v1178
        %v1276 = vsel %vm860, %v1170, %v1190
        %v1277 = vsel %vm860, %v1172, %v1192
        %v1278 = vsel %vm860, %v1174, %v1194
        %v1279 = vsel %vm860, %v1176, %v1196
        %v1280 = vsel %vm860, %v1178, %v1198
        %vm1281 = vcmask 130048
        %v1282 = vsel %vm1281, %v1190, %v1210
        %v1283 = vsel %vm1281, %v1192, %v1212
        %v1284 = vsel %vm1281, %v1194, %v1214
        %v1285 = vsel %vm1281, %v1196, %v1216
        %v1286 = vsel %vm1281, %v1198, %v1218
        %vm1287 = vcmask 785408
        %v1288 = vsel %vm1287, %v1282, %v1227
        %v1289 = vsel %vm1287, %v1283, %v1229
        %v1290 = vsel %vm1287, %v1284, %v1231
        %v1291 = vsel %vm1287, %v1285, %v1233
        %v1292 = vsel %vm1287, %v1286, %v1235
        %vm1293 = vcmask 392192
        %v1294 = vsel %vm1293, %v1227, %v1247
        %v1295 = vsel %vm1293, %v1229, %v1249
        %v1296 = vsel %vm1293, %v1231, %v1251
        %v1297 = vsel %vm1293, %v1233, %v1253
        %v1298 = vsel %vm1293, %v1235, %v1255
        %v1300 = vperm.slane %v1087, 0
        %v1303 = vsel %vm570, %v1122, 0
        %v1306 = vsel %vm570, %v1123, 0
        %v1309 = vsel %vm570, %v1124, 0
        %v1312 = vsel %vm570, %v1125, 0
        %v1315 = vsel %vm570, %v1126, 0
        %1317 = vmatpush.msra.mxu0 %v1012
        %1318 = vmatpush.msra.mxu0 %v1011
        %1319 = vmatpush.msra.mxu0 %v1010
        %1320 = vmatpush.msra.mxu0 %v1009
        %1321 = vmatpush.msra.mxu0 %v1008
        %1322 = vmatpush.msra.mxu0 %v1007
        %1323 = vmatpush.msra.mxu0 %v1006
        %1324 = vmatpush.msra.mxu0 %v1005
        %1325 = vmatpush.msra.mxu0 %v1004
        %1326 = vmatpush.msra.mxu0 %v1003
        %1327 = vmatpush.msra.mxu0 %v1002
        %1328 = vmatpush.msra.mxu0 %v1001
        %1329 = vmatpush.msra.mxu0 %v1000
        %1330 = vmatpush.msra.mxu0 %v999
        %1331 = vmatpush.msra.mxu0 %v998
        %1332 = vmatpush.msra.mxu0 %v997
        %1333 = vmatmul.f32.gmra.mxu0 %v1261
        %v1334 = vpop.f32.mrf.mxu0
        %v1335 = vadd.f32 %v1300, %v1334
        %1336 = vmatmul.f32.gmra.mxu0 %v1262
        %v1337 = vpop.f32.mrf.mxu0
        %v1338 = vadd.f32 %v1300, %v1337
        %1339 = vmatmul.f32.gmra.mxu0 %v1263
        %v1340 = vpop.f32.mrf.mxu0
        %v1341 = vadd.f32 %v1300, %v1340
        %1342 = vmatmul.f32.gmra.mxu0 %v1264
        %v1343 = vpop.f32.mrf.mxu0
        %v1344 = vadd.f32 %v1300, %v1343
        %1345 = vmatmul.f32.gmra.mxu0 %v1265
        %v1346 = vpop.f32.mrf.mxu0
        %v1347 = vadd.f32 %v1300, %v1346
        %1348 = vdwg.mxu0
        %1349 = vmatpush.msra.mxu0 %v1028
        %1350 = vmatpush.msra.mxu0 %v1027
        %1351 = vmatpush.msra.mxu0 %v1026
        %1352 = vmatpush.msra.mxu0 %v1025
        %1353 = vmatpush.msra.mxu0 %v1024
        %1354 = vmatpush.msra.mxu0 %v1023
        %1355 = vmatpush.msra.mxu0 %v1022
        %1356 = vmatpush.msra.mxu0 %v1021
        %1357 = vmatpush.msra.mxu0 %v1020
        %1358 = vmatpush.msra.mxu0 %v1019
        %1359 = vmatpush.msra.mxu0 %v1018
        %1360 = vmatpush.msra.mxu0 %v1017
        %1361 = vmatpush.msra.mxu0 %v1016
        %1362 = vmatpush.msra.mxu0 %v1015
        %1363 = vmatpush.msra.mxu0 %v1014
        %1364 = vmatpush.msra.mxu0 %v1013
        %1365 = vmatmul.f32.gmra.mxu0 %v1271
        %v1366 = vpop.f32.mrf.mxu0
        %v1367 = vadd.f32 %v1335, %v1366
        %1368 = vmatmul.f32.gmra.mxu0 %v1272
        %v1369 = vpop.f32.mrf.mxu0
        %v1370 = vadd.f32 %v1338, %v1369
        %1371 = vmatmul.f32.gmra.mxu0 %v1273
        %v1372 = vpop.f32.mrf.mxu0
        %v1373 = vadd.f32 %v1341, %v1372
        %1374 = vmatmul.f32.gmra.mxu0 %v1274
        %v1375 = vpop.f32.mrf.mxu0
        %v1376 = vadd.f32 %v1344, %v1375
        %1377 = vmatmul.f32.gmra.mxu0 %v1275
        %v1378 = vpop.f32.mrf.mxu0
        %v1379 = vadd.f32 %v1347, %v1378
        %1380 = vdwg.mxu0
        %1381 = vmatpush.msra.mxu0 %v1044
        %1382 = vmatpush.msra.mxu0 %v1043
        %1383 = vmatpush.msra.mxu0 %v1042
        %1384 = vmatpush.msra.mxu0 %v1041
        %1385 = vmatpush.msra.mxu0 %v1040
        %1386 = vmatpush.msra.mxu0 %v1039
        %1387 = vmatpush.msra.mxu0 %v1038
        %1388 = vmatpush.msra.mxu0 %v1037
        %1389 = vmatpush.msra.mxu0 %v1036
        %1390 = vmatpush.msra.mxu0 %v1035
        %1391 = vmatpush.msra.mxu0 %v1034
        %1392 = vmatpush.msra.mxu0 %v1033
        %1393 = vmatpush.msra.mxu0 %v1032
        %1394 = vmatpush.msra.mxu0 %v1031
        %1395 = vmatpush.msra.mxu0 %v1030
        %1396 = vmatpush.msra.mxu0 %v1029
        %1397 = vmatmul.f32.gmra.mxu0 %v1276
        %v1398 = vpop.f32.mrf.mxu0
        %v1399 = vadd.f32 %v1367, %v1398
        %1400 = vmatmul.f32.gmra.mxu0 %v1277
        %v1401 = vpop.f32.mrf.mxu0
        %v1402 = vadd.f32 %v1370, %v1401
        %1403 = vmatmul.f32.gmra.mxu0 %v1278
        %v1404 = vpop.f32.mrf.mxu0
        %v1405 = vadd.f32 %v1373, %v1404
        %1406 = vmatmul.f32.gmra.mxu0 %v1279
        %v1407 = vpop.f32.mrf.mxu0
        %v1408 = vadd.f32 %v1376, %v1407
        %1409 = vmatmul.f32.gmra.mxu0 %v1280
        %v1410 = vpop.f32.mrf.mxu0
        %v1411 = vadd.f32 %v1379, %v1410
        %1412 = vdwg.mxu0
        %1413 = vmatpush.msra.mxu0 %v1060
        %1414 = vmatpush.msra.mxu0 %v1059
        %1415 = vmatpush.msra.mxu0 %v1058
        %1416 = vmatpush.msra.mxu0 %v1057
        %1417 = vmatpush.msra.mxu0 %v1056
        %1418 = vmatpush.msra.mxu0 %v1055
        %1419 = vmatpush.msra.mxu0 %v1054
        %1420 = vmatpush.msra.mxu0 %v1053
        %1421 = vmatpush.msra.mxu0 %v1052
        %1422 = vmatpush.msra.mxu0 %v1051
        %1423 = vmatpush.msra.mxu0 %v1050
        %1424 = vmatpush.msra.mxu0 %v1049
        %1425 = vmatpush.msra.mxu0 %v1048
        %1426 = vmatpush.msra.mxu0 %v1047
        %1427 = vmatpush.msra.mxu0 %v1046
        %1428 = vmatpush.msra.mxu0 %v1045
        %1429 = vmatmul.f32.gmra.mxu0 %v1288
        %v1430 = vpop.f32.mrf.mxu0
        %v1431 = vadd.f32 %v1399, %v1430
        %1432 = vmatmul.f32.gmra.mxu0 %v1289
        %v1433 = vpop.f32.mrf.mxu0
        %v1434 = vadd.f32 %v1402, %v1433
        %1435 = vmatmul.f32.gmra.mxu0 %v1290
        %v1436 = vpop.f32.mrf.mxu0
        %v1437 = vadd.f32 %v1405, %v1436
        %1438 = vmatmul.f32.gmra.mxu0 %v1291
        %v1439 = vpop.f32.mrf.mxu0
        %v1440 = vadd.f32 %v1408, %v1439
        %1441 = vmatmul.f32.gmra.mxu0 %v1292
        %v1442 = vpop.f32.mrf.mxu0
        %v1443 = vadd.f32 %v1411, %v1442
        %1444 = vdwg.mxu0
        %1445 = vmatpush.msra.mxu0 %v1076
        %1446 = vmatpush.msra.mxu0 %v1075
        %1447 = vmatpush.msra.mxu0 %v1074
        %1448 = vmatpush.msra.mxu0 %v1073
        %1449 = vmatpush.msra.mxu0 %v1072
        %1450 = vmatpush.msra.mxu0 %v1071
        %1451 = vmatpush.msra.mxu0 %v1070
        %1452 = vmatpush.msra.mxu0 %v1069
        %1453 = vmatpush.msra.mxu0 %v1068
        %1454 = vmatpush.msra.mxu0 %v1067
        %1455 = vmatpush.msra.mxu0 %v1066
        %1456 = vmatpush.msra.mxu0 %v1065
        %1457 = vmatpush.msra.mxu0 %v1064
        %1458 = vmatpush.msra.mxu0 %v1063
        %1459 = vmatpush.msra.mxu0 %v1062
        %1460 = vmatpush.msra.mxu0 %v1061
        %1461 = vmatmul.f32.gmra.mxu0 %v1294
        %v1462 = vpop.f32.mrf.mxu0
        %v1463 = vadd.f32 %v1431, %v1462
        %1464 = vmatmul.f32.gmra.mxu0 %v1295
        %v1465 = vpop.f32.mrf.mxu0
        %v1466 = vadd.f32 %v1434, %v1465
        %1467 = vmatmul.f32.gmra.mxu0 %v1296
        %v1468 = vpop.f32.mrf.mxu0
        %v1469 = vadd.f32 %v1437, %v1468
        %1470 = vmatmul.f32.gmra.mxu0 %v1297
        %v1471 = vpop.f32.mrf.mxu0
        %v1472 = vadd.f32 %v1440, %v1471
        %1473 = vmatmul.f32.gmra.mxu0 %v1298
        %v1474 = vpop.f32.mrf.mxu0
        %v1475 = vadd.f32 %v1443, %v1474
        %1476 = vdwg.mxu0
        %1477 = vmatpush.msra.mxu0 0.0
        %1478 = vmatpush.msra.mxu0 0.0
        %1479 = vmatpush.msra.mxu0 0.0
        %1480 = vmatpush.msra.mxu0 0.0
        %1481 = vmatpush.msra.mxu0 0.0
        %1482 = vmatpush.msra.mxu0 0.0
        %1483 = vmatpush.msra.mxu0 %v1086
        %1484 = vmatpush.msra.mxu0 %v1085
        %1485 = vmatpush.msra.mxu0 %v1084
        %1486 = vmatpush.msra.mxu0 %v1083
        %1487 = vmatpush.msra.mxu0 %v1082
        %1488 = vmatpush.msra.mxu0 %v1081
        %1489 = vmatpush.msra.mxu0 %v1080
        %1490 = vmatpush.msra.mxu0 %v1079
        %1491 = vmatpush.msra.mxu0 %v1078
        %1492 = vmatpush.msra.mxu0 %v1077
        %1493 = vmatmul.f32.gmra.mxu0 %v1303
        %v1494 = vpop.f32.mrf.mxu0
        %v1495 = vadd.f32 %v1463, %v1494
        %1496 = vmatmul.f32.gmra.mxu0 %v1306
        %v1497 = vpop.f32.mrf.mxu0
        %v1498 = vadd.f32 %v1466, %v1497
        %1499 = vmatmul.f32.gmra.mxu0 %v1309
        %v1500 = vpop.f32.mrf.mxu0
        %v1501 = vadd.f32 %v1469, %v1500
        %1502 = vmatmul.f32.gmra.mxu0 %v1312
        %v1503 = vpop.f32.mrf.mxu0
        %v1504 = vadd.f32 %v1472, %v1503
        %1505 = vmatmul.f32.gmra.mxu0 %v1315
        %v1506 = vpop.f32.mrf.mxu0
        %v1507 = vadd.f32 %v1475, %v1506
        %1508 = vdwg.mxu0
        %v1509 = vmax.f32 %v1495, 0.0
        %v1510 = vmax.f32 %v1498, 0.0
        %v1511 = vmax.f32 %v1501, 0.0
        %v1512 = vmax.f32 %v1504, 0.0
        %v1513 = vmax.f32 %v1507, 0.0
        %v1514 = vmul.f32 %v1509, %v565
        %v1515 = vmul.f32 %v1510, %v566
        %v1516 = vmul.f32 %v1511, %v567
        %v1517 = vmul.f32 %v1512, %v568
        %v1518 = vmul.f32 %v1513, %v569
        %v1519 = vadd.f32 %v1514, %v1105
        %v1520 = vadd.f32 %v1515, %v1106
        %v1521 = vadd.f32 %v1516, %v1107
        %v1522 = vadd.f32 %v1517, %v1108
        %v1523 = vadd.f32 %v1518, %v1109
        %1524 = vst.msk [vmem:[#allocation2 + $0xb] sm:$0xff] %vm570, %v1519
        %1525 = vst.msk [vmem:[#allocation2 + $0x13] sm:$0xff] %vm570, %v1520
        %1526 = vst.msk [vmem:[#allocation2 + $0x1b] sm:$0xff] %vm570, %v1521
        %1527 = vst.msk [vmem:[#allocation2 + $0x23] sm:$0xff] %vm570, %v1522
        %1528 = vst.msk [vmem:[#allocation2 + $0x2b] sm:$0x3f] %vm995, %v1523
        %s1529 = scalar_lea.vmem [#allocation7], 720
        %v1530 = vld [vmem:[%s1529] sm:$0xff]
        %v1531 = vld [vmem:[%s1529 + $0x8] sm:$0xff]
        %v1532 = vld [vmem:[%s1529 + $0x10] sm:$0xff]
        %v1533 = vld [vmem:[%s1529 + $0x18] sm:$0xff]
        %v1534 = vld [vmem:[%s1529 + $0x20] sm:$0xff]
        %v1535 = vld [vmem:[%s1529 + $0x28] sm:$0xff]
        %v1536 = vld [vmem:[%s1529 + $0x30] sm:$0xff]
        %v1537 = vld [vmem:[%s1529 + $0x38] sm:$0xff]
        %v1538 = vld [vmem:[%s1529 + $0x40] sm:$0xff]
        %v1539 = vld [vmem:[%s1529 + $0x48] sm:$0xff]
        %v1540 = vld [vmem:[%s1529 + $0x50] sm:$0xff]
        %v1541 = vld [vmem:[%s1529 + $0x58] sm:$0xff]
        %v1542 = vld [vmem:[%s1529 + $0x60] sm:$0xff]
        %v1543 = vld [vmem:[%s1529 + $0x68] sm:$0xff]
        %v1544 = vld [vmem:[%s1529 + $0x70] sm:$0xff]
        %v1545 = vld [vmem:[%s1529 + $0x78] sm:$0xff]
        %v1546 = vld [vmem:[%s1529 + $0x80] sm:$0xff]
        %v1547 = vld [vmem:[%s1529 + $0x88] sm:$0xff]
        %v1548 = vld [vmem:[%s1529 + $0x90] sm:$0xff]
        %v1549 = vld [vmem:[%s1529 + $0x98] sm:$0xff]
        %v1550 = vld [vmem:[%s1529 + $0xa0] sm:$0xff]
        %v1551 = vld [vmem:[%s1529 + $0xa8] sm:$0xff]
        %v1552 = vld [vmem:[%s1529 + $0xb0] sm:$0xff]
        %v1553 = vld [vmem:[%s1529 + $0xb8] sm:$0xff]
        %v1554 = vld [vmem:[%s1529 + $0xc0] sm:$0xff]
        %v1555 = vld [vmem:[%s1529 + $0xc8] sm:$0xff]
        %v1556 = vld [vmem:[%s1529 + $0xd0] sm:$0xff]
        %v1557 = vld [vmem:[%s1529 + $0xd8] sm:$0xff]
        %v1558 = vld [vmem:[%s1529 + $0xe0] sm:$0xff]
        %v1559 = vld [vmem:[%s1529 + $0xe8] sm:$0xff]
        %v1560 = vld [vmem:[%s1529 + $0xf0] sm:$0xff]
        %v1561 = vld [vmem:[%s1529 + $0xf8] sm:$0xff]
        %v1562 = vld [vmem:[%s1529 + $0x100] sm:$0xff]
        %v1563 = vld [vmem:[%s1529 + $0x108] sm:$0xff]
        %v1564 = vld [vmem:[%s1529 + $0x110] sm:$0xff]
        %v1565 = vld [vmem:[%s1529 + $0x118] sm:$0xff]
        %v1566 = vld [vmem:[%s1529 + $0x120] sm:$0xff]
        %v1567 = vld [vmem:[%s1529 + $0x128] sm:$0xff]
        %v1568 = vld [vmem:[%s1529 + $0x130] sm:$0xff]
        %v1569 = vld [vmem:[%s1529 + $0x138] sm:$0xff]
        %v1570 = vld [vmem:[%s1529 + $0x140] sm:$0xff]
        %v1571 = vld [vmem:[%s1529 + $0x148] sm:$0xff]
        %v1572 = vld [vmem:[%s1529 + $0x150] sm:$0xff]
        %v1573 = vld [vmem:[%s1529 + $0x158] sm:$0xff]
        %v1574 = vld [vmem:[%s1529 + $0x160] sm:$0xff]
        %v1575 = vld [vmem:[%s1529 + $0x168] sm:$0xff]
        %v1576 = vld [vmem:[%s1529 + $0x170] sm:$0xff]
        %v1577 = vld [vmem:[%s1529 + $0x178] sm:$0xff]
        %v1578 = vld [vmem:[%s1529 + $0x180] sm:$0xff]
        %v1579 = vld [vmem:[%s1529 + $0x188] sm:$0xff]
        %v1580 = vld [vmem:[%s1529 + $0x190] sm:$0xff]
        %v1581 = vld [vmem:[%s1529 + $0x198] sm:$0xff]
        %v1582 = vld [vmem:[%s1529 + $0x1a0] sm:$0xff]
        %v1583 = vld [vmem:[%s1529 + $0x1a8] sm:$0xff]
        %v1584 = vld [vmem:[%s1529 + $0x1b0] sm:$0xff]
        %v1585 = vld [vmem:[%s1529 + $0x1b8] sm:$0xff]
        %v1586 = vld [vmem:[%s1529 + $0x1c0] sm:$0xff]
        %v1587 = vld [vmem:[%s1529 + $0x1c8] sm:$0xff]
        %v1588 = vld [vmem:[%s1529 + $0x1d0] sm:$0xff]
        %v1589 = vld [vmem:[%s1529 + $0x1d8] sm:$0xff]
        %v1590 = vld [vmem:[%s1529 + $0x1e0] sm:$0xff]
        %v1591 = vld [vmem:[%s1529 + $0x1e8] sm:$0xff]
        %v1592 = vld [vmem:[%s1529 + $0x1f0] sm:$0xff]
        %v1593 = vld [vmem:[%s1529 + $0x1f8] sm:$0xff]
        %v1594 = vld [vmem:[%s1529 + $0x200] sm:$0xff]
        %v1595 = vld [vmem:[%s1529 + $0x208] sm:$0xff]
        %v1596 = vld [vmem:[%s1529 + $0x210] sm:$0xff]
        %v1597 = vld [vmem:[%s1529 + $0x218] sm:$0xff]
        %v1598 = vld [vmem:[%s1529 + $0x220] sm:$0xff]
        %v1599 = vld [vmem:[%s1529 + $0x228] sm:$0xff]
        %v1600 = vld [vmem:[%s1529 + $0x230] sm:$0xff]
        %v1601 = vld [vmem:[%s1529 + $0x238] sm:$0xff]
        %v1602 = vld [vmem:[%s1529 + $0x240] sm:$0xff]
        %v1603 = vld [vmem:[%s1529 + $0x248] sm:$0xff]
        %v1604 = vld [vmem:[%s1529 + $0x250] sm:$0xff]
        %v1605 = vld [vmem:[%s1529 + $0x258] sm:$0xff]
        %v1606 = vld [vmem:[%s1529 + $0x260] sm:$0xff]
        %v1607 = vld [vmem:[%s1529 + $0x268] sm:$0xff]
        %v1608 = vld [vmem:[%s1529 + $0x270] sm:$0xff]
        %v1609 = vld [vmem:[%s1529 + $0x278] sm:$0xff]
        %v1610 = vld [vmem:[%s1529 + $0x280] sm:$0xff]
        %v1611 = vld [vmem:[%s1529 + $0x288] sm:$0xff]
        %v1612 = vld [vmem:[%s1529 + $0x290] sm:$0xff]
        %v1613 = vld [vmem:[%s1529 + $0x298] sm:$0xff]
        %v1614 = vld [vmem:[%s1529 + $0x2a0] sm:$0xff]
        %v1615 = vld [vmem:[%s1529 + $0x2a8] sm:$0xff]
        %v1616 = vld [vmem:[%s1529 + $0x2b0] sm:$0xff]
        %v1617 = vld [vmem:[%s1529 + $0x2b8] sm:$0xff]
        %v1618 = vld [vmem:[%s1529 + $0x2c0] sm:$0xff]
        %v1619 = vld [vmem:[%s1529 + $0x2c8] sm:$0xff]
        %s1620 = scalar_lea.vmem [#allocation8], 1
        %v1621 = vld [vmem:[%s1620] sm:$0x1]
        %v1622 = vld [vmem:[#allocation2] sm:$0xff]
        %v1623 = vld [vmem:[#allocation2 + $0x8] sm:$0xff]
        %v1624 = vld [vmem:[#allocation2 + $0x10] sm:$0xff]
        %v1625 = vld [vmem:[#allocation2 + $0x18] sm:$0xff]
        %v1626 = vld [vmem:[#allocation2 + $0x20] sm:$0x3f]
        %v1627 = vld [vmem:[#allocation2 + $0x1] sm:$0xff]
        %v1628 = vld [vmem:[#allocation2 + $0x9] sm:$0xff]
        %v1629 = vld [vmem:[#allocation2 + $0x11] sm:$0xff]
        %v1630 = vld [vmem:[#allocation2 + $0x19] sm:$0xff]
        %v1631 = vld [vmem:[#allocation2 + $0x21] sm:$0x3f]
        %v1632 = vld [vmem:[#allocation2 + $0x2] sm:$0xff]
        %v1633 = vld [vmem:[#allocation2 + $0xa] sm:$0xff]
        %v1634 = vld [vmem:[#allocation2 + $0x12] sm:$0xff]
        %v1635 = vld [vmem:[#allocation2 + $0x1a] sm:$0xff]
        %v1636 = vld [vmem:[#allocation2 + $0x22] sm:$0x3f]
        %v1637 = vld [vmem:[#allocation2 + $0x22] sm:$0xff]
        %v1638 = vld [vmem:[#allocation2 + $0x2a] sm:$0x3f]
        %v1639 = vld [vmem:[#allocation2 + $0xb] sm:$0xff]
        %v1640 = vld [vmem:[#allocation2 + $0x13] sm:$0xff]
        %v1641 = vld [vmem:[#allocation2 + $0x1b] sm:$0xff]
        %v1642 = vld [vmem:[#allocation2 + $0x23] sm:$0xff]
        %v1643 = vld [vmem:[#allocation2 + $0x2b] sm:$0x3f]
        %v1644 = vld [vmem:[#allocation2 + $0xc] sm:$0xff]
        %v1645 = vld [vmem:[#allocation2 + $0x14] sm:$0xff]
        %v1646 = vld [vmem:[#allocation2 + $0x1c] sm:$0xff]
        %v1647 = vld [vmem:[#allocation2 + $0x24] sm:$0xff]
        %v1648 = vld [vmem:[#allocation2 + $0x2c] sm:$0x3f]
        %v1649 = vld [vmem:[#allocation2 + $0x2c] sm:$0xff]
        %v1650 = vld [vmem:[#allocation2 + $0x34] sm:$0x3f]
        %v1651 = vld [vmem:[#allocation2 + $0x15] sm:$0xff]
        %v1652 = vld [vmem:[#allocation2 + $0x1d] sm:$0xff]
        %v1653 = vld [vmem:[#allocation2 + $0x25] sm:$0xff]
        %v1654 = vld [vmem:[#allocation2 + $0x2d] sm:$0xff]
        %v1655 = vld [vmem:[#allocation2 + $0x35] sm:$0x3f]
        %v1656 = vld [vmem:[#allocation2 + $0x16] sm:$0xff]
        %v1657 = vld [vmem:[#allocation2 + $0x1e] sm:$0xff]
        %v1658 = vld [vmem:[#allocation2 + $0x26] sm:$0xff]
        %v1659 = vld [vmem:[#allocation2 + $0x2e] sm:$0xff]
        %v1660 = vld [vmem:[#allocation2 + $0x36] sm:$0x3f]
        %1666 = vrot.lane.b32.xlu0 %v1627, 80
        %v1667 = vpop.permute.xlu0 %1666
        %1668 = vrot.lane.b32.xlu0 %v1628, 80
        %v1669 = vpop.permute.xlu0 %1668
        %1670 = vrot.lane.b32.xlu0 %v1629, 80
        %v1671 = vpop.permute.xlu0 %1670
        %1672 = vrot.lane.b32.xlu0 %v1630, 80
        %v1673 = vpop.permute.xlu0 %1672
        %1674 = vrot.lane.b32.xlu0 %v1631, 80
        %v1675 = vpop.permute.xlu0 %1674
        %1686 = vrot.lane.b32.xlu0 %v1632, 32
        %v1687 = vpop.permute.xlu0 %1686
        %1688 = vrot.lane.b32.xlu0 %v1633, 32
        %v1689 = vpop.permute.xlu0 %1688
        %1690 = vrot.lane.b32.xlu0 %v1634, 32
        %v1691 = vpop.permute.xlu0 %1690
        %1692 = vrot.lane.b32.xlu0 %v1635, 32
        %v1693 = vpop.permute.xlu0 %1692
        %1694 = vrot.lane.b32.xlu0 %v1636, 32
        %v1695 = vpop.permute.xlu0 %1694
        %1703 = vrot.lane.b32.xlu0 %v1633, 112
        %v1704 = vpop.permute.xlu0 %1703
        %1705 = vrot.lane.b32.xlu0 %v1634, 112
        %v1706 = vpop.permute.xlu0 %1705
        %1707 = vrot.lane.b32.xlu0 %v1635, 112
        %v1708 = vpop.permute.xlu0 %1707
        %1709 = vrot.lane.b32.xlu0 %v1637, 112
        %v1710 = vpop.permute.xlu0 %1709
        %1711 = vrot.lane.b32.xlu0 %v1638, 112
        %v1712 = vpop.permute.xlu0 %1711
        %1723 = vrot.lane.b32.xlu0 %v1639, 64
        %v1724 = vpop.permute.xlu0 %1723
        %1725 = vrot.lane.b32.xlu0 %v1640, 64
        %v1726 = vpop.permute.xlu0 %1725
        %1727 = vrot.lane.b32.xlu0 %v1641, 64
        %v1728 = vpop.permute.xlu0 %1727
        %1729 = vrot.lane.b32.xlu0 %v1642, 64
        %v1730 = vpop.permute.xlu0 %1729
        %1731 = vrot.lane.b32.xlu0 %v1643, 64
        %v1732 = vpop.permute.xlu0 %1731
        %1743 = vrot.lane.b32.xlu0 %v1644, 16
        %v1744 = vpop.permute.xlu0 %1743
        %1745 = vrot.lane.b32.xlu0 %v1645, 16
        %v1746 = vpop.permute.xlu0 %1745
        %1747 = vrot.lane.b32.xlu0 %v1646, 16
        %v1748 = vpop.permute.xlu0 %1747
        %1749 = vrot.lane.b32.xlu0 %v1647, 16
        %v1750 = vpop.permute.xlu0 %1749
        %1751 = vrot.lane.b32.xlu0 %v1648, 16
        %v1752 = vpop.permute.xlu0 %1751
        %1760 = vrot.lane.b32.xlu0 %v1645, 96
        %v1761 = vpop.permute.xlu0 %1760
        %1762 = vrot.lane.b32.xlu0 %v1646, 96
        %v1763 = vpop.permute.xlu0 %1762
        %1764 = vrot.lane.b32.xlu0 %v1647, 96
        %v1765 = vpop.permute.xlu0 %1764
        %1766 = vrot.lane.b32.xlu0 %v1649, 96
        %v1767 = vpop.permute.xlu0 %1766
        %1768 = vrot.lane.b32.xlu0 %v1650, 96
        %v1769 = vpop.permute.xlu0 %1768
        %1780 = vrot.lane.b32.xlu0 %v1651, 48
        %v1781 = vpop.permute.xlu0 %1780
        %1782 = vrot.lane.b32.xlu0 %v1652, 48
        %v1783 = vpop.permute.xlu0 %1782
        %1784 = vrot.lane.b32.xlu0 %v1653, 48
        %v1785 = vpop.permute.xlu0 %1784
        %1786 = vrot.lane.b32.xlu0 %v1654, 48
        %v1787 = vpop.permute.xlu0 %1786
        %1788 = vrot.lane.b32.xlu0 %v1655, 48
        %v1789 = vpop.permute.xlu0 %1788
        %v1795 = vsel %vm570, %v1622, %v1667
        %v1796 = vsel %vm570, %v1623, %v1669
        %v1797 = vsel %vm570, %v1624, %v1671
        %v1798 = vsel %vm570, %v1625, %v1673
        %v1799 = vsel %vm570, %v1626, %v1675
        %v1800 = vsel %vm836, %v1667, %v1687
        %v1801 = vsel %vm836, %v1669, %v1689
        %v1802 = vsel %vm836, %v1671, %v1691
        %v1803 = vsel %vm836, %v1673, %v1693
        %v1804 = vsel %vm836, %v1675, %v1695
        %v1805 = vsel %vm848, %v1800, %v1704
        %v1806 = vsel %vm848, %v1801, %v1706
        %v1807 = vsel %vm848, %v1802, %v1708
        %v1808 = vsel %vm848, %v1803, %v1710
        %v1809 = vsel %vm848, %v1804, %v1712
        %v1810 = vsel %vm860, %v1704, %v1724
        %v1811 = vsel %vm860, %v1706, %v1726
        %v1812 = vsel %vm860, %v1708, %v1728
        %v1813 = vsel %vm860, %v1710, %v1730
        %v1814 = vsel %vm860, %v1712, %v1732
        %v1815 = vsel %vm1281, %v1724, %v1744
        %v1816 = vsel %vm1281, %v1726, %v1746
        %v1817 = vsel %vm1281, %v1728, %v1748
        %v1818 = vsel %vm1281, %v1730, %v1750
        %v1819 = vsel %vm1281, %v1732, %v1752
        %v1820 = vsel %vm1287, %v1815, %v1761
        %v1821 = vsel %vm1287, %v1816, %v1763
        %v1822 = vsel %vm1287, %v1817, %v1765
        %v1823 = vsel %vm1287, %v1818, %v1767
        %v1824 = vsel %vm1287, %v1819, %v1769
        %v1825 = vsel %vm1293, %v1761, %v1781
        %v1826 = vsel %vm1293, %v1763, %v1783
        %v1827 = vsel %vm1293, %v1765, %v1785
        %v1828 = vsel %vm1293, %v1767, %v1787
        %v1829 = vsel %vm1293, %v1769, %v1789
        %v1831 = vperm.slane %v1621, 0
        %v1834 = vsel %vm570, %v1656, 0
        %v1837 = vsel %vm570, %v1657, 0
        %v1840 = vsel %vm570, %v1658, 0
        %v1843 = vsel %vm570, %v1659, 0
        %v1846 = vsel %vm570, %v1660, 0
        %1848 = vmatpush.msra.mxu0 %v1545
        %1849 = vmatpush.msra.mxu0 %v1544
        %1850 = vmatpush.msra.mxu0 %v1543
        %1851 = vmatpush.msra.mxu0 %v1542
        %1852 = vmatpush.msra.mxu0 %v1541
        %1853 = vmatpush.msra.mxu0 %v1540
        %1854 = vmatpush.msra.mxu0 %v1539
        %1855 = vmatpush.msra.mxu0 %v1538
        %1856 = vmatpush.msra.mxu0 %v1537
        %1857 = vmatpush.msra.mxu0 %v1536
        %1858 = vmatpush.msra.mxu0 %v1535
        %1859 = vmatpush.msra.mxu0 %v1534
        %1860 = vmatpush.msra.mxu0 %v1533
        %1861 = vmatpush.msra.mxu0 %v1532
        %1862 = vmatpush.msra.mxu0 %v1531
        %1863 = vmatpush.msra.mxu0 %v1530
        %1864 = vmatmul.f32.gmra.mxu0 %v1795
        %v1865 = vpop.f32.mrf.mxu0
        %v1866 = vadd.f32 %v1831, %v1865
        %1867 = vmatmul.f32.gmra.mxu0 %v1796
        %v1868 = vpop.f32.mrf.mxu0
        %v1869 = vadd.f32 %v1831, %v1868
        %1870 = vmatmul.f32.gmra.mxu0 %v1797
        %v1871 = vpop.f32.mrf.mxu0
        %v1872 = vadd.f32 %v1831, %v1871
        %1873 = vmatmul.f32.gmra.mxu0 %v1798
        %v1874 = vpop.f32.mrf.mxu0
        %v1875 = vadd.f32 %v1831, %v1874
        %1876 = vmatmul.f32.gmra.mxu0 %v1799
        %v1877 = vpop.f32.mrf.mxu0
        %v1878 = vadd.f32 %v1831, %v1877
        %1879 = vdwg.mxu0
        %1880 = vmatpush.msra.mxu0 %v1561
        %1881 = vmatpush.msra.mxu0 %v1560
        %1882 = vmatpush.msra.mxu0 %v1559
        %1883 = vmatpush.msra.mxu0 %v1558
        %1884 = vmatpush.msra.mxu0 %v1557
        %1885 = vmatpush.msra.mxu0 %v1556
        %1886 = vmatpush.msra.mxu0 %v1555
        %1887 = vmatpush.msra.mxu0 %v1554
        %1888 = vmatpush.msra.mxu0 %v1553
        %1889 = vmatpush.msra.mxu0 %v1552
        %1890 = vmatpush.msra.mxu0 %v1551
        %1891 = vmatpush.msra.mxu0 %v1550
        %1892 = vmatpush.msra.mxu0 %v1549
        %1893 = vmatpush.msra.mxu0 %v1548
        %1894 = vmatpush.msra.mxu0 %v1547
        %1895 = vmatpush.msra.mxu0 %v1546
        %1896 = vmatmul.f32.gmra.mxu0 %v1805
        %v1897 = vpop.f32.mrf.mxu0
        %v1898 = vadd.f32 %v1866, %v1897
        %1899 = vmatmul.f32.gmra.mxu0 %v1806
        %v1900 = vpop.f32.mrf.mxu0
        %v1901 = vadd.f32 %v1869, %v1900
        %1902 = vmatmul.f32.gmra.mxu0 %v1807
        %v1903 = vpop.f32.mrf.mxu0
        %v1904 = vadd.f32 %v1872, %v1903
        %1905 = vmatmul.f32.gmra.mxu0 %v1808
        %v1906 = vpop.f32.mrf.mxu0
        %v1907 = vadd.f32 %v1875, %v1906
        %1908 = vmatmul.f32.gmra.mxu0 %v1809
        %v1909 = vpop.f32.mrf.mxu0
        %v1910 = vadd.f32 %v1878, %v1909
        %1911 = vdwg.mxu0
        %1912 = vmatpush.msra.mxu0 %v1577
        %1913 = vmatpush.msra.mxu0 %v1576
        %1914 = vmatpush.msra.mxu0 %v1575
        %1915 = vmatpush.msra.mxu0 %v1574
        %1916 = vmatpush.msra.mxu0 %v1573
        %1917 = vmatpush.msra.mxu0 %v1572
        %1918 = vmatpush.msra.mxu0 %v1571
        %1919 = vmatpush.msra.mxu0 %v1570
        %1920 = vmatpush.msra.mxu0 %v1569
        %1921 = vmatpush.msra.mxu0 %v1568
        %1922 = vmatpush.msra.mxu0 %v1567
        %1923 = vmatpush.msra.mxu0 %v1566
        %1924 = vmatpush.msra.mxu0 %v1565
        %1925 = vmatpush.msra.mxu0 %v1564
        %1926 = vmatpush.msra.mxu0 %v1563
        %1927 = vmatpush.msra.mxu0 %v1562
        %1928 = vmatmul.f32.gmra.mxu0 %v1810
        %v1929 = vpop.f32.mrf.mxu0
        %v1930 = vadd.f32 %v1898, %v1929
        %1931 = vmatmul.f32.gmra.mxu0 %v1811
        %v1932 = vpop.f32.mrf.mxu0
        %v1933 = vadd.f32 %v1901, %v1932
        %1934 = vmatmul.f32.gmra.mxu0 %v1812
        %v1935 = vpop.f32.mrf.mxu0
        %v1936 = vadd.f32 %v1904, %v1935
        %1937 = vmatmul.f32.gmra.mxu0 %v1813
        %v1938 = vpop.f32.mrf.mxu0
        %v1939 = vadd.f32 %v1907, %v1938
        %1940 = vmatmul.f32.gmra.mxu0 %v1814
        %v1941 = vpop.f32.mrf.mxu0
        %v1942 = vadd.f32 %v1910, %v1941
        %1943 = vdwg.mxu0
        %1944 = vmatpush.msra.mxu0 %v1593
        %1945 = vmatpush.msra.mxu0 %v1592
        %1946 = vmatpush.msra.mxu0 %v1591
        %1947 = vmatpush.msra.mxu0 %v1590
        %1948 = vmatpush.msra.mxu0 %v1589
        %1949 = vmatpush.msra.mxu0 %v1588
        %1950 = vmatpush.msra.mxu0 %v1587
        %1951 = vmatpush.msra.mxu0 %v1586
        %1952 = vmatpush.msra.mxu0 %v1585
        %1953 = vmatpush.msra.mxu0 %v1584
        %1954 = vmatpush.msra.mxu0 %v1583
        %1955 = vmatpush.msra.mxu0 %v1582
        %1956 = vmatpush.msra.mxu0 %v1581
        %1957 = vmatpush.msra.mxu0 %v1580
        %1958 = vmatpush.msra.mxu0 %v1579
        %1959 = vmatpush.msra.mxu0 %v1578
        %1960 = vmatmul.f32.gmra.mxu0 %v1820
        %v1961 = vpop.f32.mrf.mxu0
        %v1962 = vadd.f32 %v1930, %v1961
        %1963 = vmatmul.f32.gmra.mxu0 %v1821
        %v1964 = vpop.f32.mrf.mxu0
        %v1965 = vadd.f32 %v1933, %v1964
        %1966 = vmatmul.f32.gmra.mxu0 %v1822
        %v1967 = vpop.f32.mrf.mxu0
        %v1968 = vadd.f32 %v1936, %v1967
        %1969 = vmatmul.f32.gmra.mxu0 %v1823
        %v1970 = vpop.f32.mrf.mxu0
        %v1971 = vadd.f32 %v1939, %v1970
        %1972 = vmatmul.f32.gmra.mxu0 %v1824
        %v1973 = vpop.f32.mrf.mxu0
        %v1974 = vadd.f32 %v1942, %v1973
        %1975 = vdwg.mxu0
        %1976 = vmatpush.msra.mxu0 %v1609
        %1977 = vmatpush.msra.mxu0 %v1608
        %1978 = vmatpush.msra.mxu0 %v1607
        %1979 = vmatpush.msra.mxu0 %v1606
        %1980 = vmatpush.msra.mxu0 %v1605
        %1981 = vmatpush.msra.mxu0 %v1604
        %1982 = vmatpush.msra.mxu0 %v1603
        %1983 = vmatpush.msra.mxu0 %v1602
        %1984 = vmatpush.msra.mxu0 %v1601
        %1985 = vmatpush.msra.mxu0 %v1600
        %1986 = vmatpush.msra.mxu0 %v1599
        %1987 = vmatpush.msra.mxu0 %v1598
        %1988 = vmatpush.msra.mxu0 %v1597
        %1989 = vmatpush.msra.mxu0 %v1596
        %1990 = vmatpush.msra.mxu0 %v1595
        %1991 = vmatpush.msra.mxu0 %v1594
        %1992 = vmatmul.f32.gmra.mxu0 %v1825
        %v1993 = vpop.f32.mrf.mxu0
        %v1994 = vadd.f32 %v1962, %v1993
        %1995 = vmatmul.f32.gmra.mxu0 %v1826
        %v1996 = vpop.f32.mrf.mxu0
        %v1997 = vadd.f32 %v1965, %v1996
        %1998 = vmatmul.f32.gmra.mxu0 %v1827
        %v1999 = vpop.f32.mrf.mxu0
        %v2000 = vadd.f32 %v1968, %v1999
        %2001 = vmatmul.f32.gmra.mxu0 %v1828
        %v2002 = vpop.f32.mrf.mxu0
        %v2003 = vadd.f32 %v1971, %v2002
        %2004 = vmatmul.f32.gmra.mxu0 %v1829
        %v2005 = vpop.f32.mrf.mxu0
        %v2006 = vadd.f32 %v1974, %v2005
        %2007 = vdwg.mxu0
        %2008 = vmatpush.msra.mxu0 0.0
        %2009 = vmatpush.msra.mxu0 0.0
        %2010 = vmatpush.msra.mxu0 0.0
        %2011 = vmatpush.msra.mxu0 0.0
        %2012 = vmatpush.msra.mxu0 0.0
        %2013 = vmatpush.msra.mxu0 0.0
        %2014 = vmatpush.msra.mxu0 %v1619
        %2015 = vmatpush.msra.mxu0 %v1618
        %2016 = vmatpush.msra.mxu0 %v1617
        %2017 = vmatpush.msra.mxu0 %v1616
        %2018 = vmatpush.msra.mxu0 %v1615
        %2019 = vmatpush.msra.mxu0 %v1614
        %2020 = vmatpush.msra.mxu0 %v1613
        %2021 = vmatpush.msra.mxu0 %v1612
        %2022 = vmatpush.msra.mxu0 %v1611
        %2023 = vmatpush.msra.mxu0 %v1610
        %2024 = vmatmul.f32.gmra.mxu0 %v1834
        %v2025 = vpop.f32.mrf.mxu0
        %v2026 = vadd.f32 %v1994, %v2025
        %2027 = vmatmul.f32.gmra.mxu0 %v1837
        %v2028 = vpop.f32.mrf.mxu0
        %v2029 = vadd.f32 %v1997, %v2028
        %2030 = vmatmul.f32.gmra.mxu0 %v1840
        %v2031 = vpop.f32.mrf.mxu0
        %v2032 = vadd.f32 %v2000, %v2031
        %2033 = vmatmul.f32.gmra.mxu0 %v1843
        %v2034 = vpop.f32.mrf.mxu0
        %v2035 = vadd.f32 %v2003, %v2034
        %2036 = vmatmul.f32.gmra.mxu0 %v1846
        %v2037 = vpop.f32.mrf.mxu0
        %v2038 = vadd.f32 %v2006, %v2037
        %2039 = vdwg.mxu0
        %v2040 = vmax.f32 %v2026, 0.0
        %v2041 = vmax.f32 %v2029, 0.0
        %v2042 = vmax.f32 %v2032, 0.0
        %v2043 = vmax.f32 %v2035, 0.0
        %v2044 = vmax.f32 %v2038, 0.0
        %v2045 = vmul.f32 %v2040, %v565
        %v2046 = vmul.f32 %v2041, %v566
        %v2047 = vmul.f32 %v2042, %v567
        %v2048 = vmul.f32 %v2043, %v568
        %v2049 = vmul.f32 %v2044, %v569
        %v2050 = vadd.f32 %v2045, %v1639
        %v2051 = vadd.f32 %v2046, %v1640
        %v2052 = vadd.f32 %v2047, %v1641
        %v2053 = vadd.f32 %v2048, %v1642
        %v2054 = vadd.f32 %v2049, %v1643
        %2055 = vst.msk [vmem:[#allocation2 + $0xb] sm:$0xff] %vm570, %v2050
        %2056 = vst.msk [vmem:[#allocation2 + $0x13] sm:$0xff] %vm570, %v2051
        %2057 = vst.msk [vmem:[#allocation2 + $0x1b] sm:$0xff] %vm570, %v2052
        %2058 = vst.msk [vmem:[#allocation2 + $0x23] sm:$0xff] %vm570, %v2053
        %2059 = vst.msk [vmem:[#allocation2 + $0x2b] sm:$0x3f] %vm995, %v2054
        %v2060 = vld [vmem:[#allocation10] sm:$0xff]
        %v2061 = vld [vmem:[#allocation10 + $0x8] sm:$0xff]
        %v2062 = vld [vmem:[#allocation10 + $0x10] sm:$0xff]
        %v2063 = vld [vmem:[#allocation10 + $0x18] sm:$0xff]
        %v2064 = vld [vmem:[#allocation10 + $0x20] sm:$0xff]
        %v2065 = vld [vmem:[#allocation10 + $0x28] sm:$0xff]
        %v2066 = vld [vmem:[#allocation10 + $0x30] sm:$0xff]
        %v2067 = vld [vmem:[#allocation10 + $0x38] sm:$0xff]
        %v2068 = vld [vmem:[#allocation10 + $0x40] sm:$0xff]
        %v2069 = vld [vmem:[#allocation10 + $0x48] sm:$0xff]
        %v2070 = vld [vmem:[#allocation10 + $0x50] sm:$0xff]
        %v2071 = vld [vmem:[#allocation10 + $0x58] sm:$0xff]
        %v2072 = vld [vmem:[#allocation10 + $0x60] sm:$0xff]
        %v2073 = vld [vmem:[#allocation10 + $0x68] sm:$0xff]
        %v2074 = vld [vmem:[#allocation10 + $0x70] sm:$0xff]
        %v2075 = vld [vmem:[#allocation10 + $0x78] sm:$0xff]
        %v2076 = vld [vmem:[#allocation10 + $0x80] sm:$0xff]
        %v2077 = vld [vmem:[#allocation10 + $0x88] sm:$0xff]
        %v2078 = vld [vmem:[#allocation10 + $0x90] sm:$0xff]
        %v2079 = vld [vmem:[#allocation10 + $0x98] sm:$0xff]
        %v2080 = vld [vmem:[#allocation10 + $0xa0] sm:$0xff]
        %v2081 = vld [vmem:[#allocation10 + $0xa8] sm:$0xff]
        %v2082 = vld [vmem:[#allocation10 + $0xb0] sm:$0xff]
        %v2083 = vld [vmem:[#allocation10 + $0xb8] sm:$0xff]
        %v2084 = vld [vmem:[#allocation10 + $0xc0] sm:$0xff]
        %v2085 = vld [vmem:[#allocation10 + $0xc8] sm:$0xff]
        %v2086 = vld [vmem:[#allocation10 + $0xd0] sm:$0xff]
        %v2087 = vld [vmem:[#allocation10 + $0xd8] sm:$0xff]
        %v2088 = vld [vmem:[#allocation10 + $0xe0] sm:$0xff]
        %v2089 = vld [vmem:[#allocation10 + $0xe8] sm:$0xff]
        %v2090 = vld [vmem:[#allocation10 + $0xf0] sm:$0xff]
        %v2091 = vld [vmem:[#allocation10 + $0xf8] sm:$0xff]
        %v2092 = vld [vmem:[#allocation10 + $0x100] sm:$0xff]
        %v2093 = vld [vmem:[#allocation10 + $0x108] sm:$0xff]
        %v2094 = vld [vmem:[#allocation10 + $0x110] sm:$0xff]
        %v2095 = vld [vmem:[#allocation10 + $0x118] sm:$0xff]
        %v2096 = vld [vmem:[#allocation10 + $0x120] sm:$0xff]
        %v2097 = vld [vmem:[#allocation10 + $0x128] sm:$0xff]
        %v2098 = vld [vmem:[#allocation10 + $0x130] sm:$0xff]
        %v2099 = vld [vmem:[#allocation10 + $0x138] sm:$0xff]
        %v2100 = vld [vmem:[#allocation10 + $0x140] sm:$0xff]
        %v2101 = vld [vmem:[#allocation10 + $0x148] sm:$0xff]
        %v2102 = vld [vmem:[#allocation10 + $0x150] sm:$0xff]
        %v2103 = vld [vmem:[#allocation10 + $0x158] sm:$0xff]
        %v2104 = vld [vmem:[#allocation10 + $0x160] sm:$0xff]
        %v2105 = vld [vmem:[#allocation10 + $0x168] sm:$0xff]
        %v2106 = vld [vmem:[#allocation10 + $0x170] sm:$0xff]
        %v2107 = vld [vmem:[#allocation10 + $0x178] sm:$0xff]
        %v2108 = vld [vmem:[#allocation10 + $0x180] sm:$0xff]
        %v2109 = vld [vmem:[#allocation10 + $0x188] sm:$0xff]
        %v2110 = vld [vmem:[#allocation10 + $0x190] sm:$0xff]
        %v2111 = vld [vmem:[#allocation10 + $0x198] sm:$0xff]
        %v2112 = vld [vmem:[#allocation10 + $0x1a0] sm:$0xff]
        %v2113 = vld [vmem:[#allocation10 + $0x1a8] sm:$0xff]
        %v2114 = vld [vmem:[#allocation10 + $0x1b0] sm:$0xff]
        %v2115 = vld [vmem:[#allocation10 + $0x1b8] sm:$0xff]
        %v2116 = vld [vmem:[#allocation10 + $0x1c0] sm:$0xff]
        %v2117 = vld [vmem:[#allocation10 + $0x1c8] sm:$0xff]
        %v2118 = vld [vmem:[#allocation10 + $0x1d0] sm:$0xff]
        %v2119 = vld [vmem:[#allocation10 + $0x1d8] sm:$0xff]
        %v2120 = vld [vmem:[#allocation10 + $0x1e0] sm:$0xff]
        %v2121 = vld [vmem:[#allocation10 + $0x1e8] sm:$0xff]
        %v2122 = vld [vmem:[#allocation10 + $0x1f0] sm:$0xff]
        %v2123 = vld [vmem:[#allocation10 + $0x1f8] sm:$0xff]
        %v2124 = vld [vmem:[#allocation10 + $0x200] sm:$0xff]
        %v2125 = vld [vmem:[#allocation10 + $0x208] sm:$0xff]
        %v2126 = vld [vmem:[#allocation10 + $0x210] sm:$0xff]
        %v2127 = vld [vmem:[#allocation10 + $0x218] sm:$0xff]
        %v2128 = vld [vmem:[#allocation10 + $0x220] sm:$0xff]
        %v2129 = vld [vmem:[#allocation10 + $0x228] sm:$0xff]
        %v2130 = vld [vmem:[#allocation10 + $0x230] sm:$0xff]
        %v2131 = vld [vmem:[#allocation10 + $0x238] sm:$0xff]
        %v2132 = vld [vmem:[#allocation10 + $0x240] sm:$0xff]
        %v2133 = vld [vmem:[#allocation10 + $0x248] sm:$0xff]
        %v2134 = vld [vmem:[#allocation10 + $0x250] sm:$0xff]
        %v2135 = vld [vmem:[#allocation10 + $0x258] sm:$0xff]
        %v2136 = vld [vmem:[#allocation10 + $0x260] sm:$0xff]
        %v2137 = vld [vmem:[#allocation10 + $0x268] sm:$0xff]
        %v2138 = vld [vmem:[#allocation10 + $0x270] sm:$0xff]
        %v2139 = vld [vmem:[#allocation10 + $0x278] sm:$0xff]
        %v2140 = vld [vmem:[#allocation10 + $0x280] sm:$0xff]
        %v2141 = vld [vmem:[#allocation10 + $0x288] sm:$0xff]
        %v2142 = vld [vmem:[#allocation10 + $0x290] sm:$0xff]
        %v2143 = vld [vmem:[#allocation10 + $0x298] sm:$0xff]
        %v2144 = vld [vmem:[#allocation10 + $0x2a0] sm:$0xff]
        %v2145 = vld [vmem:[#allocation10 + $0x2a8] sm:$0xff]
        %v2146 = vld [vmem:[#allocation10 + $0x2b0] sm:$0xff]
        %v2147 = vld [vmem:[#allocation10 + $0x2b8] sm:$0xff]
        %v2148 = vld [vmem:[#allocation10 + $0x2c0] sm:$0xff]
        %v2149 = vld [vmem:[#allocation10 + $0x2c8] sm:$0xff]
        %v2150 = vld [vmem:[#allocation11] sm:$0x1]
        %v2151 = vld [vmem:[#allocation2] sm:$0xff]
        %v2152 = vld [vmem:[#allocation2 + $0x8] sm:$0xff]
        %v2153 = vld [vmem:[#allocation2 + $0x10] sm:$0xff]
        %v2154 = vld [vmem:[#allocation2 + $0x18] sm:$0xff]
        %v2155 = vld [vmem:[#allocation2 + $0x20] sm:$0x3f]
        %v2156 = vld [vmem:[#allocation2 + $0x1] sm:$0xff]
        %v2157 = vld [vmem:[#allocation2 + $0x9] sm:$0xff]
        %v2158 = vld [vmem:[#allocation2 + $0x11] sm:$0xff]
        %v2159 = vld [vmem:[#allocation2 + $0x19] sm:$0xff]
        %v2160 = vld [vmem:[#allocation2 + $0x21] sm:$0x3f]
        %v2161 = vld [vmem:[#allocation2 + $0x2] sm:$0xff]
        %v2162 = vld [vmem:[#allocation2 + $0xa] sm:$0xff]
        %v2163 = vld [vmem:[#allocation2 + $0x12] sm:$0xff]
        %v2164 = vld [vmem:[#allocation2 + $0x1a] sm:$0xff]
        %v2165 = vld [vmem:[#allocation2 + $0x22] sm:$0x3f]
        %v2166 = vld [vmem:[#allocation2 + $0x22] sm:$0xff]
        %v2167 = vld [vmem:[#allocation2 + $0x2a] sm:$0x3f]
        %v2168 = vld [vmem:[#allocation2 + $0xb] sm:$0xff]
        %v2169 = vld [vmem:[#allocation2 + $0x13] sm:$0xff]
        %v2170 = vld [vmem:[#allocation2 + $0x1b] sm:$0xff]
        %v2171 = vld [vmem:[#allocation2 + $0x23] sm:$0xff]
        %v2172 = vld [vmem:[#allocation2 + $0x2b] sm:$0x3f]
        %v2173 = vld [vmem:[#allocation2 + $0xc] sm:$0xff]
        %v2174 = vld [vmem:[#allocation2 + $0x14] sm:$0xff]
        %v2175 = vld [vmem:[#allocation2 + $0x1c] sm:$0xff]
        %v2176 = vld [vmem:[#allocation2 + $0x24] sm:$0xff]
        %v2177 = vld [vmem:[#allocation2 + $0x2c] sm:$0x3f]
        %v2178 = vld [vmem:[#allocation2 + $0x2c] sm:$0xff]
        %v2179 = vld [vmem:[#allocation2 + $0x34] sm:$0x3f]
        %v2180 = vld [vmem:[#allocation2 + $0x15] sm:$0xff]
        %v2181 = vld [vmem:[#allocation2 + $0x1d] sm:$0xff]
        %v2182 = vld [vmem:[#allocation2 + $0x25] sm:$0xff]
        %v2183 = vld [vmem:[#allocation2 + $0x2d] sm:$0xff]
        %v2184 = vld [vmem:[#allocation2 + $0x35] sm:$0x3f]
        %v2185 = vld [vmem:[#allocation2 + $0x16] sm:$0xff]
        %v2186 = vld [vmem:[#allocation2 + $0x1e] sm:$0xff]
        %v2187 = vld [vmem:[#allocation2 + $0x26] sm:$0xff]
        %v2188 = vld [vmem:[#allocation2 + $0x2e] sm:$0xff]
        %v2189 = vld [vmem:[#allocation2 + $0x36] sm:$0x3f]
        %2195 = vrot.lane.b32.xlu0 %v2156, 80
        %v2196 = vpop.permute.xlu0 %2195
        %2197 = vrot.lane.b32.xlu0 %v2157, 80
        %v2198 = vpop.permute.xlu0 %2197
        %2199 = vrot.lane.b32.xlu0 %v2158, 80
        %v2200 = vpop.permute.xlu0 %2199
        %2201 = vrot.lane.b32.xlu0 %v2159, 80
        %v2202 = vpop.permute.xlu0 %2201
        %2203 = vrot.lane.b32.xlu0 %v2160, 80
        %v2204 = vpop.permute.xlu0 %2203
        %2215 = vrot.lane.b32.xlu0 %v2161, 32
        %v2216 = vpop.permute.xlu0 %2215
        %2217 = vrot.lane.b32.xlu0 %v2162, 32
        %v2218 = vpop.permute.xlu0 %2217
        %2219 = vrot.lane.b32.xlu0 %v2163, 32
        %v2220 = vpop.permute.xlu0 %2219
        %2221 = vrot.lane.b32.xlu0 %v2164, 32
        %v2222 = vpop.permute.xlu0 %2221
        %2223 = vrot.lane.b32.xlu0 %v2165, 32
        %v2224 = vpop.permute.xlu0 %2223
        %2232 = vrot.lane.b32.xlu0 %v2162, 112
        %v2233 = vpop.permute.xlu0 %2232
        %2234 = vrot.lane.b32.xlu0 %v2163, 112
        %v2235 = vpop.permute.xlu0 %2234
        %2236 = vrot.lane.b32.xlu0 %v2164, 112
        %v2237 = vpop.permute.xlu0 %2236
        %2238 = vrot.lane.b32.xlu0 %v2166, 112
        %v2239 = vpop.permute.xlu0 %2238
        %2240 = vrot.lane.b32.xlu0 %v2167, 112
        %v2241 = vpop.permute.xlu0 %2240
        %2252 = vrot.lane.b32.xlu0 %v2168, 64
        %v2253 = vpop.permute.xlu0 %2252
        %2254 = vrot.lane.b32.xlu0 %v2169, 64
        %v2255 = vpop.permute.xlu0 %2254
        %2256 = vrot.lane.b32.xlu0 %v2170, 64
        %v2257 = vpop.permute.xlu0 %2256
        %2258 = vrot.lane.b32.xlu0 %v2171, 64
        %v2259 = vpop.permute.xlu0 %2258
        %2260 = vrot.lane.b32.xlu0 %v2172, 64
        %v2261 = vpop.permute.xlu0 %2260
        %2272 = vrot.lane.b32.xlu0 %v2173, 16
        %v2273 = vpop.permute.xlu0 %2272
        %2274 = vrot.lane.b32.xlu0 %v2174, 16
        %v2275 = vpop.permute.xlu0 %2274
        %2276 = vrot.lane.b32.xlu0 %v2175, 16
        %v2277 = vpop.permute.xlu0 %2276
        %2278 = vrot.lane.b32.xlu0 %v2176, 16
        %v2279 = vpop.permute.xlu0 %2278
        %2280 = vrot.lane.b32.xlu0 %v2177, 16
        %v2281 = vpop.permute.xlu0 %2280
        %2289 = vrot.lane.b32.xlu0 %v2174, 96
        %v2290 = vpop.permute.xlu0 %2289
        %2291 = vrot.lane.b32.xlu0 %v2175, 96
        %v2292 = vpop.permute.xlu0 %2291
        %2293 = vrot.lane.b32.xlu0 %v2176, 96
        %v2294 = vpop.permute.xlu0 %2293
        %2295 = vrot.lane.b32.xlu0 %v2178, 96
        %v2296 = vpop.permute.xlu0 %2295
        %2297 = vrot.lane.b32.xlu0 %v2179, 96
        %v2298 = vpop.permute.xlu0 %2297
        %2309 = vrot.lane.b32.xlu0 %v2180, 48
        %v2310 = vpop.permute.xlu0 %2309
        %2311 = vrot.lane.b32.xlu0 %v2181, 48
        %v2312 = vpop.permute.xlu0 %2311
        %2313 = vrot.lane.b32.xlu0 %v2182, 48
        %v2314 = vpop.permute.xlu0 %2313
        %2315 = vrot.lane.b32.xlu0 %v2183, 48
        %v2316 = vpop.permute.xlu0 %2315
        %2317 = vrot.lane.b32.xlu0 %v2184, 48
        %v2318 = vpop.permute.xlu0 %2317
        %v2324 = vsel %vm570, %v2151, %v2196
        %v2325 = vsel %vm570, %v2152, %v2198
        %v2326 = vsel %vm570, %v2153, %v2200
        %v2327 = vsel %vm570, %v2154, %v2202
        %v2328 = vsel %vm570, %v2155, %v2204
        %v2329 = vsel %vm836, %v2196, %v2216
        %v2330 = vsel %vm836, %v2198, %v2218
        %v2331 = vsel %vm836, %v2200, %v2220
        %v2332 = vsel %vm836, %v2202, %v2222
        %v2333 = vsel %vm836, %v2204, %v2224
        %v2334 = vsel %vm848, %v2329, %v2233
        %v2335 = vsel %vm848, %v2330, %v2235
        %v2336 = vsel %vm848, %v2331, %v2237
        %v2337 = vsel %vm848, %v2332, %v2239
        %v2338 = vsel %vm848, %v2333, %v2241
        %v2339 = vsel %vm860, %v2233, %v2253
        %v2340 = vsel %vm860, %v2235, %v2255
        %v2341 = vsel %vm860, %v2237, %v2257
        %v2342 = vsel %vm860, %v2239, %v2259
        %v2343 = vsel %vm860, %v2241, %v2261
        %v2344 = vsel %vm1281, %v2253, %v2273
        %v2345 = vsel %vm1281, %v2255, %v2275
        %v2346 = vsel %vm1281, %v2257, %v2277
        %v2347 = vsel %vm1281, %v2259, %v2279
        %v2348 = vsel %vm1281, %v2261, %v2281
        %v2349 = vsel %vm1287, %v2344, %v2290
        %v2350 = vsel %vm1287, %v2345, %v2292
        %v2351 = vsel %vm1287, %v2346, %v2294
        %v2352 = vsel %vm1287, %v2347, %v2296
        %v2353 = vsel %vm1287, %v2348, %v2298
        %v2354 = vsel %vm1293, %v2290, %v2310
        %v2355 = vsel %vm1293, %v2292, %v2312
        %v2356 = vsel %vm1293, %v2294, %v2314
        %v2357 = vsel %vm1293, %v2296, %v2316
        %v2358 = vsel %vm1293, %v2298, %v2318
        %v2360 = vperm.slane %v2150, 0
        %v2363 = vsel %vm570, %v2185, 0
        %v2366 = vsel %vm570, %v2186, 0
        %v2369 = vsel %vm570, %v2187, 0
        %v2372 = vsel %vm570, %v2188, 0
        %v2375 = vsel %vm570, %v2189, 0
        %2377 = vmatpush.msra.mxu0 %v2075
        %2378 = vmatpush.msra.mxu0 %v2074
        %2379 = vmatpush.msra.mxu0 %v2073
        %2380 = vmatpush.msra.mxu0 %v2072
        %2381 = vmatpush.msra.mxu0 %v2071
        %2382 = vmatpush.msra.mxu0 %v2070
        %2383 = vmatpush.msra.mxu0 %v2069
        %2384 = vmatpush.msra.mxu0 %v2068
        %2385 = vmatpush.msra.mxu0 %v2067
        %2386 = vmatpush.msra.mxu0 %v2066
        %2387 = vmatpush.msra.mxu0 %v2065
        %2388 = vmatpush.msra.mxu0 %v2064
        %2389 = vmatpush.msra.mxu0 %v2063
        %2390 = vmatpush.msra.mxu0 %v2062
        %2391 = vmatpush.msra.mxu0 %v2061
        %2392 = vmatpush.msra.mxu0 %v2060
        %2393 = vmatmul.f32.gmra.mxu0 %v2324
        %v2394 = vpop.f32.mrf.mxu0
        %v2395 = vadd.f32 %v2360, %v2394
        %2396 = vmatmul.f32.gmra.mxu0 %v2325
        %v2397 = vpop.f32.mrf.mxu0
        %v2398 = vadd.f32 %v2360, %v2397
        %2399 = vmatmul.f32.gmra.mxu0 %v2326
        %v2400 = vpop.f32.mrf.mxu0
        %v2401 = vadd.f32 %v2360, %v2400
        %2402 = vmatmul.f32.gmra.mxu0 %v2327
        %v2403 = vpop.f32.mrf.mxu0
        %v2404 = vadd.f32 %v2360, %v2403
        %2405 = vmatmul.f32.gmra.mxu0 %v2328
        %v2406 = vpop.f32.mrf.mxu0
        %v2407 = vadd.f32 %v2360, %v2406
        %2408 = vdwg.mxu0
        %2409 = vmatpush.msra.mxu0 %v2091
        %2410 = vmatpush.msra.mxu0 %v2090
        %2411 = vmatpush.msra.mxu0 %v2089
        %2412 = vmatpush.msra.mxu0 %v2088
        %2413 = vmatpush.msra.mxu0 %v2087
        %2414 = vmatpush.msra.mxu0 %v2086
        %2415 = vmatpush.msra.mxu0 %v2085
        %2416 = vmatpush.msra.mxu0 %v2084
        %2417 = vmatpush.msra.mxu0 %v2083
        %2418 = vmatpush.msra.mxu0 %v2082
        %2419 = vmatpush.msra.mxu0 %v2081
        %2420 = vmatpush.msra.mxu0 %v2080
        %2421 = vmatpush.msra.mxu0 %v2079
        %2422 = vmatpush.msra.mxu0 %v2078
        %2423 = vmatpush.msra.mxu0 %v2077
        %2424 = vmatpush.msra.mxu0 %v2076
        %2425 = vmatmul.f32.gmra.mxu0 %v2334
        %v2426 = vpop.f32.mrf.mxu0
        %v2427 = vadd.f32 %v2395, %v2426
        %2428 = vmatmul.f32.gmra.mxu0 %v2335
        %v2429 = vpop.f32.mrf.mxu0
        %v2430 = vadd.f32 %v2398, %v2429
        %2431 = vmatmul.f32.gmra.mxu0 %v2336
        %v2432 = vpop.f32.mrf.mxu0
        %v2433 = vadd.f32 %v2401, %v2432
        %2434 = vmatmul.f32.gmra.mxu0 %v2337
        %v2435 = vpop.f32.mrf.mxu0
        %v2436 = vadd.f32 %v2404, %v2435
        %2437 = vmatmul.f32.gmra.mxu0 %v2338
        %v2438 = vpop.f32.mrf.mxu0
        %v2439 = vadd.f32 %v2407, %v2438
        %2440 = vdwg.mxu0
        %2441 = vmatpush.msra.mxu0 %v2107
        %2442 = vmatpush.msra.mxu0 %v2106
        %2443 = vmatpush.msra.mxu0 %v2105
        %2444 = vmatpush.msra.mxu0 %v2104
        %2445 = vmatpush.msra.mxu0 %v2103
        %2446 = vmatpush.msra.mxu0 %v2102
        %2447 = vmatpush.msra.mxu0 %v2101
        %2448 = vmatpush.msra.mxu0 %v2100
        %2449 = vmatpush.msra.mxu0 %v2099
        %2450 = vmatpush.msra.mxu0 %v2098
        %2451 = vmatpush.msra.mxu0 %v2097
        %2452 = vmatpush.msra.mxu0 %v2096
        %2453 = vmatpush.msra.mxu0 %v2095
        %2454 = vmatpush.msra.mxu0 %v2094
        %2455 = vmatpush.msra.mxu0 %v2093
        %2456 = vmatpush.msra.mxu0 %v2092
        %2457 = vmatmul.f32.gmra.mxu0 %v2339
        %v2458 = vpop.f32.mrf.mxu0
        %v2459 = vadd.f32 %v2427, %v2458
        %2460 = vmatmul.f32.gmra.mxu0 %v2340
        %v2461 = vpop.f32.mrf.mxu0
        %v2462 = vadd.f32 %v2430, %v2461
        %2463 = vmatmul.f32.gmra.mxu0 %v2341
        %v2464 = vpop.f32.mrf.mxu0
        %v2465 = vadd.f32 %v2433, %v2464
        %2466 = vmatmul.f32.gmra.mxu0 %v2342
        %v2467 = vpop.f32.mrf.mxu0
        %v2468 = vadd.f32 %v2436, %v2467
        %2469 = vmatmul.f32.gmra.mxu0 %v2343
        %v2470 = vpop.f32.mrf.mxu0
        %v2471 = vadd.f32 %v2439, %v2470
        %2472 = vdwg.mxu0
        %2473 = vmatpush.msra.mxu0 %v2123
        %2474 = vmatpush.msra.mxu0 %v2122
        %2475 = vmatpush.msra.mxu0 %v2121
        %2476 = vmatpush.msra.mxu0 %v2120
        %2477 = vmatpush.msra.mxu0 %v2119
        %2478 = vmatpush.msra.mxu0 %v2118
        %2479 = vmatpush.msra.mxu0 %v2117
        %2480 = vmatpush.msra.mxu0 %v2116
        %2481 = vmatpush.msra.mxu0 %v2115
        %2482 = vmatpush.msra.mxu0 %v2114
        %2483 = vmatpush.msra.mxu0 %v2113
        %2484 = vmatpush.msra.mxu0 %v2112
        %2485 = vmatpush.msra.mxu0 %v2111
        %2486 = vmatpush.msra.mxu0 %v2110
        %2487 = vmatpush.msra.mxu0 %v2109
        %2488 = vmatpush.msra.mxu0 %v2108
        %2489 = vmatmul.f32.gmra.mxu0 %v2349
        %v2490 = vpop.f32.mrf.mxu0
        %v2491 = vadd.f32 %v2459, %v2490
        %2492 = vmatmul.f32.gmra.mxu0 %v2350
        %v2493 = vpop.f32.mrf.mxu0
        %v2494 = vadd.f32 %v2462, %v2493
        %2495 = vmatmul.f32.gmra.mxu0 %v2351
        %v2496 = vpop.f32.mrf.mxu0
        %v2497 = vadd.f32 %v2465, %v2496
        %2498 = vmatmul.f32.gmra.mxu0 %v2352
        %v2499 = vpop.f32.mrf.mxu0
        %v2500 = vadd.f32 %v2468, %v2499
        %2501 = vmatmul.f32.gmra.mxu0 %v2353
        %v2502 = vpop.f32.mrf.mxu0
        %v2503 = vadd.f32 %v2471, %v2502
        %2504 = vdwg.mxu0
        %2505 = vmatpush.msra.mxu0 %v2139
        %2506 = vmatpush.msra.mxu0 %v2138
        %2507 = vmatpush.msra.mxu0 %v2137
        %2508 = vmatpush.msra.mxu0 %v2136
        %2509 = vmatpush.msra.mxu0 %v2135
        %2510 = vmatpush.msra.mxu0 %v2134
        %2511 = vmatpush.msra.mxu0 %v2133
        %2512 = vmatpush.msra.mxu0 %v2132
        %2513 = vmatpush.msra.mxu0 %v2131
        %2514 = vmatpush.msra.mxu0 %v2130
        %2515 = vmatpush.msra.mxu0 %v2129
        %2516 = vmatpush.msra.mxu0 %v2128
        %2517 = vmatpush.msra.mxu0 %v2127
        %2518 = vmatpush.msra.mxu0 %v2126
        %2519 = vmatpush.msra.mxu0 %v2125
        %2520 = vmatpush.msra.mxu0 %v2124
        %2521 = vmatmul.f32.gmra.mxu0 %v2354
        %v2522 = vpop.f32.mrf.mxu0
        %v2523 = vadd.f32 %v2491, %v2522
        %2524 = vmatmul.f32.gmra.mxu0 %v2355
        %v2525 = vpop.f32.mrf.mxu0
        %v2526 = vadd.f32 %v2494, %v2525
        %2527 = vmatmul.f32.gmra.mxu0 %v2356
        %v2528 = vpop.f32.mrf.mxu0
        %v2529 = vadd.f32 %v2497, %v2528
        %2530 = vmatmul.f32.gmra.mxu0 %v2357
        %v2531 = vpop.f32.mrf.mxu0
        %v2532 = vadd.f32 %v2500, %v2531
        %2533 = vmatmul.f32.gmra.mxu0 %v2358
        %v2534 = vpop.f32.mrf.mxu0
        %v2535 = vadd.f32 %v2503, %v2534
        %2536 = vdwg.mxu0
        %2537 = vmatpush.msra.mxu0 0.0
        %2538 = vmatpush.msra.mxu0 0.0
        %2539 = vmatpush.msra.mxu0 0.0
        %2540 = vmatpush.msra.mxu0 0.0
        %2541 = vmatpush.msra.mxu0 0.0
        %2542 = vmatpush.msra.mxu0 0.0
        %2543 = vmatpush.msra.mxu0 %v2149
        %2544 = vmatpush.msra.mxu0 %v2148
        %2545 = vmatpush.msra.mxu0 %v2147
        %2546 = vmatpush.msra.mxu0 %v2146
        %2547 = vmatpush.msra.mxu0 %v2145
        %2548 = vmatpush.msra.mxu0 %v2144
        %2549 = vmatpush.msra.mxu0 %v2143
        %2550 = vmatpush.msra.mxu0 %v2142
        %2551 = vmatpush.msra.mxu0 %v2141
        %2552 = vmatpush.msra.mxu0 %v2140
        %2553 = vmatmul.f32.gmra.mxu0 %v2363
        %v2554 = vpop.f32.mrf.mxu0
        %v2555 = vadd.f32 %v2523, %v2554
        %2556 = vmatmul.f32.gmra.mxu0 %v2366
        %v2557 = vpop.f32.mrf.mxu0
        %v2558 = vadd.f32 %v2526, %v2557
        %2559 = vmatmul.f32.gmra.mxu0 %v2369
        %v2560 = vpop.f32.mrf.mxu0
        %v2561 = vadd.f32 %v2529, %v2560
        %2562 = vmatmul.f32.gmra.mxu0 %v2372
        %v2563 = vpop.f32.mrf.mxu0
        %v2564 = vadd.f32 %v2532, %v2563
        %2565 = vmatmul.f32.gmra.mxu0 %v2375
        %v2566 = vpop.f32.mrf.mxu0
        %v2567 = vadd.f32 %v2535, %v2566
        %2568 = vdwg.mxu0
        %v2569 = vmul.f32 %v2555, %v565
        %v2570 = vmul.f32 %v2558, %v566
        %v2571 = vmul.f32 %v2561, %v567
        %v2572 = vmul.f32 %v2564, %v568
        %v2573 = vmul.f32 %v2567, %v569
        %2574 = vst.msk [vmem:[#allocation2 + $0xb] sm:$0xff] %vm819, %v2569
        %2575 = vst.msk [vmem:[#allocation2 + $0x13] sm:$0xff] %vm819, %v2570
        %2576 = vst.msk [vmem:[#allocation2 + $0x1b] sm:$0xff] %vm819, %v2571
        %2577 = vst.msk [vmem:[#allocation2 + $0x23] sm:$0xff] %vm819, %v2572
        %vm2578 = vcmask 324608
        %2579 = vst.msk [vmem:[#allocation2 + $0x2b] sm:$0x3f] %vm2578, %v2573
        %s2580 = scalar_lea.vmem [#allocation3], 360
        %v2581 = vld [vmem:[%s2580] sm:$0xff]
        %v2582 = vld [vmem:[%s2580 + $0x8] sm:$0xff]
        %v2583 = vld [vmem:[%s2580 + $0x10] sm:$0xff]
        %v2584 = vld [vmem:[%s2580 + $0x18] sm:$0xff]
        %v2585 = vld [vmem:[%s2580 + $0x20] sm:$0xff]
        %v2586 = vld [vmem:[%s2580 + $0x28] sm:$0xff]
        %v2587 = vld [vmem:[%s2580 + $0x30] sm:$0xff]
        %v2588 = vld [vmem:[%s2580 + $0x38] sm:$0xff]
        %v2589 = vld [vmem:[%s2580 + $0x40] sm:$0xff]
        %v2590 = vld [vmem:[%s2580 + $0x48] sm:$0xff]
        %v2591 = vld [vmem:[%s2580 + $0x50] sm:$0xff]
        %v2592 = vld [vmem:[%s2580 + $0x58] sm:$0xff]
        %v2593 = vld [vmem:[%s2580 + $0x60] sm:$0xff]
        %v2594 = vld [vmem:[%s2580 + $0x68] sm:$0xff]
        %v2595 = vld [vmem:[%s2580 + $0x70] sm:$0xff]
        %v2596 = vld [vmem:[%s2580 + $0x78] sm:$0xff]
        %v2597 = vld [vmem:[%s2580 + $0x80] sm:$0xff]
        %v2598 = vld [vmem:[%s2580 + $0x88] sm:$0xff]
        %v2599 = vld [vmem:[%s2580 + $0x90] sm:$0xff]
        %v2600 = vld [vmem:[%s2580 + $0x98] sm:$0xff]
        %v2601 = vld [vmem:[%s2580 + $0xa0] sm:$0xff]
        %v2602 = vld [vmem:[%s2580 + $0xa8] sm:$0xff]
        %v2603 = vld [vmem:[%s2580 + $0xb0] sm:$0xff]
        %v2604 = vld [vmem:[%s2580 + $0xb8] sm:$0xff]
        %v2605 = vld [vmem:[%s2580 + $0xc0] sm:$0xff]
        %v2606 = vld [vmem:[%s2580 + $0xc8] sm:$0xff]
        %v2607 = vld [vmem:[%s2580 + $0xd0] sm:$0xff]
        %v2608 = vld [vmem:[%s2580 + $0xd8] sm:$0xff]
        %v2609 = vld [vmem:[%s2580 + $0xe0] sm:$0xff]
        %v2610 = vld [vmem:[%s2580 + $0xe8] sm:$0xff]
        %v2611 = vld [vmem:[%s2580 + $0xf0] sm:$0xff]
        %v2612 = vld [vmem:[%s2580 + $0xf8] sm:$0xff]
        %v2613 = vld [vmem:[%s2580 + $0x100] sm:$0xff]
        %v2614 = vld [vmem:[%s2580 + $0x108] sm:$0xff]
        %v2615 = vld [vmem:[%s2580 + $0x110] sm:$0xff]
        %v2616 = vld [vmem:[%s2580 + $0x118] sm:$0xff]
        %v2617 = vld [vmem:[%s2580 + $0x120] sm:$0xff]
        %v2618 = vld [vmem:[%s2580 + $0x128] sm:$0xff]
        %v2619 = vld [vmem:[%s2580 + $0x130] sm:$0xff]
        %v2620 = vld [vmem:[%s2580 + $0x138] sm:$0xff]
        %v2621 = vld [vmem:[%s2580 + $0x140] sm:$0xff]
        %v2622 = vld [vmem:[%s2580 + $0x148] sm:$0xff]
        %v2623 = vld [vmem:[%s2580 + $0x150] sm:$0xff]
        %v2624 = vld [vmem:[%s2580 + $0x158] sm:$0xff]
        %v2625 = vld [vmem:[%s2580 + $0x160] sm:$0xff]
        %s2626 = scalar_lea.vmem [#allocation5], 1
        %v2627 = vld [vmem:[%s2626] sm:$0x1]
        %v2628 = vld [vmem:[#allocation2] sm:$0xff]
        %v2629 = vld [vmem:[#allocation2 + $0x8] sm:$0xff]
        %v2630 = vld [vmem:[#allocation2 + $0x10] sm:$0xff]
        %v2631 = vld [vmem:[#allocation2 + $0x18] sm:$0xff]
        %v2632 = vld [vmem:[#allocation2 + $0x20] sm:$0x3f]
        %v2633 = vld [vmem:[#allocation2 + $0x1] sm:$0xff]
        %v2634 = vld [vmem:[#allocation2 + $0x9] sm:$0xff]
        %v2635 = vld [vmem:[#allocation2 + $0x11] sm:$0xff]
        %v2636 = vld [vmem:[#allocation2 + $0x19] sm:$0xff]
        %v2637 = vld [vmem:[#allocation2 + $0x21] sm:$0x3f]
        %v2638 = vld [vmem:[#allocation2 + $0x2] sm:$0xff]
        %v2639 = vld [vmem:[#allocation2 + $0xa] sm:$0xff]
        %v2640 = vld [vmem:[#allocation2 + $0x12] sm:$0xff]
        %v2641 = vld [vmem:[#allocation2 + $0x1a] sm:$0xff]
        %v2642 = vld [vmem:[#allocation2 + $0x22] sm:$0x3f]
        %v2643 = vld [vmem:[#allocation2 + $0x22] sm:$0xff]
        %v2644 = vld [vmem:[#allocation2 + $0x2a] sm:$0x3f]
        %v2645 = vld [vmem:[#allocation2 + $0xb] sm:$0xff]
        %v2646 = vld [vmem:[#allocation2 + $0x13] sm:$0xff]
        %v2647 = vld [vmem:[#allocation2 + $0x1b] sm:$0xff]
        %v2648 = vld [vmem:[#allocation2 + $0x23] sm:$0xff]
        %v2649 = vld [vmem:[#allocation2 + $0x2b] sm:$0x3f]
        %v2650 = vld [vmem:[#allocation2 + $0xc] sm:$0xff]
        %v2651 = vld [vmem:[#allocation2 + $0x14] sm:$0xff]
        %v2652 = vld [vmem:[#allocation2 + $0x1c] sm:$0xff]
        %v2653 = vld [vmem:[#allocation2 + $0x24] sm:$0xff]
        %v2654 = vld [vmem:[#allocation2 + $0x2c] sm:$0x3f]
        %v2655 = vld [vmem:[#allocation2 + $0x2c] sm:$0xff]
        %v2656 = vld [vmem:[#allocation2 + $0x34] sm:$0x3f]
        %v2657 = vld [vmem:[#allocation2 + $0x15] sm:$0xff]
        %v2658 = vld [vmem:[#allocation2 + $0x1d] sm:$0xff]
        %v2659 = vld [vmem:[#allocation2 + $0x25] sm:$0xff]
        %v2660 = vld [vmem:[#allocation2 + $0x2d] sm:$0xff]
        %v2661 = vld [vmem:[#allocation2 + $0x35] sm:$0x3f]
        %v2662 = vld [vmem:[#allocation2 + $0x16] sm:$0xff]
        %v2663 = vld [vmem:[#allocation2 + $0x1e] sm:$0xff]
        %v2664 = vld [vmem:[#allocation2 + $0x26] sm:$0xff]
        %v2665 = vld [vmem:[#allocation2 + $0x2e] sm:$0xff]
        %v2666 = vld [vmem:[#allocation2 + $0x36] sm:$0x3f]
        %2672 = vrot.lane.b32.xlu0 %v2633, 40
        %v2673 = vpop.permute.xlu0 %2672
        %2674 = vrot.lane.b32.xlu0 %v2634, 40
        %v2675 = vpop.permute.xlu0 %2674
        %2676 = vrot.lane.b32.xlu0 %v2635, 40
        %v2677 = vpop.permute.xlu0 %2676
        %2678 = vrot.lane.b32.xlu0 %v2636, 40
        %v2679 = vpop.permute.xlu0 %2678
        %2680 = vrot.lane.b32.xlu0 %v2637, 40
        %v2681 = vpop.permute.xlu0 %2680
        %2692 = vrot.lane.b32.xlu0 %v2638, 80
        %v2693 = vpop.permute.xlu0 %2692
        %2694 = vrot.lane.b32.xlu0 %v2639, 80
        %v2695 = vpop.permute.xlu0 %2694
        %2696 = vrot.lane.b32.xlu0 %v2640, 80
        %v2697 = vpop.permute.xlu0 %2696
        %2698 = vrot.lane.b32.xlu0 %v2641, 80
        %v2699 = vpop.permute.xlu0 %2698
        %2700 = vrot.lane.b32.xlu0 %v2642, 80
        %v2701 = vpop.permute.xlu0 %2700
        %2709 = vrot.lane.b32.xlu0 %v2639, 120
        %v2710 = vpop.permute.xlu0 %2709
        %2711 = vrot.lane.b32.xlu0 %v2640, 120
        %v2712 = vpop.permute.xlu0 %2711
        %2713 = vrot.lane.b32.xlu0 %v2641, 120
        %v2714 = vpop.permute.xlu0 %2713
        %2715 = vrot.lane.b32.xlu0 %v2643, 120
        %v2716 = vpop.permute.xlu0 %2715
        %2717 = vrot.lane.b32.xlu0 %v2644, 120
        %v2718 = vpop.permute.xlu0 %2717
        %2729 = vrot.lane.b32.xlu0 %v2645, 32
        %v2730 = vpop.permute.xlu0 %2729
        %2731 = vrot.lane.b32.xlu0 %v2646, 32
        %v2732 = vpop.permute.xlu0 %2731
        %2733 = vrot.lane.b32.xlu0 %v2647, 32
        %v2734 = vpop.permute.xlu0 %2733
        %2735 = vrot.lane.b32.xlu0 %v2648, 32
        %v2736 = vpop.permute.xlu0 %2735
        %2737 = vrot.lane.b32.xlu0 %v2649, 32
        %v2738 = vpop.permute.xlu0 %2737
        %2749 = vrot.lane.b32.xlu0 %v2650, 72
        %v2750 = vpop.permute.xlu0 %2749
        %2751 = vrot.lane.b32.xlu0 %v2651, 72
        %v2752 = vpop.permute.xlu0 %2751
        %2753 = vrot.lane.b32.xlu0 %v2652, 72
        %v2754 = vpop.permute.xlu0 %2753
        %2755 = vrot.lane.b32.xlu0 %v2653, 72
        %v2756 = vpop.permute.xlu0 %2755
        %2757 = vrot.lane.b32.xlu0 %v2654, 72
        %v2758 = vpop.permute.xlu0 %2757
        %2766 = vrot.lane.b32.xlu0 %v2651, 112
        %v2767 = vpop.permute.xlu0 %2766
        %2768 = vrot.lane.b32.xlu0 %v2652, 112
        %v2769 = vpop.permute.xlu0 %2768
        %2770 = vrot.lane.b32.xlu0 %v2653, 112
        %v2771 = vpop.permute.xlu0 %2770
        %2772 = vrot.lane.b32.xlu0 %v2655, 112
        %v2773 = vpop.permute.xlu0 %2772
        %2774 = vrot.lane.b32.xlu0 %v2656, 112
        %v2775 = vpop.permute.xlu0 %2774
        %2786 = vrot.lane.b32.xlu0 %v2657, 24
        %v2787 = vpop.permute.xlu0 %2786
        %2788 = vrot.lane.b32.xlu0 %v2658, 24
        %v2789 = vpop.permute.xlu0 %2788
        %2790 = vrot.lane.b32.xlu0 %v2659, 24
        %v2791 = vpop.permute.xlu0 %2790
        %2792 = vrot.lane.b32.xlu0 %v2660, 24
        %v2793 = vpop.permute.xlu0 %2792
        %2794 = vrot.lane.b32.xlu0 %v2661, 24
        %v2795 = vpop.permute.xlu0 %2794
        %2806 = vrot.lane.b32.xlu0 %v2662, 64
        %v2807 = vpop.permute.xlu0 %2806
        %2808 = vrot.lane.b32.xlu0 %v2663, 64
        %v2809 = vpop.permute.xlu0 %2808
        %2810 = vrot.lane.b32.xlu0 %v2664, 64
        %v2811 = vpop.permute.xlu0 %2810
        %2812 = vrot.lane.b32.xlu0 %v2665, 64
        %v2813 = vpop.permute.xlu0 %2812
        %2814 = vrot.lane.b32.xlu0 %v2666, 64
        %v2815 = vpop.permute.xlu0 %2814
        %v2821 = vsel %vm819, %v2628, %v2673
        %v2822 = vsel %vm819, %v2629, %v2675
        %v2823 = vsel %vm819, %v2630, %v2677
        %v2824 = vsel %vm819, %v2631, %v2679
        %v2825 = vsel %vm819, %v2632, %v2681
        %v2826 = vsel %vm570, %v2821, %v2693
        %v2827 = vsel %vm570, %v2822, %v2695
        %v2828 = vsel %vm570, %v2823, %v2697
        %v2829 = vsel %vm570, %v2824, %v2699
        %v2830 = vsel %vm570, %v2825, %v2701
        %v2831 = vsel %vm830, %v2826, %v2710
        %v2832 = vsel %vm830, %v2827, %v2712
        %v2833 = vsel %vm830, %v2828, %v2714
        %v2834 = vsel %vm830, %v2829, %v2716
        %v2835 = vsel %vm830, %v2830, %v2718
        %v2836 = vsel %vm836, %v2710, %v2730
        %v2837 = vsel %vm836, %v2712, %v2732
        %v2838 = vsel %vm836, %v2714, %v2734
        %v2839 = vsel %vm836, %v2716, %v2736
        %v2840 = vsel %vm836, %v2718, %v2738
        %v2841 = vsel %vm842, %v2836, %v2750
        %v2842 = vsel %vm842, %v2837, %v2752
        %v2843 = vsel %vm842, %v2838, %v2754
        %v2844 = vsel %vm842, %v2839, %v2756
        %v2845 = vsel %vm842, %v2840, %v2758
        %v2846 = vsel %vm848, %v2841, %v2767
        %v2847 = vsel %vm848, %v2842, %v2769
        %v2848 = vsel %vm848, %v2843, %v2771
        %v2849 = vsel %vm848, %v2844, %v2773
        %v2850 = vsel %vm848, %v2845, %v2775
        %v2851 = vsel %vm854, %v2767, %v2787
        %v2852 = vsel %vm854, %v2769, %v2789
        %v2853 = vsel %vm854, %v2771, %v2791
        %v2854 = vsel %vm854, %v2773, %v2793
        %v2855 = vsel %vm854, %v2775, %v2795
        %v2856 = vsel %vm860, %v2851, %v2807
        %v2857 = vsel %vm860, %v2852, %v2809
        %v2858 = vsel %vm860, %v2853, %v2811
        %v2859 = vsel %vm860, %v2854, %v2813
        %v2860 = vsel %vm860, %v2855, %v2815
        %v2862 = vperm.slane %v2627, 0
        %v2865 = vsel %vm869, %v2856, 0
        %v2868 = vsel %vm869, %v2857, 0
        %v2871 = vsel %vm869, %v2858, 0
        %v2874 = vsel %vm869, %v2859, 0
        %v2877 = vsel %vm869, %v2860, 0
        %2879 = vmatpush.msra.mxu0 %v2596
        %2880 = vmatpush.msra.mxu0 %v2595
        %2881 = vmatpush.msra.mxu0 %v2594
        %2882 = vmatpush.msra.mxu0 %v2593
        %2883 = vmatpush.msra.mxu0 %v2592
        %2884 = vmatpush.msra.mxu0 %v2591
        %2885 = vmatpush.msra.mxu0 %v2590
        %2886 = vmatpush.msra.mxu0 %v2589
        %2887 = vmatpush.msra.mxu0 %v2588
        %2888 = vmatpush.msra.mxu0 %v2587
        %2889 = vmatpush.msra.mxu0 %v2586
        %2890 = vmatpush.msra.mxu0 %v2585
        %2891 = vmatpush.msra.mxu0 %v2584
        %2892 = vmatpush.msra.mxu0 %v2583
        %2893 = vmatpush.msra.mxu0 %v2582
        %2894 = vmatpush.msra.mxu0 %v2581
        %2895 = vmatmul.f32.gmra.mxu0 %v2831
        %v2896 = vpop.f32.mrf.mxu0
        %v2897 = vadd.f32 %v2862, %v2896
        %2898 = vmatmul.f32.gmra.mxu0 %v2832
        %v2899 = vpop.f32.mrf.mxu0
        %v2900 = vadd.f32 %v2862, %v2899
        %2901 = vmatmul.f32.gmra.mxu0 %v2833
        %v2902 = vpop.f32.mrf.mxu0
        %v2903 = vadd.f32 %v2862, %v2902
        %2904 = vmatmul.f32.gmra.mxu0 %v2834
        %v2905 = vpop.f32.mrf.mxu0
        %v2906 = vadd.f32 %v2862, %v2905
        %2907 = vmatmul.f32.gmra.mxu0 %v2835
        %v2908 = vpop.f32.mrf.mxu0
        %v2909 = vadd.f32 %v2862, %v2908
        %2910 = vdwg.mxu0
        %2911 = vmatpush.msra.mxu0 %v2612
        %2912 = vmatpush.msra.mxu0 %v2611
        %2913 = vmatpush.msra.mxu0 %v2610
        %2914 = vmatpush.msra.mxu0 %v2609
        %2915 = vmatpush.msra.mxu0 %v2608
        %2916 = vmatpush.msra.mxu0 %v2607
        %2917 = vmatpush.msra.mxu0 %v2606
        %2918 = vmatpush.msra.mxu0 %v2605
        %2919 = vmatpush.msra.mxu0 %v2604
        %2920 = vmatpush.msra.mxu0 %v2603
        %2921 = vmatpush.msra.mxu0 %v2602
        %2922 = vmatpush.msra.mxu0 %v2601
        %2923 = vmatpush.msra.mxu0 %v2600
        %2924 = vmatpush.msra.mxu0 %v2599
        %2925 = vmatpush.msra.mxu0 %v2598
        %2926 = vmatpush.msra.mxu0 %v2597
        %2927 = vmatmul.f32.gmra.mxu0 %v2846
        %v2928 = vpop.f32.mrf.mxu0
        %v2929 = vadd.f32 %v2897, %v2928
        %2930 = vmatmul.f32.gmra.mxu0 %v2847
        %v2931 = vpop.f32.mrf.mxu0
        %v2932 = vadd.f32 %v2900, %v2931
        %2933 = vmatmul.f32.gmra.mxu0 %v2848
        %v2934 = vpop.f32.mrf.mxu0
        %v2935 = vadd.f32 %v2903, %v2934
        %2936 = vmatmul.f32.gmra.mxu0 %v2849
        %v2937 = vpop.f32.mrf.mxu0
        %v2938 = vadd.f32 %v2906, %v2937
        %2939 = vmatmul.f32.gmra.mxu0 %v2850
        %v2940 = vpop.f32.mrf.mxu0
        %v2941 = vadd.f32 %v2909, %v2940
        %2942 = vdwg.mxu0
        %2943 = vmatpush.msra.mxu0 0.0
        %2944 = vmatpush.msra.mxu0 0.0
        %2945 = vmatpush.msra.mxu0 0.0
        %2946 = vmatpush.msra.mxu0 %v2625
        %2947 = vmatpush.msra.mxu0 %v2624
        %2948 = vmatpush.msra.mxu0 %v2623
        %2949 = vmatpush.msra.mxu0 %v2622
        %2950 = vmatpush.msra.mxu0 %v2621
        %2951 = vmatpush.msra.mxu0 %v2620
        %2952 = vmatpush.msra.mxu0 %v2619
        %2953 = vmatpush.msra.mxu0 %v2618
        %2954 = vmatpush.msra.mxu0 %v2617
        %2955 = vmatpush.msra.mxu0 %v2616
        %2956 = vmatpush.msra.mxu0 %v2615
        %2957 = vmatpush.msra.mxu0 %v2614
        %2958 = vmatpush.msra.mxu0 %v2613
        %2959 = vmatmul.f32.gmra.mxu0 %v2865
        %v2960 = vpop.f32.mrf.mxu0
        %v2961 = vadd.f32 %v2929, %v2960
        %2962 = vmatmul.f32.gmra.mxu0 %v2868
        %v2963 = vpop.f32.mrf.mxu0
        %v2964 = vadd.f32 %v2932, %v2963
        %2965 = vmatmul.f32.gmra.mxu0 %v2871
        %v2966 = vpop.f32.mrf.mxu0
        %v2967 = vadd.f32 %v2935, %v2966
        %2968 = vmatmul.f32.gmra.mxu0 %v2874
        %v2969 = vpop.f32.mrf.mxu0
        %v2970 = vadd.f32 %v2938, %v2969
        %2971 = vmatmul.f32.gmra.mxu0 %v2877
        %v2972 = vpop.f32.mrf.mxu0
        %v2973 = vadd.f32 %v2941, %v2972
        %2974 = vdwg.mxu0
        %v2975 = vmax.f32 %v2961, 0.0
        %v2976 = vmax.f32 %v2964, 0.0
        %v2977 = vmax.f32 %v2967, 0.0
        %v2978 = vmax.f32 %v2970, 0.0
        %v2979 = vmax.f32 %v2973, 0.0
        %v2980 = vmul.f32 %v2975, %v565
        %v2981 = vmul.f32 %v2976, %v566
        %v2982 = vmul.f32 %v2977, %v567
        %v2983 = vmul.f32 %v2978, %v568
        %v2984 = vmul.f32 %v2979, %v569
        %2985 = vst.msk [vmem:[#allocation2 + $0xb] sm:$0xff] %vm570, %v2980
        %2986 = vst.msk [vmem:[#allocation2 + $0x13] sm:$0xff] %vm570, %v2981
        %2987 = vst.msk [vmem:[#allocation2 + $0x1b] sm:$0xff] %vm570, %v2982
        %2988 = vst.msk [vmem:[#allocation2 + $0x23] sm:$0xff] %vm570, %v2983
        %2989 = vst.msk [vmem:[#allocation2 + $0x2b] sm:$0x3f] %vm995, %v2984
        %s2990 = scalar_lea.vmem [#allocation7], 1440
        %v2991 = vld [vmem:[%s2990] sm:$0xff]
        %v2992 = vld [vmem:[%s2990 + $0x8] sm:$0xff]
        %v2993 = vld [vmem:[%s2990 + $0x10] sm:$0xff]
        %v2994 = vld [vmem:[%s2990 + $0x18] sm:$0xff]
        %v2995 = vld [vmem:[%s2990 + $0x20] sm:$0xff]
        %v2996 = vld [vmem:[%s2990 + $0x28] sm:$0xff]
        %v2997 = vld [vmem:[%s2990 + $0x30] sm:$0xff]
        %v2998 = vld [vmem:[%s2990 + $0x38] sm:$0xff]
        %v2999 = vld [vmem:[%s2990 + $0x40] sm:$0xff]
        %v3000 = vld [vmem:[%s2990 + $0x48] sm:$0xff]
        %v3001 = vld [vmem:[%s2990 + $0x50] sm:$0xff]
        %v3002 = vld [vmem:[%s2990 + $0x58] sm:$0xff]
        %v3003 = vld [vmem:[%s2990 + $0x60] sm:$0xff]
        %v3004 = vld [vmem:[%s2990 + $0x68] sm:$0xff]
        %v3005 = vld [vmem:[%s2990 + $0x70] sm:$0xff]
        %v3006 = vld [vmem:[%s2990 + $0x78] sm:$0xff]
        %v3007 = vld [vmem:[%s2990 + $0x80] sm:$0xff]
        %v3008 = vld [vmem:[%s2990 + $0x88] sm:$0xff]
        %v3009 = vld [vmem:[%s2990 + $0x90] sm:$0xff]
        %v3010 = vld [vmem:[%s2990 + $0x98] sm:$0xff]
        %v3011 = vld [vmem:[%s2990 + $0xa0] sm:$0xff]
        %v3012 = vld [vmem:[%s2990 + $0xa8] sm:$0xff]
        %v3013 = vld [vmem:[%s2990 + $0xb0] sm:$0xff]
        %v3014 = vld [vmem:[%s2990 + $0xb8] sm:$0xff]
        %v3015 = vld [vmem:[%s2990 + $0xc0] sm:$0xff]
        %v3016 = vld [vmem:[%s2990 + $0xc8] sm:$0xff]
        %v3017 = vld [vmem:[%s2990 + $0xd0] sm:$0xff]
        %v3018 = vld [vmem:[%s2990 + $0xd8] sm:$0xff]
        %v3019 = vld [vmem:[%s2990 + $0xe0] sm:$0xff]
        %v3020 = vld [vmem:[%s2990 + $0xe8] sm:$0xff]
        %v3021 = vld [vmem:[%s2990 + $0xf0] sm:$0xff]
        %v3022 = vld [vmem:[%s2990 + $0xf8] sm:$0xff]
        %v3023 = vld [vmem:[%s2990 + $0x100] sm:$0xff]
        %v3024 = vld [vmem:[%s2990 + $0x108] sm:$0xff]
        %v3025 = vld [vmem:[%s2990 + $0x110] sm:$0xff]
        %v3026 = vld [vmem:[%s2990 + $0x118] sm:$0xff]
        %v3027 = vld [vmem:[%s2990 + $0x120] sm:$0xff]
        %v3028 = vld [vmem:[%s2990 + $0x128] sm:$0xff]
        %v3029 = vld [vmem:[%s2990 + $0x130] sm:$0xff]
        %v3030 = vld [vmem:[%s2990 + $0x138] sm:$0xff]
        %v3031 = vld [vmem:[%s2990 + $0x140] sm:$0xff]
        %v3032 = vld [vmem:[%s2990 + $0x148] sm:$0xff]
        %v3033 = vld [vmem:[%s2990 + $0x150] sm:$0xff]
        %v3034 = vld [vmem:[%s2990 + $0x158] sm:$0xff]
        %v3035 = vld [vmem:[%s2990 + $0x160] sm:$0xff]
        %v3036 = vld [vmem:[%s2990 + $0x168] sm:$0xff]
        %v3037 = vld [vmem:[%s2990 + $0x170] sm:$0xff]
        %v3038 = vld [vmem:[%s2990 + $0x178] sm:$0xff]
        %v3039 = vld [vmem:[%s2990 + $0x180] sm:$0xff]
        %v3040 = vld [vmem:[%s2990 + $0x188] sm:$0xff]
        %v3041 = vld [vmem:[%s2990 + $0x190] sm:$0xff]
        %v3042 = vld [vmem:[%s2990 + $0x198] sm:$0xff]
        %v3043 = vld [vmem:[%s2990 + $0x1a0] sm:$0xff]
        %v3044 = vld [vmem:[%s2990 + $0x1a8] sm:$0xff]
        %v3045 = vld [vmem:[%s2990 + $0x1b0] sm:$0xff]
        %v3046 = vld [vmem:[%s2990 + $0x1b8] sm:$0xff]
        %v3047 = vld [vmem:[%s2990 + $0x1c0] sm:$0xff]
        %v3048 = vld [vmem:[%s2990 + $0x1c8] sm:$0xff]
        %v3049 = vld [vmem:[%s2990 + $0x1d0] sm:$0xff]
        %v3050 = vld [vmem:[%s2990 + $0x1d8] sm:$0xff]
        %v3051 = vld [vmem:[%s2990 + $0x1e0] sm:$0xff]
        %v3052 = vld [vmem:[%s2990 + $0x1e8] sm:$0xff]
        %v3053 = vld [vmem:[%s2990 + $0x1f0] sm:$0xff]
        %v3054 = vld [vmem:[%s2990 + $0x1f8] sm:$0xff]
        %v3055 = vld [vmem:[%s2990 + $0x200] sm:$0xff]
        %v3056 = vld [vmem:[%s2990 + $0x208] sm:$0xff]
        %v3057 = vld [vmem:[%s2990 + $0x210] sm:$0xff]
        %v3058 = vld [vmem:[%s2990 + $0x218] sm:$0xff]
        %v3059 = vld [vmem:[%s2990 + $0x220] sm:$0xff]
        %v3060 = vld [vmem:[%s2990 + $0x228] sm:$0xff]
        %v3061 = vld [vmem:[%s2990 + $0x230] sm:$0xff]
        %v3062 = vld [vmem:[%s2990 + $0x238] sm:$0xff]
        %v3063 = vld [vmem:[%s2990 + $0x240] sm:$0xff]
        %v3064 = vld [vmem:[%s2990 + $0x248] sm:$0xff]
        %v3065 = vld [vmem:[%s2990 + $0x250] sm:$0xff]
        %v3066 = vld [vmem:[%s2990 + $0x258] sm:$0xff]
        %v3067 = vld [vmem:[%s2990 + $0x260] sm:$0xff]
        %v3068 = vld [vmem:[%s2990 + $0x268] sm:$0xff]
        %v3069 = vld [vmem:[%s2990 + $0x270] sm:$0xff]
        %v3070 = vld [vmem:[%s2990 + $0x278] sm:$0xff]
        %v3071 = vld [vmem:[%s2990 + $0x280] sm:$0xff]
        %v3072 = vld [vmem:[%s2990 + $0x288] sm:$0xff]
        %v3073 = vld [vmem:[%s2990 + $0x290] sm:$0xff]
        %v3074 = vld [vmem:[%s2990 + $0x298] sm:$0xff]
        %v3075 = vld [vmem:[%s2990 + $0x2a0] sm:$0xff]
        %v3076 = vld [vmem:[%s2990 + $0x2a8] sm:$0xff]
        %v3077 = vld [vmem:[%s2990 + $0x2b0] sm:$0xff]
        %v3078 = vld [vmem:[%s2990 + $0x2b8] sm:$0xff]
        %v3079 = vld [vmem:[%s2990 + $0x2c0] sm:$0xff]
        %v3080 = vld [vmem:[%s2990 + $0x2c8] sm:$0xff]
        %s3081 = scalar_lea.vmem [#allocation8], 2
        %v3082 = vld [vmem:[%s3081] sm:$0x1]
        %v3083 = vld [vmem:[#allocation2] sm:$0xff]
        %v3084 = vld [vmem:[#allocation2 + $0x8] sm:$0xff]
        %v3085 = vld [vmem:[#allocation2 + $0x10] sm:$0xff]
        %v3086 = vld [vmem:[#allocation2 + $0x18] sm:$0xff]
        %v3087 = vld [vmem:[#allocation2 + $0x20] sm:$0x3f]
        %v3088 = vld [vmem:[#allocation2 + $0x1] sm:$0xff]
        %v3089 = vld [vmem:[#allocation2 + $0x9] sm:$0xff]
        %v3090 = vld [vmem:[#allocation2 + $0x11] sm:$0xff]
        %v3091 = vld [vmem:[#allocation2 + $0x19] sm:$0xff]
        %v3092 = vld [vmem:[#allocation2 + $0x21] sm:$0x3f]
        %v3093 = vld [vmem:[#allocation2 + $0x2] sm:$0xff]
        %v3094 = vld [vmem:[#allocation2 + $0xa] sm:$0xff]
        %v3095 = vld [vmem:[#allocation2 + $0x12] sm:$0xff]
        %v3096 = vld [vmem:[#allocation2 + $0x1a] sm:$0xff]
        %v3097 = vld [vmem:[#allocation2 + $0x22] sm:$0x3f]
        %v3098 = vld [vmem:[#allocation2 + $0x22] sm:$0xff]
        %v3099 = vld [vmem:[#allocation2 + $0x2a] sm:$0x3f]
        %v3100 = vld [vmem:[#allocation2 + $0xb] sm:$0xff]
        %v3101 = vld [vmem:[#allocation2 + $0x13] sm:$0xff]
        %v3102 = vld [vmem:[#allocation2 + $0x1b] sm:$0xff]
        %v3103 = vld [vmem:[#allocation2 + $0x23] sm:$0xff]
        %v3104 = vld [vmem:[#allocation2 + $0x2b] sm:$0x3f]
        %v3105 = vld [vmem:[#allocation2 + $0xc] sm:$0xff]
        %v3106 = vld [vmem:[#allocation2 + $0x14] sm:$0xff]
        %v3107 = vld [vmem:[#allocation2 + $0x1c] sm:$0xff]
        %v3108 = vld [vmem:[#allocation2 + $0x24] sm:$0xff]
        %v3109 = vld [vmem:[#allocation2 + $0x2c] sm:$0x3f]
        %v3110 = vld [vmem:[#allocation2 + $0x2c] sm:$0xff]
        %v3111 = vld [vmem:[#allocation2 + $0x34] sm:$0x3f]
        %v3112 = vld [vmem:[#allocation2 + $0x15] sm:$0xff]
        %v3113 = vld [vmem:[#allocation2 + $0x1d] sm:$0xff]
        %v3114 = vld [vmem:[#allocation2 + $0x25] sm:$0xff]
        %v3115 = vld [vmem:[#allocation2 + $0x2d] sm:$0xff]
        %v3116 = vld [vmem:[#allocation2 + $0x35] sm:$0x3f]
        %v3117 = vld [vmem:[#allocation2 + $0x16] sm:$0xff]
        %v3118 = vld [vmem:[#allocation2 + $0x1e] sm:$0xff]
        %v3119 = vld [vmem:[#allocation2 + $0x26] sm:$0xff]
        %v3120 = vld [vmem:[#allocation2 + $0x2e] sm:$0xff]
        %v3121 = vld [vmem:[#allocation2 + $0x36] sm:$0x3f]
        %3127 = vrot.lane.b32.xlu0 %v3088, 80
        %v3128 = vpop.permute.xlu0 %3127
        %3129 = vrot.lane.b32.xlu0 %v3089, 80
        %v3130 = vpop.permute.xlu0 %3129
        %3131 = vrot.lane.b32.xlu0 %v3090, 80
        %v3132 = vpop.permute.xlu0 %3131
        %3133 = vrot.lane.b32.xlu0 %v3091, 80
        %v3134 = vpop.permute.xlu0 %3133
        %3135 = vrot.lane.b32.xlu0 %v3092, 80
        %v3136 = vpop.permute.xlu0 %3135
        %3147 = vrot.lane.b32.xlu0 %v3093, 32
        %v3148 = vpop.permute.xlu0 %3147
        %3149 = vrot.lane.b32.xlu0 %v3094, 32
        %v3150 = vpop.permute.xlu0 %3149
        %3151 = vrot.lane.b32.xlu0 %v3095, 32
        %v3152 = vpop.permute.xlu0 %3151
        %3153 = vrot.lane.b32.xlu0 %v3096, 32
        %v3154 = vpop.permute.xlu0 %3153
        %3155 = vrot.lane.b32.xlu0 %v3097, 32
        %v3156 = vpop.permute.xlu0 %3155
        %3164 = vrot.lane.b32.xlu0 %v3094, 112
        %v3165 = vpop.permute.xlu0 %3164
        %3166 = vrot.lane.b32.xlu0 %v3095, 112
        %v3167 = vpop.permute.xlu0 %3166
        %3168 = vrot.lane.b32.xlu0 %v3096, 112
        %v3169 = vpop.permute.xlu0 %3168
        %3170 = vrot.lane.b32.xlu0 %v3098, 112
        %v3171 = vpop.permute.xlu0 %3170
        %3172 = vrot.lane.b32.xlu0 %v3099, 112
        %v3173 = vpop.permute.xlu0 %3172
        %3184 = vrot.lane.b32.xlu0 %v3100, 64
        %v3185 = vpop.permute.xlu0 %3184
        %3186 = vrot.lane.b32.xlu0 %v3101, 64
        %v3187 = vpop.permute.xlu0 %3186
        %3188 = vrot.lane.b32.xlu0 %v3102, 64
        %v3189 = vpop.permute.xlu0 %3188
        %3190 = vrot.lane.b32.xlu0 %v3103, 64
        %v3191 = vpop.permute.xlu0 %3190
        %3192 = vrot.lane.b32.xlu0 %v3104, 64
        %v3193 = vpop.permute.xlu0 %3192
        %3204 = vrot.lane.b32.xlu0 %v3105, 16
        %v3205 = vpop.permute.xlu0 %3204
        %3206 = vrot.lane.b32.xlu0 %v3106, 16
        %v3207 = vpop.permute.xlu0 %3206
        %3208 = vrot.lane.b32.xlu0 %v3107, 16
        %v3209 = vpop.permute.xlu0 %3208
        %3210 = vrot.lane.b32.xlu0 %v3108, 16
        %v3211 = vpop.permute.xlu0 %3210
        %3212 = vrot.lane.b32.xlu0 %v3109, 16
        %v3213 = vpop.permute.xlu0 %3212
        %3221 = vrot.lane.b32.xlu0 %v3106, 96
        %v3222 = vpop.permute.xlu0 %3221
        %3223 = vrot.lane.b32.xlu0 %v3107, 96
        %v3224 = vpop.permute.xlu0 %3223
        %3225 = vrot.lane.b32.xlu0 %v3108, 96
        %v3226 = vpop.permute.xlu0 %3225
        %3227 = vrot.lane.b32.xlu0 %v3110, 96
        %v3228 = vpop.permute.xlu0 %3227
        %3229 = vrot.lane.b32.xlu0 %v3111, 96
        %v3230 = vpop.permute.xlu0 %3229
        %3241 = vrot.lane.b32.xlu0 %v3112, 48
        %v3242 = vpop.permute.xlu0 %3241
        %3243 = vrot.lane.b32.xlu0 %v3113, 48
        %v3244 = vpop.permute.xlu0 %3243
        %3245 = vrot.lane.b32.xlu0 %v3114, 48
        %v3246 = vpop.permute.xlu0 %3245
        %3247 = vrot.lane.b32.xlu0 %v3115, 48
        %v3248 = vpop.permute.xlu0 %3247
        %3249 = vrot.lane.b32.xlu0 %v3116, 48
        %v3250 = vpop.permute.xlu0 %3249
        %v3256 = vsel %vm570, %v3083, %v3128
        %v3257 = vsel %vm570, %v3084, %v3130
        %v3258 = vsel %vm570, %v3085, %v3132
        %v3259 = vsel %vm570, %v3086, %v3134
        %v3260 = vsel %vm570, %v3087, %v3136
        %v3261 = vsel %vm836, %v3128, %v3148
        %v3262 = vsel %vm836, %v3130, %v3150
        %v3263 = vsel %vm836, %v3132, %v3152
        %v3264 = vsel %vm836, %v3134, %v3154
        %v3265 = vsel %vm836, %v3136, %v3156
        %v3266 = vsel %vm848, %v3261, %v3165
        %v3267 = vsel %vm848, %v3262, %v3167
        %v3268 = vsel %vm848, %v3263, %v3169
        %v3269 = vsel %vm848, %v3264, %v3171
        %v3270 = vsel %vm848, %v3265, %v3173
        %v3271 = vsel %vm860, %v3165, %v3185
        %v3272 = vsel %vm860, %v3167, %v3187
        %v3273 = vsel %vm860, %v3169, %v3189
        %v3274 = vsel %vm860, %v3171, %v3191
        %v3275 = vsel %vm860, %v3173, %v3193
        %v3276 = vsel %vm1281, %v3185, %v3205
        %v3277 = vsel %vm1281, %v3187, %v3207
        %v3278 = vsel %vm1281, %v3189, %v3209
        %v3279 = vsel %vm1281, %v3191, %v3211
        %v3280 = vsel %vm1281, %v3193, %v3213
        %v3281 = vsel %vm1287, %v3276, %v3222
        %v3282 = vsel %vm1287, %v3277, %v3224
        %v3283 = vsel %vm1287, %v3278, %v3226
        %v3284 = vsel %vm1287, %v3279, %v3228
        %v3285 = vsel %vm1287, %v3280, %v3230
        %v3286 = vsel %vm1293, %v3222, %v3242
        %v3287 = vsel %vm1293, %v3224, %v3244
        %v3288 = vsel %vm1293, %v3226, %v3246
        %v3289 = vsel %vm1293, %v3228, %v3248
        %v3290 = vsel %vm1293, %v3230, %v3250
        %v3292 = vperm.slane %v3082, 0
        %v3295 = vsel %vm570, %v3117, 0
        %v3298 = vsel %vm570, %v3118, 0
        %v3301 = vsel %vm570, %v3119, 0
        %v3304 = vsel %vm570, %v3120, 0
        %v3307 = vsel %vm570, %v3121, 0
        %3309 = vmatpush.msra.mxu0 %v3006
        %3310 = vmatpush.msra.mxu0 %v3005
        %3311 = vmatpush.msra.mxu0 %v3004
        %3312 = vmatpush.msra.mxu0 %v3003
        %3313 = vmatpush.msra.mxu0 %v3002
        %3314 = vmatpush.msra.mxu0 %v3001
        %3315 = vmatpush.msra.mxu0 %v3000
        %3316 = vmatpush.msra.mxu0 %v2999
        %3317 = vmatpush.msra.mxu0 %v2998
        %3318 = vmatpush.msra.mxu0 %v2997
        %3319 = vmatpush.msra.mxu0 %v2996
        %3320 = vmatpush.msra.mxu0 %v2995
        %3321 = vmatpush.msra.mxu0 %v2994
        %3322 = vmatpush.msra.mxu0 %v2993
        %3323 = vmatpush.msra.mxu0 %v2992
        %3324 = vmatpush.msra.mxu0 %v2991
        %3325 = vmatmul.f32.gmra.mxu0 %v3256
        %v3326 = vpop.f32.mrf.mxu0
        %v3327 = vadd.f32 %v3292, %v3326
        %3328 = vmatmul.f32.gmra.mxu0 %v3257
        %v3329 = vpop.f32.mrf.mxu0
        %v3330 = vadd.f32 %v3292, %v3329
        %3331 = vmatmul.f32.gmra.mxu0 %v3258
        %v3332 = vpop.f32.mrf.mxu0
        %v3333 = vadd.f32 %v3292, %v3332
        %3334 = vmatmul.f32.gmra.mxu0 %v3259
        %v3335 = vpop.f32.mrf.mxu0
        %v3336 = vadd.f32 %v3292, %v3335
        %3337 = vmatmul.f32.gmra.mxu0 %v3260
        %v3338 = vpop.f32.mrf.mxu0
        %v3339 = vadd.f32 %v3292, %v3338
        %3340 = vdwg.mxu0
        %3341 = vmatpush.msra.mxu0 %v3022
        %3342 = vmatpush.msra.mxu0 %v3021
        %3343 = vmatpush.msra.mxu0 %v3020
        %3344 = vmatpush.msra.mxu0 %v3019
        %3345 = vmatpush.msra.mxu0 %v3018
        %3346 = vmatpush.msra.mxu0 %v3017
        %3347 = vmatpush.msra.mxu0 %v3016
        %3348 = vmatpush.msra.mxu0 %v3015
        %3349 = vmatpush.msra.mxu0 %v3014
        %3350 = vmatpush.msra.mxu0 %v3013
        %3351 = vmatpush.msra.mxu0 %v3012
        %3352 = vmatpush.msra.mxu0 %v3011
        %3353 = vmatpush.msra.mxu0 %v3010
        %3354 = vmatpush.msra.mxu0 %v3009
        %3355 = vmatpush.msra.mxu0 %v3008
        %3356 = vmatpush.msra.mxu0 %v3007
        %3357 = vmatmul.f32.gmra.mxu0 %v3266
        %v3358 = vpop.f32.mrf.mxu0
        %v3359 = vadd.f32 %v3327, %v3358
        %3360 = vmatmul.f32.gmra.mxu0 %v3267
        %v3361 = vpop.f32.mrf.mxu0
        %v3362 = vadd.f32 %v3330, %v3361
        %3363 = vmatmul.f32.gmra.mxu0 %v3268
        %v3364 = vpop.f32.mrf.mxu0
        %v3365 = vadd.f32 %v3333, %v3364
        %3366 = vmatmul.f32.gmra.mxu0 %v3269
        %v3367 = vpop.f32.mrf.mxu0
        %v3368 = vadd.f32 %v3336, %v3367
        %3369 = vmatmul.f32.gmra.mxu0 %v3270
        %v3370 = vpop.f32.mrf.mxu0
        %v3371 = vadd.f32 %v3339, %v3370
        %3372 = vdwg.mxu0
        %3373 = vmatpush.msra.mxu0 %v3038
        %3374 = vmatpush.msra.mxu0 %v3037
        %3375 = vmatpush.msra.mxu0 %v3036
        %3376 = vmatpush.msra.mxu0 %v3035
        %3377 = vmatpush.msra.mxu0 %v3034
        %3378 = vmatpush.msra.mxu0 %v3033
        %3379 = vmatpush.msra.mxu0 %v3032
        %3380 = vmatpush.msra.mxu0 %v3031
        %3381 = vmatpush.msra.mxu0 %v3030
        %3382 = vmatpush.msra.mxu0 %v3029
        %3383 = vmatpush.msra.mxu0 %v3028
        %3384 = vmatpush.msra.mxu0 %v3027
        %3385 = vmatpush.msra.mxu0 %v3026
        %3386 = vmatpush.msra.mxu0 %v3025
        %3387 = vmatpush.msra.mxu0 %v3024
        %3388 = vmatpush.msra.mxu0 %v3023
        %3389 = vmatmul.f32.gmra.mxu0 %v3271
        %v3390 = vpop.f32.mrf.mxu0
        %v3391 = vadd.f32 %v3359, %v3390
        %3392 = vmatmul.f32.gmra.mxu0 %v3272
        %v3393 = vpop.f32.mrf.mxu0
        %v3394 = vadd.f32 %v3362, %v3393
        %3395 = vmatmul.f32.gmra.mxu0 %v3273
        %v3396 = vpop.f32.mrf.mxu0
        %v3397 = vadd.f32 %v3365, %v3396
        %3398 = vmatmul.f32.gmra.mxu0 %v3274
        %v3399 = vpop.f32.mrf.mxu0
        %v3400 = vadd.f32 %v3368, %v3399
        %3401 = vmatmul.f32.gmra.mxu0 %v3275
        %v3402 = vpop.f32.mrf.mxu0
        %v3403 = vadd.f32 %v3371, %v3402
        %3404 = vdwg.mxu0
        %3405 = vmatpush.msra.mxu0 %v3054
        %3406 = vmatpush.msra.mxu0 %v3053
        %3407 = vmatpush.msra.mxu0 %v3052
        %3408 = vmatpush.msra.mxu0 %v3051
        %3409 = vmatpush.msra.mxu0 %v3050
        %3410 = vmatpush.msra.mxu0 %v3049
        %3411 = vmatpush.msra.mxu0 %v3048
        %3412 = vmatpush.msra.mxu0 %v3047
        %3413 = vmatpush.msra.mxu0 %v3046
        %3414 = vmatpush.msra.mxu0 %v3045
        %3415 = vmatpush.msra.mxu0 %v3044
        %3416 = vmatpush.msra.mxu0 %v3043
        %3417 = vmatpush.msra.mxu0 %v3042
        %3418 = vmatpush.msra.mxu0 %v3041
        %3419 = vmatpush.msra.mxu0 %v3040
        %3420 = vmatpush.msra.mxu0 %v3039
        %3421 = vmatmul.f32.gmra.mxu0 %v3281
        %v3422 = vpop.f32.mrf.mxu0
        %v3423 = vadd.f32 %v3391, %v3422
        %3424 = vmatmul.f32.gmra.mxu0 %v3282
        %v3425 = vpop.f32.mrf.mxu0
        %v3426 = vadd.f32 %v3394, %v3425
        %3427 = vmatmul.f32.gmra.mxu0 %v3283
        %v3428 = vpop.f32.mrf.mxu0
        %v3429 = vadd.f32 %v3397, %v3428
        %3430 = vmatmul.f32.gmra.mxu0 %v3284
        %v3431 = vpop.f32.mrf.mxu0
        %v3432 = vadd.f32 %v3400, %v3431
        %3433 = vmatmul.f32.gmra.mxu0 %v3285
        %v3434 = vpop.f32.mrf.mxu0
        %v3435 = vadd.f32 %v3403, %v3434
        %3436 = vdwg.mxu0
        %3437 = vmatpush.msra.mxu0 %v3070
        %3438 = vmatpush.msra.mxu0 %v3069
        %3439 = vmatpush.msra.mxu0 %v3068
        %3440 = vmatpush.msra.mxu0 %v3067
        %3441 = vmatpush.msra.mxu0 %v3066
        %3442 = vmatpush.msra.mxu0 %v3065
        %3443 = vmatpush.msra.mxu0 %v3064
        %3444 = vmatpush.msra.mxu0 %v3063
        %3445 = vmatpush.msra.mxu0 %v3062
        %3446 = vmatpush.msra.mxu0 %v3061
        %3447 = vmatpush.msra.mxu0 %v3060
        %3448 = vmatpush.msra.mxu0 %v3059
        %3449 = vmatpush.msra.mxu0 %v3058
        %3450 = vmatpush.msra.mxu0 %v3057
        %3451 = vmatpush.msra.mxu0 %v3056
        %3452 = vmatpush.msra.mxu0 %v3055
        %3453 = vmatmul.f32.gmra.mxu0 %v3286
        %v3454 = vpop.f32.mrf.mxu0
        %v3455 = vadd.f32 %v3423, %v3454
        %3456 = vmatmul.f32.gmra.mxu0 %v3287
        %v3457 = vpop.f32.mrf.mxu0
        %v3458 = vadd.f32 %v3426, %v3457
        %3459 = vmatmul.f32.gmra.mxu0 %v3288
        %v3460 = vpop.f32.mrf.mxu0
        %v3461 = vadd.f32 %v3429, %v3460
        %3462 = vmatmul.f32.gmra.mxu0 %v3289
        %v3463 = vpop.f32.mrf.mxu0
        %v3464 = vadd.f32 %v3432, %v3463
        %3465 = vmatmul.f32.gmra.mxu0 %v3290
        %v3466 = vpop.f32.mrf.mxu0
        %v3467 = vadd.f32 %v3435, %v3466
        %3468 = vdwg.mxu0
        %3469 = vmatpush.msra.mxu0 0.0
        %3470 = vmatpush.msra.mxu0 0.0
        %3471 = vmatpush.msra.mxu0 0.0
        %3472 = vmatpush.msra.mxu0 0.0
        %3473 = vmatpush.msra.mxu0 0.0
        %3474 = vmatpush.msra.mxu0 0.0
        %3475 = vmatpush.msra.mxu0 %v3080
        %3476 = vmatpush.msra.mxu0 %v3079
        %3477 = vmatpush.msra.mxu0 %v3078
        %3478 = vmatpush.msra.mxu0 %v3077
        %3479 = vmatpush.msra.mxu0 %v3076
        %3480 = vmatpush.msra.mxu0 %v3075
        %3481 = vmatpush.msra.mxu0 %v3074
        %3482 = vmatpush.msra.mxu0 %v3073
        %3483 = vmatpush.msra.mxu0 %v3072
        %3484 = vmatpush.msra.mxu0 %v3071
        %3485 = vmatmul.f32.gmra.mxu0 %v3295
        %v3486 = vpop.f32.mrf.mxu0
        %v3487 = vadd.f32 %v3455, %v3486
        %3488 = vmatmul.f32.gmra.mxu0 %v3298
        %v3489 = vpop.f32.mrf.mxu0
        %v3490 = vadd.f32 %v3458, %v3489
        %3491 = vmatmul.f32.gmra.mxu0 %v3301
        %v3492 = vpop.f32.mrf.mxu0
        %v3493 = vadd.f32 %v3461, %v3492
        %3494 = vmatmul.f32.gmra.mxu0 %v3304
        %v3495 = vpop.f32.mrf.mxu0
        %v3496 = vadd.f32 %v3464, %v3495
        %3497 = vmatmul.f32.gmra.mxu0 %v3307
        %v3498 = vpop.f32.mrf.mxu0
        %v3499 = vadd.f32 %v3467, %v3498
        %3500 = vdwg.mxu0
        %v3501 = vmax.f32 %v3487, 0.0
        %v3502 = vmax.f32 %v3490, 0.0
        %v3503 = vmax.f32 %v3493, 0.0
        %v3504 = vmax.f32 %v3496, 0.0
        %v3505 = vmax.f32 %v3499, 0.0
        %v3506 = vmul.f32 %v3501, %v565
        %v3507 = vmul.f32 %v3502, %v566
        %v3508 = vmul.f32 %v3503, %v567
        %v3509 = vmul.f32 %v3504, %v568
        %v3510 = vmul.f32 %v3505, %v569
        %v3511 = vadd.f32 %v3506, %v3100
        %v3512 = vadd.f32 %v3507, %v3101
        %v3513 = vadd.f32 %v3508, %v3102
        %v3514 = vadd.f32 %v3509, %v3103
        %v3515 = vadd.f32 %v3510, %v3104
        %3516 = vst.msk [vmem:[#allocation2 + $0xb] sm:$0xff] %vm570, %v3511
        %3517 = vst.msk [vmem:[#allocation2 + $0x13] sm:$0xff] %vm570, %v3512
        %3518 = vst.msk [vmem:[#allocation2 + $0x1b] sm:$0xff] %vm570, %v3513
        %3519 = vst.msk [vmem:[#allocation2 + $0x23] sm:$0xff] %vm570, %v3514
        %3520 = vst.msk [vmem:[#allocation2 + $0x2b] sm:$0x3f] %vm995, %v3515
        %s3521 = scalar_lea.vmem [#allocation7], 2160
        %v3522 = vld [vmem:[%s3521] sm:$0xff]
        %v3523 = vld [vmem:[%s3521 + $0x8] sm:$0xff]
        %v3524 = vld [vmem:[%s3521 + $0x10] sm:$0xff]
        %v3525 = vld [vmem:[%s3521 + $0x18] sm:$0xff]
        %v3526 = vld [vmem:[%s3521 + $0x20] sm:$0xff]
        %v3527 = vld [vmem:[%s3521 + $0x28] sm:$0xff]
        %v3528 = vld [vmem:[%s3521 + $0x30] sm:$0xff]
        %v3529 = vld [vmem:[%s3521 + $0x38] sm:$0xff]
        %v3530 = vld [vmem:[%s3521 + $0x40] sm:$0xff]
        %v3531 = vld [vmem:[%s3521 + $0x48] sm:$0xff]
        %v3532 = vld [vmem:[%s3521 + $0x50] sm:$0xff]
        %v3533 = vld [vmem:[%s3521 + $0x58] sm:$0xff]
        %v3534 = vld [vmem:[%s3521 + $0x60] sm:$0xff]
        %v3535 = vld [vmem:[%s3521 + $0x68] sm:$0xff]
        %v3536 = vld [vmem:[%s3521 + $0x70] sm:$0xff]
        %v3537 = vld [vmem:[%s3521 + $0x78] sm:$0xff]
        %v3538 = vld [vmem:[%s3521 + $0x80] sm:$0xff]
        %v3539 = vld [vmem:[%s3521 + $0x88] sm:$0xff]
        %v3540 = vld [vmem:[%s3521 + $0x90] sm:$0xff]
        %v3541 = vld [vmem:[%s3521 + $0x98] sm:$0xff]
        %v3542 = vld [vmem:[%s3521 + $0xa0] sm:$0xff]
        %v3543 = vld [vmem:[%s3521 + $0xa8] sm:$0xff]
        %v3544 = vld [vmem:[%s3521 + $0xb0] sm:$0xff]
        %v3545 = vld [vmem:[%s3521 + $0xb8] sm:$0xff]
        %v3546 = vld [vmem:[%s3521 + $0xc0] sm:$0xff]
        %v3547 = vld [vmem:[%s3521 + $0xc8] sm:$0xff]
        %v3548 = vld [vmem:[%s3521 + $0xd0] sm:$0xff]
        %v3549 = vld [vmem:[%s3521 + $0xd8] sm:$0xff]
        %v3550 = vld [vmem:[%s3521 + $0xe0] sm:$0xff]
        %v3551 = vld [vmem:[%s3521 + $0xe8] sm:$0xff]
        %v3552 = vld [vmem:[%s3521 + $0xf0] sm:$0xff]
        %v3553 = vld [vmem:[%s3521 + $0xf8] sm:$0xff]
        %v3554 = vld [vmem:[%s3521 + $0x100] sm:$0xff]
        %v3555 = vld [vmem:[%s3521 + $0x108] sm:$0xff]
        %v3556 = vld [vmem:[%s3521 + $0x110] sm:$0xff]
        %v3557 = vld [vmem:[%s3521 + $0x118] sm:$0xff]
        %v3558 = vld [vmem:[%s3521 + $0x120] sm:$0xff]
        %v3559 = vld [vmem:[%s3521 + $0x128] sm:$0xff]
        %v3560 = vld [vmem:[%s3521 + $0x130] sm:$0xff]
        %v3561 = vld [vmem:[%s3521 + $0x138] sm:$0xff]
        %v3562 = vld [vmem:[%s3521 + $0x140] sm:$0xff]
        %v3563 = vld [vmem:[%s3521 + $0x148] sm:$0xff]
        %v3564 = vld [vmem:[%s3521 + $0x150] sm:$0xff]
        %v3565 = vld [vmem:[%s3521 + $0x158] sm:$0xff]
        %v3566 = vld [vmem:[%s3521 + $0x160] sm:$0xff]
        %v3567 = vld [vmem:[%s3521 + $0x168] sm:$0xff]
        %v3568 = vld [vmem:[%s3521 + $0x170] sm:$0xff]
        %v3569 = vld [vmem:[%s3521 + $0x178] sm:$0xff]
        %v3570 = vld [vmem:[%s3521 + $0x180] sm:$0xff]
        %v3571 = vld [vmem:[%s3521 + $0x188] sm:$0xff]
        %v3572 = vld [vmem:[%s3521 + $0x190] sm:$0xff]
        %v3573 = vld [vmem:[%s3521 + $0x198] sm:$0xff]
        %v3574 = vld [vmem:[%s3521 + $0x1a0] sm:$0xff]
        %v3575 = vld [vmem:[%s3521 + $0x1a8] sm:$0xff]
        %v3576 = vld [vmem:[%s3521 + $0x1b0] sm:$0xff]
        %v3577 = vld [vmem:[%s3521 + $0x1b8] sm:$0xff]
        %v3578 = vld [vmem:[%s3521 + $0x1c0] sm:$0xff]
        %v3579 = vld [vmem:[%s3521 + $0x1c8] sm:$0xff]
        %v3580 = vld [vmem:[%s3521 + $0x1d0] sm:$0xff]
        %v3581 = vld [vmem:[%s3521 + $0x1d8] sm:$0xff]
        %v3582 = vld [vmem:[%s3521 + $0x1e0] sm:$0xff]
        %v3583 = vld [vmem:[%s3521 + $0x1e8] sm:$0xff]
        %v3584 = vld [vmem:[%s3521 + $0x1f0] sm:$0xff]
        %v3585 = vld [vmem:[%s3521 + $0x1f8] sm:$0xff]
        %v3586 = vld [vmem:[%s3521 + $0x200] sm:$0xff]
        %v3587 = vld [vmem:[%s3521 + $0x208] sm:$0xff]
        %v3588 = vld [vmem:[%s3521 + $0x210] sm:$0xff]
        %v3589 = vld [vmem:[%s3521 + $0x218] sm:$0xff]
        %v3590 = vld [vmem:[%s3521 + $0x220] sm:$0xff]
        %v3591 = vld [vmem:[%s3521 + $0x228] sm:$0xff]
        %v3592 = vld [vmem:[%s3521 + $0x230] sm:$0xff]
        %v3593 = vld [vmem:[%s3521 + $0x238] sm:$0xff]
        %v3594 = vld [vmem:[%s3521 + $0x240] sm:$0xff]
        %v3595 = vld [vmem:[%s3521 + $0x248] sm:$0xff]
        %v3596 = vld [vmem:[%s3521 + $0x250] sm:$0xff]
        %v3597 = vld [vmem:[%s3521 + $0x258] sm:$0xff]
        %v3598 = vld [vmem:[%s3521 + $0x260] sm:$0xff]
        %v3599 = vld [vmem:[%s3521 + $0x268] sm:$0xff]
        %v3600 = vld [vmem:[%s3521 + $0x270] sm:$0xff]
        %v3601 = vld [vmem:[%s3521 + $0x278] sm:$0xff]
        %v3602 = vld [vmem:[%s3521 + $0x280] sm:$0xff]
        %v3603 = vld [vmem:[%s3521 + $0x288] sm:$0xff]
        %v3604 = vld [vmem:[%s3521 + $0x290] sm:$0xff]
        %v3605 = vld [vmem:[%s3521 + $0x298] sm:$0xff]
        %v3606 = vld [vmem:[%s3521 + $0x2a0] sm:$0xff]
        %v3607 = vld [vmem:[%s3521 + $0x2a8] sm:$0xff]
        %v3608 = vld [vmem:[%s3521 + $0x2b0] sm:$0xff]
        %v3609 = vld [vmem:[%s3521 + $0x2b8] sm:$0xff]
        %v3610 = vld [vmem:[%s3521 + $0x2c0] sm:$0xff]
        %v3611 = vld [vmem:[%s3521 + $0x2c8] sm:$0xff]
        %s3612 = scalar_lea.vmem [#allocation8], 3
        %v3613 = vld [vmem:[%s3612] sm:$0x1]
        %v3614 = vld [vmem:[#allocation2] sm:$0xff]
        %v3615 = vld [vmem:[#allocation2 + $0x8] sm:$0xff]
        %v3616 = vld [vmem:[#allocation2 + $0x10] sm:$0xff]
        %v3617 = vld [vmem:[#allocation2 + $0x18] sm:$0xff]
        %v3618 = vld [vmem:[#allocation2 + $0x20] sm:$0x3f]
        %v3619 = vld [vmem:[#allocation2 + $0x1] sm:$0xff]
        %v3620 = vld [vmem:[#allocation2 + $0x9] sm:$0xff]
        %v3621 = vld [vmem:[#allocation2 + $0x11] sm:$0xff]
        %v3622 = vld [vmem:[#allocation2 + $0x19] sm:$0xff]
        %v3623 = vld [vmem:[#allocation2 + $0x21] sm:$0x3f]
        %v3624 = vld [vmem:[#allocation2 + $0x2] sm:$0xff]
        %v3625 = vld [vmem:[#allocation2 + $0xa] sm:$0xff]
        %v3626 = vld [vmem:[#allocation2 + $0x12] sm:$0xff]
        %v3627 = vld [vmem:[#allocation2 + $0x1a] sm:$0xff]
        %v3628 = vld [vmem:[#allocation2 + $0x22] sm:$0x3f]
        %v3629 = vld [vmem:[#allocation2 + $0x22] sm:$0xff]
        %v3630 = vld [vmem:[#allocation2 + $0x2a] sm:$0x3f]
        %v3631 = vld [vmem:[#allocation2 + $0xb] sm:$0xff]
        %v3632 = vld [vmem:[#allocation2 + $0x13] sm:$0xff]
        %v3633 = vld [vmem:[#allocation2 + $0x1b] sm:$0xff]
        %v3634 = vld [vmem:[#allocation2 + $0x23] sm:$0xff]
        %v3635 = vld [vmem:[#allocation2 + $0x2b] sm:$0x3f]
        %v3636 = vld [vmem:[#allocation2 + $0xc] sm:$0xff]
        %v3637 = vld [vmem:[#allocation2 + $0x14] sm:$0xff]
        %v3638 = vld [vmem:[#allocation2 + $0x1c] sm:$0xff]
        %v3639 = vld [vmem:[#allocation2 + $0x24] sm:$0xff]
        %v3640 = vld [vmem:[#allocation2 + $0x2c] sm:$0x3f]
        %v3641 = vld [vmem:[#allocation2 + $0x2c] sm:$0xff]
        %v3642 = vld [vmem:[#allocation2 + $0x34] sm:$0x3f]
        %v3643 = vld [vmem:[#allocation2 + $0x15] sm:$0xff]
        %v3644 = vld [vmem:[#allocation2 + $0x1d] sm:$0xff]
        %v3645 = vld [vmem:[#allocation2 + $0x25] sm:$0xff]
        %v3646 = vld [vmem:[#allocation2 + $0x2d] sm:$0xff]
        %v3647 = vld [vmem:[#allocation2 + $0x35] sm:$0x3f]
        %v3648 = vld [vmem:[#allocation2 + $0x16] sm:$0xff]
        %v3649 = vld [vmem:[#allocation2 + $0x1e] sm:$0xff]
        %v3650 = vld [vmem:[#allocation2 + $0x26] sm:$0xff]
        %v3651 = vld [vmem:[#allocation2 + $0x2e] sm:$0xff]
        %v3652 = vld [vmem:[#allocation2 + $0x36] sm:$0x3f]
        %3658 = vrot.lane.b32.xlu0 %v3619, 80
        %v3659 = vpop.permute.xlu0 %3658
        %3660 = vrot.lane.b32.xlu0 %v3620, 80
        %v3661 = vpop.permute.xlu0 %3660
        %3662 = vrot.lane.b32.xlu0 %v3621, 80
        %v3663 = vpop.permute.xlu0 %3662
        %3664 = vrot.lane.b32.xlu0 %v3622, 80
        %v3665 = vpop.permute.xlu0 %3664
        %3666 = vrot.lane.b32.xlu0 %v3623, 80
        %v3667 = vpop.permute.xlu0 %3666
        %3678 = vrot.lane.b32.xlu0 %v3624, 32
        %v3679 = vpop.permute.xlu0 %3678
        %3680 = vrot.lane.b32.xlu0 %v3625, 32
        %v3681 = vpop.permute.xlu0 %3680
        %3682 = vrot.lane.b32.xlu0 %v3626, 32
        %v3683 = vpop.permute.xlu0 %3682
        %3684 = vrot.lane.b32.xlu0 %v3627, 32
        %v3685 = vpop.permute.xlu0 %3684
        %3686 = vrot.lane.b32.xlu0 %v3628, 32
        %v3687 = vpop.permute.xlu0 %3686
        %3695 = vrot.lane.b32.xlu0 %v3625, 112
        %v3696 = vpop.permute.xlu0 %3695
        %3697 = vrot.lane.b32.xlu0 %v3626, 112
        %v3698 = vpop.permute.xlu0 %3697
        %3699 = vrot.lane.b32.xlu0 %v3627, 112
        %v3700 = vpop.permute.xlu0 %3699
        %3701 = vrot.lane.b32.xlu0 %v3629, 112
        %v3702 = vpop.permute.xlu0 %3701
        %3703 = vrot.lane.b32.xlu0 %v3630, 112
        %v3704 = vpop.permute.xlu0 %3703
        %3715 = vrot.lane.b32.xlu0 %v3631, 64
        %v3716 = vpop.permute.xlu0 %3715
        %3717 = vrot.lane.b32.xlu0 %v3632, 64
        %v3718 = vpop.permute.xlu0 %3717
        %3719 = vrot.lane.b32.xlu0 %v3633, 64
        %v3720 = vpop.permute.xlu0 %3719
        %3721 = vrot.lane.b32.xlu0 %v3634, 64
        %v3722 = vpop.permute.xlu0 %3721
        %3723 = vrot.lane.b32.xlu0 %v3635, 64
        %v3724 = vpop.permute.xlu0 %3723
        %3735 = vrot.lane.b32.xlu0 %v3636, 16
        %v3736 = vpop.permute.xlu0 %3735
        %3737 = vrot.lane.b32.xlu0 %v3637, 16
        %v3738 = vpop.permute.xlu0 %3737
        %3739 = vrot.lane.b32.xlu0 %v3638, 16
        %v3740 = vpop.permute.xlu0 %3739
        %3741 = vrot.lane.b32.xlu0 %v3639, 16
        %v3742 = vpop.permute.xlu0 %3741
        %3743 = vrot.lane.b32.xlu0 %v3640, 16
        %v3744 = vpop.permute.xlu0 %3743
        %3752 = vrot.lane.b32.xlu0 %v3637, 96
        %v3753 = vpop.permute.xlu0 %3752
        %3754 = vrot.lane.b32.xlu0 %v3638, 96
        %v3755 = vpop.permute.xlu0 %3754
        %3756 = vrot.lane.b32.xlu0 %v3639, 96
        %v3757 = vpop.permute.xlu0 %3756
        %3758 = vrot.lane.b32.xlu0 %v3641, 96
        %v3759 = vpop.permute.xlu0 %3758
        %3760 = vrot.lane.b32.xlu0 %v3642, 96
        %v3761 = vpop.permute.xlu0 %3760
        %3772 = vrot.lane.b32.xlu0 %v3643, 48
        %v3773 = vpop.permute.xlu0 %3772
        %3774 = vrot.lane.b32.xlu0 %v3644, 48
        %v3775 = vpop.permute.xlu0 %3774
        %3776 = vrot.lane.b32.xlu0 %v3645, 48
        %v3777 = vpop.permute.xlu0 %3776
        %3778 = vrot.lane.b32.xlu0 %v3646, 48
        %v3779 = vpop.permute.xlu0 %3778
        %3780 = vrot.lane.b32.xlu0 %v3647, 48
        %v3781 = vpop.permute.xlu0 %3780
        %v3787 = vsel %vm570, %v3614, %v3659
        %v3788 = vsel %vm570, %v3615, %v3661
        %v3789 = vsel %vm570, %v3616, %v3663
        %v3790 = vsel %vm570, %v3617, %v3665
        %v3791 = vsel %vm570, %v3618, %v3667
        %v3792 = vsel %vm836, %v3659, %v3679
        %v3793 = vsel %vm836, %v3661, %v3681
        %v3794 = vsel %vm836, %v3663, %v3683
        %v3795 = vsel %vm836, %v3665, %v3685
        %v3796 = vsel %vm836, %v3667, %v3687
        %v3797 = vsel %vm848, %v3792, %v3696
        %v3798 = vsel %vm848, %v3793, %v3698
        %v3799 = vsel %vm848, %v3794, %v3700
        %v3800 = vsel %vm848, %v3795, %v3702
        %v3801 = vsel %vm848, %v3796, %v3704
        %v3802 = vsel %vm860, %v3696, %v3716
        %v3803 = vsel %vm860, %v3698, %v3718
        %v3804 = vsel %vm860, %v3700, %v3720
        %v3805 = vsel %vm860, %v3702, %v3722
        %v3806 = vsel %vm860, %v3704, %v3724
        %v3807 = vsel %vm1281, %v3716, %v3736
        %v3808 = vsel %vm1281, %v3718, %v3738
        %v3809 = vsel %vm1281, %v3720, %v3740
        %v3810 = vsel %vm1281, %v3722, %v3742
        %v3811 = vsel %vm1281, %v3724, %v3744
        %v3812 = vsel %vm1287, %v3807, %v3753
        %v3813 = vsel %vm1287, %v3808, %v3755
        %v3814 = vsel %vm1287, %v3809, %v3757
        %v3815 = vsel %vm1287, %v3810, %v3759
        %v3816 = vsel %vm1287, %v3811, %v3761
        %v3817 = vsel %vm1293, %v3753, %v3773
        %v3818 = vsel %vm1293, %v3755, %v3775
        %v3819 = vsel %vm1293, %v3757, %v3777
        %v3820 = vsel %vm1293, %v3759, %v3779
        %v3821 = vsel %vm1293, %v3761, %v3781
        %v3823 = vperm.slane %v3613, 0
        %v3826 = vsel %vm570, %v3648, 0
        %v3829 = vsel %vm570, %v3649, 0
        %v3832 = vsel %vm570, %v3650, 0
        %v3835 = vsel %vm570, %v3651, 0
        %v3838 = vsel %vm570, %v3652, 0
        %3840 = vmatpush.msra.mxu0 %v3537
        %3841 = vmatpush.msra.mxu0 %v3536
        %3842 = vmatpush.msra.mxu0 %v3535
        %3843 = vmatpush.msra.mxu0 %v3534
        %3844 = vmatpush.msra.mxu0 %v3533
        %3845 = vmatpush.msra.mxu0 %v3532
        %3846 = vmatpush.msra.mxu0 %v3531
        %3847 = vmatpush.msra.mxu0 %v3530
        %3848 = vmatpush.msra.mxu0 %v3529
        %3849 = vmatpush.msra.mxu0 %v3528
        %3850 = vmatpush.msra.mxu0 %v3527
        %3851 = vmatpush.msra.mxu0 %v3526
        %3852 = vmatpush.msra.mxu0 %v3525
        %3853 = vmatpush.msra.mxu0 %v3524
        %3854 = vmatpush.msra.mxu0 %v3523
        %3855 = vmatpush.msra.mxu0 %v3522
        %3856 = vmatmul.f32.gmra.mxu0 %v3787
        %v3857 = vpop.f32.mrf.mxu0
        %v3858 = vadd.f32 %v3823, %v3857
        %3859 = vmatmul.f32.gmra.mxu0 %v3788
        %v3860 = vpop.f32.mrf.mxu0
        %v3861 = vadd.f32 %v3823, %v3860
        %3862 = vmatmul.f32.gmra.mxu0 %v3789
        %v3863 = vpop.f32.mrf.mxu0
        %v3864 = vadd.f32 %v3823, %v3863
        %3865 = vmatmul.f32.gmra.mxu0 %v3790
        %v3866 = vpop.f32.mrf.mxu0
        %v3867 = vadd.f32 %v3823, %v3866
        %3868 = vmatmul.f32.gmra.mxu0 %v3791
        %v3869 = vpop.f32.mrf.mxu0
        %v3870 = vadd.f32 %v3823, %v3869
        %3871 = vdwg.mxu0
        %3872 = vmatpush.msra.mxu0 %v3553
        %3873 = vmatpush.msra.mxu0 %v3552
        %3874 = vmatpush.msra.mxu0 %v3551
        %3875 = vmatpush.msra.mxu0 %v3550
        %3876 = vmatpush.msra.mxu0 %v3549
        %3877 = vmatpush.msra.mxu0 %v3548
        %3878 = vmatpush.msra.mxu0 %v3547
        %3879 = vmatpush.msra.mxu0 %v3546
        %3880 = vmatpush.msra.mxu0 %v3545
        %3881 = vmatpush.msra.mxu0 %v3544
        %3882 = vmatpush.msra.mxu0 %v3543
        %3883 = vmatpush.msra.mxu0 %v3542
        %3884 = vmatpush.msra.mxu0 %v3541
        %3885 = vmatpush.msra.mxu0 %v3540
        %3886 = vmatpush.msra.mxu0 %v3539
        %3887 = vmatpush.msra.mxu0 %v3538
        %3888 = vmatmul.f32.gmra.mxu0 %v3797
        %v3889 = vpop.f32.mrf.mxu0
        %v3890 = vadd.f32 %v3858, %v3889
        %3891 = vmatmul.f32.gmra.mxu0 %v3798
        %v3892 = vpop.f32.mrf.mxu0
        %v3893 = vadd.f32 %v3861, %v3892
        %3894 = vmatmul.f32.gmra.mxu0 %v3799
        %v3895 = vpop.f32.mrf.mxu0
        %v3896 = vadd.f32 %v3864, %v3895
        %3897 = vmatmul.f32.gmra.mxu0 %v3800
        %v3898 = vpop.f32.mrf.mxu0
        %v3899 = vadd.f32 %v3867, %v3898
        %3900 = vmatmul.f32.gmra.mxu0 %v3801
        %v3901 = vpop.f32.mrf.mxu0
        %v3902 = vadd.f32 %v3870, %v3901
        %3903 = vdwg.mxu0
        %3904 = vmatpush.msra.mxu0 %v3569
        %3905 = vmatpush.msra.mxu0 %v3568
        %3906 = vmatpush.msra.mxu0 %v3567
        %3907 = vmatpush.msra.mxu0 %v3566
        %3908 = vmatpush.msra.mxu0 %v3565
        %3909 = vmatpush.msra.mxu0 %v3564
        %3910 = vmatpush.msra.mxu0 %v3563
        %3911 = vmatpush.msra.mxu0 %v3562
        %3912 = vmatpush.msra.mxu0 %v3561
        %3913 = vmatpush.msra.mxu0 %v3560
        %3914 = vmatpush.msra.mxu0 %v3559
        %3915 = vmatpush.msra.mxu0 %v3558
        %3916 = vmatpush.msra.mxu0 %v3557
        %3917 = vmatpush.msra.mxu0 %v3556
        %3918 = vmatpush.msra.mxu0 %v3555
        %3919 = vmatpush.msra.mxu0 %v3554
        %3920 = vmatmul.f32.gmra.mxu0 %v3802
        %v3921 = vpop.f32.mrf.mxu0
        %v3922 = vadd.f32 %v3890, %v3921
        %3923 = vmatmul.f32.gmra.mxu0 %v3803
        %v3924 = vpop.f32.mrf.mxu0
        %v3925 = vadd.f32 %v3893, %v3924
        %3926 = vmatmul.f32.gmra.mxu0 %v3804
        %v3927 = vpop.f32.mrf.mxu0
        %v3928 = vadd.f32 %v3896, %v3927
        %3929 = vmatmul.f32.gmra.mxu0 %v3805
        %v3930 = vpop.f32.mrf.mxu0
        %v3931 = vadd.f32 %v3899, %v3930
        %3932 = vmatmul.f32.gmra.mxu0 %v3806
        %v3933 = vpop.f32.mrf.mxu0
        %v3934 = vadd.f32 %v3902, %v3933
        %3935 = vdwg.mxu0
        %3936 = vmatpush.msra.mxu0 %v3585
        %3937 = vmatpush.msra.mxu0 %v3584
        %3938 = vmatpush.msra.mxu0 %v3583
        %3939 = vmatpush.msra.mxu0 %v3582
        %3940 = vmatpush.msra.mxu0 %v3581
        %3941 = vmatpush.msra.mxu0 %v3580
        %3942 = vmatpush.msra.mxu0 %v3579
        %3943 = vmatpush.msra.mxu0 %v3578
        %3944 = vmatpush.msra.mxu0 %v3577
        %3945 = vmatpush.msra.mxu0 %v3576
        %3946 = vmatpush.msra.mxu0 %v3575
        %3947 = vmatpush.msra.mxu0 %v3574
        %3948 = vmatpush.msra.mxu0 %v3573
        %3949 = vmatpush.msra.mxu0 %v3572
        %3950 = vmatpush.msra.mxu0 %v3571
        %3951 = vmatpush.msra.mxu0 %v3570
        %3952 = vmatmul.f32.gmra.mxu0 %v3812
        %v3953 = vpop.f32.mrf.mxu0
        %v3954 = vadd.f32 %v3922, %v3953
        %3955 = vmatmul.f32.gmra.mxu0 %v3813
        %v3956 = vpop.f32.mrf.mxu0
        %v3957 = vadd.f32 %v3925, %v3956
        %3958 = vmatmul.f32.gmra.mxu0 %v3814
        %v3959 = vpop.f32.mrf.mxu0
        %v3960 = vadd.f32 %v3928, %v3959
        %3961 = vmatmul.f32.gmra.mxu0 %v3815
        %v3962 = vpop.f32.mrf.mxu0
        %v3963 = vadd.f32 %v3931, %v3962
        %3964 = vmatmul.f32.gmra.mxu0 %v3816
        %v3965 = vpop.f32.mrf.mxu0
        %v3966 = vadd.f32 %v3934, %v3965
        %3967 = vdwg.mxu0
        %3968 = vmatpush.msra.mxu0 %v3601
        %3969 = vmatpush.msra.mxu0 %v3600
        %3970 = vmatpush.msra.mxu0 %v3599
        %3971 = vmatpush.msra.mxu0 %v3598
        %3972 = vmatpush.msra.mxu0 %v3597
        %3973 = vmatpush.msra.mxu0 %v3596
        %3974 = vmatpush.msra.mxu0 %v3595
        %3975 = vmatpush.msra.mxu0 %v3594
        %3976 = vmatpush.msra.mxu0 %v3593
        %3977 = vmatpush.msra.mxu0 %v3592
        %3978 = vmatpush.msra.mxu0 %v3591
        %3979 = vmatpush.msra.mxu0 %v3590
        %3980 = vmatpush.msra.mxu0 %v3589
        %3981 = vmatpush.msra.mxu0 %v3588
        %3982 = vmatpush.msra.mxu0 %v3587
        %3983 = vmatpush.msra.mxu0 %v3586
        %3984 = vmatmul.f32.gmra.mxu0 %v3817
        %v3985 = vpop.f32.mrf.mxu0
        %v3986 = vadd.f32 %v3954, %v3985
        %3987 = vmatmul.f32.gmra.mxu0 %v3818
        %v3988 = vpop.f32.mrf.mxu0
        %v3989 = vadd.f32 %v3957, %v3988
        %3990 = vmatmul.f32.gmra.mxu0 %v3819
        %v3991 = vpop.f32.mrf.mxu0
        %v3992 = vadd.f32 %v3960, %v3991
        %3993 = vmatmul.f32.gmra.mxu0 %v3820
        %v3994 = vpop.f32.mrf.mxu0
        %v3995 = vadd.f32 %v3963, %v3994
        %3996 = vmatmul.f32.gmra.mxu0 %v3821
        %v3997 = vpop.f32.mrf.mxu0
        %v3998 = vadd.f32 %v3966, %v3997
        %3999 = vdwg.mxu0
        %4000 = vmatpush.msra.mxu0 0.0
        %4001 = vmatpush.msra.mxu0 0.0
        %4002 = vmatpush.msra.mxu0 0.0
        %4003 = vmatpush.msra.mxu0 0.0
        %4004 = vmatpush.msra.mxu0 0.0
        %4005 = vmatpush.msra.mxu0 0.0
        %4006 = vmatpush.msra.mxu0 %v3611
        %4007 = vmatpush.msra.mxu0 %v3610
        %4008 = vmatpush.msra.mxu0 %v3609
        %4009 = vmatpush.msra.mxu0 %v3608
        %4010 = vmatpush.msra.mxu0 %v3607
        %4011 = vmatpush.msra.mxu0 %v3606
        %4012 = vmatpush.msra.mxu0 %v3605
        %4013 = vmatpush.msra.mxu0 %v3604
        %4014 = vmatpush.msra.mxu0 %v3603
        %4015 = vmatpush.msra.mxu0 %v3602
        %4016 = vmatmul.f32.gmra.mxu0 %v3826
        %v4017 = vpop.f32.mrf.mxu0
        %v4018 = vadd.f32 %v3986, %v4017
        %4019 = vmatmul.f32.gmra.mxu0 %v3829
        %v4020 = vpop.f32.mrf.mxu0
        %v4021 = vadd.f32 %v3989, %v4020
        %4022 = vmatmul.f32.gmra.mxu0 %v3832
        %v4023 = vpop.f32.mrf.mxu0
        %v4024 = vadd.f32 %v3992, %v4023
        %4025 = vmatmul.f32.gmra.mxu0 %v3835
        %v4026 = vpop.f32.mrf.mxu0
        %v4027 = vadd.f32 %v3995, %v4026
        %4028 = vmatmul.f32.gmra.mxu0 %v3838
        %v4029 = vpop.f32.mrf.mxu0
        %v4030 = vadd.f32 %v3998, %v4029
        %4031 = vdwg.mxu0
        %v4032 = vmax.f32 %v4018, 0.0
        %v4033 = vmax.f32 %v4021, 0.0
        %v4034 = vmax.f32 %v4024, 0.0
        %v4035 = vmax.f32 %v4027, 0.0
        %v4036 = vmax.f32 %v4030, 0.0
        %v4037 = vmul.f32 %v4032, %v565
        %v4038 = vmul.f32 %v4033, %v566
        %v4039 = vmul.f32 %v4034, %v567
        %v4040 = vmul.f32 %v4035, %v568
        %v4041 = vmul.f32 %v4036, %v569
        %v4042 = vadd.f32 %v4037, %v3631
        %v4043 = vadd.f32 %v4038, %v3632
        %v4044 = vadd.f32 %v4039, %v3633
        %v4045 = vadd.f32 %v4040, %v3634
        %v4046 = vadd.f32 %v4041, %v3635
        %4047 = vst.msk [vmem:[#allocation2 + $0xb] sm:$0xff] %vm570, %v4042
        %4048 = vst.msk [vmem:[#allocation2 + $0x13] sm:$0xff] %vm570, %v4043
        %4049 = vst.msk [vmem:[#allocation2 + $0x1b] sm:$0xff] %vm570, %v4044
        %4050 = vst.msk [vmem:[#allocation2 + $0x23] sm:$0xff] %vm570, %v4045
        %4051 = vst.msk [vmem:[#allocation2 + $0x2b] sm:$0x3f] %vm995, %v4046
        %s4052 = scalar_lea.vmem [#allocation10], 720
        %v4053 = vld [vmem:[%s4052] sm:$0xff]
        %v4054 = vld [vmem:[%s4052 + $0x8] sm:$0xff]
        %v4055 = vld [vmem:[%s4052 + $0x10] sm:$0xff]
        %v4056 = vld [vmem:[%s4052 + $0x18] sm:$0xff]
        %v4057 = vld [vmem:[%s4052 + $0x20] sm:$0xff]
        %v4058 = vld [vmem:[%s4052 + $0x28] sm:$0xff]
        %v4059 = vld [vmem:[%s4052 + $0x30] sm:$0xff]
        %v4060 = vld [vmem:[%s4052 + $0x38] sm:$0xff]
        %v4061 = vld [vmem:[%s4052 + $0x40] sm:$0xff]
        %v4062 = vld [vmem:[%s4052 + $0x48] sm:$0xff]
        %v4063 = vld [vmem:[%s4052 + $0x50] sm:$0xff]
        %v4064 = vld [vmem:[%s4052 + $0x58] sm:$0xff]
        %v4065 = vld [vmem:[%s4052 + $0x60] sm:$0xff]
        %v4066 = vld [vmem:[%s4052 + $0x68] sm:$0xff]
        %v4067 = vld [vmem:[%s4052 + $0x70] sm:$0xff]
        %v4068 = vld [vmem:[%s4052 + $0x78] sm:$0xff]
        %v4069 = vld [vmem:[%s4052 + $0x80] sm:$0xff]
        %v4070 = vld [vmem:[%s4052 + $0x88] sm:$0xff]
        %v4071 = vld [vmem:[%s4052 + $0x90] sm:$0xff]
        %v4072 = vld [vmem:[%s4052 + $0x98] sm:$0xff]
        %v4073 = vld [vmem:[%s4052 + $0xa0] sm:$0xff]
        %v4074 = vld [vmem:[%s4052 + $0xa8] sm:$0xff]
        %v4075 = vld [vmem:[%s4052 + $0xb0] sm:$0xff]
        %v4076 = vld [vmem:[%s4052 + $0xb8] sm:$0xff]
        %v4077 = vld [vmem:[%s4052 + $0xc0] sm:$0xff]
        %v4078 = vld [vmem:[%s4052 + $0xc8] sm:$0xff]
        %v4079 = vld [vmem:[%s4052 + $0xd0] sm:$0xff]
        %v4080 = vld [vmem:[%s4052 + $0xd8] sm:$0xff]
        %v4081 = vld [vmem:[%s4052 + $0xe0] sm:$0xff]
        %v4082 = vld [vmem:[%s4052 + $0xe8] sm:$0xff]
        %v4083 = vld [vmem:[%s4052 + $0xf0] sm:$0xff]
        %v4084 = vld [vmem:[%s4052 + $0xf8] sm:$0xff]
        %v4085 = vld [vmem:[%s4052 + $0x100] sm:$0xff]
        %v4086 = vld [vmem:[%s4052 + $0x108] sm:$0xff]
        %v4087 = vld [vmem:[%s4052 + $0x110] sm:$0xff]
        %v4088 = vld [vmem:[%s4052 + $0x118] sm:$0xff]
        %v4089 = vld [vmem:[%s4052 + $0x120] sm:$0xff]
        %v4090 = vld [vmem:[%s4052 + $0x128] sm:$0xff]
        %v4091 = vld [vmem:[%s4052 + $0x130] sm:$0xff]
        %v4092 = vld [vmem:[%s4052 + $0x138] sm:$0xff]
        %v4093 = vld [vmem:[%s4052 + $0x140] sm:$0xff]
        %v4094 = vld [vmem:[%s4052 + $0x148] sm:$0xff]
        %v4095 = vld [vmem:[%s4052 + $0x150] sm:$0xff]
        %v4096 = vld [vmem:[%s4052 + $0x158] sm:$0xff]
        %v4097 = vld [vmem:[%s4052 + $0x160] sm:$0xff]
        %v4098 = vld [vmem:[%s4052 + $0x168] sm:$0xff]
        %v4099 = vld [vmem:[%s4052 + $0x170] sm:$0xff]
        %v4100 = vld [vmem:[%s4052 + $0x178] sm:$0xff]
        %v4101 = vld [vmem:[%s4052 + $0x180] sm:$0xff]
        %v4102 = vld [vmem:[%s4052 + $0x188] sm:$0xff]
        %v4103 = vld [vmem:[%s4052 + $0x190] sm:$0xff]
        %v4104 = vld [vmem:[%s4052 + $0x198] sm:$0xff]
        %v4105 = vld [vmem:[%s4052 + $0x1a0] sm:$0xff]
        %v4106 = vld [vmem:[%s4052 + $0x1a8] sm:$0xff]
        %v4107 = vld [vmem:[%s4052 + $0x1b0] sm:$0xff]
        %v4108 = vld [vmem:[%s4052 + $0x1b8] sm:$0xff]
        %v4109 = vld [vmem:[%s4052 + $0x1c0] sm:$0xff]
        %v4110 = vld [vmem:[%s4052 + $0x1c8] sm:$0xff]
        %v4111 = vld [vmem:[%s4052 + $0x1d0] sm:$0xff]
        %v4112 = vld [vmem:[%s4052 + $0x1d8] sm:$0xff]
        %v4113 = vld [vmem:[%s4052 + $0x1e0] sm:$0xff]
        %v4114 = vld [vmem:[%s4052 + $0x1e8] sm:$0xff]
        %v4115 = vld [vmem:[%s4052 + $0x1f0] sm:$0xff]
        %v4116 = vld [vmem:[%s4052 + $0x1f8] sm:$0xff]
        %v4117 = vld [vmem:[%s4052 + $0x200] sm:$0xff]
        %v4118 = vld [vmem:[%s4052 + $0x208] sm:$0xff]
        %v4119 = vld [vmem:[%s4052 + $0x210] sm:$0xff]
        %v4120 = vld [vmem:[%s4052 + $0x218] sm:$0xff]
        %v4121 = vld [vmem:[%s4052 + $0x220] sm:$0xff]
        %v4122 = vld [vmem:[%s4052 + $0x228] sm:$0xff]
        %v4123 = vld [vmem:[%s4052 + $0x230] sm:$0xff]
        %v4124 = vld [vmem:[%s4052 + $0x238] sm:$0xff]
        %v4125 = vld [vmem:[%s4052 + $0x240] sm:$0xff]
        %v4126 = vld [vmem:[%s4052 + $0x248] sm:$0xff]
        %v4127 = vld [vmem:[%s4052 + $0x250] sm:$0xff]
        %v4128 = vld [vmem:[%s4052 + $0x258] sm:$0xff]
        %v4129 = vld [vmem:[%s4052 + $0x260] sm:$0xff]
        %v4130 = vld [vmem:[%s4052 + $0x268] sm:$0xff]
        %v4131 = vld [vmem:[%s4052 + $0x270] sm:$0xff]
        %v4132 = vld [vmem:[%s4052 + $0x278] sm:$0xff]
        %v4133 = vld [vmem:[%s4052 + $0x280] sm:$0xff]
        %v4134 = vld [vmem:[%s4052 + $0x288] sm:$0xff]
        %v4135 = vld [vmem:[%s4052 + $0x290] sm:$0xff]
        %v4136 = vld [vmem:[%s4052 + $0x298] sm:$0xff]
        %v4137 = vld [vmem:[%s4052 + $0x2a0] sm:$0xff]
        %v4138 = vld [vmem:[%s4052 + $0x2a8] sm:$0xff]
        %v4139 = vld [vmem:[%s4052 + $0x2b0] sm:$0xff]
        %v4140 = vld [vmem:[%s4052 + $0x2b8] sm:$0xff]
        %v4141 = vld [vmem:[%s4052 + $0x2c0] sm:$0xff]
        %v4142 = vld [vmem:[%s4052 + $0x2c8] sm:$0xff]
        %s4143 = scalar_lea.vmem [#allocation11], 1
        %v4144 = vld [vmem:[%s4143] sm:$0x1]
        %v4145 = vld [vmem:[#allocation2] sm:$0xff]
        %v4146 = vld [vmem:[#allocation2 + $0x8] sm:$0xff]
        %v4147 = vld [vmem:[#allocation2 + $0x10] sm:$0xff]
        %v4148 = vld [vmem:[#allocation2 + $0x18] sm:$0xff]
        %v4149 = vld [vmem:[#allocation2 + $0x20] sm:$0x3f]
        %v4150 = vld [vmem:[#allocation2 + $0x1] sm:$0xff]
        %v4151 = vld [vmem:[#allocation2 + $0x9] sm:$0xff]
        %v4152 = vld [vmem:[#allocation2 + $0x11] sm:$0xff]
        %v4153 = vld [vmem:[#allocation2 + $0x19] sm:$0xff]
        %v4154 = vld [vmem:[#allocation2 + $0x21] sm:$0x3f]
        %v4155 = vld [vmem:[#allocation2 + $0x2] sm:$0xff]
        %v4156 = vld [vmem:[#allocation2 + $0xa] sm:$0xff]
        %v4157 = vld [vmem:[#allocation2 + $0x12] sm:$0xff]
        %v4158 = vld [vmem:[#allocation2 + $0x1a] sm:$0xff]
        %v4159 = vld [vmem:[#allocation2 + $0x22] sm:$0x3f]
        %v4160 = vld [vmem:[#allocation2 + $0x22] sm:$0xff]
        %v4161 = vld [vmem:[#allocation2 + $0x2a] sm:$0x3f]
        %v4162 = vld [vmem:[#allocation2 + $0xb] sm:$0xff]
        %v4163 = vld [vmem:[#allocation2 + $0x13] sm:$0xff]
        %v4164 = vld [vmem:[#allocation2 + $0x1b] sm:$0xff]
        %v4165 = vld [vmem:[#allocation2 + $0x23] sm:$0xff]
        %v4166 = vld [vmem:[#allocation2 + $0x2b] sm:$0x3f]
        %v4167 = vld [vmem:[#allocation2 + $0xc] sm:$0xff]
        %v4168 = vld [vmem:[#allocation2 + $0x14] sm:$0xff]
        %v4169 = vld [vmem:[#allocation2 + $0x1c] sm:$0xff]
        %v4170 = vld [vmem:[#allocation2 + $0x24] sm:$0xff]
        %v4171 = vld [vmem:[#allocation2 + $0x2c] sm:$0x3f]
        %v4172 = vld [vmem:[#allocation2 + $0x2c] sm:$0xff]
        %v4173 = vld [vmem:[#allocation2 + $0x34] sm:$0x3f]
        %v4174 = vld [vmem:[#allocation2 + $0x15] sm:$0xff]
        %v4175 = vld [vmem:[#allocation2 + $0x1d] sm:$0xff]
        %v4176 = vld [vmem:[#allocation2 + $0x25] sm:$0xff]
        %v4177 = vld [vmem:[#allocation2 + $0x2d] sm:$0xff]
        %v4178 = vld [vmem:[#allocation2 + $0x35] sm:$0x3f]
        %v4179 = vld [vmem:[#allocation2 + $0x16] sm:$0xff]
        %v4180 = vld [vmem:[#allocation2 + $0x1e] sm:$0xff]
        %v4181 = vld [vmem:[#allocation2 + $0x26] sm:$0xff]
        %v4182 = vld [vmem:[#allocation2 + $0x2e] sm:$0xff]
        %v4183 = vld [vmem:[#allocation2 + $0x36] sm:$0x3f]
        %4189 = vrot.lane.b32.xlu0 %v4150, 80
        %v4190 = vpop.permute.xlu0 %4189
        %4191 = vrot.lane.b32.xlu0 %v4151, 80
        %v4192 = vpop.permute.xlu0 %4191
        %4193 = vrot.lane.b32.xlu0 %v4152, 80
        %v4194 = vpop.permute.xlu0 %4193
        %4195 = vrot.lane.b32.xlu0 %v4153, 80
        %v4196 = vpop.permute.xlu0 %4195
        %4197 = vrot.lane.b32.xlu0 %v4154, 80
        %v4198 = vpop.permute.xlu0 %4197
        %4209 = vrot.lane.b32.xlu0 %v4155, 32
        %v4210 = vpop.permute.xlu0 %4209
        %4211 = vrot.lane.b32.xlu0 %v4156, 32
        %v4212 = vpop.permute.xlu0 %4211
        %4213 = vrot.lane.b32.xlu0 %v4157, 32
        %v4214 = vpop.permute.xlu0 %4213
        %4215 = vrot.lane.b32.xlu0 %v4158, 32
        %v4216 = vpop.permute.xlu0 %4215
        %4217 = vrot.lane.b32.xlu0 %v4159, 32
        %v4218 = vpop.permute.xlu0 %4217
        %4226 = vrot.lane.b32.xlu0 %v4156, 112
        %v4227 = vpop.permute.xlu0 %4226
        %4228 = vrot.lane.b32.xlu0 %v4157, 112
        %v4229 = vpop.permute.xlu0 %4228
        %4230 = vrot.lane.b32.xlu0 %v4158, 112
        %v4231 = vpop.permute.xlu0 %4230
        %4232 = vrot.lane.b32.xlu0 %v4160, 112
        %v4233 = vpop.permute.xlu0 %4232
        %4234 = vrot.lane.b32.xlu0 %v4161, 112
        %v4235 = vpop.permute.xlu0 %4234
        %4246 = vrot.lane.b32.xlu0 %v4162, 64
        %v4247 = vpop.permute.xlu0 %4246
        %4248 = vrot.lane.b32.xlu0 %v4163, 64
        %v4249 = vpop.permute.xlu0 %4248
        %4250 = vrot.lane.b32.xlu0 %v4164, 64
        %v4251 = vpop.permute.xlu0 %4250
        %4252 = vrot.lane.b32.xlu0 %v4165, 64
        %v4253 = vpop.permute.xlu0 %4252
        %4254 = vrot.lane.b32.xlu0 %v4166, 64
        %v4255 = vpop.permute.xlu0 %4254
        %4266 = vrot.lane.b32.xlu0 %v4167, 16
        %v4267 = vpop.permute.xlu0 %4266
        %4268 = vrot.lane.b32.xlu0 %v4168, 16
        %v4269 = vpop.permute.xlu0 %4268
        %4270 = vrot.lane.b32.xlu0 %v4169, 16
        %v4271 = vpop.permute.xlu0 %4270
        %4272 = vrot.lane.b32.xlu0 %v4170, 16
        %v4273 = vpop.permute.xlu0 %4272
        %4274 = vrot.lane.b32.xlu0 %v4171, 16
        %v4275 = vpop.permute.xlu0 %4274
        %4283 = vrot.lane.b32.xlu0 %v4168, 96
        %v4284 = vpop.permute.xlu0 %4283
        %4285 = vrot.lane.b32.xlu0 %v4169, 96
        %v4286 = vpop.permute.xlu0 %4285
        %4287 = vrot.lane.b32.xlu0 %v4170, 96
        %v4288 = vpop.permute.xlu0 %4287
        %4289 = vrot.lane.b32.xlu0 %v4172, 96
        %v4290 = vpop.permute.xlu0 %4289
        %4291 = vrot.lane.b32.xlu0 %v4173, 96
        %v4292 = vpop.permute.xlu0 %4291
        %4303 = vrot.lane.b32.xlu0 %v4174, 48
        %v4304 = vpop.permute.xlu0 %4303
        %4305 = vrot.lane.b32.xlu0 %v4175, 48
        %v4306 = vpop.permute.xlu0 %4305
        %4307 = vrot.lane.b32.xlu0 %v4176, 48
        %v4308 = vpop.permute.xlu0 %4307
        %4309 = vrot.lane.b32.xlu0 %v4177, 48
        %v4310 = vpop.permute.xlu0 %4309
        %4311 = vrot.lane.b32.xlu0 %v4178, 48
        %v4312 = vpop.permute.xlu0 %4311
        %v4318 = vsel %vm570, %v4145, %v4190
        %v4319 = vsel %vm570, %v4146, %v4192
        %v4320 = vsel %vm570, %v4147, %v4194
        %v4321 = vsel %vm570, %v4148, %v4196
        %v4322 = vsel %vm570, %v4149, %v4198
        %v4323 = vsel %vm836, %v4190, %v4210
        %v4324 = vsel %vm836, %v4192, %v4212
        %v4325 = vsel %vm836, %v4194, %v4214
        %v4326 = vsel %vm836, %v4196, %v4216
        %v4327 = vsel %vm836, %v4198, %v4218
        %v4328 = vsel %vm848, %v4323, %v4227
        %v4329 = vsel %vm848, %v4324, %v4229
        %v4330 = vsel %vm848, %v4325, %v4231
        %v4331 = vsel %vm848, %v4326, %v4233
        %v4332 = vsel %vm848, %v4327, %v4235
        %v4333 = vsel %vm860, %v4227, %v4247
        %v4334 = vsel %vm860, %v4229, %v4249
        %v4335 = vsel %vm860, %v4231, %v4251
        %v4336 = vsel %vm860, %v4233, %v4253
        %v4337 = vsel %vm860, %v4235, %v4255
        %v4338 = vsel %vm1281, %v4247, %v4267
        %v4339 = vsel %vm1281, %v4249, %v4269
        %v4340 = vsel %vm1281, %v4251, %v4271
        %v4341 = vsel %vm1281, %v4253, %v4273
        %v4342 = vsel %vm1281, %v4255, %v4275
        %v4343 = vsel %vm1287, %v4338, %v4284
        %v4344 = vsel %vm1287, %v4339, %v4286
        %v4345 = vsel %vm1287, %v4340, %v4288
        %v4346 = vsel %vm1287, %v4341, %v4290
        %v4347 = vsel %vm1287, %v4342, %v4292
        %v4348 = vsel %vm1293, %v4284, %v4304
        %v4349 = vsel %vm1293, %v4286, %v4306
        %v4350 = vsel %vm1293, %v4288, %v4308
        %v4351 = vsel %vm1293, %v4290, %v4310
        %v4352 = vsel %vm1293, %v4292, %v4312
        %v4354 = vperm.slane %v4144, 0
        %v4357 = vsel %vm570, %v4179, 0
        %v4360 = vsel %vm570, %v4180, 0
        %v4363 = vsel %vm570, %v4181, 0
        %v4366 = vsel %vm570, %v4182, 0
        %v4369 = vsel %vm570, %v4183, 0
        %4371 = vmatpush.msra.mxu0 %v4068
        %4372 = vmatpush.msra.mxu0 %v4067
        %4373 = vmatpush.msra.mxu0 %v4066
        %4374 = vmatpush.msra.mxu0 %v4065
        %4375 = vmatpush.msra.mxu0 %v4064
        %4376 = vmatpush.msra.mxu0 %v4063
        %4377 = vmatpush.msra.mxu0 %v4062
        %4378 = vmatpush.msra.mxu0 %v4061
        %4379 = vmatpush.msra.mxu0 %v4060
        %4380 = vmatpush.msra.mxu0 %v4059
        %4381 = vmatpush.msra.mxu0 %v4058
        %4382 = vmatpush.msra.mxu0 %v4057
        %4383 = vmatpush.msra.mxu0 %v4056
        %4384 = vmatpush.msra.mxu0 %v4055
        %4385 = vmatpush.msra.mxu0 %v4054
        %4386 = vmatpush.msra.mxu0 %v4053
        %4387 = vmatmul.f32.gmra.mxu0 %v4318
        %v4388 = vpop.f32.mrf.mxu0
        %v4389 = vadd.f32 %v4354, %v4388
        %4390 = vmatmul.f32.gmra.mxu0 %v4319
        %v4391 = vpop.f32.mrf.mxu0
        %v4392 = vadd.f32 %v4354, %v4391
        %4393 = vmatmul.f32.gmra.mxu0 %v4320
        %v4394 = vpop.f32.mrf.mxu0
        %v4395 = vadd.f32 %v4354, %v4394
        %4396 = vmatmul.f32.gmra.mxu0 %v4321
        %v4397 = vpop.f32.mrf.mxu0
        %v4398 = vadd.f32 %v4354, %v4397
        %4399 = vmatmul.f32.gmra.mxu0 %v4322
        %v4400 = vpop.f32.mrf.mxu0
        %v4401 = vadd.f32 %v4354, %v4400
        %4402 = vdwg.mxu0
        %4403 = vmatpush.msra.mxu0 %v4084
        %4404 = vmatpush.msra.mxu0 %v4083
        %4405 = vmatpush.msra.mxu0 %v4082
        %4406 = vmatpush.msra.mxu0 %v4081
        %4407 = vmatpush.msra.mxu0 %v4080
        %4408 = vmatpush.msra.mxu0 %v4079
        %4409 = vmatpush.msra.mxu0 %v4078
        %4410 = vmatpush.msra.mxu0 %v4077
        %4411 = vmatpush.msra.mxu0 %v4076
        %4412 = vmatpush.msra.mxu0 %v4075
        %4413 = vmatpush.msra.mxu0 %v4074
        %4414 = vmatpush.msra.mxu0 %v4073
        %4415 = vmatpush.msra.mxu0 %v4072
        %4416 = vmatpush.msra.mxu0 %v4071
        %4417 = vmatpush.msra.mxu0 %v4070
        %4418 = vmatpush.msra.mxu0 %v4069
        %4419 = vmatmul.f32.gmra.mxu0 %v4328
        %v4420 = vpop.f32.mrf.mxu0
        %v4421 = vadd.f32 %v4389, %v4420
        %4422 = vmatmul.f32.gmra.mxu0 %v4329
        %v4423 = vpop.f32.mrf.mxu0
        %v4424 = vadd.f32 %v4392, %v4423
        %4425 = vmatmul.f32.gmra.mxu0 %v4330
        %v4426 = vpop.f32.mrf.mxu0
        %v4427 = vadd.f32 %v4395, %v4426
        %4428 = vmatmul.f32.gmra.mxu0 %v4331
        %v4429 = vpop.f32.mrf.mxu0
        %v4430 = vadd.f32 %v4398, %v4429
        %4431 = vmatmul.f32.gmra.mxu0 %v4332
        %v4432 = vpop.f32.mrf.mxu0
        %v4433 = vadd.f32 %v4401, %v4432
        %4434 = vdwg.mxu0
        %4435 = vmatpush.msra.mxu0 %v4100
        %4436 = vmatpush.msra.mxu0 %v4099
        %4437 = vmatpush.msra.mxu0 %v4098
        %4438 = vmatpush.msra.mxu0 %v4097
        %4439 = vmatpush.msra.mxu0 %v4096
        %4440 = vmatpush.msra.mxu0 %v4095
        %4441 = vmatpush.msra.mxu0 %v4094
        %4442 = vmatpush.msra.mxu0 %v4093
        %4443 = vmatpush.msra.mxu0 %v4092
        %4444 = vmatpush.msra.mxu0 %v4091
        %4445 = vmatpush.msra.mxu0 %v4090
        %4446 = vmatpush.msra.mxu0 %v4089
        %4447 = vmatpush.msra.mxu0 %v4088
        %4448 = vmatpush.msra.mxu0 %v4087
        %4449 = vmatpush.msra.mxu0 %v4086
        %4450 = vmatpush.msra.mxu0 %v4085
        %4451 = vmatmul.f32.gmra.mxu0 %v4333
        %v4452 = vpop.f32.mrf.mxu0
        %v4453 = vadd.f32 %v4421, %v4452
        %4454 = vmatmul.f32.gmra.mxu0 %v4334
        %v4455 = vpop.f32.mrf.mxu0
        %v4456 = vadd.f32 %v4424, %v4455
        %4457 = vmatmul.f32.gmra.mxu0 %v4335
        %v4458 = vpop.f32.mrf.mxu0
        %v4459 = vadd.f32 %v4427, %v4458
        %4460 = vmatmul.f32.gmra.mxu0 %v4336
        %v4461 = vpop.f32.mrf.mxu0
        %v4462 = vadd.f32 %v4430, %v4461
        %4463 = vmatmul.f32.gmra.mxu0 %v4337
        %v4464 = vpop.f32.mrf.mxu0
        %v4465 = vadd.f32 %v4433, %v4464
        %4466 = vdwg.mxu0
        %4467 = vmatpush.msra.mxu0 %v4116
        %4468 = vmatpush.msra.mxu0 %v4115
        %4469 = vmatpush.msra.mxu0 %v4114
        %4470 = vmatpush.msra.mxu0 %v4113
        %4471 = vmatpush.msra.mxu0 %v4112
        %4472 = vmatpush.msra.mxu0 %v4111
        %4473 = vmatpush.msra.mxu0 %v4110
        %4474 = vmatpush.msra.mxu0 %v4109
        %4475 = vmatpush.msra.mxu0 %v4108
        %4476 = vmatpush.msra.mxu0 %v4107
        %4477 = vmatpush.msra.mxu0 %v4106
        %4478 = vmatpush.msra.mxu0 %v4105
        %4479 = vmatpush.msra.mxu0 %v4104
        %4480 = vmatpush.msra.mxu0 %v4103
        %4481 = vmatpush.msra.mxu0 %v4102
        %4482 = vmatpush.msra.mxu0 %v4101
        %4483 = vmatmul.f32.gmra.mxu0 %v4343
        %v4484 = vpop.f32.mrf.mxu0
        %v4485 = vadd.f32 %v4453, %v4484
        %4486 = vmatmul.f32.gmra.mxu0 %v4344
        %v4487 = vpop.f32.mrf.mxu0
        %v4488 = vadd.f32 %v4456, %v4487
        %4489 = vmatmul.f32.gmra.mxu0 %v4345
        %v4490 = vpop.f32.mrf.mxu0
        %v4491 = vadd.f32 %v4459, %v4490
        %4492 = vmatmul.f32.gmra.mxu0 %v4346
        %v4493 = vpop.f32.mrf.mxu0
        %v4494 = vadd.f32 %v4462, %v4493
        %4495 = vmatmul.f32.gmra.mxu0 %v4347
        %v4496 = vpop.f32.mrf.mxu0
        %v4497 = vadd.f32 %v4465, %v4496
        %4498 = vdwg.mxu0
        %4499 = vmatpush.msra.mxu0 %v4132
        %4500 = vmatpush.msra.mxu0 %v4131
        %4501 = vmatpush.msra.mxu0 %v4130
        %4502 = vmatpush.msra.mxu0 %v4129
        %4503 = vmatpush.msra.mxu0 %v4128
        %4504 = vmatpush.msra.mxu0 %v4127
        %4505 = vmatpush.msra.mxu0 %v4126
        %4506 = vmatpush.msra.mxu0 %v4125
        %4507 = vmatpush.msra.mxu0 %v4124
        %4508 = vmatpush.msra.mxu0 %v4123
        %4509 = vmatpush.msra.mxu0 %v4122
        %4510 = vmatpush.msra.mxu0 %v4121
        %4511 = vmatpush.msra.mxu0 %v4120
        %4512 = vmatpush.msra.mxu0 %v4119
        %4513 = vmatpush.msra.mxu0 %v4118
        %4514 = vmatpush.msra.mxu0 %v4117
        %4515 = vmatmul.f32.gmra.mxu0 %v4348
        %v4516 = vpop.f32.mrf.mxu0
        %v4517 = vadd.f32 %v4485, %v4516
        %4518 = vmatmul.f32.gmra.mxu0 %v4349
        %v4519 = vpop.f32.mrf.mxu0
        %v4520 = vadd.f32 %v4488, %v4519
        %4521 = vmatmul.f32.gmra.mxu0 %v4350
        %v4522 = vpop.f32.mrf.mxu0
        %v4523 = vadd.f32 %v4491, %v4522
        %4524 = vmatmul.f32.gmra.mxu0 %v4351
        %v4525 = vpop.f32.mrf.mxu0
        %v4526 = vadd.f32 %v4494, %v4525
        %4527 = vmatmul.f32.gmra.mxu0 %v4352
        %v4528 = vpop.f32.mrf.mxu0
        %v4529 = vadd.f32 %v4497, %v4528
        %4530 = vdwg.mxu0
        %4531 = vmatpush.msra.mxu0 0.0
        %4532 = vmatpush.msra.mxu0 0.0
        %4533 = vmatpush.msra.mxu0 0.0
        %4534 = vmatpush.msra.mxu0 0.0
        %4535 = vmatpush.msra.mxu0 0.0
        %4536 = vmatpush.msra.mxu0 0.0
        %4537 = vmatpush.msra.mxu0 %v4142
        %4538 = vmatpush.msra.mxu0 %v4141
        %4539 = vmatpush.msra.mxu0 %v4140
        %4540 = vmatpush.msra.mxu0 %v4139
        %4541 = vmatpush.msra.mxu0 %v4138
        %4542 = vmatpush.msra.mxu0 %v4137
        %4543 = vmatpush.msra.mxu0 %v4136
        %4544 = vmatpush.msra.mxu0 %v4135
        %4545 = vmatpush.msra.mxu0 %v4134
        %4546 = vmatpush.msra.mxu0 %v4133
        %4547 = vmatmul.f32.gmra.mxu0 %v4357
        %v4548 = vpop.f32.mrf.mxu0
        %v4549 = vadd.f32 %v4517, %v4548
        %4550 = vmatmul.f32.gmra.mxu0 %v4360
        %v4551 = vpop.f32.mrf.mxu0
        %v4552 = vadd.f32 %v4520, %v4551
        %4553 = vmatmul.f32.gmra.mxu0 %v4363
        %v4554 = vpop.f32.mrf.mxu0
        %v4555 = vadd.f32 %v4523, %v4554
        %4556 = vmatmul.f32.gmra.mxu0 %v4366
        %v4557 = vpop.f32.mrf.mxu0
        %v4558 = vadd.f32 %v4526, %v4557
        %4559 = vmatmul.f32.gmra.mxu0 %v4369
        %v4560 = vpop.f32.mrf.mxu0
        %v4561 = vadd.f32 %v4529, %v4560
        %4562 = vdwg.mxu0
        %v4563 = vmul.f32 %v4549, %v565
        %v4564 = vmul.f32 %v4552, %v566
        %v4565 = vmul.f32 %v4555, %v567
        %v4566 = vmul.f32 %v4558, %v568
        %v4567 = vmul.f32 %v4561, %v569
        %4568 = vst.msk [vmem:[#allocation2 + $0xb] sm:$0xff] %vm819, %v4563
        %4569 = vst.msk [vmem:[#allocation2 + $0x13] sm:$0xff] %vm819, %v4564
        %4570 = vst.msk [vmem:[#allocation2 + $0x1b] sm:$0xff] %vm819, %v4565
        %4571 = vst.msk [vmem:[#allocation2 + $0x23] sm:$0xff] %vm819, %v4566
        %4572 = vst.msk [vmem:[#allocation2 + $0x2b] sm:$0x3f] %vm2578, %v4567
        %s4573 = scalar_lea.vmem [#allocation3], 720
        %v4574 = vld [vmem:[%s4573] sm:$0xff]
        %v4575 = vld [vmem:[%s4573 + $0x8] sm:$0xff]
        %v4576 = vld [vmem:[%s4573 + $0x10] sm:$0xff]
        %v4577 = vld [vmem:[%s4573 + $0x18] sm:$0xff]
        %v4578 = vld [vmem:[%s4573 + $0x20] sm:$0xff]
        %v4579 = vld [vmem:[%s4573 + $0x28] sm:$0xff]
        %v4580 = vld [vmem:[%s4573 + $0x30] sm:$0xff]
        %v4581 = vld [vmem:[%s4573 + $0x38] sm:$0xff]
        %v4582 = vld [vmem:[%s4573 + $0x40] sm:$0xff]
        %v4583 = vld [vmem:[%s4573 + $0x48] sm:$0xff]
        %v4584 = vld [vmem:[%s4573 + $0x50] sm:$0xff]
        %v4585 = vld [vmem:[%s4573 + $0x58] sm:$0xff]
        %v4586 = vld [vmem:[%s4573 + $0x60] sm:$0xff]
        %v4587 = vld [vmem:[%s4573 + $0x68] sm:$0xff]
        %v4588 = vld [vmem:[%s4573 + $0x70] sm:$0xff]
        %v4589 = vld [vmem:[%s4573 + $0x78] sm:$0xff]
        %v4590 = vld [vmem:[%s4573 + $0x80] sm:$0xff]
        %v4591 = vld [vmem:[%s4573 + $0x88] sm:$0xff]
        %v4592 = vld [vmem:[%s4573 + $0x90] sm:$0xff]
        %v4593 = vld [vmem:[%s4573 + $0x98] sm:$0xff]
        %v4594 = vld [vmem:[%s4573 + $0xa0] sm:$0xff]
        %v4595 = vld [vmem:[%s4573 + $0xa8] sm:$0xff]
        %v4596 = vld [vmem:[%s4573 + $0xb0] sm:$0xff]
        %v4597 = vld [vmem:[%s4573 + $0xb8] sm:$0xff]
        %v4598 = vld [vmem:[%s4573 + $0xc0] sm:$0xff]
        %v4599 = vld [vmem:[%s4573 + $0xc8] sm:$0xff]
        %v4600 = vld [vmem:[%s4573 + $0xd0] sm:$0xff]
        %v4601 = vld [vmem:[%s4573 + $0xd8] sm:$0xff]
        %v4602 = vld [vmem:[%s4573 + $0xe0] sm:$0xff]
        %v4603 = vld [vmem:[%s4573 + $0xe8] sm:$0xff]
        %v4604 = vld [vmem:[%s4573 + $0xf0] sm:$0xff]
        %v4605 = vld [vmem:[%s4573 + $0xf8] sm:$0xff]
        %v4606 = vld [vmem:[%s4573 + $0x100] sm:$0xff]
        %v4607 = vld [vmem:[%s4573 + $0x108] sm:$0xff]
        %v4608 = vld [vmem:[%s4573 + $0x110] sm:$0xff]
        %v4609 = vld [vmem:[%s4573 + $0x118] sm:$0xff]
        %v4610 = vld [vmem:[%s4573 + $0x120] sm:$0xff]
        %v4611 = vld [vmem:[%s4573 + $0x128] sm:$0xff]
        %v4612 = vld [vmem:[%s4573 + $0x130] sm:$0xff]
        %v4613 = vld [vmem:[%s4573 + $0x138] sm:$0xff]
        %v4614 = vld [vmem:[%s4573 + $0x140] sm:$0xff]
        %v4615 = vld [vmem:[%s4573 + $0x148] sm:$0xff]
        %v4616 = vld [vmem:[%s4573 + $0x150] sm:$0xff]
        %v4617 = vld [vmem:[%s4573 + $0x158] sm:$0xff]
        %v4618 = vld [vmem:[%s4573 + $0x160] sm:$0xff]
        %s4619 = scalar_lea.vmem [#allocation5], 2
        %v4620 = vld [vmem:[%s4619] sm:$0x1]
        %v4621 = vld [vmem:[#allocation2] sm:$0xff]
        %v4622 = vld [vmem:[#allocation2 + $0x8] sm:$0xff]
        %v4623 = vld [vmem:[#allocation2 + $0x10] sm:$0xff]
        %v4624 = vld [vmem:[#allocation2 + $0x18] sm:$0xff]
        %v4625 = vld [vmem:[#allocation2 + $0x20] sm:$0x3f]
        %v4626 = vld [vmem:[#allocation2 + $0x1] sm:$0xff]
        %v4627 = vld [vmem:[#allocation2 + $0x9] sm:$0xff]
        %v4628 = vld [vmem:[#allocation2 + $0x11] sm:$0xff]
        %v4629 = vld [vmem:[#allocation2 + $0x19] sm:$0xff]
        %v4630 = vld [vmem:[#allocation2 + $0x21] sm:$0x3f]
        %v4631 = vld [vmem:[#allocation2 + $0x2] sm:$0xff]
        %v4632 = vld [vmem:[#allocation2 + $0xa] sm:$0xff]
        %v4633 = vld [vmem:[#allocation2 + $0x12] sm:$0xff]
        %v4634 = vld [vmem:[#allocation2 + $0x1a] sm:$0xff]
        %v4635 = vld [vmem:[#allocation2 + $0x22] sm:$0x3f]
        %v4636 = vld [vmem:[#allocation2 + $0x22] sm:$0xff]
        %v4637 = vld [vmem:[#allocation2 + $0x2a] sm:$0x3f]
        %v4638 = vld [vmem:[#allocation2 + $0xb] sm:$0xff]
        %v4639 = vld [vmem:[#allocation2 + $0x13] sm:$0xff]
        %v4640 = vld [vmem:[#allocation2 + $0x1b] sm:$0xff]
        %v4641 = vld [vmem:[#allocation2 + $0x23] sm:$0xff]
        %v4642 = vld [vmem:[#allocation2 + $0x2b] sm:$0x3f]
        %v4643 = vld [vmem:[#allocation2 + $0xc] sm:$0xff]
        %v4644 = vld [vmem:[#allocation2 + $0x14] sm:$0xff]
        %v4645 = vld [vmem:[#allocation2 + $0x1c] sm:$0xff]
        %v4646 = vld [vmem:[#allocation2 + $0x24] sm:$0xff]
        %v4647 = vld [vmem:[#allocation2 + $0x2c] sm:$0x3f]
        %v4648 = vld [vmem:[#allocation2 + $0x2c] sm:$0xff]
        %v4649 = vld [vmem:[#allocation2 + $0x34] sm:$0x3f]
        %v4650 = vld [vmem:[#allocation2 + $0x15] sm:$0xff]
        %v4651 = vld [vmem:[#allocation2 + $0x1d] sm:$0xff]
        %v4652 = vld [vmem:[#allocation2 + $0x25] sm:$0xff]
        %v4653 = vld [vmem:[#allocation2 + $0x2d] sm:$0xff]
        %v4654 = vld [vmem:[#allocation2 + $0x35] sm:$0x3f]
        %v4655 = vld [vmem:[#allocation2 + $0x16] sm:$0xff]
        %v4656 = vld [vmem:[#allocation2 + $0x1e] sm:$0xff]
        %v4657 = vld [vmem:[#allocation2 + $0x26] sm:$0xff]
        %v4658 = vld [vmem:[#allocation2 + $0x2e] sm:$0xff]
        %v4659 = vld [vmem:[#allocation2 + $0x36] sm:$0x3f]
        %4665 = vrot.lane.b32.xlu0 %v4626, 40
        %v4666 = vpop.permute.xlu0 %4665
        %4667 = vrot.lane.b32.xlu0 %v4627, 40
        %v4668 = vpop.permute.xlu0 %4667
        %4669 = vrot.lane.b32.xlu0 %v4628, 40
        %v4670 = vpop.permute.xlu0 %4669
        %4671 = vrot.lane.b32.xlu0 %v4629, 40
        %v4672 = vpop.permute.xlu0 %4671
        %4673 = vrot.lane.b32.xlu0 %v4630, 40
        %v4674 = vpop.permute.xlu0 %4673
        %4685 = vrot.lane.b32.xlu0 %v4631, 80
        %v4686 = vpop.permute.xlu0 %4685
        %4687 = vrot.lane.b32.xlu0 %v4632, 80
        %v4688 = vpop.permute.xlu0 %4687
        %4689 = vrot.lane.b32.xlu0 %v4633, 80
        %v4690 = vpop.permute.xlu0 %4689
        %4691 = vrot.lane.b32.xlu0 %v4634, 80
        %v4692 = vpop.permute.xlu0 %4691
        %4693 = vrot.lane.b32.xlu0 %v4635, 80
        %v4694 = vpop.permute.xlu0 %4693
        %4702 = vrot.lane.b32.xlu0 %v4632, 120
        %v4703 = vpop.permute.xlu0 %4702
        %4704 = vrot.lane.b32.xlu0 %v4633, 120
        %v4705 = vpop.permute.xlu0 %4704
        %4706 = vrot.lane.b32.xlu0 %v4634, 120
        %v4707 = vpop.permute.xlu0 %4706
        %4708 = vrot.lane.b32.xlu0 %v4636, 120
        %v4709 = vpop.permute.xlu0 %4708
        %4710 = vrot.lane.b32.xlu0 %v4637, 120
        %v4711 = vpop.permute.xlu0 %4710
        %4722 = vrot.lane.b32.xlu0 %v4638, 32
        %v4723 = vpop.permute.xlu0 %4722
        %4724 = vrot.lane.b32.xlu0 %v4639, 32
        %v4725 = vpop.permute.xlu0 %4724
        %4726 = vrot.lane.b32.xlu0 %v4640, 32
        %v4727 = vpop.permute.xlu0 %4726
        %4728 = vrot.lane.b32.xlu0 %v4641, 32
        %v4729 = vpop.permute.xlu0 %4728
        %4730 = vrot.lane.b32.xlu0 %v4642, 32
        %v4731 = vpop.permute.xlu0 %4730
        %4742 = vrot.lane.b32.xlu0 %v4643, 72
        %v4743 = vpop.permute.xlu0 %4742
        %4744 = vrot.lane.b32.xlu0 %v4644, 72
        %v4745 = vpop.permute.xlu0 %4744
        %4746 = vrot.lane.b32.xlu0 %v4645, 72
        %v4747 = vpop.permute.xlu0 %4746
        %4748 = vrot.lane.b32.xlu0 %v4646, 72
        %v4749 = vpop.permute.xlu0 %4748
        %4750 = vrot.lane.b32.xlu0 %v4647, 72
        %v4751 = vpop.permute.xlu0 %4750
        %4759 = vrot.lane.b32.xlu0 %v4644, 112
        %v4760 = vpop.permute.xlu0 %4759
        %4761 = vrot.lane.b32.xlu0 %v4645, 112
        %v4762 = vpop.permute.xlu0 %4761
        %4763 = vrot.lane.b32.xlu0 %v4646, 112
        %v4764 = vpop.permute.xlu0 %4763
        %4765 = vrot.lane.b32.xlu0 %v4648, 112
        %v4766 = vpop.permute.xlu0 %4765
        %4767 = vrot.lane.b32.xlu0 %v4649, 112
        %v4768 = vpop.permute.xlu0 %4767
        %4779 = vrot.lane.b32.xlu0 %v4650, 24
        %v4780 = vpop.permute.xlu0 %4779
        %4781 = vrot.lane.b32.xlu0 %v4651, 24
        %v4782 = vpop.permute.xlu0 %4781
        %4783 = vrot.lane.b32.xlu0 %v4652, 24
        %v4784 = vpop.permute.xlu0 %4783
        %4785 = vrot.lane.b32.xlu0 %v4653, 24
        %v4786 = vpop.permute.xlu0 %4785
        %4787 = vrot.lane.b32.xlu0 %v4654, 24
        %v4788 = vpop.permute.xlu0 %4787
        %4799 = vrot.lane.b32.xlu0 %v4655, 64
        %v4800 = vpop.permute.xlu0 %4799
        %4801 = vrot.lane.b32.xlu0 %v4656, 64
        %v4802 = vpop.permute.xlu0 %4801
        %4803 = vrot.lane.b32.xlu0 %v4657, 64
        %v4804 = vpop.permute.xlu0 %4803
        %4805 = vrot.lane.b32.xlu0 %v4658, 64
        %v4806 = vpop.permute.xlu0 %4805
        %4807 = vrot.lane.b32.xlu0 %v4659, 64
        %v4808 = vpop.permute.xlu0 %4807
        %v4814 = vsel %vm819, %v4621, %v4666
        %v4815 = vsel %vm819, %v4622, %v4668
        %v4816 = vsel %vm819, %v4623, %v4670
        %v4817 = vsel %vm819, %v4624, %v4672
        %v4818 = vsel %vm819, %v4625, %v4674
        %v4819 = vsel %vm570, %v4814, %v4686
        %v4820 = vsel %vm570, %v4815, %v4688
        %v4821 = vsel %vm570, %v4816, %v4690
        %v4822 = vsel %vm570, %v4817, %v4692
        %v4823 = vsel %vm570, %v4818, %v4694
        %v4824 = vsel %vm830, %v4819, %v4703
        %v4825 = vsel %vm830, %v4820, %v4705
        %v4826 = vsel %vm830, %v4821, %v4707
        %v4827 = vsel %vm830, %v4822, %v4709
        %v4828 = vsel %vm830, %v4823, %v4711
        %v4829 = vsel %vm836, %v4703, %v4723
        %v4830 = vsel %vm836, %v4705, %v4725
        %v4831 = vsel %vm836, %v4707, %v4727
        %v4832 = vsel %vm836, %v4709, %v4729
        %v4833 = vsel %vm836, %v4711, %v4731
        %v4834 = vsel %vm842, %v4829, %v4743
        %v4835 = vsel %vm842, %v4830, %v4745
        %v4836 = vsel %vm842, %v4831, %v4747
        %v4837 = vsel %vm842, %v4832, %v4749
        %v4838 = vsel %vm842, %v4833, %v4751
        %v4839 = vsel %vm848, %v4834, %v4760
        %v4840 = vsel %vm848, %v4835, %v4762
        %v4841 = vsel %vm848, %v4836, %v4764
        %v4842 = vsel %vm848, %v4837, %v4766
        %v4843 = vsel %vm848, %v4838, %v4768
        %v4844 = vsel %vm854, %v4760, %v4780
        %v4845 = vsel %vm854, %v4762, %v4782
        %v4846 = vsel %vm854, %v4764, %v4784
        %v4847 = vsel %vm854, %v4766, %v4786
        %v4848 = vsel %vm854, %v4768, %v4788
        %v4849 = vsel %vm860, %v4844, %v4800
        %v4850 = vsel %vm860, %v4845, %v4802
        %v4851 = vsel %vm860, %v4846, %v4804
        %v4852 = vsel %vm860, %v4847, %v4806
        %v4853 = vsel %vm860, %v4848, %v4808
        %v4855 = vperm.slane %v4620, 0
        %v4858 = vsel %vm869, %v4849, 0
        %v4861 = vsel %vm869, %v4850, 0
        %v4864 = vsel %vm869, %v4851, 0
        %v4867 = vsel %vm869, %v4852, 0
        %v4870 = vsel %vm869, %v4853, 0
        %4872 = vmatpush.msra.mxu0 %v4589
        %4873 = vmatpush.msra.mxu0 %v4588
        %4874 = vmatpush.msra.mxu0 %v4587
        %4875 = vmatpush.msra.mxu0 %v4586
        %4876 = vmatpush.msra.mxu0 %v4585
        %4877 = vmatpush.msra.mxu0 %v4584
        %4878 = vmatpush.msra.mxu0 %v4583
        %4879 = vmatpush.msra.mxu0 %v4582
        %4880 = vmatpush.msra.mxu0 %v4581
        %4881 = vmatpush.msra.mxu0 %v4580
        %4882 = vmatpush.msra.mxu0 %v4579
        %4883 = vmatpush.msra.mxu0 %v4578
        %4884 = vmatpush.msra.mxu0 %v4577
        %4885 = vmatpush.msra.mxu0 %v4576
        %4886 = vmatpush.msra.mxu0 %v4575
        %4887 = vmatpush.msra.mxu0 %v4574
        %4888 = vmatmul.f32.gmra.mxu0 %v4824
        %v4889 = vpop.f32.mrf.mxu0
        %v4890 = vadd.f32 %v4855, %v4889
        %4891 = vmatmul.f32.gmra.mxu0 %v4825
        %v4892 = vpop.f32.mrf.mxu0
        %v4893 = vadd.f32 %v4855, %v4892
        %4894 = vmatmul.f32.gmra.mxu0 %v4826
        %v4895 = vpop.f32.mrf.mxu0
        %v4896 = vadd.f32 %v4855, %v4895
        %4897 = vmatmul.f32.gmra.mxu0 %v4827
        %v4898 = vpop.f32.mrf.mxu0
        %v4899 = vadd.f32 %v4855, %v4898
        %4900 = vmatmul.f32.gmra.mxu0 %v4828
        %v4901 = vpop.f32.mrf.mxu0
        %v4902 = vadd.f32 %v4855, %v4901
        %4903 = vdwg.mxu0
        %4904 = vmatpush.msra.mxu0 %v4605
        %4905 = vmatpush.msra.mxu0 %v4604
        %4906 = vmatpush.msra.mxu0 %v4603
        %4907 = vmatpush.msra.mxu0 %v4602
        %4908 = vmatpush.msra.mxu0 %v4601
        %4909 = vmatpush.msra.mxu0 %v4600
        %4910 = vmatpush.msra.mxu0 %v4599
        %4911 = vmatpush.msra.mxu0 %v4598
        %4912 = vmatpush.msra.mxu0 %v4597
        %4913 = vmatpush.msra.mxu0 %v4596
        %4914 = vmatpush.msra.mxu0 %v4595
        %4915 = vmatpush.msra.mxu0 %v4594
        %4916 = vmatpush.msra.mxu0 %v4593
        %4917 = vmatpush.msra.mxu0 %v4592
        %4918 = vmatpush.msra.mxu0 %v4591
        %4919 = vmatpush.msra.mxu0 %v4590
        %4920 = vmatmul.f32.gmra.mxu0 %v4839
        %v4921 = vpop.f32.mrf.mxu0
        %v4922 = vadd.f32 %v4890, %v4921
        %4923 = vmatmul.f32.gmra.mxu0 %v4840
        %v4924 = vpop.f32.mrf.mxu0
        %v4925 = vadd.f32 %v4893, %v4924
        %4926 = vmatmul.f32.gmra.mxu0 %v4841
        %v4927 = vpop.f32.mrf.mxu0
        %v4928 = vadd.f32 %v4896, %v4927
        %4929 = vmatmul.f32.gmra.mxu0 %v4842
        %v4930 = vpop.f32.mrf.mxu0
        %v4931 = vadd.f32 %v4899, %v4930
        %4932 = vmatmul.f32.gmra.mxu0 %v4843
        %v4933 = vpop.f32.mrf.mxu0
        %v4934 = vadd.f32 %v4902, %v4933
        %4935 = vdwg.mxu0
        %4936 = vmatpush.msra.mxu0 0.0
        %4937 = vmatpush.msra.mxu0 0.0
        %4938 = vmatpush.msra.mxu0 0.0
        %4939 = vmatpush.msra.mxu0 %v4618
        %4940 = vmatpush.msra.mxu0 %v4617
        %4941 = vmatpush.msra.mxu0 %v4616
        %4942 = vmatpush.msra.mxu0 %v4615
        %4943 = vmatpush.msra.mxu0 %v4614
        %4944 = vmatpush.msra.mxu0 %v4613
        %4945 = vmatpush.msra.mxu0 %v4612
        %4946 = vmatpush.msra.mxu0 %v4611
        %4947 = vmatpush.msra.mxu0 %v4610
        %4948 = vmatpush.msra.mxu0 %v4609
        %4949 = vmatpush.msra.mxu0 %v4608
        %4950 = vmatpush.msra.mxu0 %v4607
        %4951 = vmatpush.msra.mxu0 %v4606
        %4952 = vmatmul.f32.gmra.mxu0 %v4858
        %v4953 = vpop.f32.mrf.mxu0
        %v4954 = vadd.f32 %v4922, %v4953
        %4955 = vmatmul.f32.gmra.mxu0 %v4861
        %v4956 = vpop.f32.mrf.mxu0
        %v4957 = vadd.f32 %v4925, %v4956
        %4958 = vmatmul.f32.gmra.mxu0 %v4864
        %v4959 = vpop.f32.mrf.mxu0
        %v4960 = vadd.f32 %v4928, %v4959
        %4961 = vmatmul.f32.gmra.mxu0 %v4867
        %v4962 = vpop.f32.mrf.mxu0
        %v4963 = vadd.f32 %v4931, %v4962
        %4964 = vmatmul.f32.gmra.mxu0 %v4870
        %v4965 = vpop.f32.mrf.mxu0
        %v4966 = vadd.f32 %v4934, %v4965
        %4967 = vdwg.mxu0
        %v4968 = vmax.f32 %v4954, 0.0
        %v4969 = vmax.f32 %v4957, 0.0
        %v4970 = vmax.f32 %v4960, 0.0
        %v4971 = vmax.f32 %v4963, 0.0
        %v4972 = vmax.f32 %v4966, 0.0
        %v4973 = vmul.f32 %v4968, %v565
        %v4974 = vmul.f32 %v4969, %v566
        %v4975 = vmul.f32 %v4970, %v567
        %v4976 = vmul.f32 %v4971, %v568
        %v4977 = vmul.f32 %v4972, %v569
        %4978 = vst.msk [vmem:[#allocation2 + $0xb] sm:$0xff] %vm570, %v4973
        %4979 = vst.msk [vmem:[#allocation2 + $0x13] sm:$0xff] %vm570, %v4974
        %4980 = vst.msk [vmem:[#allocation2 + $0x1b] sm:$0xff] %vm570, %v4975
        %4981 = vst.msk [vmem:[#allocation2 + $0x23] sm:$0xff] %vm570, %v4976
        %4982 = vst.msk [vmem:[#allocation2 + $0x2b] sm:$0x3f] %vm995, %v4977
        %s4983 = scalar_lea.vmem [#allocation7], 2880
        %v4984 = vld [vmem:[%s4983] sm:$0xff]
        %v4985 = vld [vmem:[%s4983 + $0x8] sm:$0xff]
        %v4986 = vld [vmem:[%s4983 + $0x10] sm:$0xff]
        %v4987 = vld [vmem:[%s4983 + $0x18] sm:$0xff]
        %v4988 = vld [vmem:[%s4983 + $0x20] sm:$0xff]
        %v4989 = vld [vmem:[%s4983 + $0x28] sm:$0xff]
        %v4990 = vld [vmem:[%s4983 + $0x30] sm:$0xff]
        %v4991 = vld [vmem:[%s4983 + $0x38] sm:$0xff]
        %v4992 = vld [vmem:[%s4983 + $0x40] sm:$0xff]
        %v4993 = vld [vmem:[%s4983 + $0x48] sm:$0xff]
        %v4994 = vld [vmem:[%s4983 + $0x50] sm:$0xff]
        %v4995 = vld [vmem:[%s4983 + $0x58] sm:$0xff]
        %v4996 = vld [vmem:[%s4983 + $0x60] sm:$0xff]
        %v4997 = vld [vmem:[%s4983 + $0x68] sm:$0xff]
        %v4998 = vld [vmem:[%s4983 + $0x70] sm:$0xff]
        %v4999 = vld [vmem:[%s4983 + $0x78] sm:$0xff]
        %v5000 = vld [vmem:[%s4983 + $0x80] sm:$0xff]
        %v5001 = vld [vmem:[%s4983 + $0x88] sm:$0xff]
        %v5002 = vld [vmem:[%s4983 + $0x90] sm:$0xff]
        %v5003 = vld [vmem:[%s4983 + $0x98] sm:$0xff]
        %v5004 = vld [vmem:[%s4983 + $0xa0] sm:$0xff]
        %v5005 = vld [vmem:[%s4983 + $0xa8] sm:$0xff]
        %v5006 = vld [vmem:[%s4983 + $0xb0] sm:$0xff]
        %v5007 = vld [vmem:[%s4983 + $0xb8] sm:$0xff]
        %v5008 = vld [vmem:[%s4983 + $0xc0] sm:$0xff]
        %v5009 = vld [vmem:[%s4983 + $0xc8] sm:$0xff]
        %v5010 = vld [vmem:[%s4983 + $0xd0] sm:$0xff]
        %v5011 = vld [vmem:[%s4983 + $0xd8] sm:$0xff]
        %v5012 = vld [vmem:[%s4983 + $0xe0] sm:$0xff]
        %v5013 = vld [vmem:[%s4983 + $0xe8] sm:$0xff]
        %v5014 = vld [vmem:[%s4983 + $0xf0] sm:$0xff]
        %v5015 = vld [vmem:[%s4983 + $0xf8] sm:$0xff]
        %v5016 = vld [vmem:[%s4983 + $0x100] sm:$0xff]
        %v5017 = vld [vmem:[%s4983 + $0x108] sm:$0xff]
        %v5018 = vld [vmem:[%s4983 + $0x110] sm:$0xff]
        %v5019 = vld [vmem:[%s4983 + $0x118] sm:$0xff]
        %v5020 = vld [vmem:[%s4983 + $0x120] sm:$0xff]
        %v5021 = vld [vmem:[%s4983 + $0x128] sm:$0xff]
        %v5022 = vld [vmem:[%s4983 + $0x130] sm:$0xff]
        %v5023 = vld [vmem:[%s4983 + $0x138] sm:$0xff]
        %v5024 = vld [vmem:[%s4983 + $0x140] sm:$0xff]
        %v5025 = vld [vmem:[%s4983 + $0x148] sm:$0xff]
        %v5026 = vld [vmem:[%s4983 + $0x150] sm:$0xff]
        %v5027 = vld [vmem:[%s4983 + $0x158] sm:$0xff]
        %v5028 = vld [vmem:[%s4983 + $0x160] sm:$0xff]
        %v5029 = vld [vmem:[%s4983 + $0x168] sm:$0xff]
        %v5030 = vld [vmem:[%s4983 + $0x170] sm:$0xff]
        %v5031 = vld [vmem:[%s4983 + $0x178] sm:$0xff]
        %v5032 = vld [vmem:[%s4983 + $0x180] sm:$0xff]
        %v5033 = vld [vmem:[%s4983 + $0x188] sm:$0xff]
        %v5034 = vld [vmem:[%s4983 + $0x190] sm:$0xff]
        %v5035 = vld [vmem:[%s4983 + $0x198] sm:$0xff]
        %v5036 = vld [vmem:[%s4983 + $0x1a0] sm:$0xff]
        %v5037 = vld [vmem:[%s4983 + $0x1a8] sm:$0xff]
        %v5038 = vld [vmem:[%s4983 + $0x1b0] sm:$0xff]
        %v5039 = vld [vmem:[%s4983 + $0x1b8] sm:$0xff]
        %v5040 = vld [vmem:[%s4983 + $0x1c0] sm:$0xff]
        %v5041 = vld [vmem:[%s4983 + $0x1c8] sm:$0xff]
        %v5042 = vld [vmem:[%s4983 + $0x1d0] sm:$0xff]
        %v5043 = vld [vmem:[%s4983 + $0x1d8] sm:$0xff]
        %v5044 = vld [vmem:[%s4983 + $0x1e0] sm:$0xff]
        %v5045 = vld [vmem:[%s4983 + $0x1e8] sm:$0xff]
        %v5046 = vld [vmem:[%s4983 + $0x1f0] sm:$0xff]
        %v5047 = vld [vmem:[%s4983 + $0x1f8] sm:$0xff]
        %v5048 = vld [vmem:[%s4983 + $0x200] sm:$0xff]
        %v5049 = vld [vmem:[%s4983 + $0x208] sm:$0xff]
        %v5050 = vld [vmem:[%s4983 + $0x210] sm:$0xff]
        %v5051 = vld [vmem:[%s4983 + $0x218] sm:$0xff]
        %v5052 = vld [vmem:[%s4983 + $0x220] sm:$0xff]
        %v5053 = vld [vmem:[%s4983 + $0x228] sm:$0xff]
        %v5054 = vld [vmem:[%s4983 + $0x230] sm:$0xff]
        %v5055 = vld [vmem:[%s4983 + $0x238] sm:$0xff]
        %v5056 = vld [vmem:[%s4983 + $0x240] sm:$0xff]
        %v5057 = vld [vmem:[%s4983 + $0x248] sm:$0xff]
        %v5058 = vld [vmem:[%s4983 + $0x250] sm:$0xff]
        %v5059 = vld [vmem:[%s4983 + $0x258] sm:$0xff]
        %v5060 = vld [vmem:[%s4983 + $0x260] sm:$0xff]
        %v5061 = vld [vmem:[%s4983 + $0x268] sm:$0xff]
        %v5062 = vld [vmem:[%s4983 + $0x270] sm:$0xff]
        %v5063 = vld [vmem:[%s4983 + $0x278] sm:$0xff]
        %v5064 = vld [vmem:[%s4983 + $0x280] sm:$0xff]
        %v5065 = vld [vmem:[%s4983 + $0x288] sm:$0xff]
        %v5066 = vld [vmem:[%s4983 + $0x290] sm:$0xff]
        %v5067 = vld [vmem:[%s4983 + $0x298] sm:$0xff]
        %v5068 = vld [vmem:[%s4983 + $0x2a0] sm:$0xff]
        %v5069 = vld [vmem:[%s4983 + $0x2a8] sm:$0xff]
        %v5070 = vld [vmem:[%s4983 + $0x2b0] sm:$0xff]
        %v5071 = vld [vmem:[%s4983 + $0x2b8] sm:$0xff]
        %v5072 = vld [vmem:[%s4983 + $0x2c0] sm:$0xff]
        %v5073 = vld [vmem:[%s4983 + $0x2c8] sm:$0xff]
        %s5074 = scalar_lea.vmem [#allocation8], 4
        %v5075 = vld [vmem:[%s5074] sm:$0x1]
        %v5076 = vld [vmem:[#allocation2] sm:$0xff]
        %v5077 = vld [vmem:[#allocation2 + $0x8] sm:$0xff]
        %v5078 = vld [vmem:[#allocation2 + $0x10] sm:$0xff]
        %v5079 = vld [vmem:[#allocation2 + $0x18] sm:$0xff]
        %v5080 = vld [vmem:[#allocation2 + $0x20] sm:$0x3f]
        %v5081 = vld [vmem:[#allocation2 + $0x1] sm:$0xff]
        %v5082 = vld [vmem:[#allocation2 + $0x9] sm:$0xff]
        %v5083 = vld [vmem:[#allocation2 + $0x11] sm:$0xff]
        %v5084 = vld [vmem:[#allocation2 + $0x19] sm:$0xff]
        %v5085 = vld [vmem:[#allocation2 + $0x21] sm:$0x3f]
        %v5086 = vld [vmem:[#allocation2 + $0x2] sm:$0xff]
        %v5087 = vld [vmem:[#allocation2 + $0xa] sm:$0xff]
        %v5088 = vld [vmem:[#allocation2 + $0x12] sm:$0xff]
        %v5089 = vld [vmem:[#allocation2 + $0x1a] sm:$0xff]
        %v5090 = vld [vmem:[#allocation2 + $0x22] sm:$0x3f]
        %v5091 = vld [vmem:[#allocation2 + $0x22] sm:$0xff]
        %v5092 = vld [vmem:[#allocation2 + $0x2a] sm:$0x3f]
        %v5093 = vld [vmem:[#allocation2 + $0xb] sm:$0xff]
        %v5094 = vld [vmem:[#allocation2 + $0x13] sm:$0xff]
        %v5095 = vld [vmem:[#allocation2 + $0x1b] sm:$0xff]
        %v5096 = vld [vmem:[#allocation2 + $0x23] sm:$0xff]
        %v5097 = vld [vmem:[#allocation2 + $0x2b] sm:$0x3f]
        %v5098 = vld [vmem:[#allocation2 + $0xc] sm:$0xff]
        %v5099 = vld [vmem:[#allocation2 + $0x14] sm:$0xff]
        %v5100 = vld [vmem:[#allocation2 + $0x1c] sm:$0xff]
        %v5101 = vld [vmem:[#allocation2 + $0x24] sm:$0xff]
        %v5102 = vld [vmem:[#allocation2 + $0x2c] sm:$0x3f]
        %v5103 = vld [vmem:[#allocation2 + $0x2c] sm:$0xff]
        %v5104 = vld [vmem:[#allocation2 + $0x34] sm:$0x3f]
        %v5105 = vld [vmem:[#allocation2 + $0x15] sm:$0xff]
        %v5106 = vld [vmem:[#allocation2 + $0x1d] sm:$0xff]
        %v5107 = vld [vmem:[#allocation2 + $0x25] sm:$0xff]
        %v5108 = vld [vmem:[#allocation2 + $0x2d] sm:$0xff]
        %v5109 = vld [vmem:[#allocation2 + $0x35] sm:$0x3f]
        %v5110 = vld [vmem:[#allocation2 + $0x16] sm:$0xff]
        %v5111 = vld [vmem:[#allocation2 + $0x1e] sm:$0xff]
        %v5112 = vld [vmem:[#allocation2 + $0x26] sm:$0xff]
        %v5113 = vld [vmem:[#allocation2 + $0x2e] sm:$0xff]
        %v5114 = vld [vmem:[#allocation2 + $0x36] sm:$0x3f]
        %5120 = vrot.lane.b32.xlu0 %v5081, 80
        %v5121 = vpop.permute.xlu0 %5120
        %5122 = vrot.lane.b32.xlu0 %v5082, 80
        %v5123 = vpop.permute.xlu0 %5122
        %5124 = vrot.lane.b32.xlu0 %v5083, 80
        %v5125 = vpop.permute.xlu0 %5124
        %5126 = vrot.lane.b32.xlu0 %v5084, 80
        %v5127 = vpop.permute.xlu0 %5126
        %5128 = vrot.lane.b32.xlu0 %v5085, 80
        %v5129 = vpop.permute.xlu0 %5128
        %5140 = vrot.lane.b32.xlu0 %v5086, 32
        %v5141 = vpop.permute.xlu0 %5140
        %5142 = vrot.lane.b32.xlu0 %v5087, 32
        %v5143 = vpop.permute.xlu0 %5142
        %5144 = vrot.lane.b32.xlu0 %v5088, 32
        %v5145 = vpop.permute.xlu0 %5144
        %5146 = vrot.lane.b32.xlu0 %v5089, 32
        %v5147 = vpop.permute.xlu0 %5146
        %5148 = vrot.lane.b32.xlu0 %v5090, 32
        %v5149 = vpop.permute.xlu0 %5148
        %5157 = vrot.lane.b32.xlu0 %v5087, 112
        %v5158 = vpop.permute.xlu0 %5157
        %5159 = vrot.lane.b32.xlu0 %v5088, 112
        %v5160 = vpop.permute.xlu0 %5159
        %5161 = vrot.lane.b32.xlu0 %v5089, 112
        %v5162 = vpop.permute.xlu0 %5161
        %5163 = vrot.lane.b32.xlu0 %v5091, 112
        %v5164 = vpop.permute.xlu0 %5163
        %5165 = vrot.lane.b32.xlu0 %v5092, 112
        %v5166 = vpop.permute.xlu0 %5165
        %5177 = vrot.lane.b32.xlu0 %v5093, 64
        %v5178 = vpop.permute.xlu0 %5177
        %5179 = vrot.lane.b32.xlu0 %v5094, 64
        %v5180 = vpop.permute.xlu0 %5179
        %5181 = vrot.lane.b32.xlu0 %v5095, 64
        %v5182 = vpop.permute.xlu0 %5181
        %5183 = vrot.lane.b32.xlu0 %v5096, 64
        %v5184 = vpop.permute.xlu0 %5183
        %5185 = vrot.lane.b32.xlu0 %v5097, 64
        %v5186 = vpop.permute.xlu0 %5185
        %5197 = vrot.lane.b32.xlu0 %v5098, 16
        %v5198 = vpop.permute.xlu0 %5197
        %5199 = vrot.lane.b32.xlu0 %v5099, 16
        %v5200 = vpop.permute.xlu0 %5199
        %5201 = vrot.lane.b32.xlu0 %v5100, 16
        %v5202 = vpop.permute.xlu0 %5201
        %5203 = vrot.lane.b32.xlu0 %v5101, 16
        %v5204 = vpop.permute.xlu0 %5203
        %5205 = vrot.lane.b32.xlu0 %v5102, 16
        %v5206 = vpop.permute.xlu0 %5205
        %5214 = vrot.lane.b32.xlu0 %v5099, 96
        %v5215 = vpop.permute.xlu0 %5214
        %5216 = vrot.lane.b32.xlu0 %v5100, 96
        %v5217 = vpop.permute.xlu0 %5216
        %5218 = vrot.lane.b32.xlu0 %v5101, 96
        %v5219 = vpop.permute.xlu0 %5218
        %5220 = vrot.lane.b32.xlu0 %v5103, 96
        %v5221 = vpop.permute.xlu0 %5220
        %5222 = vrot.lane.b32.xlu0 %v5104, 96
        %v5223 = vpop.permute.xlu0 %5222
        %5234 = vrot.lane.b32.xlu0 %v5105, 48
        %v5235 = vpop.permute.xlu0 %5234
        %5236 = vrot.lane.b32.xlu0 %v5106, 48
        %v5237 = vpop.permute.xlu0 %5236
        %5238 = vrot.lane.b32.xlu0 %v5107, 48
        %v5239 = vpop.permute.xlu0 %5238
        %5240 = vrot.lane.b32.xlu0 %v5108, 48
        %v5241 = vpop.permute.xlu0 %5240
        %5242 = vrot.lane.b32.xlu0 %v5109, 48
        %v5243 = vpop.permute.xlu0 %5242
        %v5249 = vsel %vm570, %v5076, %v5121
        %v5250 = vsel %vm570, %v5077, %v5123
        %v5251 = vsel %vm570, %v5078, %v5125
        %v5252 = vsel %vm570, %v5079, %v5127
        %v5253 = vsel %vm570, %v5080, %v5129
        %v5254 = vsel %vm836, %v5121, %v5141
        %v5255 = vsel %vm836, %v5123, %v5143
        %v5256 = vsel %vm836, %v5125, %v5145
        %v5257 = vsel %vm836, %v5127, %v5147
        %v5258 = vsel %vm836, %v5129, %v5149
        %v5259 = vsel %vm848, %v5254, %v5158
        %v5260 = vsel %vm848, %v5255, %v5160
        %v5261 = vsel %vm848, %v5256, %v5162
        %v5262 = vsel %vm848, %v5257, %v5164
        %v5263 = vsel %vm848, %v5258, %v5166
        %v5264 = vsel %vm860, %v5158, %v5178
        %v5265 = vsel %vm860, %v5160, %v5180
        %v5266 = vsel %vm860, %v5162, %v5182
        %v5267 = vsel %vm860, %v5164, %v5184
        %v5268 = vsel %vm860, %v5166, %v5186
        %v5269 = vsel %vm1281, %v5178, %v5198
        %v5270 = vsel %vm1281, %v5180, %v5200
        %v5271 = vsel %vm1281, %v5182, %v5202
        %v5272 = vsel %vm1281, %v5184, %v5204
        %v5273 = vsel %vm1281, %v5186, %v5206
        %v5274 = vsel %vm1287, %v5269, %v5215
        %v5275 = vsel %vm1287, %v5270, %v5217
        %v5276 = vsel %vm1287, %v5271, %v5219
        %v5277 = vsel %vm1287, %v5272, %v5221
        %v5278 = vsel %vm1287, %v5273, %v5223
        %v5279 = vsel %vm1293, %v5215, %v5235
        %v5280 = vsel %vm1293, %v5217, %v5237
        %v5281 = vsel %vm1293, %v5219, %v5239
        %v5282 = vsel %vm1293, %v5221, %v5241
        %v5283 = vsel %vm1293, %v5223, %v5243
        %v5285 = vperm.slane %v5075, 0
        %v5288 = vsel %vm570, %v5110, 0
        %v5291 = vsel %vm570, %v5111, 0
        %v5294 = vsel %vm570, %v5112, 0
        %v5297 = vsel %vm570, %v5113, 0
        %v5300 = vsel %vm570, %v5114, 0
        %5302 = vmatpush.msra.mxu0 %v4999
        %5303 = vmatpush.msra.mxu0 %v4998
        %5304 = vmatpush.msra.mxu0 %v4997
        %5305 = vmatpush.msra.mxu0 %v4996
        %5306 = vmatpush.msra.mxu0 %v4995
        %5307 = vmatpush.msra.mxu0 %v4994
        %5308 = vmatpush.msra.mxu0 %v4993
        %5309 = vmatpush.msra.mxu0 %v4992
        %5310 = vmatpush.msra.mxu0 %v4991
        %5311 = vmatpush.msra.mxu0 %v4990
        %5312 = vmatpush.msra.mxu0 %v4989
        %5313 = vmatpush.msra.mxu0 %v4988
        %5314 = vmatpush.msra.mxu0 %v4987
        %5315 = vmatpush.msra.mxu0 %v4986
        %5316 = vmatpush.msra.mxu0 %v4985
        %5317 = vmatpush.msra.mxu0 %v4984
        %5318 = vmatmul.f32.gmra.mxu0 %v5249
        %v5319 = vpop.f32.mrf.mxu0
        %v5320 = vadd.f32 %v5285, %v5319
        %5321 = vmatmul.f32.gmra.mxu0 %v5250
        %v5322 = vpop.f32.mrf.mxu0
        %v5323 = vadd.f32 %v5285, %v5322
        %5324 = vmatmul.f32.gmra.mxu0 %v5251
        %v5325 = vpop.f32.mrf.mxu0
        %v5326 = vadd.f32 %v5285, %v5325
        %5327 = vmatmul.f32.gmra.mxu0 %v5252
        %v5328 = vpop.f32.mrf.mxu0
        %v5329 = vadd.f32 %v5285, %v5328
        %5330 = vmatmul.f32.gmra.mxu0 %v5253
        %v5331 = vpop.f32.mrf.mxu0
        %v5332 = vadd.f32 %v5285, %v5331
        %5333 = vdwg.mxu0
        %5334 = vmatpush.msra.mxu0 %v5015
        %5335 = vmatpush.msra.mxu0 %v5014
        %5336 = vmatpush.msra.mxu0 %v5013
        %5337 = vmatpush.msra.mxu0 %v5012
        %5338 = vmatpush.msra.mxu0 %v5011
        %5339 = vmatpush.msra.mxu0 %v5010
        %5340 = vmatpush.msra.mxu0 %v5009
        %5341 = vmatpush.msra.mxu0 %v5008
        %5342 = vmatpush.msra.mxu0 %v5007
        %5343 = vmatpush.msra.mxu0 %v5006
        %5344 = vmatpush.msra.mxu0 %v5005
        %5345 = vmatpush.msra.mxu0 %v5004
        %5346 = vmatpush.msra.mxu0 %v5003
        %5347 = vmatpush.msra.mxu0 %v5002
        %5348 = vmatpush.msra.mxu0 %v5001
        %5349 = vmatpush.msra.mxu0 %v5000
        %5350 = vmatmul.f32.gmra.mxu0 %v5259
        %v5351 = vpop.f32.mrf.mxu0
        %v5352 = vadd.f32 %v5320, %v5351
        %5353 = vmatmul.f32.gmra.mxu0 %v5260
        %v5354 = vpop.f32.mrf.mxu0
        %v5355 = vadd.f32 %v5323, %v5354
        %5356 = vmatmul.f32.gmra.mxu0 %v5261
        %v5357 = vpop.f32.mrf.mxu0
        %v5358 = vadd.f32 %v5326, %v5357
        %5359 = vmatmul.f32.gmra.mxu0 %v5262
        %v5360 = vpop.f32.mrf.mxu0
        %v5361 = vadd.f32 %v5329, %v5360
        %5362 = vmatmul.f32.gmra.mxu0 %v5263
        %v5363 = vpop.f32.mrf.mxu0
        %v5364 = vadd.f32 %v5332, %v5363
        %5365 = vdwg.mxu0
        %5366 = vmatpush.msra.mxu0 %v5031
        %5367 = vmatpush.msra.mxu0 %v5030
        %5368 = vmatpush.msra.mxu0 %v5029
        %5369 = vmatpush.msra.mxu0 %v5028
        %5370 = vmatpush.msra.mxu0 %v5027
        %5371 = vmatpush.msra.mxu0 %v5026
        %5372 = vmatpush.msra.mxu0 %v5025
        %5373 = vmatpush.msra.mxu0 %v5024
        %5374 = vmatpush.msra.mxu0 %v5023
        %5375 = vmatpush.msra.mxu0 %v5022
        %5376 = vmatpush.msra.mxu0 %v5021
        %5377 = vmatpush.msra.mxu0 %v5020
        %5378 = vmatpush.msra.mxu0 %v5019
        %5379 = vmatpush.msra.mxu0 %v5018
        %5380 = vmatpush.msra.mxu0 %v5017
        %5381 = vmatpush.msra.mxu0 %v5016
        %5382 = vmatmul.f32.gmra.mxu0 %v5264
        %v5383 = vpop.f32.mrf.mxu0
        %v5384 = vadd.f32 %v5352, %v5383
        %5385 = vmatmul.f32.gmra.mxu0 %v5265
        %v5386 = vpop.f32.mrf.mxu0
        %v5387 = vadd.f32 %v5355, %v5386
        %5388 = vmatmul.f32.gmra.mxu0 %v5266
        %v5389 = vpop.f32.mrf.mxu0
        %v5390 = vadd.f32 %v5358, %v5389
        %5391 = vmatmul.f32.gmra.mxu0 %v5267
        %v5392 = vpop.f32.mrf.mxu0
        %v5393 = vadd.f32 %v5361, %v5392
        %5394 = vmatmul.f32.gmra.mxu0 %v5268
        %v5395 = vpop.f32.mrf.mxu0
        %v5396 = vadd.f32 %v5364, %v5395
        %5397 = vdwg.mxu0
        %5398 = vmatpush.msra.mxu0 %v5047
        %5399 = vmatpush.msra.mxu0 %v5046
        %5400 = vmatpush.msra.mxu0 %v5045
        %5401 = vmatpush.msra.mxu0 %v5044
        %5402 = vmatpush.msra.mxu0 %v5043
        %5403 = vmatpush.msra.mxu0 %v5042
        %5404 = vmatpush.msra.mxu0 %v5041
        %5405 = vmatpush.msra.mxu0 %v5040
        %5406 = vmatpush.msra.mxu0 %v5039
        %5407 = vmatpush.msra.mxu0 %v5038
        %5408 = vmatpush.msra.mxu0 %v5037
        %5409 = vmatpush.msra.mxu0 %v5036
        %5410 = vmatpush.msra.mxu0 %v5035
        %5411 = vmatpush.msra.mxu0 %v5034
        %5412 = vmatpush.msra.mxu0 %v5033
        %5413 = vmatpush.msra.mxu0 %v5032
        %5414 = vmatmul.f32.gmra.mxu0 %v5274
        %v5415 = vpop.f32.mrf.mxu0
        %v5416 = vadd.f32 %v5384, %v5415
        %5417 = vmatmul.f32.gmra.mxu0 %v5275
        %v5418 = vpop.f32.mrf.mxu0
        %v5419 = vadd.f32 %v5387, %v5418
        %5420 = vmatmul.f32.gmra.mxu0 %v5276
        %v5421 = vpop.f32.mrf.mxu0
        %v5422 = vadd.f32 %v5390, %v5421
        %5423 = vmatmul.f32.gmra.mxu0 %v5277
        %v5424 = vpop.f32.mrf.mxu0
        %v5425 = vadd.f32 %v5393, %v5424
        %5426 = vmatmul.f32.gmra.mxu0 %v5278
        %v5427 = vpop.f32.mrf.mxu0
        %v5428 = vadd.f32 %v5396, %v5427
        %5429 = vdwg.mxu0
        %5430 = vmatpush.msra.mxu0 %v5063
        %5431 = vmatpush.msra.mxu0 %v5062
        %5432 = vmatpush.msra.mxu0 %v5061
        %5433 = vmatpush.msra.mxu0 %v5060
        %5434 = vmatpush.msra.mxu0 %v5059
        %5435 = vmatpush.msra.mxu0 %v5058
        %5436 = vmatpush.msra.mxu0 %v5057
        %5437 = vmatpush.msra.mxu0 %v5056
        %5438 = vmatpush.msra.mxu0 %v5055
        %5439 = vmatpush.msra.mxu0 %v5054
        %5440 = vmatpush.msra.mxu0 %v5053
        %5441 = vmatpush.msra.mxu0 %v5052
        %5442 = vmatpush.msra.mxu0 %v5051
        %5443 = vmatpush.msra.mxu0 %v5050
        %5444 = vmatpush.msra.mxu0 %v5049
        %5445 = vmatpush.msra.mxu0 %v5048
        %5446 = vmatmul.f32.gmra.mxu0 %v5279
        %v5447 = vpop.f32.mrf.mxu0
        %v5448 = vadd.f32 %v5416, %v5447
        %5449 = vmatmul.f32.gmra.mxu0 %v5280
        %v5450 = vpop.f32.mrf.mxu0
        %v5451 = vadd.f32 %v5419, %v5450
        %5452 = vmatmul.f32.gmra.mxu0 %v5281
        %v5453 = vpop.f32.mrf.mxu0
        %v5454 = vadd.f32 %v5422, %v5453
        %5455 = vmatmul.f32.gmra.mxu0 %v5282
        %v5456 = vpop.f32.mrf.mxu0
        %v5457 = vadd.f32 %v5425, %v5456
        %5458 = vmatmul.f32.gmra.mxu0 %v5283
        %v5459 = vpop.f32.mrf.mxu0
        %v5460 = vadd.f32 %v5428, %v5459
        %5461 = vdwg.mxu0
        %5462 = vmatpush.msra.mxu0 0.0
        %5463 = vmatpush.msra.mxu0 0.0
        %5464 = vmatpush.msra.mxu0 0.0
        %5465 = vmatpush.msra.mxu0 0.0
        %5466 = vmatpush.msra.mxu0 0.0
        %5467 = vmatpush.msra.mxu0 0.0
        %5468 = vmatpush.msra.mxu0 %v5073
        %5469 = vmatpush.msra.mxu0 %v5072
        %5470 = vmatpush.msra.mxu0 %v5071
        %5471 = vmatpush.msra.mxu0 %v5070
        %5472 = vmatpush.msra.mxu0 %v5069
        %5473 = vmatpush.msra.mxu0 %v5068
        %5474 = vmatpush.msra.mxu0 %v5067
        %5475 = vmatpush.msra.mxu0 %v5066
        %5476 = vmatpush.msra.mxu0 %v5065
        %5477 = vmatpush.msra.mxu0 %v5064
        %5478 = vmatmul.f32.gmra.mxu0 %v5288
        %v5479 = vpop.f32.mrf.mxu0
        %v5480 = vadd.f32 %v5448, %v5479
        %5481 = vmatmul.f32.gmra.mxu0 %v5291
        %v5482 = vpop.f32.mrf.mxu0
        %v5483 = vadd.f32 %v5451, %v5482
        %5484 = vmatmul.f32.gmra.mxu0 %v5294
        %v5485 = vpop.f32.mrf.mxu0
        %v5486 = vadd.f32 %v5454, %v5485
        %5487 = vmatmul.f32.gmra.mxu0 %v5297
        %v5488 = vpop.f32.mrf.mxu0
        %v5489 = vadd.f32 %v5457, %v5488
        %5490 = vmatmul.f32.gmra.mxu0 %v5300
        %v5491 = vpop.f32.mrf.mxu0
        %v5492 = vadd.f32 %v5460, %v5491
        %5493 = vdwg.mxu0
        %v5494 = vmax.f32 %v5480, 0.0
        %v5495 = vmax.f32 %v5483, 0.0
        %v5496 = vmax.f32 %v5486, 0.0
        %v5497 = vmax.f32 %v5489, 0.0
        %v5498 = vmax.f32 %v5492, 0.0
        %v5499 = vmul.f32 %v5494, %v565
        %v5500 = vmul.f32 %v5495, %v566
        %v5501 = vmul.f32 %v5496, %v567
        %v5502 = vmul.f32 %v5497, %v568
        %v5503 = vmul.f32 %v5498, %v569
        %v5504 = vadd.f32 %v5499, %v5093
        %v5505 = vadd.f32 %v5500, %v5094
        %v5506 = vadd.f32 %v5501, %v5095
        %v5507 = vadd.f32 %v5502, %v5096
        %v5508 = vadd.f32 %v5503, %v5097
        %5509 = vst.msk [vmem:[#allocation2 + $0xb] sm:$0xff] %vm570, %v5504
        %5510 = vst.msk [vmem:[#allocation2 + $0x13] sm:$0xff] %vm570, %v5505
        %5511 = vst.msk [vmem:[#allocation2 + $0x1b] sm:$0xff] %vm570, %v5506
        %5512 = vst.msk [vmem:[#allocation2 + $0x23] sm:$0xff] %vm570, %v5507
        %5513 = vst.msk [vmem:[#allocation2 + $0x2b] sm:$0x3f] %vm995, %v5508
        %s5514 = scalar_lea.vmem [#allocation7], 3600
        %v5515 = vld [vmem:[%s5514] sm:$0xff]
        %v5516 = vld [vmem:[%s5514 + $0x8] sm:$0xff]
        %v5517 = vld [vmem:[%s5514 + $0x10] sm:$0xff]
        %v5518 = vld [vmem:[%s5514 + $0x18] sm:$0xff]
        %v5519 = vld [vmem:[%s5514 + $0x20] sm:$0xff]
        %v5520 = vld [vmem:[%s5514 + $0x28] sm:$0xff]
        %v5521 = vld [vmem:[%s5514 + $0x30] sm:$0xff]
        %v5522 = vld [vmem:[%s5514 + $0x38] sm:$0xff]
        %v5523 = vld [vmem:[%s5514 + $0x40] sm:$0xff]
        %v5524 = vld [vmem:[%s5514 + $0x48] sm:$0xff]
        %v5525 = vld [vmem:[%s5514 + $0x50] sm:$0xff]
        %v5526 = vld [vmem:[%s5514 + $0x58] sm:$0xff]
        %v5527 = vld [vmem:[%s5514 + $0x60] sm:$0xff]
        %v5528 = vld [vmem:[%s5514 + $0x68] sm:$0xff]
        %v5529 = vld [vmem:[%s5514 + $0x70] sm:$0xff]
        %v5530 = vld [vmem:[%s5514 + $0x78] sm:$0xff]
        %v5531 = vld [vmem:[%s5514 + $0x80] sm:$0xff]
        %v5532 = vld [vmem:[%s5514 + $0x88] sm:$0xff]
        %v5533 = vld [vmem:[%s5514 + $0x90] sm:$0xff]
        %v5534 = vld [vmem:[%s5514 + $0x98] sm:$0xff]
        %v5535 = vld [vmem:[%s5514 + $0xa0] sm:$0xff]
        %v5536 = vld [vmem:[%s5514 + $0xa8] sm:$0xff]
        %v5537 = vld [vmem:[%s5514 + $0xb0] sm:$0xff]
        %v5538 = vld [vmem:[%s5514 + $0xb8] sm:$0xff]
        %v5539 = vld [vmem:[%s5514 + $0xc0] sm:$0xff]
        %v5540 = vld [vmem:[%s5514 + $0xc8] sm:$0xff]
        %v5541 = vld [vmem:[%s5514 + $0xd0] sm:$0xff]
        %v5542 = vld [vmem:[%s5514 + $0xd8] sm:$0xff]
        %v5543 = vld [vmem:[%s5514 + $0xe0] sm:$0xff]
        %v5544 = vld [vmem:[%s5514 + $0xe8] sm:$0xff]
        %v5545 = vld [vmem:[%s5514 + $0xf0] sm:$0xff]
        %v5546 = vld [vmem:[%s5514 + $0xf8] sm:$0xff]
        %v5547 = vld [vmem:[%s5514 + $0x100] sm:$0xff]
        %v5548 = vld [vmem:[%s5514 + $0x108] sm:$0xff]
        %v5549 = vld [vmem:[%s5514 + $0x110] sm:$0xff]
        %v5550 = vld [vmem:[%s5514 + $0x118] sm:$0xff]
        %v5551 = vld [vmem:[%s5514 + $0x120] sm:$0xff]
        %v5552 = vld [vmem:[%s5514 + $0x128] sm:$0xff]
        %v5553 = vld [vmem:[%s5514 + $0x130] sm:$0xff]
        %v5554 = vld [vmem:[%s5514 + $0x138] sm:$0xff]
        %v5555 = vld [vmem:[%s5514 + $0x140] sm:$0xff]
        %v5556 = vld [vmem:[%s5514 + $0x148] sm:$0xff]
        %v5557 = vld [vmem:[%s5514 + $0x150] sm:$0xff]
        %v5558 = vld [vmem:[%s5514 + $0x158] sm:$0xff]
        %v5559 = vld [vmem:[%s5514 + $0x160] sm:$0xff]
        %v5560 = vld [vmem:[%s5514 + $0x168] sm:$0xff]
        %v5561 = vld [vmem:[%s5514 + $0x170] sm:$0xff]
        %v5562 = vld [vmem:[%s5514 + $0x178] sm:$0xff]
        %v5563 = vld [vmem:[%s5514 + $0x180] sm:$0xff]
        %v5564 = vld [vmem:[%s5514 + $0x188] sm:$0xff]
        %v5565 = vld [vmem:[%s5514 + $0x190] sm:$0xff]
        %v5566 = vld [vmem:[%s5514 + $0x198] sm:$0xff]
        %v5567 = vld [vmem:[%s5514 + $0x1a0] sm:$0xff]
        %v5568 = vld [vmem:[%s5514 + $0x1a8] sm:$0xff]
        %v5569 = vld [vmem:[%s5514 + $0x1b0] sm:$0xff]
        %v5570 = vld [vmem:[%s5514 + $0x1b8] sm:$0xff]
        %v5571 = vld [vmem:[%s5514 + $0x1c0] sm:$0xff]
        %v5572 = vld [vmem:[%s5514 + $0x1c8] sm:$0xff]
        %v5573 = vld [vmem:[%s5514 + $0x1d0] sm:$0xff]
        %v5574 = vld [vmem:[%s5514 + $0x1d8] sm:$0xff]
        %v5575 = vld [vmem:[%s5514 + $0x1e0] sm:$0xff]
        %v5576 = vld [vmem:[%s5514 + $0x1e8] sm:$0xff]
        %v5577 = vld [vmem:[%s5514 + $0x1f0] sm:$0xff]
        %v5578 = vld [vmem:[%s5514 + $0x1f8] sm:$0xff]
        %v5579 = vld [vmem:[%s5514 + $0x200] sm:$0xff]
        %v5580 = vld [vmem:[%s5514 + $0x208] sm:$0xff]
        %v5581 = vld [vmem:[%s5514 + $0x210] sm:$0xff]
        %v5582 = vld [vmem:[%s5514 + $0x218] sm:$0xff]
        %v5583 = vld [vmem:[%s5514 + $0x220] sm:$0xff]
        %v5584 = vld [vmem:[%s5514 + $0x228] sm:$0xff]
        %v5585 = vld [vmem:[%s5514 + $0x230] sm:$0xff]
        %v5586 = vld [vmem:[%s5514 + $0x238] sm:$0xff]
        %v5587 = vld [vmem:[%s5514 + $0x240] sm:$0xff]
        %v5588 = vld [vmem:[%s5514 + $0x248] sm:$0xff]
        %v5589 = vld [vmem:[%s5514 + $0x250] sm:$0xff]
        %v5590 = vld [vmem:[%s5514 + $0x258] sm:$0xff]
        %v5591 = vld [vmem:[%s5514 + $0x260] sm:$0xff]
        %v5592 = vld [vmem:[%s5514 + $0x268] sm:$0xff]
        %v5593 = vld [vmem:[%s5514 + $0x270] sm:$0xff]
        %v5594 = vld [vmem:[%s5514 + $0x278] sm:$0xff]
        %v5595 = vld [vmem:[%s5514 + $0x280] sm:$0xff]
        %v5596 = vld [vmem:[%s5514 + $0x288] sm:$0xff]
        %v5597 = vld [vmem:[%s5514 + $0x290] sm:$0xff]
        %v5598 = vld [vmem:[%s5514 + $0x298] sm:$0xff]
        %v5599 = vld [vmem:[%s5514 + $0x2a0] sm:$0xff]
        %v5600 = vld [vmem:[%s5514 + $0x2a8] sm:$0xff]
        %v5601 = vld [vmem:[%s5514 + $0x2b0] sm:$0xff]
        %v5602 = vld [vmem:[%s5514 + $0x2b8] sm:$0xff]
        %v5603 = vld [vmem:[%s5514 + $0x2c0] sm:$0xff]
        %v5604 = vld [vmem:[%s5514 + $0x2c8] sm:$0xff]
        %s5605 = scalar_lea.vmem [#allocation8], 5
        %v5606 = vld [vmem:[%s5605] sm:$0x1]
        %v5607 = vld [vmem:[#allocation2] sm:$0xff]
        %v5608 = vld [vmem:[#allocation2 + $0x8] sm:$0xff]
        %v5609 = vld [vmem:[#allocation2 + $0x10] sm:$0xff]
        %v5610 = vld [vmem:[#allocation2 + $0x18] sm:$0xff]
        %v5611 = vld [vmem:[#allocation2 + $0x20] sm:$0x3f]
        %v5612 = vld [vmem:[#allocation2 + $0x1] sm:$0xff]
        %v5613 = vld [vmem:[#allocation2 + $0x9] sm:$0xff]
        %v5614 = vld [vmem:[#allocation2 + $0x11] sm:$0xff]
        %v5615 = vld [vmem:[#allocation2 + $0x19] sm:$0xff]
        %v5616 = vld [vmem:[#allocation2 + $0x21] sm:$0x3f]
        %v5617 = vld [vmem:[#allocation2 + $0x2] sm:$0xff]
        %v5618 = vld [vmem:[#allocation2 + $0xa] sm:$0xff]
        %v5619 = vld [vmem:[#allocation2 + $0x12] sm:$0xff]
        %v5620 = vld [vmem:[#allocation2 + $0x1a] sm:$0xff]
        %v5621 = vld [vmem:[#allocation2 + $0x22] sm:$0x3f]
        %v5622 = vld [vmem:[#allocation2 + $0x22] sm:$0xff]
        %v5623 = vld [vmem:[#allocation2 + $0x2a] sm:$0x3f]
        %v5624 = vld [vmem:[#allocation2 + $0xb] sm:$0xff]
        %v5625 = vld [vmem:[#allocation2 + $0x13] sm:$0xff]
        %v5626 = vld [vmem:[#allocation2 + $0x1b] sm:$0xff]
        %v5627 = vld [vmem:[#allocation2 + $0x23] sm:$0xff]
        %v5628 = vld [vmem:[#allocation2 + $0x2b] sm:$0x3f]
        %v5629 = vld [vmem:[#allocation2 + $0xc] sm:$0xff]
        %v5630 = vld [vmem:[#allocation2 + $0x14] sm:$0xff]
        %v5631 = vld [vmem:[#allocation2 + $0x1c] sm:$0xff]
        %v5632 = vld [vmem:[#allocation2 + $0x24] sm:$0xff]
        %v5633 = vld [vmem:[#allocation2 + $0x2c] sm:$0x3f]
        %v5634 = vld [vmem:[#allocation2 + $0x2c] sm:$0xff]
        %v5635 = vld [vmem:[#allocation2 + $0x34] sm:$0x3f]
        %v5636 = vld [vmem:[#allocation2 + $0x15] sm:$0xff]
        %v5637 = vld [vmem:[#allocation2 + $0x1d] sm:$0xff]
        %v5638 = vld [vmem:[#allocation2 + $0x25] sm:$0xff]
        %v5639 = vld [vmem:[#allocation2 + $0x2d] sm:$0xff]
        %v5640 = vld [vmem:[#allocation2 + $0x35] sm:$0x3f]
        %v5641 = vld [vmem:[#allocation2 + $0x16] sm:$0xff]
        %v5642 = vld [vmem:[#allocation2 + $0x1e] sm:$0xff]
        %v5643 = vld [vmem:[#allocation2 + $0x26] sm:$0xff]
        %v5644 = vld [vmem:[#allocation2 + $0x2e] sm:$0xff]
        %v5645 = vld [vmem:[#allocation2 + $0x36] sm:$0x3f]
        %5651 = vrot.lane.b32.xlu0 %v5612, 80
        %v5652 = vpop.permute.xlu0 %5651
        %5653 = vrot.lane.b32.xlu0 %v5613, 80
        %v5654 = vpop.permute.xlu0 %5653
        %5655 = vrot.lane.b32.xlu0 %v5614, 80
        %v5656 = vpop.permute.xlu0 %5655
        %5657 = vrot.lane.b32.xlu0 %v5615, 80
        %v5658 = vpop.permute.xlu0 %5657
        %5659 = vrot.lane.b32.xlu0 %v5616, 80
        %v5660 = vpop.permute.xlu0 %5659
        %5671 = vrot.lane.b32.xlu0 %v5617, 32
        %v5672 = vpop.permute.xlu0 %5671
        %5673 = vrot.lane.b32.xlu0 %v5618, 32
        %v5674 = vpop.permute.xlu0 %5673
        %5675 = vrot.lane.b32.xlu0 %v5619, 32
        %v5676 = vpop.permute.xlu0 %5675
        %5677 = vrot.lane.b32.xlu0 %v5620, 32
        %v5678 = vpop.permute.xlu0 %5677
        %5679 = vrot.lane.b32.xlu0 %v5621, 32
        %v5680 = vpop.permute.xlu0 %5679
        %5688 = vrot.lane.b32.xlu0 %v5618, 112
        %v5689 = vpop.permute.xlu0 %5688
        %5690 = vrot.lane.b32.xlu0 %v5619, 112
        %v5691 = vpop.permute.xlu0 %5690
        %5692 = vrot.lane.b32.xlu0 %v5620, 112
        %v5693 = vpop.permute.xlu0 %5692
        %5694 = vrot.lane.b32.xlu0 %v5622, 112
        %v5695 = vpop.permute.xlu0 %5694
        %5696 = vrot.lane.b32.xlu0 %v5623, 112
        %v5697 = vpop.permute.xlu0 %5696
        %5708 = vrot.lane.b32.xlu0 %v5624, 64
        %v5709 = vpop.permute.xlu0 %5708
        %5710 = vrot.lane.b32.xlu0 %v5625, 64
        %v5711 = vpop.permute.xlu0 %5710
        %5712 = vrot.lane.b32.xlu0 %v5626, 64
        %v5713 = vpop.permute.xlu0 %5712
        %5714 = vrot.lane.b32.xlu0 %v5627, 64
        %v5715 = vpop.permute.xlu0 %5714
        %5716 = vrot.lane.b32.xlu0 %v5628, 64
        %v5717 = vpop.permute.xlu0 %5716
        %5728 = vrot.lane.b32.xlu0 %v5629, 16
        %v5729 = vpop.permute.xlu0 %5728
        %5730 = vrot.lane.b32.xlu0 %v5630, 16
        %v5731 = vpop.permute.xlu0 %5730
        %5732 = vrot.lane.b32.xlu0 %v5631, 16
        %v5733 = vpop.permute.xlu0 %5732
        %5734 = vrot.lane.b32.xlu0 %v5632, 16
        %v5735 = vpop.permute.xlu0 %5734
        %5736 = vrot.lane.b32.xlu0 %v5633, 16
        %v5737 = vpop.permute.xlu0 %5736
        %5745 = vrot.lane.b32.xlu0 %v5630, 96
        %v5746 = vpop.permute.xlu0 %5745
        %5747 = vrot.lane.b32.xlu0 %v5631, 96
        %v5748 = vpop.permute.xlu0 %5747
        %5749 = vrot.lane.b32.xlu0 %v5632, 96
        %v5750 = vpop.permute.xlu0 %5749
        %5751 = vrot.lane.b32.xlu0 %v5634, 96
        %v5752 = vpop.permute.xlu0 %5751
        %5753 = vrot.lane.b32.xlu0 %v5635, 96
        %v5754 = vpop.permute.xlu0 %5753
        %5765 = vrot.lane.b32.xlu0 %v5636, 48
        %v5766 = vpop.permute.xlu0 %5765
        %5767 = vrot.lane.b32.xlu0 %v5637, 48
        %v5768 = vpop.permute.xlu0 %5767
        %5769 = vrot.lane.b32.xlu0 %v5638, 48
        %v5770 = vpop.permute.xlu0 %5769
        %5771 = vrot.lane.b32.xlu0 %v5639, 48
        %v5772 = vpop.permute.xlu0 %5771
        %5773 = vrot.lane.b32.xlu0 %v5640, 48
        %v5774 = vpop.permute.xlu0 %5773
        %v5780 = vsel %vm570, %v5607, %v5652
        %v5781 = vsel %vm570, %v5608, %v5654
        %v5782 = vsel %vm570, %v5609, %v5656
        %v5783 = vsel %vm570, %v5610, %v5658
        %v5784 = vsel %vm570, %v5611, %v5660
        %v5785 = vsel %vm836, %v5652, %v5672
        %v5786 = vsel %vm836, %v5654, %v5674
        %v5787 = vsel %vm836, %v5656, %v5676
        %v5788 = vsel %vm836, %v5658, %v5678
        %v5789 = vsel %vm836, %v5660, %v5680
        %v5790 = vsel %vm848, %v5785, %v5689
        %v5791 = vsel %vm848, %v5786, %v5691
        %v5792 = vsel %vm848, %v5787, %v5693
        %v5793 = vsel %vm848, %v5788, %v5695
        %v5794 = vsel %vm848, %v5789, %v5697
        %v5795 = vsel %vm860, %v5689, %v5709
        %v5796 = vsel %vm860, %v5691, %v5711
        %v5797 = vsel %vm860, %v5693, %v5713
        %v5798 = vsel %vm860, %v5695, %v5715
        %v5799 = vsel %vm860, %v5697, %v5717
        %v5800 = vsel %vm1281, %v5709, %v5729
        %v5801 = vsel %vm1281, %v5711, %v5731
        %v5802 = vsel %vm1281, %v5713, %v5733
        %v5803 = vsel %vm1281, %v5715, %v5735
        %v5804 = vsel %vm1281, %v5717, %v5737
        %v5805 = vsel %vm1287, %v5800, %v5746
        %v5806 = vsel %vm1287, %v5801, %v5748
        %v5807 = vsel %vm1287, %v5802, %v5750
        %v5808 = vsel %vm1287, %v5803, %v5752
        %v5809 = vsel %vm1287, %v5804, %v5754
        %v5810 = vsel %vm1293, %v5746, %v5766
        %v5811 = vsel %vm1293, %v5748, %v5768
        %v5812 = vsel %vm1293, %v5750, %v5770
        %v5813 = vsel %vm1293, %v5752, %v5772
        %v5814 = vsel %vm1293, %v5754, %v5774
        %v5816 = vperm.slane %v5606, 0
        %v5819 = vsel %vm570, %v5641, 0
        %v5822 = vsel %vm570, %v5642, 0
        %v5825 = vsel %vm570, %v5643, 0
        %v5828 = vsel %vm570, %v5644, 0
        %v5831 = vsel %vm570, %v5645, 0
        %5833 = vmatpush.msra.mxu0 %v5530
        %5834 = vmatpush.msra.mxu0 %v5529
        %5835 = vmatpush.msra.mxu0 %v5528
        %5836 = vmatpush.msra.mxu0 %v5527
        %5837 = vmatpush.msra.mxu0 %v5526
        %5838 = vmatpush.msra.mxu0 %v5525
        %5839 = vmatpush.msra.mxu0 %v5524
        %5840 = vmatpush.msra.mxu0 %v5523
        %5841 = vmatpush.msra.mxu0 %v5522
        %5842 = vmatpush.msra.mxu0 %v5521
        %5843 = vmatpush.msra.mxu0 %v5520
        %5844 = vmatpush.msra.mxu0 %v5519
        %5845 = vmatpush.msra.mxu0 %v5518
        %5846 = vmatpush.msra.mxu0 %v5517
        %5847 = vmatpush.msra.mxu0 %v5516
        %5848 = vmatpush.msra.mxu0 %v5515
        %5849 = vmatmul.f32.gmra.mxu0 %v5780
        %v5850 = vpop.f32.mrf.mxu0
        %v5851 = vadd.f32 %v5816, %v5850
        %5852 = vmatmul.f32.gmra.mxu0 %v5781
        %v5853 = vpop.f32.mrf.mxu0
        %v5854 = vadd.f32 %v5816, %v5853
        %5855 = vmatmul.f32.gmra.mxu0 %v5782
        %v5856 = vpop.f32.mrf.mxu0
        %v5857 = vadd.f32 %v5816, %v5856
        %5858 = vmatmul.f32.gmra.mxu0 %v5783
        %v5859 = vpop.f32.mrf.mxu0
        %v5860 = vadd.f32 %v5816, %v5859
        %5861 = vmatmul.f32.gmra.mxu0 %v5784
        %v5862 = vpop.f32.mrf.mxu0
        %v5863 = vadd.f32 %v5816, %v5862
        %5864 = vdwg.mxu0
        %5865 = vmatpush.msra.mxu0 %v5546
        %5866 = vmatpush.msra.mxu0 %v5545
        %5867 = vmatpush.msra.mxu0 %v5544
        %5868 = vmatpush.msra.mxu0 %v5543
        %5869 = vmatpush.msra.mxu0 %v5542
        %5870 = vmatpush.msra.mxu0 %v5541
        %5871 = vmatpush.msra.mxu0 %v5540
        %5872 = vmatpush.msra.mxu0 %v5539
        %5873 = vmatpush.msra.mxu0 %v5538
        %5874 = vmatpush.msra.mxu0 %v5537
        %5875 = vmatpush.msra.mxu0 %v5536
        %5876 = vmatpush.msra.mxu0 %v5535
        %5877 = vmatpush.msra.mxu0 %v5534
        %5878 = vmatpush.msra.mxu0 %v5533
        %5879 = vmatpush.msra.mxu0 %v5532
        %5880 = vmatpush.msra.mxu0 %v5531
        %5881 = vmatmul.f32.gmra.mxu0 %v5790
        %v5882 = vpop.f32.mrf.mxu0
        %v5883 = vadd.f32 %v5851, %v5882
        %5884 = vmatmul.f32.gmra.mxu0 %v5791
        %v5885 = vpop.f32.mrf.mxu0
        %v5886 = vadd.f32 %v5854, %v5885
        %5887 = vmatmul.f32.gmra.mxu0 %v5792
        %v5888 = vpop.f32.mrf.mxu0
        %v5889 = vadd.f32 %v5857, %v5888
        %5890 = vmatmul.f32.gmra.mxu0 %v5793
        %v5891 = vpop.f32.mrf.mxu0
        %v5892 = vadd.f32 %v5860, %v5891
        %5893 = vmatmul.f32.gmra.mxu0 %v5794
        %v5894 = vpop.f32.mrf.mxu0
        %v5895 = vadd.f32 %v5863, %v5894
        %5896 = vdwg.mxu0
        %5897 = vmatpush.msra.mxu0 %v5562
        %5898 = vmatpush.msra.mxu0 %v5561
        %5899 = vmatpush.msra.mxu0 %v5560
        %5900 = vmatpush.msra.mxu0 %v5559
        %5901 = vmatpush.msra.mxu0 %v5558
        %5902 = vmatpush.msra.mxu0 %v5557
        %5903 = vmatpush.msra.mxu0 %v5556
        %5904 = vmatpush.msra.mxu0 %v5555
        %5905 = vmatpush.msra.mxu0 %v5554
        %5906 = vmatpush.msra.mxu0 %v5553
        %5907 = vmatpush.msra.mxu0 %v5552
        %5908 = vmatpush.msra.mxu0 %v5551
        %5909 = vmatpush.msra.mxu0 %v5550
        %5910 = vmatpush.msra.mxu0 %v5549
        %5911 = vmatpush.msra.mxu0 %v5548
        %5912 = vmatpush.msra.mxu0 %v5547
        %5913 = vmatmul.f32.gmra.mxu0 %v5795
        %v5914 = vpop.f32.mrf.mxu0
        %v5915 = vadd.f32 %v5883, %v5914
        %5916 = vmatmul.f32.gmra.mxu0 %v5796
        %v5917 = vpop.f32.mrf.mxu0
        %v5918 = vadd.f32 %v5886, %v5917
        %5919 = vmatmul.f32.gmra.mxu0 %v5797
        %v5920 = vpop.f32.mrf.mxu0
        %v5921 = vadd.f32 %v5889, %v5920
        %5922 = vmatmul.f32.gmra.mxu0 %v5798
        %v5923 = vpop.f32.mrf.mxu0
        %v5924 = vadd.f32 %v5892, %v5923
        %5925 = vmatmul.f32.gmra.mxu0 %v5799
        %v5926 = vpop.f32.mrf.mxu0
        %v5927 = vadd.f32 %v5895, %v5926
        %5928 = vdwg.mxu0
        %5929 = vmatpush.msra.mxu0 %v5578
        %5930 = vmatpush.msra.mxu0 %v5577
        %5931 = vmatpush.msra.mxu0 %v5576
        %5932 = vmatpush.msra.mxu0 %v5575
        %5933 = vmatpush.msra.mxu0 %v5574
        %5934 = vmatpush.msra.mxu0 %v5573
        %5935 = vmatpush.msra.mxu0 %v5572
        %5936 = vmatpush.msra.mxu0 %v5571
        %5937 = vmatpush.msra.mxu0 %v5570
        %5938 = vmatpush.msra.mxu0 %v5569
        %5939 = vmatpush.msra.mxu0 %v5568
        %5940 = vmatpush.msra.mxu0 %v5567
        %5941 = vmatpush.msra.mxu0 %v5566
        %5942 = vmatpush.msra.mxu0 %v5565
        %5943 = vmatpush.msra.mxu0 %v5564
        %5944 = vmatpush.msra.mxu0 %v5563
        %5945 = vmatmul.f32.gmra.mxu0 %v5805
        %v5946 = vpop.f32.mrf.mxu0
        %v5947 = vadd.f32 %v5915, %v5946
        %5948 = vmatmul.f32.gmra.mxu0 %v5806
        %v5949 = vpop.f32.mrf.mxu0
        %v5950 = vadd.f32 %v5918, %v5949
        %5951 = vmatmul.f32.gmra.mxu0 %v5807
        %v5952 = vpop.f32.mrf.mxu0
        %v5953 = vadd.f32 %v5921, %v5952
        %5954 = vmatmul.f32.gmra.mxu0 %v5808
        %v5955 = vpop.f32.mrf.mxu0
        %v5956 = vadd.f32 %v5924, %v5955
        %5957 = vmatmul.f32.gmra.mxu0 %v5809
        %v5958 = vpop.f32.mrf.mxu0
        %v5959 = vadd.f32 %v5927, %v5958
        %5960 = vdwg.mxu0
        %5961 = vmatpush.msra.mxu0 %v5594
        %5962 = vmatpush.msra.mxu0 %v5593
        %5963 = vmatpush.msra.mxu0 %v5592
        %5964 = vmatpush.msra.mxu0 %v5591
        %5965 = vmatpush.msra.mxu0 %v5590
        %5966 = vmatpush.msra.mxu0 %v5589
        %5967 = vmatpush.msra.mxu0 %v5588
        %5968 = vmatpush.msra.mxu0 %v5587
        %5969 = vmatpush.msra.mxu0 %v5586
        %5970 = vmatpush.msra.mxu0 %v5585
        %5971 = vmatpush.msra.mxu0 %v5584
        %5972 = vmatpush.msra.mxu0 %v5583
        %5973 = vmatpush.msra.mxu0 %v5582
        %5974 = vmatpush.msra.mxu0 %v5581
        %5975 = vmatpush.msra.mxu0 %v5580
        %5976 = vmatpush.msra.mxu0 %v5579
        %5977 = vmatmul.f32.gmra.mxu0 %v5810
        %v5978 = vpop.f32.mrf.mxu0
        %v5979 = vadd.f32 %v5947, %v5978
        %5980 = vmatmul.f32.gmra.mxu0 %v5811
        %v5981 = vpop.f32.mrf.mxu0
        %v5982 = vadd.f32 %v5950, %v5981
        %5983 = vmatmul.f32.gmra.mxu0 %v5812
        %v5984 = vpop.f32.mrf.mxu0
        %v5985 = vadd.f32 %v5953, %v5984
        %5986 = vmatmul.f32.gmra.mxu0 %v5813
        %v5987 = vpop.f32.mrf.mxu0
        %v5988 = vadd.f32 %v5956, %v5987
        %5989 = vmatmul.f32.gmra.mxu0 %v5814
        %v5990 = vpop.f32.mrf.mxu0
        %v5991 = vadd.f32 %v5959, %v5990
        %5992 = vdwg.mxu0
        %5993 = vmatpush.msra.mxu0 0.0
        %5994 = vmatpush.msra.mxu0 0.0
        %5995 = vmatpush.msra.mxu0 0.0
        %5996 = vmatpush.msra.mxu0 0.0
        %5997 = vmatpush.msra.mxu0 0.0
        %5998 = vmatpush.msra.mxu0 0.0
        %5999 = vmatpush.msra.mxu0 %v5604
        %6000 = vmatpush.msra.mxu0 %v5603
        %6001 = vmatpush.msra.mxu0 %v5602
        %6002 = vmatpush.msra.mxu0 %v5601
        %6003 = vmatpush.msra.mxu0 %v5600
        %6004 = vmatpush.msra.mxu0 %v5599
        %6005 = vmatpush.msra.mxu0 %v5598
        %6006 = vmatpush.msra.mxu0 %v5597
        %6007 = vmatpush.msra.mxu0 %v5596
        %6008 = vmatpush.msra.mxu0 %v5595
        %6009 = vmatmul.f32.gmra.mxu0 %v5819
        %v6010 = vpop.f32.mrf.mxu0
        %v6011 = vadd.f32 %v5979, %v6010
        %6012 = vmatmul.f32.gmra.mxu0 %v5822
        %v6013 = vpop.f32.mrf.mxu0
        %v6014 = vadd.f32 %v5982, %v6013
        %6015 = vmatmul.f32.gmra.mxu0 %v5825
        %v6016 = vpop.f32.mrf.mxu0
        %v6017 = vadd.f32 %v5985, %v6016
        %6018 = vmatmul.f32.gmra.mxu0 %v5828
        %v6019 = vpop.f32.mrf.mxu0
        %v6020 = vadd.f32 %v5988, %v6019
        %6021 = vmatmul.f32.gmra.mxu0 %v5831
        %v6022 = vpop.f32.mrf.mxu0
        %v6023 = vadd.f32 %v5991, %v6022
        %6024 = vdwg.mxu0
        %v6025 = vmax.f32 %v6011, 0.0
        %v6026 = vmax.f32 %v6014, 0.0
        %v6027 = vmax.f32 %v6017, 0.0
        %v6028 = vmax.f32 %v6020, 0.0
        %v6029 = vmax.f32 %v6023, 0.0
        %v6030 = vmul.f32 %v6025, %v565
        %v6031 = vmul.f32 %v6026, %v566
        %v6032 = vmul.f32 %v6027, %v567
        %v6033 = vmul.f32 %v6028, %v568
        %v6034 = vmul.f32 %v6029, %v569
        %v6035 = vadd.f32 %v6030, %v5624
        %v6036 = vadd.f32 %v6031, %v5625
        %v6037 = vadd.f32 %v6032, %v5626
        %v6038 = vadd.f32 %v6033, %v5627
        %v6039 = vadd.f32 %v6034, %v5628
        %6040 = vst.msk [vmem:[#allocation2 + $0xb] sm:$0xff] %vm570, %v6035
        %6041 = vst.msk [vmem:[#allocation2 + $0x13] sm:$0xff] %vm570, %v6036
        %6042 = vst.msk [vmem:[#allocation2 + $0x1b] sm:$0xff] %vm570, %v6037
        %6043 = vst.msk [vmem:[#allocation2 + $0x23] sm:$0xff] %vm570, %v6038
        %6044 = vst.msk [vmem:[#allocation2 + $0x2b] sm:$0x3f] %vm995, %v6039
        %s6045 = scalar_lea.vmem [#allocation10], 1440
        %v6046 = vld [vmem:[%s6045] sm:$0xff]
        %v6047 = vld [vmem:[%s6045 + $0x8] sm:$0xff]
        %v6048 = vld [vmem:[%s6045 + $0x10] sm:$0xff]
        %v6049 = vld [vmem:[%s6045 + $0x18] sm:$0xff]
        %v6050 = vld [vmem:[%s6045 + $0x20] sm:$0xff]
        %v6051 = vld [vmem:[%s6045 + $0x28] sm:$0xff]
        %v6052 = vld [vmem:[%s6045 + $0x30] sm:$0xff]
        %v6053 = vld [vmem:[%s6045 + $0x38] sm:$0xff]
        %v6054 = vld [vmem:[%s6045 + $0x40] sm:$0xff]
        %v6055 = vld [vmem:[%s6045 + $0x48] sm:$0xff]
        %v6056 = vld [vmem:[%s6045 + $0x50] sm:$0xff]
        %v6057 = vld [vmem:[%s6045 + $0x58] sm:$0xff]
        %v6058 = vld [vmem:[%s6045 + $0x60] sm:$0xff]
        %v6059 = vld [vmem:[%s6045 + $0x68] sm:$0xff]
        %v6060 = vld [vmem:[%s6045 + $0x70] sm:$0xff]
        %v6061 = vld [vmem:[%s6045 + $0x78] sm:$0xff]
        %v6062 = vld [vmem:[%s6045 + $0x80] sm:$0xff]
        %v6063 = vld [vmem:[%s6045 + $0x88] sm:$0xff]
        %v6064 = vld [vmem:[%s6045 + $0x90] sm:$0xff]
        %v6065 = vld [vmem:[%s6045 + $0x98] sm:$0xff]
        %v6066 = vld [vmem:[%s6045 + $0xa0] sm:$0xff]
        %v6067 = vld [vmem:[%s6045 + $0xa8] sm:$0xff]
        %v6068 = vld [vmem:[%s6045 + $0xb0] sm:$0xff]
        %v6069 = vld [vmem:[%s6045 + $0xb8] sm:$0xff]
        %v6070 = vld [vmem:[%s6045 + $0xc0] sm:$0xff]
        %v6071 = vld [vmem:[%s6045 + $0xc8] sm:$0xff]
        %v6072 = vld [vmem:[%s6045 + $0xd0] sm:$0xff]
        %v6073 = vld [vmem:[%s6045 + $0xd8] sm:$0xff]
        %v6074 = vld [vmem:[%s6045 + $0xe0] sm:$0xff]
        %v6075 = vld [vmem:[%s6045 + $0xe8] sm:$0xff]
        %v6076 = vld [vmem:[%s6045 + $0xf0] sm:$0xff]
        %v6077 = vld [vmem:[%s6045 + $0xf8] sm:$0xff]
        %v6078 = vld [vmem:[%s6045 + $0x100] sm:$0xff]
        %v6079 = vld [vmem:[%s6045 + $0x108] sm:$0xff]
        %v6080 = vld [vmem:[%s6045 + $0x110] sm:$0xff]
        %v6081 = vld [vmem:[%s6045 + $0x118] sm:$0xff]
        %v6082 = vld [vmem:[%s6045 + $0x120] sm:$0xff]
        %v6083 = vld [vmem:[%s6045 + $0x128] sm:$0xff]
        %v6084 = vld [vmem:[%s6045 + $0x130] sm:$0xff]
        %v6085 = vld [vmem:[%s6045 + $0x138] sm:$0xff]
        %v6086 = vld [vmem:[%s6045 + $0x140] sm:$0xff]
        %v6087 = vld [vmem:[%s6045 + $0x148] sm:$0xff]
        %v6088 = vld [vmem:[%s6045 + $0x150] sm:$0xff]
        %v6089 = vld [vmem:[%s6045 + $0x158] sm:$0xff]
        %v6090 = vld [vmem:[%s6045 + $0x160] sm:$0xff]
        %v6091 = vld [vmem:[%s6045 + $0x168] sm:$0xff]
        %v6092 = vld [vmem:[%s6045 + $0x170] sm:$0xff]
        %v6093 = vld [vmem:[%s6045 + $0x178] sm:$0xff]
        %v6094 = vld [vmem:[%s6045 + $0x180] sm:$0xff]
        %v6095 = vld [vmem:[%s6045 + $0x188] sm:$0xff]
        %v6096 = vld [vmem:[%s6045 + $0x190] sm:$0xff]
        %v6097 = vld [vmem:[%s6045 + $0x198] sm:$0xff]
        %v6098 = vld [vmem:[%s6045 + $0x1a0] sm:$0xff]
        %v6099 = vld [vmem:[%s6045 + $0x1a8] sm:$0xff]
        %v6100 = vld [vmem:[%s6045 + $0x1b0] sm:$0xff]
        %v6101 = vld [vmem:[%s6045 + $0x1b8] sm:$0xff]
        %v6102 = vld [vmem:[%s6045 + $0x1c0] sm:$0xff]
        %v6103 = vld [vmem:[%s6045 + $0x1c8] sm:$0xff]
        %v6104 = vld [vmem:[%s6045 + $0x1d0] sm:$0xff]
        %v6105 = vld [vmem:[%s6045 + $0x1d8] sm:$0xff]
        %v6106 = vld [vmem:[%s6045 + $0x1e0] sm:$0xff]
        %v6107 = vld [vmem:[%s6045 + $0x1e8] sm:$0xff]
        %v6108 = vld [vmem:[%s6045 + $0x1f0] sm:$0xff]
        %v6109 = vld [vmem:[%s6045 + $0x1f8] sm:$0xff]
        %v6110 = vld [vmem:[%s6045 + $0x200] sm:$0xff]
        %v6111 = vld [vmem:[%s6045 + $0x208] sm:$0xff]
        %v6112 = vld [vmem:[%s6045 + $0x210] sm:$0xff]
        %v6113 = vld [vmem:[%s6045 + $0x218] sm:$0xff]
        %v6114 = vld [vmem:[%s6045 + $0x220] sm:$0xff]
        %v6115 = vld [vmem:[%s6045 + $0x228] sm:$0xff]
        %v6116 = vld [vmem:[%s6045 + $0x230] sm:$0xff]
        %v6117 = vld [vmem:[%s6045 + $0x238] sm:$0xff]
        %v6118 = vld [vmem:[%s6045 + $0x240] sm:$0xff]
        %v6119 = vld [vmem:[%s6045 + $0x248] sm:$0xff]
        %v6120 = vld [vmem:[%s6045 + $0x250] sm:$0xff]
        %v6121 = vld [vmem:[%s6045 + $0x258] sm:$0xff]
        %v6122 = vld [vmem:[%s6045 + $0x260] sm:$0xff]
        %v6123 = vld [vmem:[%s6045 + $0x268] sm:$0xff]
        %v6124 = vld [vmem:[%s6045 + $0x270] sm:$0xff]
        %v6125 = vld [vmem:[%s6045 + $0x278] sm:$0xff]
        %v6126 = vld [vmem:[%s6045 + $0x280] sm:$0xff]
        %v6127 = vld [vmem:[%s6045 + $0x288] sm:$0xff]
        %v6128 = vld [vmem:[%s6045 + $0x290] sm:$0xff]
        %v6129 = vld [vmem:[%s6045 + $0x298] sm:$0xff]
        %v6130 = vld [vmem:[%s6045 + $0x2a0] sm:$0xff]
        %v6131 = vld [vmem:[%s6045 + $0x2a8] sm:$0xff]
        %v6132 = vld [vmem:[%s6045 + $0x2b0] sm:$0xff]
        %v6133 = vld [vmem:[%s6045 + $0x2b8] sm:$0xff]
        %v6134 = vld [vmem:[%s6045 + $0x2c0] sm:$0xff]
        %v6135 = vld [vmem:[%s6045 + $0x2c8] sm:$0xff]
        %s6136 = scalar_lea.vmem [#allocation11], 2
        %v6137 = vld [vmem:[%s6136] sm:$0x1]
        %v6138 = vld [vmem:[#allocation2] sm:$0xff]
        %v6139 = vld [vmem:[#allocation2 + $0x8] sm:$0xff]
        %v6140 = vld [vmem:[#allocation2 + $0x10] sm:$0xff]
        %v6141 = vld [vmem:[#allocation2 + $0x18] sm:$0xff]
        %v6142 = vld [vmem:[#allocation2 + $0x20] sm:$0x3f]
        %v6143 = vld [vmem:[#allocation2 + $0x1] sm:$0xff]
        %v6144 = vld [vmem:[#allocation2 + $0x9] sm:$0xff]
        %v6145 = vld [vmem:[#allocation2 + $0x11] sm:$0xff]
        %v6146 = vld [vmem:[#allocation2 + $0x19] sm:$0xff]
        %v6147 = vld [vmem:[#allocation2 + $0x21] sm:$0x3f]
        %v6148 = vld [vmem:[#allocation2 + $0x2] sm:$0xff]
        %v6149 = vld [vmem:[#allocation2 + $0xa] sm:$0xff]
        %v6150 = vld [vmem:[#allocation2 + $0x12] sm:$0xff]
        %v6151 = vld [vmem:[#allocation2 + $0x1a] sm:$0xff]
        %v6152 = vld [vmem:[#allocation2 + $0x22] sm:$0x3f]
        %v6153 = vld [vmem:[#allocation2 + $0x22] sm:$0xff]
        %v6154 = vld [vmem:[#allocation2 + $0x2a] sm:$0x3f]
        %v6155 = vld [vmem:[#allocation2 + $0xb] sm:$0xff]
        %v6156 = vld [vmem:[#allocation2 + $0x13] sm:$0xff]
        %v6157 = vld [vmem:[#allocation2 + $0x1b] sm:$0xff]
        %v6158 = vld [vmem:[#allocation2 + $0x23] sm:$0xff]
        %v6159 = vld [vmem:[#allocation2 + $0x2b] sm:$0x3f]
        %v6160 = vld [vmem:[#allocation2 + $0xc] sm:$0xff]
        %v6161 = vld [vmem:[#allocation2 + $0x14] sm:$0xff]
        %v6162 = vld [vmem:[#allocation2 + $0x1c] sm:$0xff]
        %v6163 = vld [vmem:[#allocation2 + $0x24] sm:$0xff]
        %v6164 = vld [vmem:[#allocation2 + $0x2c] sm:$0x3f]
        %v6165 = vld [vmem:[#allocation2 + $0x2c] sm:$0xff]
        %v6166 = vld [vmem:[#allocation2 + $0x34] sm:$0x3f]
        %v6167 = vld [vmem:[#allocation2 + $0x15] sm:$0xff]
        %v6168 = vld [vmem:[#allocation2 + $0x1d] sm:$0xff]
        %v6169 = vld [vmem:[#allocation2 + $0x25] sm:$0xff]
        %v6170 = vld [vmem:[#allocation2 + $0x2d] sm:$0xff]
        %v6171 = vld [vmem:[#allocation2 + $0x35] sm:$0x3f]
        %v6172 = vld [vmem:[#allocation2 + $0x16] sm:$0xff]
        %v6173 = vld [vmem:[#allocation2 + $0x1e] sm:$0xff]
        %v6174 = vld [vmem:[#allocation2 + $0x26] sm:$0xff]
        %v6175 = vld [vmem:[#allocation2 + $0x2e] sm:$0xff]
        %v6176 = vld [vmem:[#allocation2 + $0x36] sm:$0x3f]
        %6182 = vrot.lane.b32.xlu0 %v6143, 80
        %v6183 = vpop.permute.xlu0 %6182
        %6184 = vrot.lane.b32.xlu0 %v6144, 80
        %v6185 = vpop.permute.xlu0 %6184
        %6186 = vrot.lane.b32.xlu0 %v6145, 80
        %v6187 = vpop.permute.xlu0 %6186
        %6188 = vrot.lane.b32.xlu0 %v6146, 80
        %v6189 = vpop.permute.xlu0 %6188
        %6190 = vrot.lane.b32.xlu0 %v6147, 80
        %v6191 = vpop.permute.xlu0 %6190
        %6202 = vrot.lane.b32.xlu0 %v6148, 32
        %v6203 = vpop.permute.xlu0 %6202
        %6204 = vrot.lane.b32.xlu0 %v6149, 32
        %v6205 = vpop.permute.xlu0 %6204
        %6206 = vrot.lane.b32.xlu0 %v6150, 32
        %v6207 = vpop.permute.xlu0 %6206
        %6208 = vrot.lane.b32.xlu0 %v6151, 32
        %v6209 = vpop.permute.xlu0 %6208
        %6210 = vrot.lane.b32.xlu0 %v6152, 32
        %v6211 = vpop.permute.xlu0 %6210
        %6219 = vrot.lane.b32.xlu0 %v6149, 112
        %v6220 = vpop.permute.xlu0 %6219
        %6221 = vrot.lane.b32.xlu0 %v6150, 112
        %v6222 = vpop.permute.xlu0 %6221
        %6223 = vrot.lane.b32.xlu0 %v6151, 112
        %v6224 = vpop.permute.xlu0 %6223
        %6225 = vrot.lane.b32.xlu0 %v6153, 112
        %v6226 = vpop.permute.xlu0 %6225
        %6227 = vrot.lane.b32.xlu0 %v6154, 112
        %v6228 = vpop.permute.xlu0 %6227
        %6239 = vrot.lane.b32.xlu0 %v6155, 64
        %v6240 = vpop.permute.xlu0 %6239
        %6241 = vrot.lane.b32.xlu0 %v6156, 64
        %v6242 = vpop.permute.xlu0 %6241
        %6243 = vrot.lane.b32.xlu0 %v6157, 64
        %v6244 = vpop.permute.xlu0 %6243
        %6245 = vrot.lane.b32.xlu0 %v6158, 64
        %v6246 = vpop.permute.xlu0 %6245
        %6247 = vrot.lane.b32.xlu0 %v6159, 64
        %v6248 = vpop.permute.xlu0 %6247
        %6259 = vrot.lane.b32.xlu0 %v6160, 16
        %v6260 = vpop.permute.xlu0 %6259
        %6261 = vrot.lane.b32.xlu0 %v6161, 16
        %v6262 = vpop.permute.xlu0 %6261
        %6263 = vrot.lane.b32.xlu0 %v6162, 16
        %v6264 = vpop.permute.xlu0 %6263
        %6265 = vrot.lane.b32.xlu0 %v6163, 16
        %v6266 = vpop.permute.xlu0 %6265
        %6267 = vrot.lane.b32.xlu0 %v6164, 16
        %v6268 = vpop.permute.xlu0 %6267
        %6276 = vrot.lane.b32.xlu0 %v6161, 96
        %v6277 = vpop.permute.xlu0 %6276
        %6278 = vrot.lane.b32.xlu0 %v6162, 96
        %v6279 = vpop.permute.xlu0 %6278
        %6280 = vrot.lane.b32.xlu0 %v6163, 96
        %v6281 = vpop.permute.xlu0 %6280
        %6282 = vrot.lane.b32.xlu0 %v6165, 96
        %v6283 = vpop.permute.xlu0 %6282
        %6284 = vrot.lane.b32.xlu0 %v6166, 96
        %v6285 = vpop.permute.xlu0 %6284
        %6296 = vrot.lane.b32.xlu0 %v6167, 48
        %v6297 = vpop.permute.xlu0 %6296
        %6298 = vrot.lane.b32.xlu0 %v6168, 48
        %v6299 = vpop.permute.xlu0 %6298
        %6300 = vrot.lane.b32.xlu0 %v6169, 48
        %v6301 = vpop.permute.xlu0 %6300
        %6302 = vrot.lane.b32.xlu0 %v6170, 48
        %v6303 = vpop.permute.xlu0 %6302
        %6304 = vrot.lane.b32.xlu0 %v6171, 48
        %v6305 = vpop.permute.xlu0 %6304
        %v6311 = vsel %vm570, %v6138, %v6183
        %v6312 = vsel %vm570, %v6139, %v6185
        %v6313 = vsel %vm570, %v6140, %v6187
        %v6314 = vsel %vm570, %v6141, %v6189
        %v6315 = vsel %vm570, %v6142, %v6191
        %v6316 = vsel %vm836, %v6183, %v6203
        %v6317 = vsel %vm836, %v6185, %v6205
        %v6318 = vsel %vm836, %v6187, %v6207
        %v6319 = vsel %vm836, %v6189, %v6209
        %v6320 = vsel %vm836, %v6191, %v6211
        %v6321 = vsel %vm848, %v6316, %v6220
        %v6322 = vsel %vm848, %v6317, %v6222
        %v6323 = vsel %vm848, %v6318, %v6224
        %v6324 = vsel %vm848, %v6319, %v6226
        %v6325 = vsel %vm848, %v6320, %v6228
        %v6326 = vsel %vm860, %v6220, %v6240
        %v6327 = vsel %vm860, %v6222, %v6242
        %v6328 = vsel %vm860, %v6224, %v6244
        %v6329 = vsel %vm860, %v6226, %v6246
        %v6330 = vsel %vm860, %v6228, %v6248
        %v6331 = vsel %vm1281, %v6240, %v6260
        %v6332 = vsel %vm1281, %v6242, %v6262
        %v6333 = vsel %vm1281, %v6244, %v6264
        %v6334 = vsel %vm1281, %v6246, %v6266
        %v6335 = vsel %vm1281, %v6248, %v6268
        %v6336 = vsel %vm1287, %v6331, %v6277
        %v6337 = vsel %vm1287, %v6332, %v6279
        %v6338 = vsel %vm1287, %v6333, %v6281
        %v6339 = vsel %vm1287, %v6334, %v6283
        %v6340 = vsel %vm1287, %v6335, %v6285
        %v6341 = vsel %vm1293, %v6277, %v6297
        %v6342 = vsel %vm1293, %v6279, %v6299
        %v6343 = vsel %vm1293, %v6281, %v6301
        %v6344 = vsel %vm1293, %v6283, %v6303
        %v6345 = vsel %vm1293, %v6285, %v6305
        %v6347 = vperm.slane %v6137, 0
        %v6350 = vsel %vm570, %v6172, 0
        %v6353 = vsel %vm570, %v6173, 0
        %v6356 = vsel %vm570, %v6174, 0
        %v6359 = vsel %vm570, %v6175, 0
        %v6362 = vsel %vm570, %v6176, 0
        %6364 = vmatpush.msra.mxu0 %v6061
        %6365 = vmatpush.msra.mxu0 %v6060
        %6366 = vmatpush.msra.mxu0 %v6059
        %6367 = vmatpush.msra.mxu0 %v6058
        %6368 = vmatpush.msra.mxu0 %v6057
        %6369 = vmatpush.msra.mxu0 %v6056
        %6370 = vmatpush.msra.mxu0 %v6055
        %6371 = vmatpush.msra.mxu0 %v6054
        %6372 = vmatpush.msra.mxu0 %v6053
        %6373 = vmatpush.msra.mxu0 %v6052
        %6374 = vmatpush.msra.mxu0 %v6051
        %6375 = vmatpush.msra.mxu0 %v6050
        %6376 = vmatpush.msra.mxu0 %v6049
        %6377 = vmatpush.msra.mxu0 %v6048
        %6378 = vmatpush.msra.mxu0 %v6047
        %6379 = vmatpush.msra.mxu0 %v6046
        %6380 = vmatmul.f32.gmra.mxu0 %v6311
        %v6381 = vpop.f32.mrf.mxu0
        %v6382 = vadd.f32 %v6347, %v6381
        %6383 = vmatmul.f32.gmra.mxu0 %v6312
        %v6384 = vpop.f32.mrf.mxu0
        %v6385 = vadd.f32 %v6347, %v6384
        %6386 = vmatmul.f32.gmra.mxu0 %v6313
        %v6387 = vpop.f32.mrf.mxu0
        %v6388 = vadd.f32 %v6347, %v6387
        %6389 = vmatmul.f32.gmra.mxu0 %v6314
        %v6390 = vpop.f32.mrf.mxu0
        %v6391 = vadd.f32 %v6347, %v6390
        %6392 = vmatmul.f32.gmra.mxu0 %v6315
        %v6393 = vpop.f32.mrf.mxu0
        %v6394 = vadd.f32 %v6347, %v6393
        %6395 = vdwg.mxu0
        %6396 = vmatpush.msra.mxu0 %v6077
        %6397 = vmatpush.msra.mxu0 %v6076
        %6398 = vmatpush.msra.mxu0 %v6075
        %6399 = vmatpush.msra.mxu0 %v6074
        %6400 = vmatpush.msra.mxu0 %v6073
        %6401 = vmatpush.msra.mxu0 %v6072
        %6402 = vmatpush.msra.mxu0 %v6071
        %6403 = vmatpush.msra.mxu0 %v6070
        %6404 = vmatpush.msra.mxu0 %v6069
        %6405 = vmatpush.msra.mxu0 %v6068
        %6406 = vmatpush.msra.mxu0 %v6067
        %6407 = vmatpush.msra.mxu0 %v6066
        %6408 = vmatpush.msra.mxu0 %v6065
        %6409 = vmatpush.msra.mxu0 %v6064
        %6410 = vmatpush.msra.mxu0 %v6063
        %6411 = vmatpush.msra.mxu0 %v6062
        %6412 = vmatmul.f32.gmra.mxu0 %v6321
        %v6413 = vpop.f32.mrf.mxu0
        %v6414 = vadd.f32 %v6382, %v6413
        %6415 = vmatmul.f32.gmra.mxu0 %v6322
        %v6416 = vpop.f32.mrf.mxu0
        %v6417 = vadd.f32 %v6385, %v6416
        %6418 = vmatmul.f32.gmra.mxu0 %v6323
        %v6419 = vpop.f32.mrf.mxu0
        %v6420 = vadd.f32 %v6388, %v6419
        %6421 = vmatmul.f32.gmra.mxu0 %v6324
        %v6422 = vpop.f32.mrf.mxu0
        %v6423 = vadd.f32 %v6391, %v6422
        %6424 = vmatmul.f32.gmra.mxu0 %v6325
        %v6425 = vpop.f32.mrf.mxu0
        %v6426 = vadd.f32 %v6394, %v6425
        %6427 = vdwg.mxu0
        %6428 = vmatpush.msra.mxu0 %v6093
        %6429 = vmatpush.msra.mxu0 %v6092
        %6430 = vmatpush.msra.mxu0 %v6091
        %6431 = vmatpush.msra.mxu0 %v6090
        %6432 = vmatpush.msra.mxu0 %v6089
        %6433 = vmatpush.msra.mxu0 %v6088
        %6434 = vmatpush.msra.mxu0 %v6087
        %6435 = vmatpush.msra.mxu0 %v6086
        %6436 = vmatpush.msra.mxu0 %v6085
        %6437 = vmatpush.msra.mxu0 %v6084
        %6438 = vmatpush.msra.mxu0 %v6083
        %6439 = vmatpush.msra.mxu0 %v6082
        %6440 = vmatpush.msra.mxu0 %v6081
        %6441 = vmatpush.msra.mxu0 %v6080
        %6442 = vmatpush.msra.mxu0 %v6079
        %6443 = vmatpush.msra.mxu0 %v6078
        %6444 = vmatmul.f32.gmra.mxu0 %v6326
        %v6445 = vpop.f32.mrf.mxu0
        %v6446 = vadd.f32 %v6414, %v6445
        %6447 = vmatmul.f32.gmra.mxu0 %v6327
        %v6448 = vpop.f32.mrf.mxu0
        %v6449 = vadd.f32 %v6417, %v6448
        %6450 = vmatmul.f32.gmra.mxu0 %v6328
        %v6451 = vpop.f32.mrf.mxu0
        %v6452 = vadd.f32 %v6420, %v6451
        %6453 = vmatmul.f32.gmra.mxu0 %v6329
        %v6454 = vpop.f32.mrf.mxu0
        %v6455 = vadd.f32 %v6423, %v6454
        %6456 = vmatmul.f32.gmra.mxu0 %v6330
        %v6457 = vpop.f32.mrf.mxu0
        %v6458 = vadd.f32 %v6426, %v6457
        %6459 = vdwg.mxu0
        %6460 = vmatpush.msra.mxu0 %v6109
        %6461 = vmatpush.msra.mxu0 %v6108
        %6462 = vmatpush.msra.mxu0 %v6107
        %6463 = vmatpush.msra.mxu0 %v6106
        %6464 = vmatpush.msra.mxu0 %v6105
        %6465 = vmatpush.msra.mxu0 %v6104
        %6466 = vmatpush.msra.mxu0 %v6103
        %6467 = vmatpush.msra.mxu0 %v6102
        %6468 = vmatpush.msra.mxu0 %v6101
        %6469 = vmatpush.msra.mxu0 %v6100
        %6470 = vmatpush.msra.mxu0 %v6099
        %6471 = vmatpush.msra.mxu0 %v6098
        %6472 = vmatpush.msra.mxu0 %v6097
        %6473 = vmatpush.msra.mxu0 %v6096
        %6474 = vmatpush.msra.mxu0 %v6095
        %6475 = vmatpush.msra.mxu0 %v6094
        %6476 = vmatmul.f32.gmra.mxu0 %v6336
        %v6477 = vpop.f32.mrf.mxu0
        %v6478 = vadd.f32 %v6446, %v6477
        %6479 = vmatmul.f32.gmra.mxu0 %v6337
        %v6480 = vpop.f32.mrf.mxu0
        %v6481 = vadd.f32 %v6449, %v6480
        %6482 = vmatmul.f32.gmra.mxu0 %v6338
        %v6483 = vpop.f32.mrf.mxu0
        %v6484 = vadd.f32 %v6452, %v6483
        %6485 = vmatmul.f32.gmra.mxu0 %v6339
        %v6486 = vpop.f32.mrf.mxu0
        %v6487 = vadd.f32 %v6455, %v6486
        %6488 = vmatmul.f32.gmra.mxu0 %v6340
        %v6489 = vpop.f32.mrf.mxu0
        %v6490 = vadd.f32 %v6458, %v6489
        %6491 = vdwg.mxu0
        %6492 = vmatpush.msra.mxu0 %v6125
        %6493 = vmatpush.msra.mxu0 %v6124
        %6494 = vmatpush.msra.mxu0 %v6123
        %6495 = vmatpush.msra.mxu0 %v6122
        %6496 = vmatpush.msra.mxu0 %v6121
        %6497 = vmatpush.msra.mxu0 %v6120
        %6498 = vmatpush.msra.mxu0 %v6119
        %6499 = vmatpush.msra.mxu0 %v6118
        %6500 = vmatpush.msra.mxu0 %v6117
        %6501 = vmatpush.msra.mxu0 %v6116
        %6502 = vmatpush.msra.mxu0 %v6115
        %6503 = vmatpush.msra.mxu0 %v6114
        %6504 = vmatpush.msra.mxu0 %v6113
        %6505 = vmatpush.msra.mxu0 %v6112
        %6506 = vmatpush.msra.mxu0 %v6111
        %6507 = vmatpush.msra.mxu0 %v6110
        %6508 = vmatmul.f32.gmra.mxu0 %v6341
        %v6509 = vpop.f32.mrf.mxu0
        %v6510 = vadd.f32 %v6478, %v6509
        %6511 = vmatmul.f32.gmra.mxu0 %v6342
        %v6512 = vpop.f32.mrf.mxu0
        %v6513 = vadd.f32 %v6481, %v6512
        %6514 = vmatmul.f32.gmra.mxu0 %v6343
        %v6515 = vpop.f32.mrf.mxu0
        %v6516 = vadd.f32 %v6484, %v6515
        %6517 = vmatmul.f32.gmra.mxu0 %v6344
        %v6518 = vpop.f32.mrf.mxu0
        %v6519 = vadd.f32 %v6487, %v6518
        %6520 = vmatmul.f32.gmra.mxu0 %v6345
        %v6521 = vpop.f32.mrf.mxu0
        %v6522 = vadd.f32 %v6490, %v6521
        %6523 = vdwg.mxu0
        %6524 = vmatpush.msra.mxu0 0.0
        %6525 = vmatpush.msra.mxu0 0.0
        %6526 = vmatpush.msra.mxu0 0.0
        %6527 = vmatpush.msra.mxu0 0.0
        %6528 = vmatpush.msra.mxu0 0.0
        %6529 = vmatpush.msra.mxu0 0.0
        %6530 = vmatpush.msra.mxu0 %v6135
        %6531 = vmatpush.msra.mxu0 %v6134
        %6532 = vmatpush.msra.mxu0 %v6133
        %6533 = vmatpush.msra.mxu0 %v6132
        %6534 = vmatpush.msra.mxu0 %v6131
        %6535 = vmatpush.msra.mxu0 %v6130
        %6536 = vmatpush.msra.mxu0 %v6129
        %6537 = vmatpush.msra.mxu0 %v6128
        %6538 = vmatpush.msra.mxu0 %v6127
        %6539 = vmatpush.msra.mxu0 %v6126
        %6540 = vmatmul.f32.gmra.mxu0 %v6350
        %v6541 = vpop.f32.mrf.mxu0
        %v6542 = vadd.f32 %v6510, %v6541
        %6543 = vmatmul.f32.gmra.mxu0 %v6353
        %v6544 = vpop.f32.mrf.mxu0
        %v6545 = vadd.f32 %v6513, %v6544
        %6546 = vmatmul.f32.gmra.mxu0 %v6356
        %v6547 = vpop.f32.mrf.mxu0
        %v6548 = vadd.f32 %v6516, %v6547
        %6549 = vmatmul.f32.gmra.mxu0 %v6359
        %v6550 = vpop.f32.mrf.mxu0
        %v6551 = vadd.f32 %v6519, %v6550
        %6552 = vmatmul.f32.gmra.mxu0 %v6362
        %v6553 = vpop.f32.mrf.mxu0
        %v6554 = vadd.f32 %v6522, %v6553
        %6555 = vdwg.mxu0
        %v6556 = vmul.f32 %v6542, %v565
        %v6557 = vmul.f32 %v6545, %v566
        %v6558 = vmul.f32 %v6548, %v567
        %v6559 = vmul.f32 %v6551, %v568
        %v6560 = vmul.f32 %v6554, %v569
        %6561 = vst.msk [vmem:[#allocation2 + $0xb] sm:$0xff] %vm819, %v6556
        %6562 = vst.msk [vmem:[#allocation2 + $0x13] sm:$0xff] %vm819, %v6557
        %6563 = vst.msk [vmem:[#allocation2 + $0x1b] sm:$0xff] %vm819, %v6558
        %6564 = vst.msk [vmem:[#allocation2 + $0x23] sm:$0xff] %vm819, %v6559
        %6565 = vst.msk [vmem:[#allocation2 + $0x2b] sm:$0x3f] %vm2578, %v6560
        %6571 = vrot.lane.b32.xlu0 %v4563, 40
        %v6572 = vpop.permute.xlu0 %6571
        %6573 = vrot.lane.b32.xlu0 %v4564, 40
        %v6574 = vpop.permute.xlu0 %6573
        %6575 = vrot.lane.b32.xlu0 %v4565, 40
        %v6576 = vpop.permute.xlu0 %6575
        %6577 = vrot.lane.b32.xlu0 %v4566, 40
        %v6578 = vpop.permute.xlu0 %6577
        %6579 = vrot.lane.b32.xlu0 %v4567, 40
        %v6580 = vpop.permute.xlu0 %6579
        %6591 = vrot.lane.b32.xlu0 %v6556, 80
        %v6592 = vpop.permute.xlu0 %6591
        %6593 = vrot.lane.b32.xlu0 %v6557, 80
        %v6594 = vpop.permute.xlu0 %6593
        %6595 = vrot.lane.b32.xlu0 %v6558, 80
        %v6596 = vpop.permute.xlu0 %6595
        %6597 = vrot.lane.b32.xlu0 %v6559, 80
        %v6598 = vpop.permute.xlu0 %6597
        %6599 = vrot.lane.b32.xlu0 %v6560, 80
        %v6600 = vpop.permute.xlu0 %6599
        %v6606 = vsel %vm819, %v2569, %v6572
        %v6607 = vsel %vm819, %v2570, %v6574
        %v6608 = vsel %vm819, %v2571, %v6576
        %v6609 = vsel %vm819, %v2572, %v6578
        %v6610 = vsel %vm819, %v2573, %v6580
        %v6611 = vsel %vm570, %v6606, %v6592
        %v6612 = vsel %vm570, %v6607, %v6594
        %v6613 = vsel %vm570, %v6608, %v6596
        %v6614 = vsel %vm570, %v6609, %v6598
        %v6615 = vsel %vm570, %v6610, %v6600
        %v6616 = vsel %vm830, %v6611, 0.0
        %v6617 = vsel %vm830, %v6612, 0.0
        %v6618 = vsel %vm830, %v6613, 0.0
        %v6619 = vsel %vm830, %v6614, 0.0
        %v6620 = vsel %vm830, %v6615, 0.0
        %6621 = vst [vmem:[%s378] sm:$0xff] %v6616
        %6622 = vst [vmem:[%s378 + $0x8] sm:$0xff] %v6617
        %6623 = vst [vmem:[%s378 + $0x10] sm:$0xff] %v6618
        %6624 = vst [vmem:[%s378 + $0x18] sm:$0xff] %v6619
        %6625 = vst [vmem:[%s378 + $0x20] sm:$0x3f] %v6620
        %p6626 = scmp.lt.s32.totalorder %s22, 1
        %s6627 = scalar_select %p6626, %s22, 1
        %s6628 = smul.addr %s6627, 5
        %s6629 = smul.addr %s6628, 8
        %s6630 = scalar_lea.vmem %s7, %s6629
        // Predicated region
        $region73: #{conv3d_model_forward.1} parent=47 // pred_check
          %p6631 = pneg %p192
        $region74: #{conv3d_model_forward.1} parent=47 // pred_check_branch
          %6633 = sbr.rel (%p6631) target = $region76
        $region75: #{conv3d_model_forward.1} parent=47 // pred_region
          _
        $region76: #{conv3d_model_forward.1} parent=47 // pred_fallthru
          _
      $region48: #{conv3d_model_forward.1} parent=5 // pred_fallthru
        _
      %p6634 = scmp.le.s32.totalorder 2, %s17
      // Predicated region
      $region77: #{conv3d_model_forward.1} parent=5 // pred_check
        %p6635 = pneg %p6634
      $region78: #{conv3d_model_forward.1} parent=5 // pred_check_branch
        %6637 = sbr.rel (%p6635) target = $region80
      $region79: #{conv3d_model_forward.1} parent=5 // pred_region
        %s6638 = ssub.s32 %s17, 2
        // Predicated region
        $region81: #{conv3d_model_forward.1} parent=79 // pred_check
          %p6639 = pneg %p198
        $region82: #{conv3d_model_forward.1} parent=79 // pred_check_branch
          %6641 = sbr.rel (%p6639) target = $region84
        $region83: #{conv3d_model_forward.1} parent=79 // pred_region
          %p6642 = scmp.lt.s32.totalorder %s23, 1
          %s6643 = scalar_select %p6642, %s23, 1
          %s6644 = smul.addr %s6643, 5
          %s6645 = smul.addr %s6644, 8
          %s6646 = scalar_lea.vmem %s7, %s6645
        $region84: #{conv3d_model_forward.1} parent=79 // pred_fallthru
          _
      $region80: #{conv3d_model_forward.1} parent=5 // pred_fallthru
        _
    $region6: #{conv3d_model_forward.1} parent=1 // loop_footer
      %s21 = sadd.s32 1, %s17
    $region7: #{conv3d_model_forward.1} parent=1 // loop_footer_branch
      %16 = sbr.rel target = $region3
    $region8: #{conv3d_model_forward.1} parent=1 // loop_exit
      _
    %6647 = vsyncpa [#allocation4], 1
    %s6648 = scalar_lea.sflag [#allocation4], 1
    %6649 = vsyncpa %s6648, 1
    %6650 = vsyncpa [#allocation6], 1
    %6651 = vsyncpa [#allocation9], 1
    %6652 = vsyncpa [#allocation12], 1

</llo_original>
